<compile_context>
chip_gen: v6e
topology: v6e:2x2x1
jax: 0.10.0
libtpu: 0.0.40
codegen_flags: <defaults>
</compile_context>

<pallas_src>
import jax
import jax.numpy as jnp
from jax.experimental import pallas as pl
from jax.experimental.pallas import tpu as pltpu


def basic_block_kernel(x_ref, w1_ref, w2_ref, b1_ref, b2_ref, out_ref,
                       pad1, pad2, patches):
    """One batch element per grid step.

    x_ref   : (1, H, W, Cp)   input (unpadded, channel-padded to Cp)
    w1_ref  : (9*Cp, Cp)      conv1 weights, BN1 scale folded, im2col layout
    w2_ref  : (9*Cp, Cp)      conv2 weights, BN2 scale folded, im2col layout
    b1_ref  : (1, Cp)         folded BN1 shift
    b2_ref  : (1, Cp)         folded BN2 shift
    out_ref : (1, H, W, Cp)
    pad1    : (H+2, W+2, Cp)  VMEM halo buffer for conv1 input
    pad2    : (H+2, W+2, Cp)  VMEM halo buffer for conv2 input (= relu(bn1(conv1)))
    patches : (TR, W, 9*Cp)   VMEM im2col buffer for one row tile
    """
    H = out_ref.shape[1]
    W = out_ref.shape[2]
    Cp = out_ref.shape[3]
    TR = patches.shape[0]
    n_tiles = H // TR

    # Zero only the halo border strips (interiors are fully overwritten below).
    zrow = jnp.zeros((1, W + 2, Cp), jnp.float32)
    zcol = jnp.zeros((H, 1, Cp), jnp.float32)
    for buf in (pad1, pad2):
        buf[0:1, :, :] = zrow
        buf[H + 1:H + 2, :, :] = zrow
        buf[1:H + 1, 0:1, :] = zcol
        buf[1:H + 1, W + 1:W + 2, :] = zcol

    # Stage the single input DMA into the conv1 halo buffer.
    pad1[1:H + 1, 1:W + 1, :] = x_ref[0]

    b1 = b1_ref[...]   # (1, Cp)
    b2 = b2_ref[...]

    def conv_rows(pad_ref, w_ref, r0):
        # im2col for output rows [r0, r0+TR): one MXU matmul with K = 9*Cp.
        for t in range(9):
            dy, dx = divmod(t, 3)
            patches[:, :, t * Cp:(t + 1) * Cp] = \
                pad_ref[r0 + dy:r0 + dy + TR, dx:dx + W, :]
        return jnp.dot(patches[...].reshape(TR * W, 9 * Cp), w_ref[...],
                       preferred_element_type=jnp.float32)

    # conv1 (+ folded BN1) + ReLU -> interior of pad2 (halo for conv2)
    for i in range(n_tiles):
        r0 = i * TR
        y1 = jnp.maximum(conv_rows(pad1, w1_ref, r0) + b1, 0.0)
        pad2[1 + r0:1 + r0 + TR, 1:W + 1, :] = y1.reshape(TR, W, Cp)

    # conv2 (+ folded BN2) + residual + ReLU -> output (lane-dense store)
    for i in range(n_tiles):
        r0 = i * TR
        y2 = conv_rows(pad2, w2_ref, r0) + b2
        y2 = y2 + x_ref[0, r0:r0 + TR, :, :].reshape(TR * W, Cp)
        out_ref[0, r0:r0 + TR, :, :] = jnp.maximum(y2, 0.0).reshape(TR, W, Cp)


def _fold_bn_into_conv(w_oihw, gamma, beta, mean, var, c_pad, eps=1e-5):
    """Fold BN (eval mode) scale into conv weights; return im2col-layout weights
    (9*Cp, Cp) and the remaining shift (1, Cp), both zero-padded to Cp channels."""
    scale = gamma / jnp.sqrt(var + eps)                       # (C,)
    shift = beta - mean * scale                               # (C,)
    C = w_oihw.shape[0]
    w = jnp.transpose(w_oihw, (2, 3, 1, 0)).astype(jnp.float32)   # OIHW -> HWIO
    w = w * scale[None, None, None, :]                        # fold BN scale
    w = jnp.pad(w, ((0, 0), (0, 0), (0, c_pad - C), (0, c_pad - C)))
    w_flat = w.reshape(9 * c_pad, c_pad)                      # K = 9*Cp layout
    b = jnp.pad(shift.astype(jnp.float32), (0, c_pad - C)).reshape(1, c_pad)
    return w_flat, b


def basic_block_forward(x_nchw, w1_oihw, w2_oihw, bn1, bn2, *, row_tile=8):
    """BasicBlock forward (stride=1, downsample=None). x is NCHW like PyTorch."""
    N, C, H, W = x_nchw.shape
    Cp = ((C + 127) // 128) * 128                 # lane-dense channel padding
    TR = row_tile if H % row_tile == 0 else H     # M (row) tile inside kernel

    x = jnp.transpose(x_nchw, (0, 2, 3, 1)).astype(jnp.float32)   # NHWC
    if Cp != C:
        x = jnp.pad(x, ((0, 0), (0, 0), (0, 0), (0, Cp - C)))

    w1f, b1 = _fold_bn_into_conv(w1_oihw, *bn1, c_pad=Cp)
    w2f, b2 = _fold_bn_into_conv(w2_oihw, *bn2, c_pad=Cp)

    out_nhwc = pl.pallas_call(
        basic_block_kernel,
        out_shape=jax.ShapeDtypeStruct((N, H, W, Cp), jnp.float32),
        grid_spec=pltpu.PrefetchScalarGridSpec(
            num_scalar_prefetch=0,
            grid=(N,),
            in_specs=[
                pl.BlockSpec((1, H, W, Cp), lambda n: (n, 0, 0, 0)),
                pl.BlockSpec((9 * Cp, Cp), lambda n: (0, 0)),
                pl.BlockSpec((9 * Cp, Cp), lambda n: (0, 0)),
                pl.BlockSpec((1, Cp), lambda n: (0, 0)),
                pl.BlockSpec((1, Cp), lambda n: (0, 0)),
            ],
            out_specs=pl.BlockSpec((1, H, W, Cp), lambda n: (n, 0, 0, 0)),
            scratch_shapes=[
                pltpu.VMEM((H + 2, W + 2, Cp), jnp.float32),   # conv1 halo
                pltpu.VMEM((H + 2, W + 2, Cp), jnp.float32),   # conv2 halo
                pltpu.VMEM((TR, W, 9 * Cp), jnp.float32),      # im2col patches
            ],
        ),
        compiler_params=pltpu.CompilerParams(
            dimension_semantics=("parallel",)),
    )(x, w1f, w2f, b1, b2)

    out_nhwc = out_nhwc[..., :C]                  # drop channel padding
    return jnp.transpose(out_nhwc, (0, 3, 1, 2))  # back to NCHW


# ---------------- pure-JAX reference for verification ----------------
def _conv3x3_ref(x_nhwc, w_hwio):
    return jax.lax.conv_general_dilated(
        x_nhwc, w_hwio, window_strides=(1, 1), padding=((1, 1), (1, 1)),
        dimension_numbers=("NHWC", "HWIO", "NHWC"))


def basic_block_ref(x_nchw, w1_oihw, w2_oihw, bn1, bn2, eps=1e-5):
    x = jnp.transpose(x_nchw, (0, 2, 3, 1)).astype(jnp.float32)
    w1 = jnp.transpose(w1_oihw, (2, 3, 1, 0))
    w2 = jnp.transpose(w2_oihw, (2, 3, 1, 0))

    def bn_apply(v, bn):
        gamma, beta, mean, var = bn
        s = gamma / jnp.sqrt(var + eps)
        return v * s + (beta - mean * s)

    out = jnp.maximum(bn_apply(_conv3x3_ref(x, w1), bn1), 0.0)
    out = bn_apply(_conv3x3_ref(out, w2), bn2)
    out = jnp.maximum(out + x, 0.0)
    return jnp.transpose(out, (0, 3, 1, 2))


if __name__ == "__main__":
    key = jax.random.PRNGKey(0)
    ks = jax.random.split(key, 12)

    N, C, H, W = 2, 4, 16, 16          # inplanes == planes, stride=1, no downsample
    x = jax.random.normal(ks[0], (N, C, H, W), jnp.float32)

    # conv weights in PyTorch OIHW layout (bias=False)
    w1 = 0.1 * jax.random.normal(ks[1], (C, C, 3, 3), jnp.float32)
    w2 = 0.1 * jax.random.normal(ks[2], (C, C, 3, 3), jnp.float32)

    # BatchNorm params: (gamma, beta, running_mean, running_var)
    bn1 = (1.0 + 0.1 * jax.random.normal(ks[3], (C,), jnp.float32),
           0.1 * jax.random.normal(ks[4], (C,), jnp.float32),
           0.1 * jax.random.normal(ks[5], (C,), jnp.float32),
           jax.random.uniform(ks[6], (C,), jnp.float32, 0.5, 1.5))
    bn2 = (1.0 + 0.1 * jax.random.normal(ks[7], (C,), jnp.float32),
           0.1 * jax.random.normal(ks[8], (C,), jnp.float32),
           0.1 * jax.random.normal(ks[9], (C,), jnp.float32),
           jax.random.uniform(ks[10], (C,), jnp.float32, 0.5, 1.5))

    out = basic_block_forward(x, w1, w2, bn1, bn2)
    out = jax.block_until_ready(out)

    ref = basic_block_ref(x, w1, w2, bn1, bn2)
    assert out.shape == (N, C, H, W)
    assert jnp.allclose(out, ref, atol=1e-4, rtol=1e-4), "mismatch vs reference"

    print("KERNEL_OK")
</pallas_src>

<mosaic_0001>
module attributes {stable_mosaic.version = 11 : i64} {
  func.func @basic_block_kernel(%arg0: i32, %arg1: memref<1x16x16x128xf32, #tpu.memory_space<vmem>>, %arg2: memref<1152x128xf32, #tpu.memory_space<vmem>>, %arg3: memref<1152x128xf32, #tpu.memory_space<vmem>>, %arg4: memref<1x128xf32, #tpu.memory_space<vmem>>, %arg5: memref<1x128xf32, #tpu.memory_space<vmem>>, %arg6: memref<1x16x16x128xf32, #tpu.memory_space<vmem>>, %arg7: memref<18x18x128xf32, #tpu.memory_space<vmem>>, %arg8: memref<18x18x128xf32, #tpu.memory_space<vmem>>, %arg9: memref<8x16x1152xf32, #tpu.memory_space<vmem>>) attributes {dimension_semantics = [#tpu.dimension_semantics<parallel>], iteration_bounds = array<i64: 2>, scalar_prefetch = 0 : i64, scratch_operands = 3 : i64, tpu.core_type = #tpu.core_type<tc>, window_params = [{transform_indices = @transform_0, window_bounds = array<i64: 1, 16, 16, 128>}, {pipeline_mode = #tpu.pipeline_mode<synchronous>, transform_indices = @transform_1, window_bounds = array<i64: 1152, 128>}, {pipeline_mode = #tpu.pipeline_mode<synchronous>, transform_indices = @transform_2, window_bounds = array<i64: 1152, 128>}, {pipeline_mode = #tpu.pipeline_mode<synchronous>, transform_indices = @transform_3, window_bounds = array<i64: 1, 128>}, {pipeline_mode = #tpu.pipeline_mode<synchronous>, transform_indices = @transform_4, window_bounds = array<i64: 1, 128>}, {transform_indices = @transform_5, window_bounds = array<i64: 1, 16, 16, 128>}]} {
    %cst = arith.constant 0.000000e+00 : f32
    %0 = vector.broadcast %cst : f32 to vector<1x18x128xf32>
    %cst_0 = arith.constant 0.000000e+00 : f32
    %1 = vector.broadcast %cst_0 : f32 to vector<16x1x128xf32>
    %c0 = arith.constant 0 : index
    %c0_1 = arith.constant 0 : index
    %c0_2 = arith.constant 0 : index
    %2 = vector.load %arg7[%c0, %c0_1, %c0_2] : memref<18x18x128xf32, #tpu.memory_space<vmem>>, vector<1x18x128xf32>
    tpu.vector_store %arg7[%c0, %c0_1, %c0_2], %0 {strides = array<i32>} : memref<18x18x128xf32, #tpu.memory_space<vmem>>, vector<1x18x128xf32>,
    %c17 = arith.constant 17 : index
    %c0_3 = arith.constant 0 : index
    %c0_4 = arith.constant 0 : index
    %3 = vector.load %arg7[%c17, %c0_3, %c0_4] : memref<18x18x128xf32, #tpu.memory_space<vmem>>, vector<1x18x128xf32>
    tpu.vector_store %arg7[%c17, %c0_3, %c0_4], %0 {strides = array<i32>} : memref<18x18x128xf32, #tpu.memory_space<vmem>>, vector<1x18x128xf32>,
    %c1 = arith.constant 1 : index
    %c0_5 = arith.constant 0 : index
    %c0_6 = arith.constant 0 : index
    %4 = vector.load %arg7[%c1, %c0_5, %c0_6] : memref<18x18x128xf32, #tpu.memory_space<vmem>>, vector<16x1x128xf32>
    tpu.vector_store %arg7[%c1, %c0_5, %c0_6], %1 {strides = array<i32>} : memref<18x18x128xf32, #tpu.memory_space<vmem>>, vector<16x1x128xf32>,
    %c1_7 = arith.constant 1 : index
    %c17_8 = arith.constant 17 : index
    %c0_9 = arith.constant 0 : index
    %5 = vector.load %arg7[%c1_7, %c17_8, %c0_9] : memref<18x18x128xf32, #tpu.memory_space<vmem>>, vector<16x1x128xf32>
    tpu.vector_store %arg7[%c1_7, %c17_8, %c0_9], %1 {strides = array<i32>} : memref<18x18x128xf32, #tpu.memory_space<vmem>>, vector<16x1x128xf32>,
    %c0_10 = arith.constant 0 : index
    %c0_11 = arith.constant 0 : index
    %c0_12 = arith.constant 0 : index
    %6 = vector.load %arg8[%c0_10, %c0_11, %c0_12] : memref<18x18x128xf32, #tpu.memory_space<vmem>>, vector<1x18x128xf32>
    tpu.vector_store %arg8[%c0_10, %c0_11, %c0_12], %0 {strides = array<i32>} : memref<18x18x128xf32, #tpu.memory_space<vmem>>, vector<1x18x128xf32>,
    %c17_13 = arith.constant 17 : index
    %c0_14 = arith.constant 0 : index
    %c0_15 = arith.constant 0 : index
    %7 = vector.load %arg8[%c17_13, %c0_14, %c0_15] : memref<18x18x128xf32, #tpu.memory_space<vmem>>, vector<1x18x128xf32>
    tpu.vector_store %arg8[%c17_13, %c0_14, %c0_15], %0 {strides = array<i32>} : memref<18x18x128xf32, #tpu.memory_space<vmem>>, vector<1x18x128xf32>,
    %c1_16 = arith.constant 1 : index
    %c0_17 = arith.constant 0 : index
    %c0_18 = arith.constant 0 : index
    %8 = vector.load %arg8[%c1_16, %c0_17, %c0_18] : memref<18x18x128xf32, #tpu.memory_space<vmem>>, vector<16x1x128xf32>
    tpu.vector_store %arg8[%c1_16, %c0_17, %c0_18], %1 {strides = array<i32>} : memref<18x18x128xf32, #tpu.memory_space<vmem>>, vector<16x1x128xf32>,
    %c1_19 = arith.constant 1 : index
    %c17_20 = arith.constant 17 : index
    %c0_21 = arith.constant 0 : index
    %9 = vector.load %arg8[%c1_19, %c17_20, %c0_21] : memref<18x18x128xf32, #tpu.memory_space<vmem>>, vector<16x1x128xf32>
    tpu.vector_store %arg8[%c1_19, %c17_20, %c0_21], %1 {strides = array<i32>} : memref<18x18x128xf32, #tpu.memory_space<vmem>>, vector<16x1x128xf32>,
    %c0_22 = arith.constant 0 : index
    %c0_23 = arith.constant 0 : index
    %c0_24 = arith.constant 0 : index
    %c0_25 = arith.constant 0 : index
    %10 = vector.load %arg1[%c0_22, %c0_23, %c0_24, %c0_25] : memref<1x16x16x128xf32, #tpu.memory_space<vmem>>, vector<1x16x16x128xf32>
    %11 = vector.shape_cast %10 : vector<1x16x16x128xf32> to vector<16x16x128xf32>
    %c1_26 = arith.constant 1 : index
    %c1_27 = arith.constant 1 : index
    %c0_28 = arith.constant 0 : index
    %12 = vector.load %arg7[%c1_26, %c1_27, %c0_28] : memref<18x18x128xf32, #tpu.memory_space<vmem>>, vector<16x16x128xf32>
    tpu.vector_store %arg7[%c1_26, %c1_27, %c0_28], %11 {strides = array<i32>} : memref<18x18x128xf32, #tpu.memory_space<vmem>>, vector<16x16x128xf32>,
    %c0_29 = arith.constant 0 : index
    %c0_30 = arith.constant 0 : index
    %13 = vector.load %arg4[%c0_29, %c0_30] : memref<1x128xf32, #tpu.memory_space<vmem>>, vector<1x128xf32>
    %c0_31 = arith.constant 0 : index
    %c0_32 = arith.constant 0 : index
    %14 = vector.load %arg5[%c0_31, %c0_32] : memref<1x128xf32, #tpu.memory_space<vmem>>, vector<1x128xf32>
    %c0_33 = arith.constant 0 : index
    %c0_34 = arith.constant 0 : index
    %c0_35 = arith.constant 0 : index
    %15 = vector.load %arg7[%c0_33, %c0_34, %c0_35] : memref<18x18x128xf32, #tpu.memory_space<vmem>>, vector<8x16x128xf32>
    %c0_36 = arith.constant 0 : index
    %c0_37 = arith.constant 0 : index
    %c0_38 = arith.constant 0 : index
    %16 = vector.load %arg9[%c0_36, %c0_37, %c0_38] : memref<8x16x1152xf32, #tpu.memory_space<vmem>>, vector<8x16x128xf32>
    tpu.vector_store %arg9[%c0_36, %c0_37, %c0_38], %15 {strides = array<i32>} : memref<8x16x1152xf32, #tpu.memory_space<vmem>>, vector<8x16x128xf32>,
    %c0_39 = arith.constant 0 : index
    %c1_40 = arith.constant 1 : index
    %c0_41 = arith.constant 0 : index
    %17 = vector.load %arg7[%c0_39, %c1_40, %c0_41] : memref<18x18x128xf32, #tpu.memory_space<vmem>>, vector<8x16x128xf32>
    %c0_42 = arith.constant 0 : index
    %c0_43 = arith.constant 0 : index
    %c128 = arith.constant 128 : index
    %18 = vector.load %arg9[%c0_42, %c0_43, %c128] : memref<8x16x1152xf32, #tpu.memory_space<vmem>>, vector<8x16x128xf32>
    tpu.vector_store %arg9[%c0_42, %c0_43, %c128], %17 {strides = array<i32>} : memref<8x16x1152xf32, #tpu.memory_space<vmem>>, vector<8x16x128xf32>,
    %c0_44 = arith.constant 0 : index
    %c2 = arith.constant 2 : index
    %c0_45 = arith.constant 0 : index
    %19 = vector.load %arg7[%c0_44, %c2, %c0_45] : memref<18x18x128xf32, #tpu.memory_space<vmem>>, vector<8x16x128xf32>
    %c0_46 = arith.constant 0 : index
    %c0_47 = arith.constant 0 : index
    %c256 = arith.constant 256 : index
    %20 = vector.load %arg9[%c0_46, %c0_47, %c256] : memref<8x16x1152xf32, #tpu.memory_space<vmem>>, vector<8x16x128xf32>
    tpu.vector_store %arg9[%c0_46, %c0_47, %c256], %19 {strides = array<i32>} : memref<8x16x1152xf32, #tpu.memory_space<vmem>>, vector<8x16x128xf32>,
    %c1_48 = arith.constant 1 : index
    %c0_49 = arith.constant 0 : index
    %c0_50 = arith.constant 0 : index
    %21 = vector.load %arg7[%c1_48, %c0_49, %c0_50] : memref<18x18x128xf32, #tpu.memory_space<vmem>>, vector<8x16x128xf32>
    %c0_51 = arith.constant 0 : index
    %c0_52 = arith.constant 0 : index
    %c384 = arith.constant 384 : index
    %22 = vector.load %arg9[%c0_51, %c0_52, %c384] : memref<8x16x1152xf32, #tpu.memory_space<vmem>>, vector<8x16x128xf32>
    tpu.vector_store %arg9[%c0_51, %c0_52, %c384], %21 {strides = array<i32>} : memref<8x16x1152xf32, #tpu.memory_space<vmem>>, vector<8x16x128xf32>,
    %c1_53 = arith.constant 1 : index
    %c1_54 = arith.constant 1 : index
    %c0_55 = arith.constant 0 : index
    %23 = vector.load %arg7[%c1_53, %c1_54, %c0_55] : memref<18x18x128xf32, #tpu.memory_space<vmem>>, vector<8x16x128xf32>
    %c0_56 = arith.constant 0 : index
    %c0_57 = arith.constant 0 : index
    %c512 = arith.constant 512 : index
    %24 = vector.load %arg9[%c0_56, %c0_57, %c512] : memref<8x16x1152xf32, #tpu.memory_space<vmem>>, vector<8x16x128xf32>
    tpu.vector_store %arg9[%c0_56, %c0_57, %c512], %23 {strides = array<i32>} : memref<8x16x1152xf32, #tpu.memory_space<vmem>>, vector<8x16x128xf32>,
    %c1_58 = arith.constant 1 : index
    %c2_59 = arith.constant 2 : index
    %c0_60 = arith.constant 0 : index
    %25 = vector.load %arg7[%c1_58, %c2_59, %c0_60] : memref<18x18x128xf32, #tpu.memory_space<vmem>>, vector<8x16x128xf32>
    %c0_61 = arith.constant 0 : index
    %c0_62 = arith.constant 0 : index
    %c640 = arith.constant 640 : index
    %26 = vector.load %arg9[%c0_61, %c0_62, %c640] : memref<8x16x1152xf32, #tpu.memory_space<vmem>>, vector<8x16x128xf32>
    tpu.vector_store %arg9[%c0_61, %c0_62, %c640], %25 {strides = array<i32>} : memref<8x16x1152xf32, #tpu.memory_space<vmem>>, vector<8x16x128xf32>,
    %c2_63 = arith.constant 2 : index
    %c0_64 = arith.constant 0 : index
    %c0_65 = arith.constant 0 : index
    %27 = vector.load %arg7[%c2_63, %c0_64, %c0_65] : memref<18x18x128xf32, #tpu.memory_space<vmem>>, vector<8x16x128xf32>
    %c0_66 = arith.constant 0 : index
    %c0_67 = arith.constant 0 : index
    %c768 = arith.constant 768 : index
    %28 = vector.load %arg9[%c0_66, %c0_67, %c768] : memref<8x16x1152xf32, #tpu.memory_space<vmem>>, vector<8x16x128xf32>
    tpu.vector_store %arg9[%c0_66, %c0_67, %c768], %27 {strides = array<i32>} : memref<8x16x1152xf32, #tpu.memory_space<vmem>>, vector<8x16x128xf32>,
    %c2_68 = arith.constant 2 : index
    %c1_69 = arith.constant 1 : index
    %c0_70 = arith.constant 0 : index
    %29 = vector.load %arg7[%c2_68, %c1_69, %c0_70] : memref<18x18x128xf32, #tpu.memory_space<vmem>>, vector<8x16x128xf32>
    %c0_71 = arith.constant 0 : index
    %c0_72 = arith.constant 0 : index
    %c896 = arith.constant 896 : index
    %30 = vector.load %arg9[%c0_71, %c0_72, %c896] : memref<8x16x1152xf32, #tpu.memory_space<vmem>>, vector<8x16x128xf32>
    tpu.vector_store %arg9[%c0_71, %c0_72, %c896], %29 {strides = array<i32>} : memref<8x16x1152xf32, #tpu.memory_space<vmem>>, vector<8x16x128xf32>,
    %c2_73 = arith.constant 2 : index
    %c2_74 = arith.constant 2 : index
    %c0_75 = arith.constant 0 : index
    %31 = vector.load %arg7[%c2_73, %c2_74, %c0_75] : memref<18x18x128xf32, #tpu.memory_space<vmem>>, vector<8x16x128xf32>
    %c0_76 = arith.constant 0 : index
    %c0_77 = arith.constant 0 : index
    %c1024 = arith.constant 1024 : index
    %32 = vector.load %arg9[%c0_76, %c0_77, %c1024] : memref<8x16x1152xf32, #tpu.memory_space<vmem>>, vector<8x16x128xf32>
    tpu.vector_store %arg9[%c0_76, %c0_77, %c1024], %31 {strides = array<i32>} : memref<8x16x1152xf32, #tpu.memory_space<vmem>>, vector<8x16x128xf32>,
    %c0_78 = arith.constant 0 : index
    %c0_79 = arith.constant 0 : index
    %c0_80 = arith.constant 0 : index
    %33 = vector.load %arg9[%c0_78, %c0_79, %c0_80] : memref<8x16x1152xf32, #tpu.memory_space<vmem>>, vector<8x16x1152xf32>
    %34 = vector.shape_cast %33 : vector<8x16x1152xf32> to vector<128x1152xf32>
    %c0_81 = arith.constant 0 : index
    %c0_82 = arith.constant 0 : index
    %35 = vector.load %arg2[%c0_81, %c0_82] : memref<1152x128xf32, #tpu.memory_space<vmem>>, vector<1152x128xf32>
    %cst_83 = arith.constant dense<0.000000e+00> : vector<128x128xf32>
    %36 = tpu.matmul %34, %35, %cst_83 {dimension_numbers = #tpu.dot_dimension_numbers<[1], [0], [0], [1], [0, 0, 1, 1], [], []>} : vector<128x1152xf32>, vector<1152x128xf32>, vector<128x128xf32> -> vector<128x128xf32>
    %37 = vector.broadcast %13 : vector<1x128xf32> to vector<128x128xf32>
    %38 = arith.addf %36, %37 : vector<128x128xf32>
    %cst_84 = arith.constant 0.000000e+00 : f32
    %39 = vector.broadcast %cst_84 : f32 to vector<128x128xf32>
    %40 = arith.maximumf %38, %39 : vector<128x128xf32>
    %41 = vector.shape_cast %40 : vector<128x128xf32> to vector<8x16x128xf32>
    %c1_85 = arith.constant 1 : index
    %c1_86 = arith.constant 1 : index
    %c0_87 = arith.constant 0 : index
    %42 = vector.load %arg8[%c1_85, %c1_86, %c0_87] : memref<18x18x128xf32, #tpu.memory_space<vmem>>, vector<8x16x128xf32>
    tpu.vector_store %arg8[%c1_85, %c1_86, %c0_87], %41 {strides = array<i32>} : memref<18x18x128xf32, #tpu.memory_space<vmem>>, vector<8x16x128xf32>,
    %c8 = arith.constant 8 : index
    %c0_88 = arith.constant 0 : index
    %c0_89 = arith.constant 0 : index
    %43 = vector.load %arg7[%c8, %c0_88, %c0_89] : memref<18x18x128xf32, #tpu.memory_space<vmem>>, vector<8x16x128xf32>
    %c0_90 = arith.constant 0 : index
    %c0_91 = arith.constant 0 : index
    %c0_92 = arith.constant 0 : index
    %44 = vector.load %arg9[%c0_90, %c0_91, %c0_92] : memref<8x16x1152xf32, #tpu.memory_space<vmem>>, vector<8x16x128xf32>
    tpu.vector_store %arg9[%c0_90, %c0_91, %c0_92], %43 {strides = array<i32>} : memref<8x16x1152xf32, #tpu.memory_space<vmem>>, vector<8x16x128xf32>,
    %c8_93 = arith.constant 8 : index
    %c1_94 = arith.constant 1 : index
    %c0_95 = arith.constant 0 : index
    %45 = vector.load %arg7[%c8_93, %c1_94, %c0_95] : memref<18x18x128xf32, #tpu.memory_space<vmem>>, vector<8x16x128xf32>
    %c0_96 = arith.constant 0 : index
    %c0_97 = arith.constant 0 : index
    %c128_98 = arith.constant 128 : index
    %46 = vector.load %arg9[%c0_96, %c0_97, %c128_98] : memref<8x16x1152xf32, #tpu.memory_space<vmem>>, vector<8x16x128xf32>
    tpu.vector_store %arg9[%c0_96, %c0_97, %c128_98], %45 {strides = array<i32>} : memref<8x16x1152xf32, #tpu.memory_space<vmem>>, vector<8x16x128xf32>,
    %c8_99 = arith.constant 8 : index
    %c2_100 = arith.constant 2 : index
    %c0_101 = arith.constant 0 : index
    %47 = vector.load %arg7[%c8_99, %c2_100, %c0_101] : memref<18x18x128xf32, #tpu.memory_space<vmem>>, vector<8x16x128xf32>
    %c0_102 = arith.constant 0 : index
    %c0_103 = arith.constant 0 : index
    %c256_104 = arith.constant 256 : index
    %48 = vector.load %arg9[%c0_102, %c0_103, %c256_104] : memref<8x16x1152xf32, #tpu.memory_space<vmem>>, vector<8x16x128xf32>
    tpu.vector_store %arg9[%c0_102, %c0_103, %c256_104], %47 {strides = array<i32>} : memref<8x16x1152xf32, #tpu.memory_space<vmem>>, vector<8x16x128xf32>,
    %c9 = arith.constant 9 : index
    %c0_105 = arith.constant 0 : index
    %c0_106 = arith.constant 0 : index
    %49 = vector.load %arg7[%c9, %c0_105, %c0_106] : memref<18x18x128xf32, #tpu.memory_space<vmem>>, vector<8x16x128xf32>
    %c0_107 = arith.constant 0 : index
    %c0_108 = arith.constant 0 : index
    %c384_109 = arith.constant 384 : index
    %50 = vector.load %arg9[%c0_107, %c0_108, %c384_109] : memref<8x16x1152xf32, #tpu.memory_space<vmem>>, vector<8x16x128xf32>
    tpu.vector_store %arg9[%c0_107, %c0_108, %c384_109], %49 {strides = array<i32>} : memref<8x16x1152xf32, #tpu.memory_space<vmem>>, vector<8x16x128xf32>,
    %c9_110 = arith.constant 9 : index
    %c1_111 = arith.constant 1 : index
    %c0_112 = arith.constant 0 : index
    %51 = vector.load %arg7[%c9_110, %c1_111, %c0_112] : memref<18x18x128xf32, #tpu.memory_space<vmem>>, vector<8x16x128xf32>
    %c0_113 = arith.constant 0 : index
    %c0_114 = arith.constant 0 : index
    %c512_115 = arith.constant 512 : index
    %52 = vector.load %arg9[%c0_113, %c0_114, %c512_115] : memref<8x16x1152xf32, #tpu.memory_space<vmem>>, vector<8x16x128xf32>
    tpu.vector_store %arg9[%c0_113, %c0_114, %c512_115], %51 {strides = array<i32>} : memref<8x16x1152xf32, #tpu.memory_space<vmem>>, vector<8x16x128xf32>,
    %c9_116 = arith.constant 9 : index
    %c2_117 = arith.constant 2 : index
    %c0_118 = arith.constant 0 : index
    %53 = vector.load %arg7[%c9_116, %c2_117, %c0_118] : memref<18x18x128xf32, #tpu.memory_space<vmem>>, vector<8x16x128xf32>
    %c0_119 = arith.constant 0 : index
    %c0_120 = arith.constant 0 : index
    %c640_121 = arith.constant 640 : index
    %54 = vector.load %arg9[%c0_119, %c0_120, %c640_121] : memref<8x16x1152xf32, #tpu.memory_space<vmem>>, vector<8x16x128xf32>
    tpu.vector_store %arg9[%c0_119, %c0_120, %c640_121], %53 {strides = array<i32>} : memref<8x16x1152xf32, #tpu.memory_space<vmem>>, vector<8x16x128xf32>,
    %c10 = arith.constant 10 : index
    %c0_122 = arith.constant 0 : index
    %c0_123 = arith.constant 0 : index
    %55 = vector.load %arg7[%c10, %c0_122, %c0_123] : memref<18x18x128xf32, #tpu.memory_space<vmem>>, vector<8x16x128xf32>
    %c0_124 = arith.constant 0 : index
    %c0_125 = arith.constant 0 : index
    %c768_126 = arith.constant 768 : index
    %56 = vector.load %arg9[%c0_124, %c0_125, %c768_126] : memref<8x16x1152xf32, #tpu.memory_space<vmem>>, vector<8x16x128xf32>
    tpu.vector_store %arg9[%c0_124, %c0_125, %c768_126], %55 {strides = array<i32>} : memref<8x16x1152xf32, #tpu.memory_space<vmem>>, vector<8x16x128xf32>,
    %c10_127 = arith.constant 10 : index
    %c1_128 = arith.constant 1 : index
    %c0_129 = arith.constant 0 : index
    %57 = vector.load %arg7[%c10_127, %c1_128, %c0_129] : memref<18x18x128xf32, #tpu.memory_space<vmem>>, vector<8x16x128xf32>
    %c0_130 = arith.constant 0 : index
    %c0_131 = arith.constant 0 : index
    %c896_132 = arith.constant 896 : index
    %58 = vector.load %arg9[%c0_130, %c0_131, %c896_132] : memref<8x16x1152xf32, #tpu.memory_space<vmem>>, vector<8x16x128xf32>
    tpu.vector_store %arg9[%c0_130, %c0_131, %c896_132], %57 {strides = array<i32>} : memref<8x16x1152xf32, #tpu.memory_space<vmem>>, vector<8x16x128xf32>,
    %c10_133 = arith.constant 10 : index
    %c2_134 = arith.constant 2 : index
    %c0_135 = arith.constant 0 : index
    %59 = vector.load %arg7[%c10_133, %c2_134, %c0_135] : memref<18x18x128xf32, #tpu.memory_space<vmem>>, vector<8x16x128xf32>
    %c0_136 = arith.constant 0 : index
    %c0_137 = arith.constant 0 : index
    %c1024_138 = arith.constant 1024 : index
    %60 = vector.load %arg9[%c0_136, %c0_137, %c1024_138] : memref<8x16x1152xf32, #tpu.memory_space<vmem>>, vector<8x16x128xf32>
    tpu.vector_store %arg9[%c0_136, %c0_137, %c1024_138], %59 {strides = array<i32>} : memref<8x16x1152xf32, #tpu.memory_space<vmem>>, vector<8x16x128xf32>,
    %c0_139 = arith.constant 0 : index
    %c0_140 = arith.constant 0 : index
    %c0_141 = arith.constant 0 : index
    %61 = vector.load %arg9[%c0_139, %c0_140, %c0_141] : memref<8x16x1152xf32, #tpu.memory_space<vmem>>, vector<8x16x1152xf32>
    %62 = vector.shape_cast %61 : vector<8x16x1152xf32> to vector<128x1152xf32>
    %c0_142 = arith.constant 0 : index
    %c0_143 = arith.constant 0 : index
    %63 = vector.load %arg2[%c0_142, %c0_143] : memref<1152x128xf32, #tpu.memory_space<vmem>>, vector<1152x128xf32>
    %cst_144 = arith.constant dense<0.000000e+00> : vector<128x128xf32>
    %64 = tpu.matmul %62, %63, %cst_144 {dimension_numbers = #tpu.dot_dimension_numbers<[1], [0], [0], [1], [0, 0, 1, 1], [], []>} : vector<128x1152xf32>, vector<1152x128xf32>, vector<128x128xf32> -> vector<128x128xf32>
    %65 = vector.broadcast %13 : vector<1x128xf32> to vector<128x128xf32>
    %66 = arith.addf %64, %65 : vector<128x128xf32>
    %cst_145 = arith.constant 0.000000e+00 : f32
    %67 = vector.broadcast %cst_145 : f32 to vector<128x128xf32>
    %68 = arith.maximumf %66, %67 : vector<128x128xf32>
    %69 = vector.shape_cast %68 : vector<128x128xf32> to vector<8x16x128xf32>
    %c9_146 = arith.constant 9 : index
    %c1_147 = arith.constant 1 : index
    %c0_148 = arith.constant 0 : index
    %70 = vector.load %arg8[%c9_146, %c1_147, %c0_148] : memref<18x18x128xf32, #tpu.memory_space<vmem>>, vector<8x16x128xf32>
    tpu.vector_store %arg8[%c9_146, %c1_147, %c0_148], %69 {strides = array<i32>} : memref<18x18x128xf32, #tpu.memory_space<vmem>>, vector<8x16x128xf32>,
    %c0_149 = arith.constant 0 : index
    %c0_150 = arith.constant 0 : index
    %c0_151 = arith.constant 0 : index
    %71 = vector.load %arg8[%c0_149, %c0_150, %c0_151] : memref<18x18x128xf32, #tpu.memory_space<vmem>>, vector<8x16x128xf32>
    %c0_152 = arith.constant 0 : index
    %c0_153 = arith.constant 0 : index
    %c0_154 = arith.constant 0 : index
    %72 = vector.load %arg9[%c0_152, %c0_153, %c0_154] : memref<8x16x1152xf32, #tpu.memory_space<vmem>>, vector<8x16x128xf32>
    tpu.vector_store %arg9[%c0_152, %c0_153, %c0_154], %71 {strides = array<i32>} : memref<8x16x1152xf32, #tpu.memory_space<vmem>>, vector<8x16x128xf32>,
    %c0_155 = arith.constant 0 : index
    %c1_156 = arith.constant 1 : index
    %c0_157 = arith.constant 0 : index
    %73 = vector.load %arg8[%c0_155, %c1_156, %c0_157] : memref<18x18x128xf32, #tpu.memory_space<vmem>>, vector<8x16x128xf32>
    %c0_158 = arith.constant 0 : index
    %c0_159 = arith.constant 0 : index
    %c128_160 = arith.constant 128 : index
    %74 = vector.load %arg9[%c0_158, %c0_159, %c128_160] : memref<8x16x1152xf32, #tpu.memory_space<vmem>>, vector<8x16x128xf32>
    tpu.vector_store %arg9[%c0_158, %c0_159, %c128_160], %73 {strides = array<i32>} : memref<8x16x1152xf32, #tpu.memory_space<vmem>>, vector<8x16x128xf32>,
    %c0_161 = arith.constant 0 : index
    %c2_162 = arith.constant 2 : index
    %c0_163 = arith.constant 0 : index
    %75 = vector.load %arg8[%c0_161, %c2_162, %c0_163] : memref<18x18x128xf32, #tpu.memory_space<vmem>>, vector<8x16x128xf32>
    %c0_164 = arith.constant 0 : index
    %c0_165 = arith.constant 0 : index
    %c256_166 = arith.constant 256 : index
    %76 = vector.load %arg9[%c0_164, %c0_165, %c256_166] : memref<8x16x1152xf32, #tpu.memory_space<vmem>>, vector<8x16x128xf32>
    tpu.vector_store %arg9[%c0_164, %c0_165, %c256_166], %75 {strides = array<i32>} : memref<8x16x1152xf32, #tpu.memory_space<vmem>>, vector<8x16x128xf32>,
    %c1_167 = arith.constant 1 : index
    %c0_168 = arith.constant 0 : index
    %c0_169 = arith.constant 0 : index
    %77 = vector.load %arg8[%c1_167, %c0_168, %c0_169] : memref<18x18x128xf32, #tpu.memory_space<vmem>>, vector<8x16x128xf32>
    %c0_170 = arith.constant 0 : index
    %c0_171 = arith.constant 0 : index
    %c384_172 = arith.constant 384 : index
    %78 = vector.load %arg9[%c0_170, %c0_171, %c384_172] : memref<8x16x1152xf32, #tpu.memory_space<vmem>>, vector<8x16x128xf32>
    tpu.vector_store %arg9[%c0_170, %c0_171, %c384_172], %77 {strides = array<i32>} : memref<8x16x1152xf32, #tpu.memory_space<vmem>>, vector<8x16x128xf32>,
    %c1_173 = arith.constant 1 : index
    %c1_174 = arith.constant 1 : index
    %c0_175 = arith.constant 0 : index
    %79 = vector.load %arg8[%c1_173, %c1_174, %c0_175] : memref<18x18x128xf32, #tpu.memory_space<vmem>>, vector<8x16x128xf32>
    %c0_176 = arith.constant 0 : index
    %c0_177 = arith.constant 0 : index
    %c512_178 = arith.constant 512 : index
    %80 = vector.load %arg9[%c0_176, %c0_177, %c512_178] : memref<8x16x1152xf32, #tpu.memory_space<vmem>>, vector<8x16x128xf32>
    tpu.vector_store %arg9[%c0_176, %c0_177, %c512_178], %79 {strides = array<i32>} : memref<8x16x1152xf32, #tpu.memory_space<vmem>>, vector<8x16x128xf32>,
    %c1_179 = arith.constant 1 : index
    %c2_180 = arith.constant 2 : index
    %c0_181 = arith.constant 0 : index
    %81 = vector.load %arg8[%c1_179, %c2_180, %c0_181] : memref<18x18x128xf32, #tpu.memory_space<vmem>>, vector<8x16x128xf32>
    %c0_182 = arith.constant 0 : index
    %c0_183 = arith.constant 0 : index
    %c640_184 = arith.constant 640 : index
    %82 = vector.load %arg9[%c0_182, %c0_183, %c640_184] : memref<8x16x1152xf32, #tpu.memory_space<vmem>>, vector<8x16x128xf32>
    tpu.vector_store %arg9[%c0_182, %c0_183, %c640_184], %81 {strides = array<i32>} : memref<8x16x1152xf32, #tpu.memory_space<vmem>>, vector<8x16x128xf32>,
    %c2_185 = arith.constant 2 : index
    %c0_186 = arith.constant 0 : index
    %c0_187 = arith.constant 0 : index
    %83 = vector.load %arg8[%c2_185, %c0_186, %c0_187] : memref<18x18x128xf32, #tpu.memory_space<vmem>>, vector<8x16x128xf32>
    %c0_188 = arith.constant 0 : index
    %c0_189 = arith.constant 0 : index
    %c768_190 = arith.constant 768 : index
    %84 = vector.load %arg9[%c0_188, %c0_189, %c768_190] : memref<8x16x1152xf32, #tpu.memory_space<vmem>>, vector<8x16x128xf32>
    tpu.vector_store %arg9[%c0_188, %c0_189, %c768_190], %83 {strides = array<i32>} : memref<8x16x1152xf32, #tpu.memory_space<vmem>>, vector<8x16x128xf32>,
    %c2_191 = arith.constant 2 : index
    %c1_192 = arith.constant 1 : index
    %c0_193 = arith.constant 0 : index
    %85 = vector.load %arg8[%c2_191, %c1_192, %c0_193] : memref<18x18x128xf32, #tpu.memory_space<vmem>>, vector<8x16x128xf32>
    %c0_194 = arith.constant 0 : index
    %c0_195 = arith.constant 0 : index
    %c896_196 = arith.constant 896 : index
    %86 = vector.load %arg9[%c0_194, %c0_195, %c896_196] : memref<8x16x1152xf32, #tpu.memory_space<vmem>>, vector<8x16x128xf32>
    tpu.vector_store %arg9[%c0_194, %c0_195, %c896_196], %85 {strides = array<i32>} : memref<8x16x1152xf32, #tpu.memory_space<vmem>>, vector<8x16x128xf32>,
    %c2_197 = arith.constant 2 : index
    %c2_198 = arith.constant 2 : index
    %c0_199 = arith.constant 0 : index
    %87 = vector.load %arg8[%c2_197, %c2_198, %c0_199] : memref<18x18x128xf32, #tpu.memory_space<vmem>>, vector<8x16x128xf32>
    %c0_200 = arith.constant 0 : index
    %c0_201 = arith.constant 0 : index
    %c1024_202 = arith.constant 1024 : index
    %88 = vector.load %arg9[%c0_200, %c0_201, %c1024_202] : memref<8x16x1152xf32, #tpu.memory_space<vmem>>, vector<8x16x128xf32>
    tpu.vector_store %arg9[%c0_200, %c0_201, %c1024_202], %87 {strides = array<i32>} : memref<8x16x1152xf32, #tpu.memory_space<vmem>>, vector<8x16x128xf32>,
    %c0_203 = arith.constant 0 : index
    %c0_204 = arith.constant 0 : index
    %c0_205 = arith.constant 0 : index
    %89 = vector.load %arg9[%c0_203, %c0_204, %c0_205] : memref<8x16x1152xf32, #tpu.memory_space<vmem>>, vector<8x16x1152xf32>
    %90 = vector.shape_cast %89 : vector<8x16x1152xf32> to vector<128x1152xf32>
    %c0_206 = arith.constant 0 : index
    %c0_207 = arith.constant 0 : index
    %91 = vector.load %arg3[%c0_206, %c0_207] : memref<1152x128xf32, #tpu.memory_space<vmem>>, vector<1152x128xf32>
    %cst_208 = arith.constant dense<0.000000e+00> : vector<128x128xf32>
    %92 = tpu.matmul %90, %91, %cst_208 {dimension_numbers = #tpu.dot_dimension_numbers<[1], [0], [0], [1], [0, 0, 1, 1], [], []>} : vector<128x1152xf32>, vector<1152x128xf32>, vector<128x128xf32> -> vector<128x128xf32>
    %93 = vector.broadcast %14 : vector<1x128xf32> to vector<128x128xf32>
    %94 = arith.addf %92, %93 : vector<128x128xf32>
    %c0_209 = arith.constant 0 : index
    %c0_210 = arith.constant 0 : index
    %c0_211 = arith.constant 0 : index
    %c0_212 = arith.constant 0 : index
    %95 = vector.load %arg1[%c0_209, %c0_210, %c0_211, %c0_212] : memref<1x16x16x128xf32, #tpu.memory_space<vmem>>, vector<1x8x16x128xf32>
    %96 = vector.shape_cast %95 : vector<1x8x16x128xf32> to vector<8x16x128xf32>
    %97 = vector.shape_cast %96 : vector<8x16x128xf32> to vector<128x128xf32>
    %98 = arith.addf %94, %97 : vector<128x128xf32>
    %cst_213 = arith.constant 0.000000e+00 : f32
    %99 = vector.broadcast %cst_213 : f32 to vector<128x128xf32>
    %100 = arith.maximumf %98, %99 : vector<128x128xf32>
    %101 = vector.shape_cast %100 : vector<128x128xf32> to vector<8x16x128xf32>
    %c0_214 = arith.constant 0 : index
    %c0_215 = arith.constant 0 : index
    %c0_216 = arith.constant 0 : index
    %c0_217 = arith.constant 0 : index
    %102 = vector.load %arg6[%c0_214, %c0_215, %c0_216, %c0_217] : memref<1x16x16x128xf32, #tpu.memory_space<vmem>>, vector<1x8x16x128xf32>
    %103 = vector.shape_cast %102 : vector<1x8x16x128xf32> to vector<8x16x128xf32>
    %104 = vector.shape_cast %101 : vector<8x16x128xf32> to vector<1x8x16x128xf32>
    tpu.vector_store %arg6[%c0_214, %c0_215, %c0_216, %c0_217], %104 {strides = array<i32>} : memref<1x16x16x128xf32, #tpu.memory_space<vmem>>, vector<1x8x16x128xf32>,
    %c8_218 = arith.constant 8 : index
    %c0_219 = arith.constant 0 : index
    %c0_220 = arith.constant 0 : index
    %105 = vector.load %arg8[%c8_218, %c0_219, %c0_220] : memref<18x18x128xf32, #tpu.memory_space<vmem>>, vector<8x16x128xf32>
    %c0_221 = arith.constant 0 : index
    %c0_222 = arith.constant 0 : index
    %c0_223 = arith.constant 0 : index
    %106 = vector.load %arg9[%c0_221, %c0_222, %c0_223] : memref<8x16x1152xf32, #tpu.memory_space<vmem>>, vector<8x16x128xf32>
    tpu.vector_store %arg9[%c0_221, %c0_222, %c0_223], %105 {strides = array<i32>} : memref<8x16x1152xf32, #tpu.memory_space<vmem>>, vector<8x16x128xf32>,
    %c8_224 = arith.constant 8 : index
    %c1_225 = arith.constant 1 : index
    %c0_226 = arith.constant 0 : index
    %107 = vector.load %arg8[%c8_224, %c1_225, %c0_226] : memref<18x18x128xf32, #tpu.memory_space<vmem>>, vector<8x16x128xf32>
    %c0_227 = arith.constant 0 : index
    %c0_228 = arith.constant 0 : index
    %c128_229 = arith.constant 128 : index
    %108 = vector.load %arg9[%c0_227, %c0_228, %c128_229] : memref<8x16x1152xf32, #tpu.memory_space<vmem>>, vector<8x16x128xf32>
    tpu.vector_store %arg9[%c0_227, %c0_228, %c128_229], %107 {strides = array<i32>} : memref<8x16x1152xf32, #tpu.memory_space<vmem>>, vector<8x16x128xf32>,
    %c8_230 = arith.constant 8 : index
    %c2_231 = arith.constant 2 : index
    %c0_232 = arith.constant 0 : index
    %109 = vector.load %arg8[%c8_230, %c2_231, %c0_232] : memref<18x18x128xf32, #tpu.memory_space<vmem>>, vector<8x16x128xf32>
    %c0_233 = arith.constant 0 : index
    %c0_234 = arith.constant 0 : index
    %c256_235 = arith.constant 256 : index
    %110 = vector.load %arg9[%c0_233, %c0_234, %c256_235] : memref<8x16x1152xf32, #tpu.memory_space<vmem>>, vector<8x16x128xf32>
    tpu.vector_store %arg9[%c0_233, %c0_234, %c256_235], %109 {strides = array<i32>} : memref<8x16x1152xf32, #tpu.memory_space<vmem>>, vector<8x16x128xf32>,
    %c9_236 = arith.constant 9 : index
    %c0_237 = arith.constant 0 : index
    %c0_238 = arith.constant 0 : index
    %111 = vector.load %arg8[%c9_236, %c0_237, %c0_238] : memref<18x18x128xf32, #tpu.memory_space<vmem>>, vector<8x16x128xf32>
    %c0_239 = arith.constant 0 : index
    %c0_240 = arith.constant 0 : index
    %c384_241 = arith.constant 384 : index
    %112 = vector.load %arg9[%c0_239, %c0_240, %c384_241] : memref<8x16x1152xf32, #tpu.memory_space<vmem>>, vector<8x16x128xf32>
    tpu.vector_store %arg9[%c0_239, %c0_240, %c384_241], %111 {strides = array<i32>} : memref<8x16x1152xf32, #tpu.memory_space<vmem>>, vector<8x16x128xf32>,
    %c9_242 = arith.constant 9 : index
    %c1_243 = arith.constant 1 : index
    %c0_244 = arith.constant 0 : index
    %113 = vector.load %arg8[%c9_242, %c1_243, %c0_244] : memref<18x18x128xf32, #tpu.memory_space<vmem>>, vector<8x16x128xf32>
    %c0_245 = arith.constant 0 : index
    %c0_246 = arith.constant 0 : index
    %c512_247 = arith.constant 512 : index
    %114 = vector.load %arg9[%c0_245, %c0_246, %c512_247] : memref<8x16x1152xf32, #tpu.memory_space<vmem>>, vector<8x16x128xf32>
    tpu.vector_store %arg9[%c0_245, %c0_246, %c512_247], %113 {strides = array<i32>} : memref<8x16x1152xf32, #tpu.memory_space<vmem>>, vector<8x16x128xf32>,
    %c9_248 = arith.constant 9 : index
    %c2_249 = arith.constant 2 : index
    %c0_250 = arith.constant 0 : index
    %115 = vector.load %arg8[%c9_248, %c2_249, %c0_250] : memref<18x18x128xf32, #tpu.memory_space<vmem>>, vector<8x16x128xf32>
    %c0_251 = arith.constant 0 : index
    %c0_252 = arith.constant 0 : index
    %c640_253 = arith.constant 640 : index
    %116 = vector.load %arg9[%c0_251, %c0_252, %c640_253] : memref<8x16x1152xf32, #tpu.memory_space<vmem>>, vector<8x16x128xf32>
    tpu.vector_store %arg9[%c0_251, %c0_252, %c640_253], %115 {strides = array<i32>} : memref<8x16x1152xf32, #tpu.memory_space<vmem>>, vector<8x16x128xf32>,
    %c10_254 = arith.constant 10 : index
    %c0_255 = arith.constant 0 : index
    %c0_256 = arith.constant 0 : index
    %117 = vector.load %arg8[%c10_254, %c0_255, %c0_256] : memref<18x18x128xf32, #tpu.memory_space<vmem>>, vector<8x16x128xf32>
    %c0_257 = arith.constant 0 : index
    %c0_258 = arith.constant 0 : index
    %c768_259 = arith.constant 768 : index
    %118 = vector.load %arg9[%c0_257, %c0_258, %c768_259] : memref<8x16x1152xf32, #tpu.memory_space<vmem>>, vector<8x16x128xf32>
    tpu.vector_store %arg9[%c0_257, %c0_258, %c768_259], %117 {strides = array<i32>} : memref<8x16x1152xf32, #tpu.memory_space<vmem>>, vector<8x16x128xf32>,
    %c10_260 = arith.constant 10 : index
    %c1_261 = arith.constant 1 : index
    %c0_262 = arith.constant 0 : index
    %119 = vector.load %arg8[%c10_260, %c1_261, %c0_262] : memref<18x18x128xf32, #tpu.memory_space<vmem>>, vector<8x16x128xf32>
    %c0_263 = arith.constant 0 : index
    %c0_264 = arith.constant 0 : index
    %c896_265 = arith.constant 896 : index
    %120 = vector.load %arg9[%c0_263, %c0_264, %c896_265] : memref<8x16x1152xf32, #tpu.memory_space<vmem>>, vector<8x16x128xf32>
    tpu.vector_store %arg9[%c0_263, %c0_264, %c896_265], %119 {strides = array<i32>} : memref<8x16x1152xf32, #tpu.memory_space<vmem>>, vector<8x16x128xf32>,
    %c10_266 = arith.constant 10 : index
    %c2_267 = arith.constant 2 : index
    %c0_268 = arith.constant 0 : index
    %121 = vector.load %arg8[%c10_266, %c2_267, %c0_268] : memref<18x18x128xf32, #tpu.memory_space<vmem>>, vector<8x16x128xf32>
    %c0_269 = arith.constant 0 : index
    %c0_270 = arith.constant 0 : index
    %c1024_271 = arith.constant 1024 : index
    %122 = vector.load %arg9[%c0_269, %c0_270, %c1024_271] : memref<8x16x1152xf32, #tpu.memory_space<vmem>>, vector<8x16x128xf32>
    tpu.vector_store %arg9[%c0_269, %c0_270, %c1024_271], %121 {strides = array<i32>} : memref<8x16x1152xf32, #tpu.memory_space<vmem>>, vector<8x16x128xf32>,
    %c0_272 = arith.constant 0 : index
    %c0_273 = arith.constant 0 : index
    %c0_274 = arith.constant 0 : index
    %123 = vector.load %arg9[%c0_272, %c0_273, %c0_274] : memref<8x16x1152xf32, #tpu.memory_space<vmem>>, vector<8x16x1152xf32>
    %124 = vector.shape_cast %123 : vector<8x16x1152xf32> to vector<128x1152xf32>
    %c0_275 = arith.constant 0 : index
    %c0_276 = arith.constant 0 : index
    %125 = vector.load %arg3[%c0_275, %c0_276] : memref<1152x128xf32, #tpu.memory_space<vmem>>, vector<1152x128xf32>
    %cst_277 = arith.constant dense<0.000000e+00> : vector<128x128xf32>
    %126 = tpu.matmul %124, %125, %cst_277 {dimension_numbers = #tpu.dot_dimension_numbers<[1], [0], [0], [1], [0, 0, 1, 1], [], []>} : vector<128x1152xf32>, vector<1152x128xf32>, vector<128x128xf32> -> vector<128x128xf32>
    %127 = vector.broadcast %14 : vector<1x128xf32> to vector<128x128xf32>
    %128 = arith.addf %126, %127 : vector<128x128xf32>
    %c0_278 = arith.constant 0 : index
    %c8_279 = arith.constant 8 : index
    %c0_280 = arith.constant 0 : index
    %c0_281 = arith.constant 0 : index
    %129 = vector.load %arg1[%c0_278, %c8_279, %c0_280, %c0_281] : memref<1x16x16x128xf32, #tpu.memory_space<vmem>>, vector<1x8x16x128xf32>
    %130 = vector.shape_cast %129 : vector<1x8x16x128xf32> to vector<8x16x128xf32>
    %131 = vector.shape_cast %130 : vector<8x16x128xf32> to vector<128x128xf32>
    %132 = arith.addf %128, %131 : vector<128x128xf32>
    %cst_282 = arith.constant 0.000000e+00 : f32
    %133 = vector.broadcast %cst_282 : f32 to vector<128x128xf32>
    %134 = arith.maximumf %132, %133 : vector<128x128xf32>
    %135 = vector.shape_cast %134 : vector<128x128xf32> to vector<8x16x128xf32>
    %c0_283 = arith.constant 0 : index
    %c8_284 = arith.constant 8 : index
    %c0_285 = arith.constant 0 : index
    %c0_286 = arith.constant 0 : index
    %136 = vector.load %arg6[%c0_283, %c8_284, %c0_285, %c0_286] : memref<1x16x16x128xf32, #tpu.memory_space<vmem>>, vector<1x8x16x128xf32>
    %137 = vector.shape_cast %136 : vector<1x8x16x128xf32> to vector<8x16x128xf32>
    %138 = vector.shape_cast %135 : vector<8x16x128xf32> to vector<1x8x16x128xf32>
    tpu.vector_store %arg6[%c0_283, %c8_284, %c0_285, %c0_286], %138 {strides = array<i32>} : memref<1x16x16x128xf32, #tpu.memory_space<vmem>>, vector<1x8x16x128xf32>,
    return
  }
  func.func @transform_0(%arg0: i32) -> (i32, i32, i32, i32) {
    %c0_i32 = arith.constant 0 : i32
    %c0_i32_0 = arith.constant 0 : i32
    %c0_i32_1 = arith.constant 0 : i32
    %c0_i32_2 = arith.constant 0 : i32
    return %arg0, %c0_i32, %c0_i32_0, %c0_i32_1 : i32, i32, i32, i32
  }
  func.func @transform_1(%arg0: i32) -> (i32, i32) {
    %c0_i32 = arith.constant 0 : i32
    %c0_i32_0 = arith.constant 0 : i32
    %c0_i32_1 = arith.constant 0 : i32
    return %c0_i32, %c0_i32_0 : i32, i32
  }
  func.func @transform_2(%arg0: i32) -> (i32, i32) {
    %c0_i32 = arith.constant 0 : i32
    %c0_i32_0 = arith.constant 0 : i32
    %c0_i32_1 = arith.constant 0 : i32
    return %c0_i32, %c0_i32_0 : i32, i32
  }
  func.func @transform_3(%arg0: i32) -> (i32, i32) {
    %c0_i32 = arith.constant 0 : i32
    %c0_i32_0 = arith.constant 0 : i32
    %c0_i32_1 = arith.constant 0 : i32
    return %c0_i32, %c0_i32_0 : i32, i32
  }
  func.func @transform_4(%arg0: i32) -> (i32, i32) {
    %c0_i32 = arith.constant 0 : i32
    %c0_i32_0 = arith.constant 0 : i32
    %c0_i32_1 = arith.constant 0 : i32
    return %c0_i32, %c0_i32_0 : i32, i32
  }
  func.func @transform_5(%arg0: i32) -> (i32, i32, i32, i32) {
    %c0_i32 = arith.constant 0 : i32
    %c0_i32_0 = arith.constant 0 : i32
    %c0_i32_1 = arith.constant 0 : i32
    %c0_i32_2 = arith.constant 0 : i32
    return %arg0, %c0_i32, %c0_i32_0, %c0_i32_1 : i32, i32, i32, i32
  }
}

</mosaic_0001>

<llo_original>
// kernel: tpu_custom_call.1
$region0: #{tpu_custom_call.1}
  #allocation0 [shape = 'u32[]', space=smem, size = 0x4, offset = 0x4, fixed_abs, tag = 'smem constant byte address 0x4 - core index']
  #allocation1 [shape = 'u32[144,128]{1,0:T(1,128)}', space=vmem, size = 0x12000, scoped, tag = 'internal scratch']
  #allocation2 [shape = 'f32[18,18,128]{2,1,0:T(8,128)}', space=vmem, size = 0x36000, scoped, tag = 'scratch operand']
  #allocation3 [shape = 'f32[18,18,128]{2,1,0:T(8,128)}', space=vmem, size = 0x36000, scoped, tag = 'scratch operand']
  #allocation4 [shape = 'f32[8,16,1152]{2,1,0:T(8,128)}', space=vmem, size = 0x90000, scoped, tag = 'scratch operand']
  %s0 = inlined_call_operand.hbm [shape: f32[2,16,16,128], index: 0, kind: input, shape index: {}]
  %s1 = inlined_call_operand.hbm [shape: f32[1152,128], index: 1, kind: input, shape index: {}]
  %s2 = inlined_call_operand.hbm [shape: f32[1152,128], index: 2, kind: input, shape index: {}]
  %s3 = inlined_call_operand.vmem [shape: f32[1,128], index: 3, kind: input, shape index: {}]
  %s4 = inlined_call_operand.vmem [shape: f32[1,128], index: 4, kind: input, shape index: {}]
  %s5 = inlined_call_operand.hbm [shape: f32[2,16,16,128], index: 5, kind: output, shape index: {}]
  %s6 = sld [smem:[#allocation0]]
  $region65: #{tpu_custom_call.1} parent=0
    _
  %s8 = ssub.s32 1, %s6
  %s9 = scalar_select 0, %s8, %s6
  $region1: #{tpu_custom_call.1} parent=0
    #allocation5 [shape = 'u8[262144]{0}', space=vmem, size = 0x40000, scoped, tag = 'input window, operand 0']
    #allocation6 [shape = 's32[2]{0}', space=sflag, size = 0x8, scoped, tag = 'scoped memory for tpu_custom_call.1']
    #allocation7 [shape = 's32[2]{0}', space=sflag, size = 0x8, scoped, tag = 'scoped memory for tpu_custom_call.1']
    #allocation8 [shape = 'u8[589824]{0}', space=vmem, size = 0x90000, scoped, tag = 'input window, operand 1, single buffered']
    #allocation9 [shape = 's32[1]{0}', space=sflag, size = 0x4, scoped, tag = 'scoped memory for tpu_custom_call.1']
    #allocation10 [shape = 'u8[589824]{0}', space=vmem, size = 0x90000, scoped, tag = 'input window, operand 2, single buffered']
    #allocation11 [shape = 'u8[262144]{0}', space=vmem, size = 0x40000, scoped, tag = 'output window, operand 0']
    %10 = vsyncpa [#allocation6], 0
    %s11 = scalar_lea.sflag [#allocation6], 1
    %12 = vsyncpa %s11, 0
    %13 = vsyncpa [#allocation9], 0
    %14 = vsyncpa [#allocation7], 0
    %s15 = scalar_lea.sflag [#allocation7], 1
    %16 = vsyncpa %s15, 0
    loop: start=0, step=1, limit=4
    $region2: #{tpu_custom_call.1} parent=1 // loop_pre_header
      _
    $region3: #{tpu_custom_call.1} parent=1 // loop_header
      %s18 = sphi 0, %s22
      %p19 = scmp.ge.s32.totalorder %s18, 4
      %s28 = sphi 0, %s30
      %s31 = sphi 0, %s28
      %s32 = sphi 0, %s31
      %s48 = sphi 0, %s32
      %s52 = sphi 0, %s52
      %s54 = sphi 0, %s52
      %s55 = sphi 0, %s54
      %s69 = sphi 0, %s55
      %s73 = sphi 0, %s73
      %s75 = sphi 0, %s73
      %s76 = sphi 0, %s75
      %s90 = sphi 0, %s76
      %s94 = sphi 0, %s94
      %s96 = sphi 0, %s94
      %s97 = sphi 0, %s96
      %s111 = sphi 0, %s97
      %s115 = sphi 0, %s115
      %s117 = sphi 0, %s115
      %s118 = sphi 0, %s117
      %s132 = sphi 0, %s118
      %s138 = sphi 0, %s140
      %s141 = sphi 0, %s138
      %s142 = sphi 0, %s141
      %s158 = sphi 0, %s142
    $region4: #{tpu_custom_call.1} parent=1 // loop_header_branch
      %21 = sbr.rel (%p19) target = $region8
    $region5: #{tpu_custom_call.1} parent=1 // loop_body
      %s23 = ssub.s32 %s18, 1
      %s24 = ssub.s32 %s18, 2
      %s25 = sadd.s32 %s18, 1
      %s26 = ssub.s32 %s18, %s25
      %p27 = scmp.eq.s32.totalorder %s26, 0
      %s29 = sadd.s32 %s28, 1
      %s30 = scalar_select %p27, %s28, %s29
      %p33 = pneg %p27
      %p34 = scmp.eq.s32.totalorder %s18, 1
      %p35 = por %p33, %p34
      %p36 = scmp.ne.s32.totalorder %s28, %s31
      %p37 = scmp.eq.s32.totalorder %s18, 0
      %p38 = por %p36, %p37
      %p39 = scmp.ne.s32.totalorder %s28, %s31
      %p40 = scmp.eq.s32.totalorder %s23, 1
      %p41 = por %p39, %p40
      %p42 = scmp.ne.s32.totalorder %s31, %s32
      %p43 = scmp.eq.s32.totalorder %s23, 0
      %p44 = por %p42, %p43
      %p45 = scmp.ne.s32.totalorder %s31, %s32
      %p46 = scmp.eq.s32.totalorder %s24, 1
      %p47 = por %p45, %p46
      %p49 = scmp.ne.s32.totalorder %s32, %s48
      %p50 = scmp.eq.s32.totalorder %s24, 0
      %p51 = por %p49, %p50
      %s53 = sadd.s32 %s52, 1
      %p56 = scmp.eq.s32.totalorder %s18, 1
      %p57 = scmp.ne.s32.totalorder %s52, %s54
      %p58 = scmp.eq.s32.totalorder %s18, 0
      %p59 = por %p57, %p58
      %p60 = scmp.ne.s32.totalorder %s52, %s54
      %p61 = scmp.eq.s32.totalorder %s23, 1
      %p62 = por %p60, %p61
      %p63 = scmp.ne.s32.totalorder %s54, %s55
      %p64 = scmp.eq.s32.totalorder %s23, 0
      %p65 = por %p63, %p64
      %p66 = scmp.ne.s32.totalorder %s54, %s55
      %p67 = scmp.eq.s32.totalorder %s24, 1
      %p68 = por %p66, %p67
      %p70 = scmp.ne.s32.totalorder %s55, %s69
      %p71 = scmp.eq.s32.totalorder %s24, 0
      %p72 = por %p70, %p71
      %s74 = sadd.s32 %s73, 1
      %p77 = scmp.eq.s32.totalorder %s18, 1
      %p78 = scmp.ne.s32.totalorder %s73, %s75
      %p79 = scmp.eq.s32.totalorder %s18, 0
      %p80 = por %p78, %p79
      %p81 = scmp.ne.s32.totalorder %s73, %s75
      %p82 = scmp.eq.s32.totalorder %s23, 1
      %p83 = por %p81, %p82
      %p84 = scmp.ne.s32.totalorder %s75, %s76
      %p85 = scmp.eq.s32.totalorder %s23, 0
      %p86 = por %p84, %p85
      %p87 = scmp.ne.s32.totalorder %s75, %s76
      %p88 = scmp.eq.s32.totalorder %s24, 1
      %p89 = por %p87, %p88
      %p91 = scmp.ne.s32.totalorder %s76, %s90
      %p92 = scmp.eq.s32.totalorder %s24, 0
      %p93 = por %p91, %p92
      %s95 = sadd.s32 %s94, 1
      %p98 = scmp.eq.s32.totalorder %s18, 1
      %p99 = scmp.ne.s32.totalorder %s94, %s96
      %p100 = scmp.eq.s32.totalorder %s18, 0
      %p101 = por %p99, %p100
      %p102 = scmp.ne.s32.totalorder %s94, %s96
      %p103 = scmp.eq.s32.totalorder %s23, 1
      %p104 = por %p102, %p103
      %p105 = scmp.ne.s32.totalorder %s96, %s97
      %p106 = scmp.eq.s32.totalorder %s23, 0
      %p107 = por %p105, %p106
      %p108 = scmp.ne.s32.totalorder %s96, %s97
      %p109 = scmp.eq.s32.totalorder %s24, 1
      %p110 = por %p108, %p109
      %p112 = scmp.ne.s32.totalorder %s97, %s111
      %p113 = scmp.eq.s32.totalorder %s24, 0
      %p114 = por %p112, %p113
      %s116 = sadd.s32 %s115, 1
      %p119 = scmp.eq.s32.totalorder %s18, 1
      %p120 = scmp.ne.s32.totalorder %s115, %s117
      %p121 = scmp.eq.s32.totalorder %s18, 0
      %p122 = por %p120, %p121
      %p123 = scmp.ne.s32.totalorder %s115, %s117
      %p124 = scmp.eq.s32.totalorder %s23, 1
      %p125 = por %p123, %p124
      %p126 = scmp.ne.s32.totalorder %s117, %s118
      %p127 = scmp.eq.s32.totalorder %s23, 0
      %p128 = por %p126, %p127
      %p129 = scmp.ne.s32.totalorder %s117, %s118
      %p130 = scmp.eq.s32.totalorder %s24, 1
      %p131 = por %p129, %p130
      %p133 = scmp.ne.s32.totalorder %s118, %s132
      %p134 = scmp.eq.s32.totalorder %s24, 0
      %p135 = por %p133, %p134
      %s136 = ssub.s32 %s18, %s25
      %p137 = scmp.eq.s32.totalorder %s136, 0
      %s139 = sadd.s32 %s138, 1
      %s140 = scalar_select %p137, %s138, %s139
      %p143 = pneg %p137
      %p144 = scmp.eq.s32.totalorder %s18, 1
      %p145 = por %p143, %p144
      %p146 = scmp.ne.s32.totalorder %s138, %s141
      %p147 = scmp.eq.s32.totalorder %s18, 0
      %p148 = por %p146, %p147
      %p149 = scmp.ne.s32.totalorder %s138, %s141
      %p150 = scmp.eq.s32.totalorder %s23, 1
      %p151 = por %p149, %p150
      %p152 = scmp.ne.s32.totalorder %s141, %s142
      %p153 = scmp.eq.s32.totalorder %s23, 0
      %p154 = por %p152, %p153
      %p155 = scmp.ne.s32.totalorder %s141, %s142
      %p156 = scmp.eq.s32.totalorder %s24, 1
      %p157 = por %p155, %p156
      %p159 = scmp.ne.s32.totalorder %s142, %s158
      %p160 = scmp.eq.s32.totalorder %s24, 0
      %p161 = por %p159, %p160
      %p162 = scmp.le.s32.totalorder 1, %s18
      %p163 = scmp.lt.s32.totalorder %s18, 3
      %p164 = pnand %p162, %p163
      %p165 = pneg %p164
      // Predicated region
      $region9: #{tpu_custom_call.1} parent=5 // pred_check
        _
      $region10: #{tpu_custom_call.1} parent=5 // pred_check_branch
        %167 = sbr.rel (%p164) target = $region12
      $region11: #{tpu_custom_call.1} parent=5 // pred_region
        %s168 = ssub.s32 %s18, 1
        // Predicated region
        $region13: #{tpu_custom_call.1} parent=11 // pred_check
          %p169 = pneg %p65
        $region14: #{tpu_custom_call.1} parent=11 // pred_check_branch
          %171 = sbr.rel (%p169) target = $region16
        $region15: #{tpu_custom_call.1} parent=11 // pred_region
          %s173 = ssub.s32 18432, 18432
          %174 = vsyncadd [#allocation9], %s173
          %s175 = sshll.u32 [#allocation8], 4
          %s176 = int_to_ptr.vmem [resolvable:$true] %s175
          %181 = dma.hbm_to_vmem [thread:$0]  %s1, 18432, %s176, [#allocation9], 128, 128, 8
        $region16: #{tpu_custom_call.1} parent=11 // pred_fallthru
          _
        // Predicated region
        $region17: #{tpu_custom_call.1} parent=11 // pred_check
          %p182 = pneg %p86
        $region18: #{tpu_custom_call.1} parent=11 // pred_check_branch
          %184 = sbr.rel (%p182) target = $region20
        $region19: #{tpu_custom_call.1} parent=11 // pred_region
          %s186 = ssub.s32 18432, 18432
          %187 = vsyncadd [#allocation9], %s186
          %s188 = sshll.u32 [#allocation10], 4
          %s189 = int_to_ptr.vmem [resolvable:$true] %s188
          %194 = dma.hbm_to_vmem [thread:$0]  %s2, 18432, %s189, [#allocation9], 128, 128, 8
        $region20: #{tpu_custom_call.1} parent=11 // pred_fallthru
          _
        // Predicated region
        $region21: #{tpu_custom_call.1} parent=11 // pred_check
          %p195 = pneg %p107
        $region22: #{tpu_custom_call.1} parent=11 // pred_check_branch
          %197 = sbr.rel (%p195) target = $region24
        $region23: #{tpu_custom_call.1} parent=11 // pred_region
          _
        $region24: #{tpu_custom_call.1} parent=11 // pred_fallthru
          _
        // Predicated region
        $region25: #{tpu_custom_call.1} parent=11 // pred_check
          %p198 = pneg %p128
        $region26: #{tpu_custom_call.1} parent=11 // pred_check_branch
          %200 = sbr.rel (%p198) target = $region28
        $region27: #{tpu_custom_call.1} parent=11 // pred_region
          _
        $region28: #{tpu_custom_call.1} parent=11 // pred_fallthru
          _
      $region12: #{tpu_custom_call.1} parent=5 // pred_fallthru
        _
      %p201 = scmp.lt.s32.totalorder %s18, 2
      // Predicated region
      $region29: #{tpu_custom_call.1} parent=5 // pred_check
        %p202 = pneg %p201
      $region30: #{tpu_custom_call.1} parent=5 // pred_check_branch
        %204 = sbr.rel (%p202) target = $region32
      $region31: #{tpu_custom_call.1} parent=5 // pred_region
        // Predicated region
        $region33: #{tpu_custom_call.1} parent=31 // pred_check
          %p205 = pneg %p38
        $region34: #{tpu_custom_call.1} parent=31 // pred_check_branch
          %207 = sbr.rel (%p205) target = $region36
        $region35: #{tpu_custom_call.1} parent=31 // pred_region
          %s208 = sand.u32 %s28, 1
          %s209 = scalar_lea.sflag [#allocation6], %s208
          %s210 = sand.u32 %s28, 1
          %s211 = smul.addr %s210, 256
          %s212 = scalar_lea.vmem [#allocation5], %s211
          %s214 = ssub.s32 4096, 4096
          %215 = vsyncadd %s209, %s214
          %s216 = smul.addr %s18, 32
          %s217 = smul.addr %s216, 128
          %s218 = scalar_lea.hbm %s0, %s217
          %s219 = sshll.u32 %s212, 4
          %s220 = int_to_ptr.vmem [resolvable:$true] %s219
          %225 = dma.hbm_to_vmem [thread:$0]  %s218, 4096, %s220, %s209, 128, 128, 8
        $region36: #{tpu_custom_call.1} parent=31 // pred_fallthru
          _
      $region32: #{tpu_custom_call.1} parent=5 // pred_fallthru
        _
      %p226 = scmp.le.s32.totalorder 1, %s18
      %p227 = scmp.lt.s32.totalorder %s18, 3
      %p228 = pnand %p226, %p227
      %p229 = pneg %p228
      // Predicated region
      $region37: #{tpu_custom_call.1} parent=5 // pred_check
        _
      $region38: #{tpu_custom_call.1} parent=5 // pred_check_branch
        %231 = sbr.rel (%p228) target = $region40
      $region39: #{tpu_custom_call.1} parent=5 // pred_region
        %s232 = ssub.s32 %s18, 1
        %s233 = sand.u32 %s31, 1
        %s234 = scalar_lea.sflag [#allocation6], %s233
        %s235 = sand.u32 %s31, 1
        %s236 = smul.addr %s235, 256
        %s237 = scalar_lea.vmem [#allocation5], %s236
        // Predicated region
        $region41: #{tpu_custom_call.1} parent=39 // pred_check
          %p238 = pneg %p44
        $region42: #{tpu_custom_call.1} parent=39 // pred_check_branch
          %240 = sbr.rel (%p238) target = $region44
        $region43: #{tpu_custom_call.1} parent=39 // pred_region
          %241 = dma.done %s234, 4096
        $region44: #{tpu_custom_call.1} parent=39 // pred_fallthru
          _
        // Predicated region
        $region45: #{tpu_custom_call.1} parent=39 // pred_check
          %p242 = pneg %p65
        $region46: #{tpu_custom_call.1} parent=39 // pred_check_branch
          %244 = sbr.rel (%p242) target = $region48
        $region47: #{tpu_custom_call.1} parent=39 // pred_region
          %245 = dma.done [#allocation9], 18432
        $region48: #{tpu_custom_call.1} parent=39 // pred_fallthru
          _
        // Predicated region
        $region49: #{tpu_custom_call.1} parent=39 // pred_check
          %p246 = pneg %p86
        $region50: #{tpu_custom_call.1} parent=39 // pred_check_branch
          %248 = sbr.rel (%p246) target = $region52
        $region51: #{tpu_custom_call.1} parent=39 // pred_region
          %249 = dma.done [#allocation9], 18432
        $region52: #{tpu_custom_call.1} parent=39 // pred_fallthru
          _
        %s250 = sand.u32 %s31, 1
        %s251 = scalar_lea.sflag [#allocation6], %s250
        %s252 = sand.u32 %s31, 1
        %s253 = smul.addr %s252, 256
        %s254 = scalar_lea.vmem [#allocation5], %s253
        %p255 = pneg %p44
        %p256 = pneg %p41
        %p257 = pneg %p65
        %p258 = pneg %p62
        %p259 = pneg %p86
        %p260 = pneg %p83
        %p261 = pneg %p107
        %p262 = pneg %p104
        %p263 = pneg %p128
        %p264 = pneg %p125
        %p265 = pneg %p154
        %p266 = pneg %p151
        %s267 = sand.u32 %s141, 1
        %s268 = scalar_lea.sflag [#allocation7], %s267
        %s269 = sand.u32 %s141, 1
        %s270 = smul.addr %s269, 256
        %s271 = scalar_lea.vmem [#allocation11], %s270
        %272 = vst [vmem:[#allocation2] sm:$0xff] 0.0
        %273 = vst [vmem:[#allocation2 + $0x8] sm:$0xff] 0.0
        %274 = vst [vmem:[#allocation2 + $0x10] sm:$0x3] 0.0
        %s275 = scalar_lea.vmem [#allocation2], 408
        %276 = vst [vmem:[%s275] sm:$0xff] 0.0
        %277 = vst [vmem:[%s275 + $0x8] sm:$0xff] 0.0
        %278 = vst [vmem:[%s275 + $0x10] sm:$0x3] 0.0
        %s279 = scalar_lea.vmem [#allocation2], 24
        %280 = vst [vmem:[%s279] sm:$0x1] 0.0
        %281 = vst [vmem:[%s279 + $0x18] sm:$0x1] 0.0
        %282 = vst [vmem:[%s279 + $0x30] sm:$0x1] 0.0
        %283 = vst [vmem:[%s279 + $0x48] sm:$0x1] 0.0
        %284 = vst [vmem:[%s279 + $0x60] sm:$0x1] 0.0
        %285 = vst [vmem:[%s279 + $0x78] sm:$0x1] 0.0
        %286 = vst [vmem:[%s279 + $0x90] sm:$0x1] 0.0
        %287 = vst [vmem:[%s279 + $0xa8] sm:$0x1] 0.0
        %288 = vst [vmem:[%s279 + $0xc0] sm:$0x1] 0.0
        %289 = vst [vmem:[%s279 + $0xd8] sm:$0x1] 0.0
        %290 = vst [vmem:[%s279 + $0xf0] sm:$0x1] 0.0
        %291 = vst [vmem:[%s279 + $0x108] sm:$0x1] 0.0
        %292 = vst [vmem:[%s279 + $0x120] sm:$0x1] 0.0
        %293 = vst [vmem:[%s279 + $0x138] sm:$0x1] 0.0
        %294 = vst [vmem:[%s279 + $0x150] sm:$0x1] 0.0
        %295 = vst [vmem:[%s279 + $0x168] sm:$0x1] 0.0
        %296 = vst [vmem:[%s279 + $0x11] sm:$0x1] 0.0
        %297 = vst [vmem:[%s279 + $0x29] sm:$0x1] 0.0
        %298 = vst [vmem:[%s279 + $0x41] sm:$0x1] 0.0
        %299 = vst [vmem:[%s279 + $0x59] sm:$0x1] 0.0
        %300 = vst [vmem:[%s279 + $0x71] sm:$0x1] 0.0
        %301 = vst [vmem:[%s279 + $0x89] sm:$0x1] 0.0
        %302 = vst [vmem:[%s279 + $0xa1] sm:$0x1] 0.0
        %303 = vst [vmem:[%s279 + $0xb9] sm:$0x1] 0.0
        %304 = vst [vmem:[%s279 + $0xd1] sm:$0x1] 0.0
        %305 = vst [vmem:[%s279 + $0xe9] sm:$0x1] 0.0
        %306 = vst [vmem:[%s279 + $0x101] sm:$0x1] 0.0
        %307 = vst [vmem:[%s279 + $0x119] sm:$0x1] 0.0
        %308 = vst [vmem:[%s279 + $0x131] sm:$0x1] 0.0
        %309 = vst [vmem:[%s279 + $0x149] sm:$0x1] 0.0
        %310 = vst [vmem:[%s279 + $0x161] sm:$0x1] 0.0
        %311 = vst [vmem:[%s279 + $0x179] sm:$0x1] 0.0
        %312 = vst [vmem:[#allocation3] sm:$0xff] 0.0
        %313 = vst [vmem:[#allocation3 + $0x8] sm:$0xff] 0.0
        %314 = vst [vmem:[#allocation3 + $0x10] sm:$0x3] 0.0
        %s315 = scalar_lea.vmem [#allocation3], 408
        %316 = vst [vmem:[%s315] sm:$0xff] 0.0
        %317 = vst [vmem:[%s315 + $0x8] sm:$0xff] 0.0
        %318 = vst [vmem:[%s315 + $0x10] sm:$0x3] 0.0
        %s319 = scalar_lea.vmem [#allocation3], 24
        %320 = vst [vmem:[%s319] sm:$0x1] 0.0
        %321 = vst [vmem:[%s319 + $0x18] sm:$0x1] 0.0
        %322 = vst [vmem:[%s319 + $0x30] sm:$0x1] 0.0
        %323 = vst [vmem:[%s319 + $0x48] sm:$0x1] 0.0
        %324 = vst [vmem:[%s319 + $0x60] sm:$0x1] 0.0
        %325 = vst [vmem:[%s319 + $0x78] sm:$0x1] 0.0
        %326 = vst [vmem:[%s319 + $0x90] sm:$0x1] 0.0
        %327 = vst [vmem:[%s319 + $0xa8] sm:$0x1] 0.0
        %328 = vst [vmem:[%s319 + $0xc0] sm:$0x1] 0.0
        %329 = vst [vmem:[%s319 + $0xd8] sm:$0x1] 0.0
        %330 = vst [vmem:[%s319 + $0xf0] sm:$0x1] 0.0
        %331 = vst [vmem:[%s319 + $0x108] sm:$0x1] 0.0
        %332 = vst [vmem:[%s319 + $0x120] sm:$0x1] 0.0
        %333 = vst [vmem:[%s319 + $0x138] sm:$0x1] 0.0
        %334 = vst [vmem:[%s319 + $0x150] sm:$0x1] 0.0
        %335 = vst [vmem:[%s319 + $0x168] sm:$0x1] 0.0
        %336 = vst [vmem:[%s319 + $0x11] sm:$0x1] 0.0
        %337 = vst [vmem:[%s319 + $0x29] sm:$0x1] 0.0
        %338 = vst [vmem:[%s319 + $0x41] sm:$0x1] 0.0
        %339 = vst [vmem:[%s319 + $0x59] sm:$0x1] 0.0
        %340 = vst [vmem:[%s319 + $0x71] sm:$0x1] 0.0
        %341 = vst [vmem:[%s319 + $0x89] sm:$0x1] 0.0
        %342 = vst [vmem:[%s319 + $0xa1] sm:$0x1] 0.0
        %343 = vst [vmem:[%s319 + $0xb9] sm:$0x1] 0.0
        %344 = vst [vmem:[%s319 + $0xd1] sm:$0x1] 0.0
        %345 = vst [vmem:[%s319 + $0xe9] sm:$0x1] 0.0
        %346 = vst [vmem:[%s319 + $0x101] sm:$0x1] 0.0
        %347 = vst [vmem:[%s319 + $0x119] sm:$0x1] 0.0
        %348 = vst [vmem:[%s319 + $0x131] sm:$0x1] 0.0
        %349 = vst [vmem:[%s319 + $0x149] sm:$0x1] 0.0
        %350 = vst [vmem:[%s319 + $0x161] sm:$0x1] 0.0
        %351 = vst [vmem:[%s319 + $0x179] sm:$0x1] 0.0
        %v352 = vld [vmem:[%s237] sm:$0xff]
        %v353 = vld [vmem:[%s237 + $0x8] sm:$0xff]
        %v354 = vld [vmem:[%s237 + $0x10] sm:$0xff]
        %v355 = vld [vmem:[%s237 + $0x18] sm:$0xff]
        %v356 = vld [vmem:[%s237 + $0x20] sm:$0xff]
        %v357 = vld [vmem:[%s237 + $0x28] sm:$0xff]
        %v358 = vld [vmem:[%s237 + $0x30] sm:$0xff]
        %v359 = vld [vmem:[%s237 + $0x38] sm:$0xff]
        %v360 = vld [vmem:[%s237 + $0x40] sm:$0xff]
        %v361 = vld [vmem:[%s237 + $0x48] sm:$0xff]
        %v362 = vld [vmem:[%s237 + $0x50] sm:$0xff]
        %v363 = vld [vmem:[%s237 + $0x58] sm:$0xff]
        %v364 = vld [vmem:[%s237 + $0x60] sm:$0xff]
        %v365 = vld [vmem:[%s237 + $0x68] sm:$0xff]
        %v366 = vld [vmem:[%s237 + $0x70] sm:$0xff]
        %v367 = vld [vmem:[%s237 + $0x78] sm:$0xff]
        %v368 = vld [vmem:[%s237 + $0x80] sm:$0xff]
        %v369 = vld [vmem:[%s237 + $0x88] sm:$0xff]
        %v370 = vld [vmem:[%s237 + $0x90] sm:$0xff]
        %v371 = vld [vmem:[%s237 + $0x98] sm:$0xff]
        %v372 = vld [vmem:[%s237 + $0xa0] sm:$0xff]
        %v373 = vld [vmem:[%s237 + $0xa8] sm:$0xff]
        %v374 = vld [vmem:[%s237 + $0xb0] sm:$0xff]
        %v375 = vld [vmem:[%s237 + $0xb8] sm:$0xff]
        %v376 = vld [vmem:[%s237 + $0xc0] sm:$0xff]
        %v377 = vld [vmem:[%s237 + $0xc8] sm:$0xff]
        %v378 = vld [vmem:[%s237 + $0xd0] sm:$0xff]
        %v379 = vld [vmem:[%s237 + $0xd8] sm:$0xff]
        %v380 = vld [vmem:[%s237 + $0xe0] sm:$0xff]
        %v381 = vld [vmem:[%s237 + $0xe8] sm:$0xff]
        %v382 = vld [vmem:[%s237 + $0xf0] sm:$0xff]
        %v383 = vld [vmem:[%s237 + $0xf8] sm:$0xff]
        %384 = vst [vmem:[%s279 + $0x1] sm:$0xff] %v352
        %385 = vst [vmem:[%s279 + $0x9] sm:$0xff] %v353
        %386 = vst [vmem:[%s279 + $0x19] sm:$0xff] %v354
        %387 = vst [vmem:[%s279 + $0x21] sm:$0xff] %v355
        %388 = vst [vmem:[%s279 + $0x31] sm:$0xff] %v356
        %389 = vst [vmem:[%s279 + $0x39] sm:$0xff] %v357
        %390 = vst [vmem:[%s279 + $0x49] sm:$0xff] %v358
        %391 = vst [vmem:[%s279 + $0x51] sm:$0xff] %v359
        %392 = vst [vmem:[%s279 + $0x61] sm:$0xff] %v360
        %393 = vst [vmem:[%s279 + $0x69] sm:$0xff] %v361
        %394 = vst [vmem:[%s279 + $0x79] sm:$0xff] %v362
        %395 = vst [vmem:[%s279 + $0x81] sm:$0xff] %v363
        %396 = vst [vmem:[%s279 + $0x91] sm:$0xff] %v364
        %397 = vst [vmem:[%s279 + $0x99] sm:$0xff] %v365
        %398 = vst [vmem:[%s279 + $0xa9] sm:$0xff] %v366
        %399 = vst [vmem:[%s279 + $0xb1] sm:$0xff] %v367
        %400 = vst [vmem:[%s279 + $0xc1] sm:$0xff] %v368
        %401 = vst [vmem:[%s279 + $0xc9] sm:$0xff] %v369
        %402 = vst [vmem:[%s279 + $0xd9] sm:$0xff] %v370
        %403 = vst [vmem:[%s279 + $0xe1] sm:$0xff] %v371
        %404 = vst [vmem:[%s279 + $0xf1] sm:$0xff] %v372
        %405 = vst [vmem:[%s279 + $0xf9] sm:$0xff] %v373
        %406 = vst [vmem:[%s279 + $0x109] sm:$0xff] %v374
        %407 = vst [vmem:[%s279 + $0x111] sm:$0xff] %v375
        %408 = vst [vmem:[%s279 + $0x121] sm:$0xff] %v376
        %409 = vst [vmem:[%s279 + $0x129] sm:$0xff] %v377
        %410 = vst [vmem:[%s279 + $0x139] sm:$0xff] %v378
        %411 = vst [vmem:[%s279 + $0x141] sm:$0xff] %v379
        %412 = vst [vmem:[%s279 + $0x151] sm:$0xff] %v380
        %413 = vst [vmem:[%s279 + $0x159] sm:$0xff] %v381
        %414 = vst [vmem:[%s279 + $0x169] sm:$0xff] %v382
        %415 = vst [vmem:[%s279 + $0x171] sm:$0xff] %v383
        %v416 = vld [vmem:[%s3] sm:$0x1]
        %v417 = vld [vmem:[%s4] sm:$0x1]
        %v418 = vld [vmem:[#allocation2] sm:$0xff]
        %v419 = vld [vmem:[#allocation2 + $0x8] sm:$0xff]
        %v420 = vld [vmem:[#allocation2 + $0x18] sm:$0xff]
        %v421 = vld [vmem:[#allocation2 + $0x20] sm:$0xff]
        %v422 = vld [vmem:[#allocation2 + $0x30] sm:$0xff]
        %v423 = vld [vmem:[#allocation2 + $0x38] sm:$0xff]
        %v424 = vld [vmem:[#allocation2 + $0x48] sm:$0xff]
        %v425 = vld [vmem:[#allocation2 + $0x50] sm:$0xff]
        %v426 = vld [vmem:[#allocation2 + $0x60] sm:$0xff]
        %v427 = vld [vmem:[#allocation2 + $0x68] sm:$0xff]
        %v428 = vld [vmem:[#allocation2 + $0x78] sm:$0xff]
        %v429 = vld [vmem:[#allocation2 + $0x80] sm:$0xff]
        %v430 = vld [vmem:[#allocation2 + $0x90] sm:$0xff]
        %v431 = vld [vmem:[#allocation2 + $0x98] sm:$0xff]
        %v432 = vld [vmem:[#allocation2 + $0xa8] sm:$0xff]
        %v433 = vld [vmem:[#allocation2 + $0xb0] sm:$0xff]
        %434 = vst [vmem:[#allocation4] sm:$0xff] %v418
        %435 = vst [vmem:[#allocation4 + $0x48] sm:$0xff] %v419
        %436 = vst [vmem:[#allocation4 + $0x90] sm:$0xff] %v420
        %437 = vst [vmem:[#allocation4 + $0xd8] sm:$0xff] %v421
        %438 = vst [vmem:[#allocation4 + $0x120] sm:$0xff] %v422
        %439 = vst [vmem:[#allocation4 + $0x168] sm:$0xff] %v423
        %440 = vst [vmem:[#allocation4 + $0x1b0] sm:$0xff] %v424
        %441 = vst [vmem:[#allocation4 + $0x1f8] sm:$0xff] %v425
        %442 = vst [vmem:[#allocation4 + $0x240] sm:$0xff] %v426
        %443 = vst [vmem:[#allocation4 + $0x288] sm:$0xff] %v427
        %444 = vst [vmem:[#allocation4 + $0x2d0] sm:$0xff] %v428
        %445 = vst [vmem:[#allocation4 + $0x318] sm:$0xff] %v429
        %446 = vst [vmem:[#allocation4 + $0x360] sm:$0xff] %v430
        %447 = vst [vmem:[#allocation4 + $0x3a8] sm:$0xff] %v431
        %448 = vst [vmem:[#allocation4 + $0x3f0] sm:$0xff] %v432
        %449 = vst [vmem:[#allocation4 + $0x438] sm:$0xff] %v433
        %v450 = vld [vmem:[#allocation2 + $0x1] sm:$0xff]
        %v451 = vld [vmem:[#allocation2 + $0x9] sm:$0xff]
        %v452 = vld [vmem:[#allocation2 + $0x19] sm:$0xff]
        %v453 = vld [vmem:[#allocation2 + $0x21] sm:$0xff]
        %v454 = vld [vmem:[#allocation2 + $0x31] sm:$0xff]
        %v455 = vld [vmem:[#allocation2 + $0x39] sm:$0xff]
        %v456 = vld [vmem:[#allocation2 + $0x49] sm:$0xff]
        %v457 = vld [vmem:[#allocation2 + $0x51] sm:$0xff]
        %v458 = vld [vmem:[#allocation2 + $0x61] sm:$0xff]
        %v459 = vld [vmem:[#allocation2 + $0x69] sm:$0xff]
        %v460 = vld [vmem:[#allocation2 + $0x79] sm:$0xff]
        %v461 = vld [vmem:[#allocation2 + $0x81] sm:$0xff]
        %v462 = vld [vmem:[#allocation2 + $0x91] sm:$0xff]
        %v463 = vld [vmem:[#allocation2 + $0x99] sm:$0xff]
        %v464 = vld [vmem:[#allocation2 + $0xa9] sm:$0xff]
        %v465 = vld [vmem:[#allocation2 + $0xb1] sm:$0xff]
        %466 = vst [vmem:[#allocation4 + $0x8] sm:$0xff] %v450
        %467 = vst [vmem:[#allocation4 + $0x50] sm:$0xff] %v451
        %468 = vst [vmem:[#allocation4 + $0x98] sm:$0xff] %v452
        %469 = vst [vmem:[#allocation4 + $0xe0] sm:$0xff] %v453
        %470 = vst [vmem:[#allocation4 + $0x128] sm:$0xff] %v454
        %471 = vst [vmem:[#allocation4 + $0x170] sm:$0xff] %v455
        %472 = vst [vmem:[#allocation4 + $0x1b8] sm:$0xff] %v456
        %473 = vst [vmem:[#allocation4 + $0x200] sm:$0xff] %v457
        %474 = vst [vmem:[#allocation4 + $0x248] sm:$0xff] %v458
        %475 = vst [vmem:[#allocation4 + $0x290] sm:$0xff] %v459
        %476 = vst [vmem:[#allocation4 + $0x2d8] sm:$0xff] %v460
        %477 = vst [vmem:[#allocation4 + $0x320] sm:$0xff] %v461
        %478 = vst [vmem:[#allocation4 + $0x368] sm:$0xff] %v462
        %479 = vst [vmem:[#allocation4 + $0x3b0] sm:$0xff] %v463
        %480 = vst [vmem:[#allocation4 + $0x3f8] sm:$0xff] %v464
        %481 = vst [vmem:[#allocation4 + $0x440] sm:$0xff] %v465
        %v482 = vld [vmem:[#allocation2 + $0x2] sm:$0xff]
        %v483 = vld [vmem:[#allocation2 + $0xa] sm:$0xff]
        %v484 = vld [vmem:[#allocation2 + $0x1a] sm:$0xff]
        %v485 = vld [vmem:[#allocation2 + $0x22] sm:$0xff]
        %v486 = vld [vmem:[#allocation2 + $0x32] sm:$0xff]
        %v487 = vld [vmem:[#allocation2 + $0x3a] sm:$0xff]
        %v488 = vld [vmem:[#allocation2 + $0x4a] sm:$0xff]
        %v489 = vld [vmem:[#allocation2 + $0x52] sm:$0xff]
        %v490 = vld [vmem:[#allocation2 + $0x62] sm:$0xff]
        %v491 = vld [vmem:[#allocation2 + $0x6a] sm:$0xff]
        %v492 = vld [vmem:[#allocation2 + $0x7a] sm:$0xff]
        %v493 = vld [vmem:[#allocation2 + $0x82] sm:$0xff]
        %v494 = vld [vmem:[#allocation2 + $0x92] sm:$0xff]
        %v495 = vld [vmem:[#allocation2 + $0x9a] sm:$0xff]
        %v496 = vld [vmem:[#allocation2 + $0xaa] sm:$0xff]
        %v497 = vld [vmem:[#allocation2 + $0xb2] sm:$0xff]
        %498 = vst [vmem:[#allocation4 + $0x10] sm:$0xff] %v482
        %499 = vst [vmem:[#allocation4 + $0x58] sm:$0xff] %v483
        %500 = vst [vmem:[#allocation4 + $0xa0] sm:$0xff] %v484
        %501 = vst [vmem:[#allocation4 + $0xe8] sm:$0xff] %v485
        %502 = vst [vmem:[#allocation4 + $0x130] sm:$0xff] %v486
        %503 = vst [vmem:[#allocation4 + $0x178] sm:$0xff] %v487
        %504 = vst [vmem:[#allocation4 + $0x1c0] sm:$0xff] %v488
        %505 = vst [vmem:[#allocation4 + $0x208] sm:$0xff] %v489
        %506 = vst [vmem:[#allocation4 + $0x250] sm:$0xff] %v490
        %507 = vst [vmem:[#allocation4 + $0x298] sm:$0xff] %v491
        %508 = vst [vmem:[#allocation4 + $0x2e0] sm:$0xff] %v492
        %509 = vst [vmem:[#allocation4 + $0x328] sm:$0xff] %v493
        %510 = vst [vmem:[#allocation4 + $0x370] sm:$0xff] %v494
        %511 = vst [vmem:[#allocation4 + $0x3b8] sm:$0xff] %v495
        %512 = vst [vmem:[#allocation4 + $0x400] sm:$0xff] %v496
        %513 = vst [vmem:[#allocation4 + $0x448] sm:$0xff] %v497
        %v514 = vld [vmem:[%s279] sm:$0xff]
        %v515 = vld [vmem:[%s279 + $0x8] sm:$0xff]
        %v516 = vld [vmem:[%s279 + $0x18] sm:$0xff]
        %v517 = vld [vmem:[%s279 + $0x20] sm:$0xff]
        %v518 = vld [vmem:[%s279 + $0x30] sm:$0xff]
        %v519 = vld [vmem:[%s279 + $0x38] sm:$0xff]
        %v520 = vld [vmem:[%s279 + $0x48] sm:$0xff]
        %v521 = vld [vmem:[%s279 + $0x50] sm:$0xff]
        %v522 = vld [vmem:[%s279 + $0x60] sm:$0xff]
        %v523 = vld [vmem:[%s279 + $0x68] sm:$0xff]
        %v524 = vld [vmem:[%s279 + $0x78] sm:$0xff]
        %v525 = vld [vmem:[%s279 + $0x80] sm:$0xff]
        %v526 = vld [vmem:[%s279 + $0x90] sm:$0xff]
        %v527 = vld [vmem:[%s279 + $0x98] sm:$0xff]
        %v528 = vld [vmem:[%s279 + $0xa8] sm:$0xff]
        %v529 = vld [vmem:[%s279 + $0xb0] sm:$0xff]
        %530 = vst [vmem:[#allocation4 + $0x18] sm:$0xff] %v514
        %531 = vst [vmem:[#allocation4 + $0x60] sm:$0xff] %v515
        %532 = vst [vmem:[#allocation4 + $0xa8] sm:$0xff] %v516
        %533 = vst [vmem:[#allocation4 + $0xf0] sm:$0xff] %v517
        %534 = vst [vmem:[#allocation4 + $0x138] sm:$0xff] %v518
        %535 = vst [vmem:[#allocation4 + $0x180] sm:$0xff] %v519
        %536 = vst [vmem:[#allocation4 + $0x1c8] sm:$0xff] %v520
        %537 = vst [vmem:[#allocation4 + $0x210] sm:$0xff] %v521
        %538 = vst [vmem:[#allocation4 + $0x258] sm:$0xff] %v522
        %539 = vst [vmem:[#allocation4 + $0x2a0] sm:$0xff] %v523
        %540 = vst [vmem:[#allocation4 + $0x2e8] sm:$0xff] %v524
        %541 = vst [vmem:[#allocation4 + $0x330] sm:$0xff] %v525
        %542 = vst [vmem:[#allocation4 + $0x378] sm:$0xff] %v526
        %543 = vst [vmem:[#allocation4 + $0x3c0] sm:$0xff] %v527
        %544 = vst [vmem:[#allocation4 + $0x408] sm:$0xff] %v528
        %545 = vst [vmem:[#allocation4 + $0x450] sm:$0xff] %v529
        %v546 = vld [vmem:[%s279 + $0x1] sm:$0xff]
        %v547 = vld [vmem:[%s279 + $0x9] sm:$0xff]
        %v548 = vld [vmem:[%s279 + $0x19] sm:$0xff]
        %v549 = vld [vmem:[%s279 + $0x21] sm:$0xff]
        %v550 = vld [vmem:[%s279 + $0x31] sm:$0xff]
        %v551 = vld [vmem:[%s279 + $0x39] sm:$0xff]
        %v552 = vld [vmem:[%s279 + $0x49] sm:$0xff]
        %v553 = vld [vmem:[%s279 + $0x51] sm:$0xff]
        %v554 = vld [vmem:[%s279 + $0x61] sm:$0xff]
        %v555 = vld [vmem:[%s279 + $0x69] sm:$0xff]
        %v556 = vld [vmem:[%s279 + $0x79] sm:$0xff]
        %v557 = vld [vmem:[%s279 + $0x81] sm:$0xff]
        %v558 = vld [vmem:[%s279 + $0x91] sm:$0xff]
        %v559 = vld [vmem:[%s279 + $0x99] sm:$0xff]
        %v560 = vld [vmem:[%s279 + $0xa9] sm:$0xff]
        %v561 = vld [vmem:[%s279 + $0xb1] sm:$0xff]
        %562 = vst [vmem:[#allocation4 + $0x20] sm:$0xff] %v546
        %563 = vst [vmem:[#allocation4 + $0x68] sm:$0xff] %v547
        %564 = vst [vmem:[#allocation4 + $0xb0] sm:$0xff] %v548
        %565 = vst [vmem:[#allocation4 + $0xf8] sm:$0xff] %v549
        %566 = vst [vmem:[#allocation4 + $0x140] sm:$0xff] %v550
        %567 = vst [vmem:[#allocation4 + $0x188] sm:$0xff] %v551
        %568 = vst [vmem:[#allocation4 + $0x1d0] sm:$0xff] %v552
        %569 = vst [vmem:[#allocation4 + $0x218] sm:$0xff] %v553
        %570 = vst [vmem:[#allocation4 + $0x260] sm:$0xff] %v554
        %571 = vst [vmem:[#allocation4 + $0x2a8] sm:$0xff] %v555
        %572 = vst [vmem:[#allocation4 + $0x2f0] sm:$0xff] %v556
        %573 = vst [vmem:[#allocation4 + $0x338] sm:$0xff] %v557
        %574 = vst [vmem:[#allocation4 + $0x380] sm:$0xff] %v558
        %575 = vst [vmem:[#allocation4 + $0x3c8] sm:$0xff] %v559
        %576 = vst [vmem:[#allocation4 + $0x410] sm:$0xff] %v560
        %577 = vst [vmem:[#allocation4 + $0x458] sm:$0xff] %v561
        %v578 = vld [vmem:[%s279 + $0x2] sm:$0xff]
        %v579 = vld [vmem:[%s279 + $0xa] sm:$0xff]
        %v580 = vld [vmem:[%s279 + $0x1a] sm:$0xff]
        %v581 = vld [vmem:[%s279 + $0x22] sm:$0xff]
        %v582 = vld [vmem:[%s279 + $0x32] sm:$0xff]
        %v583 = vld [vmem:[%s279 + $0x3a] sm:$0xff]
        %v584 = vld [vmem:[%s279 + $0x4a] sm:$0xff]
        %v585 = vld [vmem:[%s279 + $0x52] sm:$0xff]
        %v586 = vld [vmem:[%s279 + $0x62] sm:$0xff]
        %v587 = vld [vmem:[%s279 + $0x6a] sm:$0xff]
        %v588 = vld [vmem:[%s279 + $0x7a] sm:$0xff]
        %v589 = vld [vmem:[%s279 + $0x82] sm:$0xff]
        %v590 = vld [vmem:[%s279 + $0x92] sm:$0xff]
        %v591 = vld [vmem:[%s279 + $0x9a] sm:$0xff]
        %v592 = vld [vmem:[%s279 + $0xaa] sm:$0xff]
        %v593 = vld [vmem:[%s279 + $0xb2] sm:$0xff]
        %594 = vst [vmem:[#allocation4 + $0x28] sm:$0xff] %v578
        %595 = vst [vmem:[#allocation4 + $0x70] sm:$0xff] %v579
        %596 = vst [vmem:[#allocation4 + $0xb8] sm:$0xff] %v580
        %597 = vst [vmem:[#allocation4 + $0x100] sm:$0xff] %v581
        %598 = vst [vmem:[#allocation4 + $0x148] sm:$0xff] %v582
        %599 = vst [vmem:[#allocation4 + $0x190] sm:$0xff] %v583
        %600 = vst [vmem:[#allocation4 + $0x1d8] sm:$0xff] %v584
        %601 = vst [vmem:[#allocation4 + $0x220] sm:$0xff] %v585
        %602 = vst [vmem:[#allocation4 + $0x268] sm:$0xff] %v586
        %603 = vst [vmem:[#allocation4 + $0x2b0] sm:$0xff] %v587
        %604 = vst [vmem:[#allocation4 + $0x2f8] sm:$0xff] %v588
        %605 = vst [vmem:[#allocation4 + $0x340] sm:$0xff] %v589
        %606 = vst [vmem:[#allocation4 + $0x388] sm:$0xff] %v590
        %607 = vst [vmem:[#allocation4 + $0x3d0] sm:$0xff] %v591
        %608 = vst [vmem:[#allocation4 + $0x418] sm:$0xff] %v592
        %609 = vst [vmem:[#allocation4 + $0x460] sm:$0xff] %v593
        %s610 = scalar_lea.vmem [#allocation2], 48
        %v611 = vld [vmem:[%s610] sm:$0xff]
        %v612 = vld [vmem:[%s610 + $0x8] sm:$0xff]
        %v613 = vld [vmem:[%s610 + $0x18] sm:$0xff]
        %v614 = vld [vmem:[%s610 + $0x20] sm:$0xff]
        %v615 = vld [vmem:[%s610 + $0x30] sm:$0xff]
        %v616 = vld [vmem:[%s610 + $0x38] sm:$0xff]
        %v617 = vld [vmem:[%s610 + $0x48] sm:$0xff]
        %v618 = vld [vmem:[%s610 + $0x50] sm:$0xff]
        %v619 = vld [vmem:[%s610 + $0x60] sm:$0xff]
        %v620 = vld [vmem:[%s610 + $0x68] sm:$0xff]
        %v621 = vld [vmem:[%s610 + $0x78] sm:$0xff]
        %v622 = vld [vmem:[%s610 + $0x80] sm:$0xff]
        %v623 = vld [vmem:[%s610 + $0x90] sm:$0xff]
        %v624 = vld [vmem:[%s610 + $0x98] sm:$0xff]
        %v625 = vld [vmem:[%s610 + $0xa8] sm:$0xff]
        %v626 = vld [vmem:[%s610 + $0xb0] sm:$0xff]
        %627 = vst [vmem:[#allocation4 + $0x30] sm:$0xff] %v611
        %628 = vst [vmem:[#allocation4 + $0x78] sm:$0xff] %v612
        %629 = vst [vmem:[#allocation4 + $0xc0] sm:$0xff] %v613
        %630 = vst [vmem:[#allocation4 + $0x108] sm:$0xff] %v614
        %631 = vst [vmem:[#allocation4 + $0x150] sm:$0xff] %v615
        %632 = vst [vmem:[#allocation4 + $0x198] sm:$0xff] %v616
        %633 = vst [vmem:[#allocation4 + $0x1e0] sm:$0xff] %v617
        %634 = vst [vmem:[#allocation4 + $0x228] sm:$0xff] %v618
        %635 = vst [vmem:[#allocation4 + $0x270] sm:$0xff] %v619
        %636 = vst [vmem:[#allocation4 + $0x2b8] sm:$0xff] %v620
        %637 = vst [vmem:[#allocation4 + $0x300] sm:$0xff] %v621
        %638 = vst [vmem:[#allocation4 + $0x348] sm:$0xff] %v622
        %639 = vst [vmem:[#allocation4 + $0x390] sm:$0xff] %v623
        %640 = vst [vmem:[#allocation4 + $0x3d8] sm:$0xff] %v624
        %641 = vst [vmem:[#allocation4 + $0x420] sm:$0xff] %v625
        %642 = vst [vmem:[#allocation4 + $0x468] sm:$0xff] %v626
        %v643 = vld [vmem:[%s610 + $0x1] sm:$0xff]
        %v644 = vld [vmem:[%s610 + $0x9] sm:$0xff]
        %v645 = vld [vmem:[%s610 + $0x19] sm:$0xff]
        %v646 = vld [vmem:[%s610 + $0x21] sm:$0xff]
        %v647 = vld [vmem:[%s610 + $0x31] sm:$0xff]
        %v648 = vld [vmem:[%s610 + $0x39] sm:$0xff]
        %v649 = vld [vmem:[%s610 + $0x49] sm:$0xff]
        %v650 = vld [vmem:[%s610 + $0x51] sm:$0xff]
        %v651 = vld [vmem:[%s610 + $0x61] sm:$0xff]
        %v652 = vld [vmem:[%s610 + $0x69] sm:$0xff]
        %v653 = vld [vmem:[%s610 + $0x79] sm:$0xff]
        %v654 = vld [vmem:[%s610 + $0x81] sm:$0xff]
        %v655 = vld [vmem:[%s610 + $0x91] sm:$0xff]
        %v656 = vld [vmem:[%s610 + $0x99] sm:$0xff]
        %v657 = vld [vmem:[%s610 + $0xa9] sm:$0xff]
        %v658 = vld [vmem:[%s610 + $0xb1] sm:$0xff]
        %659 = vst [vmem:[#allocation4 + $0x38] sm:$0xff] %v643
        %660 = vst [vmem:[#allocation4 + $0x80] sm:$0xff] %v644
        %661 = vst [vmem:[#allocation4 + $0xc8] sm:$0xff] %v645
        %662 = vst [vmem:[#allocation4 + $0x110] sm:$0xff] %v646
        %663 = vst [vmem:[#allocation4 + $0x158] sm:$0xff] %v647
        %664 = vst [vmem:[#allocation4 + $0x1a0] sm:$0xff] %v648
        %665 = vst [vmem:[#allocation4 + $0x1e8] sm:$0xff] %v649
        %666 = vst [vmem:[#allocation4 + $0x230] sm:$0xff] %v650
        %667 = vst [vmem:[#allocation4 + $0x278] sm:$0xff] %v651
        %668 = vst [vmem:[#allocation4 + $0x2c0] sm:$0xff] %v652
        %669 = vst [vmem:[#allocation4 + $0x308] sm:$0xff] %v653
        %670 = vst [vmem:[#allocation4 + $0x350] sm:$0xff] %v654
        %671 = vst [vmem:[#allocation4 + $0x398] sm:$0xff] %v655
        %672 = vst [vmem:[#allocation4 + $0x3e0] sm:$0xff] %v656
        %673 = vst [vmem:[#allocation4 + $0x428] sm:$0xff] %v657
        %674 = vst [vmem:[#allocation4 + $0x470] sm:$0xff] %v658
        %v675 = vld [vmem:[%s610 + $0x2] sm:$0xff]
        %v676 = vld [vmem:[%s610 + $0xa] sm:$0xff]
        %v677 = vld [vmem:[%s610 + $0x1a] sm:$0xff]
        %v678 = vld [vmem:[%s610 + $0x22] sm:$0xff]
        %v679 = vld [vmem:[%s610 + $0x32] sm:$0xff]
        %v680 = vld [vmem:[%s610 + $0x3a] sm:$0xff]
        %v681 = vld [vmem:[%s610 + $0x4a] sm:$0xff]
        %v682 = vld [vmem:[%s610 + $0x52] sm:$0xff]
        %v683 = vld [vmem:[%s610 + $0x62] sm:$0xff]
        %v684 = vld [vmem:[%s610 + $0x6a] sm:$0xff]
        %v685 = vld [vmem:[%s610 + $0x7a] sm:$0xff]
        %v686 = vld [vmem:[%s610 + $0x82] sm:$0xff]
        %v687 = vld [vmem:[%s610 + $0x92] sm:$0xff]
        %v688 = vld [vmem:[%s610 + $0x9a] sm:$0xff]
        %v689 = vld [vmem:[%s610 + $0xaa] sm:$0xff]
        %v690 = vld [vmem:[%s610 + $0xb2] sm:$0xff]
        %691 = vst [vmem:[#allocation4 + $0x40] sm:$0xff] %v675
        %692 = vst [vmem:[#allocation4 + $0x88] sm:$0xff] %v676
        %693 = vst [vmem:[#allocation4 + $0xd0] sm:$0xff] %v677
        %694 = vst [vmem:[#allocation4 + $0x118] sm:$0xff] %v678
        %695 = vst [vmem:[#allocation4 + $0x160] sm:$0xff] %v679
        %696 = vst [vmem:[#allocation4 + $0x1a8] sm:$0xff] %v680
        %697 = vst [vmem:[#allocation4 + $0x1f0] sm:$0xff] %v681
        %698 = vst [vmem:[#allocation4 + $0x238] sm:$0xff] %v682
        %699 = vst [vmem:[#allocation4 + $0x280] sm:$0xff] %v683
        %700 = vst [vmem:[#allocation4 + $0x2c8] sm:$0xff] %v684
        %701 = vst [vmem:[#allocation4 + $0x310] sm:$0xff] %v685
        %702 = vst [vmem:[#allocation4 + $0x358] sm:$0xff] %v686
        %703 = vst [vmem:[#allocation4 + $0x3a0] sm:$0xff] %v687
        %704 = vst [vmem:[#allocation4 + $0x3e8] sm:$0xff] %v688
        %705 = vst [vmem:[#allocation4 + $0x430] sm:$0xff] %v689
        %706 = vst [vmem:[#allocation4 + $0x478] sm:$0xff] %v690
        %v707 = vld [vmem:[#allocation4] sm:$0xff]
        %v708 = vld [vmem:[#allocation4 + $0x8] sm:$0xff]
        %v709 = vld [vmem:[#allocation4 + $0x10] sm:$0xff]
        %v710 = vld [vmem:[#allocation4 + $0x18] sm:$0xff]
        %v711 = vld [vmem:[#allocation4 + $0x20] sm:$0xff]
        %v712 = vld [vmem:[#allocation4 + $0x28] sm:$0xff]
        %v713 = vld [vmem:[#allocation4 + $0x30] sm:$0xff]
        %v714 = vld [vmem:[#allocation4 + $0x38] sm:$0xff]
        %v715 = vld [vmem:[#allocation4 + $0x40] sm:$0xff]
        %v716 = vld [vmem:[#allocation4 + $0x48] sm:$0xff]
        %v717 = vld [vmem:[#allocation4 + $0x50] sm:$0xff]
        %v718 = vld [vmem:[#allocation4 + $0x58] sm:$0xff]
        %v719 = vld [vmem:[#allocation4 + $0x60] sm:$0xff]
        %v720 = vld [vmem:[#allocation4 + $0x68] sm:$0xff]
        %v721 = vld [vmem:[#allocation4 + $0x70] sm:$0xff]
        %v722 = vld [vmem:[#allocation4 + $0x78] sm:$0xff]
        %v723 = vld [vmem:[#allocation4 + $0x80] sm:$0xff]
        %v724 = vld [vmem:[#allocation4 + $0x88] sm:$0xff]
        %v725 = vld [vmem:[#allocation4 + $0x90] sm:$0xff]
        %v726 = vld [vmem:[#allocation4 + $0x98] sm:$0xff]
        %v727 = vld [vmem:[#allocation4 + $0xa0] sm:$0xff]
        %v728 = vld [vmem:[#allocation4 + $0xa8] sm:$0xff]
        %v729 = vld [vmem:[#allocation4 + $0xb0] sm:$0xff]
        %v730 = vld [vmem:[#allocation4 + $0xb8] sm:$0xff]
        %v731 = vld [vmem:[#allocation4 + $0xc0] sm:$0xff]
        %v732 = vld [vmem:[#allocation4 + $0xc8] sm:$0xff]
        %v733 = vld [vmem:[#allocation4 + $0xd0] sm:$0xff]
        %v734 = vld [vmem:[#allocation4 + $0xd8] sm:$0xff]
        %v735 = vld [vmem:[#allocation4 + $0xe0] sm:$0xff]
        %v736 = vld [vmem:[#allocation4 + $0xe8] sm:$0xff]
        %v737 = vld [vmem:[#allocation4 + $0xf0] sm:$0xff]
        %v738 = vld [vmem:[#allocation4 + $0xf8] sm:$0xff]
        %v739 = vld [vmem:[#allocation4 + $0x100] sm:$0xff]
        %v740 = vld [vmem:[#allocation4 + $0x108] sm:$0xff]
        %v741 = vld [vmem:[#allocation4 + $0x110] sm:$0xff]
        %v742 = vld [vmem:[#allocation4 + $0x118] sm:$0xff]
        %v743 = vld [vmem:[#allocation4 + $0x120] sm:$0xff]
        %v744 = vld [vmem:[#allocation4 + $0x128] sm:$0xff]
        %v745 = vld [vmem:[#allocation4 + $0x130] sm:$0xff]
        %v746 = vld [vmem:[#allocation4 + $0x138] sm:$0xff]
        %v747 = vld [vmem:[#allocation4 + $0x140] sm:$0xff]
        %v748 = vld [vmem:[#allocation4 + $0x148] sm:$0xff]
        %v749 = vld [vmem:[#allocation4 + $0x150] sm:$0xff]
        %v750 = vld [vmem:[#allocation4 + $0x158] sm:$0xff]
        %v751 = vld [vmem:[#allocation4 + $0x160] sm:$0xff]
        %v752 = vld [vmem:[#allocation4 + $0x168] sm:$0xff]
        %v753 = vld [vmem:[#allocation4 + $0x170] sm:$0xff]
        %v754 = vld [vmem:[#allocation4 + $0x178] sm:$0xff]
        %v755 = vld [vmem:[#allocation4 + $0x180] sm:$0xff]
        %v756 = vld [vmem:[#allocation4 + $0x188] sm:$0xff]
        %v757 = vld [vmem:[#allocation4 + $0x190] sm:$0xff]
        %v758 = vld [vmem:[#allocation4 + $0x198] sm:$0xff]
        %v759 = vld [vmem:[#allocation4 + $0x1a0] sm:$0xff]
        %v760 = vld [vmem:[#allocation4 + $0x1a8] sm:$0xff]
        %v761 = vld [vmem:[#allocation4 + $0x1b0] sm:$0xff]
        %v762 = vld [vmem:[#allocation4 + $0x1b8] sm:$0xff]
        %v763 = vld [vmem:[#allocation4 + $0x1c0] sm:$0xff]
        %v764 = vld [vmem:[#allocation4 + $0x1c8] sm:$0xff]
        %v765 = vld [vmem:[#allocation4 + $0x1d0] sm:$0xff]
        %v766 = vld [vmem:[#allocation4 + $0x1d8] sm:$0xff]
        %v767 = vld [vmem:[#allocation4 + $0x1e0] sm:$0xff]
        %v768 = vld [vmem:[#allocation4 + $0x1e8] sm:$0xff]
        %v769 = vld [vmem:[#allocation4 + $0x1f0] sm:$0xff]
        %v770 = vld [vmem:[#allocation4 + $0x1f8] sm:$0xff]
        %v771 = vld [vmem:[#allocation4 + $0x200] sm:$0xff]
        %v772 = vld [vmem:[#allocation4 + $0x208] sm:$0xff]
        %v773 = vld [vmem:[#allocation4 + $0x210] sm:$0xff]
        %v774 = vld [vmem:[#allocation4 + $0x218] sm:$0xff]
        %v775 = vld [vmem:[#allocation4 + $0x220] sm:$0xff]
        %v776 = vld [vmem:[#allocation4 + $0x228] sm:$0xff]
        %v777 = vld [vmem:[#allocation4 + $0x230] sm:$0xff]
        %v778 = vld [vmem:[#allocation4 + $0x238] sm:$0xff]
        %v779 = vld [vmem:[#allocation4 + $0x240] sm:$0xff]
        %v780 = vld [vmem:[#allocation4 + $0x248] sm:$0xff]
        %v781 = vld [vmem:[#allocation4 + $0x250] sm:$0xff]
        %v782 = vld [vmem:[#allocation4 + $0x258] sm:$0xff]
        %v783 = vld [vmem:[#allocation4 + $0x260] sm:$0xff]
        %v784 = vld [vmem:[#allocation4 + $0x268] sm:$0xff]
        %v785 = vld [vmem:[#allocation4 + $0x270] sm:$0xff]
        %v786 = vld [vmem:[#allocation4 + $0x278] sm:$0xff]
        %v787 = vld [vmem:[#allocation4 + $0x280] sm:$0xff]
        %v788 = vld [vmem:[#allocation4 + $0x288] sm:$0xff]
        %v789 = vld [vmem:[#allocation4 + $0x290] sm:$0xff]
        %v790 = vld [vmem:[#allocation4 + $0x298] sm:$0xff]
        %v791 = vld [vmem:[#allocation4 + $0x2a0] sm:$0xff]
        %v792 = vld [vmem:[#allocation4 + $0x2a8] sm:$0xff]
        %v793 = vld [vmem:[#allocation4 + $0x2b0] sm:$0xff]
        %v794 = vld [vmem:[#allocation4 + $0x2b8] sm:$0xff]
        %v795 = vld [vmem:[#allocation4 + $0x2c0] sm:$0xff]
        %v796 = vld [vmem:[#allocation4 + $0x2c8] sm:$0xff]
        %v797 = vld [vmem:[#allocation4 + $0x2d0] sm:$0xff]
        %v798 = vld [vmem:[#allocation4 + $0x2d8] sm:$0xff]
        %v799 = vld [vmem:[#allocation4 + $0x2e0] sm:$0xff]
        %v800 = vld [vmem:[#allocation4 + $0x2e8] sm:$0xff]
        %v801 = vld [vmem:[#allocation4 + $0x2f0] sm:$0xff]
        %v802 = vld [vmem:[#allocation4 + $0x2f8] sm:$0xff]
        %v803 = vld [vmem:[#allocation4 + $0x300] sm:$0xff]
        %v804 = vld [vmem:[#allocation4 + $0x308] sm:$0xff]
        %v805 = vld [vmem:[#allocation4 + $0x310] sm:$0xff]
        %v806 = vld [vmem:[#allocation4 + $0x318] sm:$0xff]
        %v807 = vld [vmem:[#allocation4 + $0x320] sm:$0xff]
        %v808 = vld [vmem:[#allocation4 + $0x328] sm:$0xff]
        %v809 = vld [vmem:[#allocation4 + $0x330] sm:$0xff]
        %v810 = vld [vmem:[#allocation4 + $0x338] sm:$0xff]
        %v811 = vld [vmem:[#allocation4 + $0x340] sm:$0xff]
        %v812 = vld [vmem:[#allocation4 + $0x348] sm:$0xff]
        %v813 = vld [vmem:[#allocation4 + $0x350] sm:$0xff]
        %v814 = vld [vmem:[#allocation4 + $0x358] sm:$0xff]
        %v815 = vld [vmem:[#allocation4 + $0x360] sm:$0xff]
        %v816 = vld [vmem:[#allocation4 + $0x368] sm:$0xff]
        %v817 = vld [vmem:[#allocation4 + $0x370] sm:$0xff]
        %v818 = vld [vmem:[#allocation4 + $0x378] sm:$0xff]
        %v819 = vld [vmem:[#allocation4 + $0x380] sm:$0xff]
        %v820 = vld [vmem:[#allocation4 + $0x388] sm:$0xff]
        %v821 = vld [vmem:[#allocation4 + $0x390] sm:$0xff]
        %v822 = vld [vmem:[#allocation4 + $0x398] sm:$0xff]
        %v823 = vld [vmem:[#allocation4 + $0x3a0] sm:$0xff]
        %v824 = vld [vmem:[#allocation4 + $0x3a8] sm:$0xff]
        %v825 = vld [vmem:[#allocation4 + $0x3b0] sm:$0xff]
        %v826 = vld [vmem:[#allocation4 + $0x3b8] sm:$0xff]
        %v827 = vld [vmem:[#allocation4 + $0x3c0] sm:$0xff]
        %v828 = vld [vmem:[#allocation4 + $0x3c8] sm:$0xff]
        %v829 = vld [vmem:[#allocation4 + $0x3d0] sm:$0xff]
        %v830 = vld [vmem:[#allocation4 + $0x3d8] sm:$0xff]
        %v831 = vld [vmem:[#allocation4 + $0x3e0] sm:$0xff]
        %v832 = vld [vmem:[#allocation4 + $0x3e8] sm:$0xff]
        %v833 = vld [vmem:[#allocation4 + $0x3f0] sm:$0xff]
        %v834 = vld [vmem:[#allocation4 + $0x3f8] sm:$0xff]
        %v835 = vld [vmem:[#allocation4 + $0x400] sm:$0xff]
        %v836 = vld [vmem:[#allocation4 + $0x408] sm:$0xff]
        %v837 = vld [vmem:[#allocation4 + $0x410] sm:$0xff]
        %v838 = vld [vmem:[#allocation4 + $0x418] sm:$0xff]
        %v839 = vld [vmem:[#allocation4 + $0x420] sm:$0xff]
        %v840 = vld [vmem:[#allocation4 + $0x428] sm:$0xff]
        %v841 = vld [vmem:[#allocation4 + $0x430] sm:$0xff]
        %v842 = vld [vmem:[#allocation4 + $0x438] sm:$0xff]
        %v843 = vld [vmem:[#allocation4 + $0x440] sm:$0xff]
        %v844 = vld [vmem:[#allocation4 + $0x448] sm:$0xff]
        %v845 = vld [vmem:[#allocation4 + $0x450] sm:$0xff]
        %v846 = vld [vmem:[#allocation4 + $0x458] sm:$0xff]
        %v847 = vld [vmem:[#allocation4 + $0x460] sm:$0xff]
        %v848 = vld [vmem:[#allocation4 + $0x468] sm:$0xff]
        %v849 = vld [vmem:[#allocation4 + $0x470] sm:$0xff]
        %v850 = vld [vmem:[#allocation4 + $0x478] sm:$0xff]
        %v851 = vld [vmem:[#allocation8] sm:$0xff]
        %v852 = vld [vmem:[#allocation8 + $0x8] sm:$0xff]
        %v853 = vld [vmem:[#allocation8 + $0x10] sm:$0xff]
        %v854 = vld [vmem:[#allocation8 + $0x18] sm:$0xff]
        %v855 = vld [vmem:[#allocation8 + $0x20] sm:$0xff]
        %v856 = vld [vmem:[#allocation8 + $0x28] sm:$0xff]
        %v857 = vld [vmem:[#allocation8 + $0x30] sm:$0xff]
        %v858 = vld [vmem:[#allocation8 + $0x38] sm:$0xff]
        %v859 = vld [vmem:[#allocation8 + $0x40] sm:$0xff]
        %v860 = vld [vmem:[#allocation8 + $0x48] sm:$0xff]
        %v861 = vld [vmem:[#allocation8 + $0x50] sm:$0xff]
        %v862 = vld [vmem:[#allocation8 + $0x58] sm:$0xff]
        %v863 = vld [vmem:[#allocation8 + $0x60] sm:$0xff]
        %v864 = vld [vmem:[#allocation8 + $0x68] sm:$0xff]
        %v865 = vld [vmem:[#allocation8 + $0x70] sm:$0xff]
        %v866 = vld [vmem:[#allocation8 + $0x78] sm:$0xff]
        %v867 = vld [vmem:[#allocation8 + $0x80] sm:$0xff]
        %v868 = vld [vmem:[#allocation8 + $0x88] sm:$0xff]
        %v869 = vld [vmem:[#allocation8 + $0x90] sm:$0xff]
        %v870 = vld [vmem:[#allocation8 + $0x98] sm:$0xff]
        %v871 = vld [vmem:[#allocation8 + $0xa0] sm:$0xff]
        %v872 = vld [vmem:[#allocation8 + $0xa8] sm:$0xff]
        %v873 = vld [vmem:[#allocation8 + $0xb0] sm:$0xff]
        %v874 = vld [vmem:[#allocation8 + $0xb8] sm:$0xff]
        %v875 = vld [vmem:[#allocation8 + $0xc0] sm:$0xff]
        %v876 = vld [vmem:[#allocation8 + $0xc8] sm:$0xff]
        %v877 = vld [vmem:[#allocation8 + $0xd0] sm:$0xff]
        %v878 = vld [vmem:[#allocation8 + $0xd8] sm:$0xff]
        %v879 = vld [vmem:[#allocation8 + $0xe0] sm:$0xff]
        %v880 = vld [vmem:[#allocation8 + $0xe8] sm:$0xff]
        %v881 = vld [vmem:[#allocation8 + $0xf0] sm:$0xff]
        %v882 = vld [vmem:[#allocation8 + $0xf8] sm:$0xff]
        %v883 = vld [vmem:[#allocation8 + $0x100] sm:$0xff]
        %v884 = vld [vmem:[#allocation8 + $0x108] sm:$0xff]
        %v885 = vld [vmem:[#allocation8 + $0x110] sm:$0xff]
        %v886 = vld [vmem:[#allocation8 + $0x118] sm:$0xff]
        %v887 = vld [vmem:[#allocation8 + $0x120] sm:$0xff]
        %v888 = vld [vmem:[#allocation8 + $0x128] sm:$0xff]
        %v889 = vld [vmem:[#allocation8 + $0x130] sm:$0xff]
        %v890 = vld [vmem:[#allocation8 + $0x138] sm:$0xff]
        %v891 = vld [vmem:[#allocation8 + $0x140] sm:$0xff]
        %v892 = vld [vmem:[#allocation8 + $0x148] sm:$0xff]
        %v893 = vld [vmem:[#allocation8 + $0x150] sm:$0xff]
        %v894 = vld [vmem:[#allocation8 + $0x158] sm:$0xff]
        %v895 = vld [vmem:[#allocation8 + $0x160] sm:$0xff]
        %v896 = vld [vmem:[#allocation8 + $0x168] sm:$0xff]
        %v897 = vld [vmem:[#allocation8 + $0x170] sm:$0xff]
        %v898 = vld [vmem:[#allocation8 + $0x178] sm:$0xff]
        %v899 = vld [vmem:[#allocation8 + $0x180] sm:$0xff]
        %v900 = vld [vmem:[#allocation8 + $0x188] sm:$0xff]
        %v901 = vld [vmem:[#allocation8 + $0x190] sm:$0xff]
        %v902 = vld [vmem:[#allocation8 + $0x198] sm:$0xff]
        %v903 = vld [vmem:[#allocation8 + $0x1a0] sm:$0xff]
        %v904 = vld [vmem:[#allocation8 + $0x1a8] sm:$0xff]
        %v905 = vld [vmem:[#allocation8 + $0x1b0] sm:$0xff]
        %v906 = vld [vmem:[#allocation8 + $0x1b8] sm:$0xff]
        %v907 = vld [vmem:[#allocation8 + $0x1c0] sm:$0xff]
        %v908 = vld [vmem:[#allocation8 + $0x1c8] sm:$0xff]
        %v909 = vld [vmem:[#allocation8 + $0x1d0] sm:$0xff]
        %v910 = vld [vmem:[#allocation8 + $0x1d8] sm:$0xff]
        %v911 = vld [vmem:[#allocation8 + $0x1e0] sm:$0xff]
        %v912 = vld [vmem:[#allocation8 + $0x1e8] sm:$0xff]
        %v913 = vld [vmem:[#allocation8 + $0x1f0] sm:$0xff]
        %v914 = vld [vmem:[#allocation8 + $0x1f8] sm:$0xff]
        %v915 = vld [vmem:[#allocation8 + $0x200] sm:$0xff]
        %v916 = vld [vmem:[#allocation8 + $0x208] sm:$0xff]
        %v917 = vld [vmem:[#allocation8 + $0x210] sm:$0xff]
        %v918 = vld [vmem:[#allocation8 + $0x218] sm:$0xff]
        %v919 = vld [vmem:[#allocation8 + $0x220] sm:$0xff]
        %v920 = vld [vmem:[#allocation8 + $0x228] sm:$0xff]
        %v921 = vld [vmem:[#allocation8 + $0x230] sm:$0xff]
        %v922 = vld [vmem:[#allocation8 + $0x238] sm:$0xff]
        %v923 = vld [vmem:[#allocation8 + $0x240] sm:$0xff]
        %v924 = vld [vmem:[#allocation8 + $0x248] sm:$0xff]
        %v925 = vld [vmem:[#allocation8 + $0x250] sm:$0xff]
        %v926 = vld [vmem:[#allocation8 + $0x258] sm:$0xff]
        %v927 = vld [vmem:[#allocation8 + $0x260] sm:$0xff]
        %v928 = vld [vmem:[#allocation8 + $0x268] sm:$0xff]
        %v929 = vld [vmem:[#allocation8 + $0x270] sm:$0xff]
        %v930 = vld [vmem:[#allocation8 + $0x278] sm:$0xff]
        %v931 = vld [vmem:[#allocation8 + $0x280] sm:$0xff]
        %v932 = vld [vmem:[#allocation8 + $0x288] sm:$0xff]
        %v933 = vld [vmem:[#allocation8 + $0x290] sm:$0xff]
        %v934 = vld [vmem:[#allocation8 + $0x298] sm:$0xff]
        %v935 = vld [vmem:[#allocation8 + $0x2a0] sm:$0xff]
        %v936 = vld [vmem:[#allocation8 + $0x2a8] sm:$0xff]
        %v937 = vld [vmem:[#allocation8 + $0x2b0] sm:$0xff]
        %v938 = vld [vmem:[#allocation8 + $0x2b8] sm:$0xff]
        %v939 = vld [vmem:[#allocation8 + $0x2c0] sm:$0xff]
        %v940 = vld [vmem:[#allocation8 + $0x2c8] sm:$0xff]
        %v941 = vld [vmem:[#allocation8 + $0x2d0] sm:$0xff]
        %v942 = vld [vmem:[#allocation8 + $0x2d8] sm:$0xff]
        %v943 = vld [vmem:[#allocation8 + $0x2e0] sm:$0xff]
        %v944 = vld [vmem:[#allocation8 + $0x2e8] sm:$0xff]
        %v945 = vld [vmem:[#allocation8 + $0x2f0] sm:$0xff]
        %v946 = vld [vmem:[#allocation8 + $0x2f8] sm:$0xff]
        %v947 = vld [vmem:[#allocation8 + $0x300] sm:$0xff]
        %v948 = vld [vmem:[#allocation8 + $0x308] sm:$0xff]
        %v949 = vld [vmem:[#allocation8 + $0x310] sm:$0xff]
        %v950 = vld [vmem:[#allocation8 + $0x318] sm:$0xff]
        %v951 = vld [vmem:[#allocation8 + $0x320] sm:$0xff]
        %v952 = vld [vmem:[#allocation8 + $0x328] sm:$0xff]
        %v953 = vld [vmem:[#allocation8 + $0x330] sm:$0xff]
        %v954 = vld [vmem:[#allocation8 + $0x338] sm:$0xff]
        %v955 = vld [vmem:[#allocation8 + $0x340] sm:$0xff]
        %v956 = vld [vmem:[#allocation8 + $0x348] sm:$0xff]
        %v957 = vld [vmem:[#allocation8 + $0x350] sm:$0xff]
        %v958 = vld [vmem:[#allocation8 + $0x358] sm:$0xff]
        %v959 = vld [vmem:[#allocation8 + $0x360] sm:$0xff]
        %v960 = vld [vmem:[#allocation8 + $0x368] sm:$0xff]
        %v961 = vld [vmem:[#allocation8 + $0x370] sm:$0xff]
        %v962 = vld [vmem:[#allocation8 + $0x378] sm:$0xff]
        %v963 = vld [vmem:[#allocation8 + $0x380] sm:$0xff]
        %v964 = vld [vmem:[#allocation8 + $0x388] sm:$0xff]
        %v965 = vld [vmem:[#allocation8 + $0x390] sm:$0xff]
        %v966 = vld [vmem:[#allocation8 + $0x398] sm:$0xff]
        %v967 = vld [vmem:[#allocation8 + $0x3a0] sm:$0xff]
        %v968 = vld [vmem:[#allocation8 + $0x3a8] sm:$0xff]
        %v969 = vld [vmem:[#allocation8 + $0x3b0] sm:$0xff]
        %v970 = vld [vmem:[#allocation8 + $0x3b8] sm:$0xff]
        %v971 = vld [vmem:[#allocation8 + $0x3c0] sm:$0xff]
        %v972 = vld [vmem:[#allocation8 + $0x3c8] sm:$0xff]
        %v973 = vld [vmem:[#allocation8 + $0x3d0] sm:$0xff]
        %v974 = vld [vmem:[#allocation8 + $0x3d8] sm:$0xff]
        %v975 = vld [vmem:[#allocation8 + $0x3e0] sm:$0xff]
        %v976 = vld [vmem:[#allocation8 + $0x3e8] sm:$0xff]
        %v977 = vld [vmem:[#allocation8 + $0x3f0] sm:$0xff]
        %v978 = vld [vmem:[#allocation8 + $0x3f8] sm:$0xff]
        %v979 = vld [vmem:[#allocation8 + $0x400] sm:$0xff]
        %v980 = vld [vmem:[#allocation8 + $0x408] sm:$0xff]
        %v981 = vld [vmem:[#allocation8 + $0x410] sm:$0xff]
        %v982 = vld [vmem:[#allocation8 + $0x418] sm:$0xff]
        %v983 = vld [vmem:[#allocation8 + $0x420] sm:$0xff]
        %v984 = vld [vmem:[#allocation8 + $0x428] sm:$0xff]
        %v985 = vld [vmem:[#allocation8 + $0x430] sm:$0xff]
        %v986 = vld [vmem:[#allocation8 + $0x438] sm:$0xff]
        %v987 = vld [vmem:[#allocation8 + $0x440] sm:$0xff]
        %v988 = vld [vmem:[#allocation8 + $0x448] sm:$0xff]
        %v989 = vld [vmem:[#allocation8 + $0x450] sm:$0xff]
        %v990 = vld [vmem:[#allocation8 + $0x458] sm:$0xff]
        %v991 = vld [vmem:[#allocation8 + $0x460] sm:$0xff]
        %v992 = vld [vmem:[#allocation8 + $0x468] sm:$0xff]
        %v993 = vld [vmem:[#allocation8 + $0x470] sm:$0xff]
        %v994 = vld [vmem:[#allocation8 + $0x478] sm:$0xff]
        %v996 = vlaneseq
        %v997 = vshrl.u32 %v996, 7
        %v998 = vsub.s32 0, %v997
        %v999 = vrot.slane %v416, %v998
        %1001 = vmatprep.subr.mxu0 0.0
        %1002 = vmatpush1.msra.mxu0 %v866
        %1003 = vmatprep.subr.mxu0 0.0
        %1004 = vmatpush1.msra.mxu0 %v865
        %1005 = vmatprep.subr.mxu0 0.0
        %1006 = vmatpush1.msra.mxu0 %v864
        %1007 = vmatprep.subr.mxu0 0.0
        %1008 = vmatpush1.msra.mxu0 %v863
        %1009 = vmatprep.subr.mxu0 0.0
        %1010 = vmatpush1.msra.mxu0 %v862
        %1011 = vmatprep.subr.mxu0 0.0
        %1012 = vmatpush1.msra.mxu0 %v861
        %1013 = vmatprep.subr.mxu0 0.0
        %1014 = vmatpush1.msra.mxu0 %v860
        %1015 = vmatprep.subr.mxu0 0.0
        %1016 = vmatpush1.msra.mxu0 %v859
        %1017 = vmatprep.subr.mxu0 0.0
        %1018 = vmatpush1.msra.mxu0 %v858
        %1019 = vmatprep.subr.mxu0 0.0
        %1020 = vmatpush1.msra.mxu0 %v857
        %1021 = vmatprep.subr.mxu0 0.0
        %1022 = vmatpush1.msra.mxu0 %v856
        %1023 = vmatprep.subr.mxu0 0.0
        %1024 = vmatpush1.msra.mxu0 %v855
        %1025 = vmatprep.subr.mxu0 0.0
        %1026 = vmatpush1.msra.mxu0 %v854
        %1027 = vmatprep.subr.mxu0 0.0
        %1028 = vmatpush1.msra.mxu0 %v853
        %1029 = vmatprep.subr.mxu0 0.0
        %1030 = vmatpush1.msra.mxu0 %v852
        %1031 = vmatprep.subr.mxu0 0.0
        %1032 = vmatpush1.msra.mxu0 %v851
        %1033 = vmatprep.subr.mxu0 0.0
        %1034 = vmatpush2.msra.mxu0 %v882
        %1035 = vmatprep.subr.mxu0 0.0
        %1036 = vmatpush2.msra.mxu0 %v881
        %1037 = vmatprep.subr.mxu0 0.0
        %1038 = vmatpush2.msra.mxu0 %v880
        %1039 = vmatprep.subr.mxu0 0.0
        %1040 = vmatpush2.msra.mxu0 %v879
        %1041 = vmatprep.subr.mxu0 0.0
        %1042 = vmatpush2.msra.mxu0 %v878
        %1043 = vmatprep.subr.mxu0 0.0
        %1044 = vmatpush2.msra.mxu0 %v877
        %1045 = vmatprep.subr.mxu0 0.0
        %1046 = vmatpush2.msra.mxu0 %v876
        %1047 = vmatprep.subr.mxu0 0.0
        %1048 = vmatpush2.msra.mxu0 %v875
        %1049 = vmatprep.subr.mxu0 0.0
        %1050 = vmatpush2.msra.mxu0 %v874
        %1051 = vmatprep.subr.mxu0 0.0
        %1052 = vmatpush2.msra.mxu0 %v873
        %1053 = vmatprep.subr.mxu0 0.0
        %1054 = vmatpush2.msra.mxu0 %v872
        %1055 = vmatprep.subr.mxu0 0.0
        %1056 = vmatpush2.msra.mxu0 %v871
        %1057 = vmatprep.subr.mxu0 0.0
        %1058 = vmatpush2.msra.mxu0 %v870
        %1059 = vmatprep.subr.mxu0 0.0
        %1060 = vmatpush2.msra.mxu0 %v869
        %1061 = vmatprep.subr.mxu0 0.0
        %1062 = vmatpush2.msra.mxu0 %v868
        %1063 = vmatprep.subr.mxu0 0.0
        %1064 = vmatpush2.msra.mxu0 %v867
        %1065 = vmatprep.mubr.f32.mxu0 %v708
        %1066 = vmatmul.mubr.f32.gmra.mxu0 %v707
        %v1067 = vpop.f32.mrf.mxu0
        %v1068 = vadd.f32 %v999, %v1067
        %v1069 = vpop.f32.mrf.mxu0
        %1070 = vmatprep.mubr.f32.mxu0 %v717
        %1071 = vmatmul.mubr.f32.gmra.mxu0 %v716
        %v1072 = vpop.f32.mrf.mxu0
        %v1073 = vadd.f32 %v999, %v1072
        %v1074 = vpop.f32.mrf.mxu0
        %1075 = vmatprep.mubr.f32.mxu0 %v726
        %1076 = vmatmul.mubr.f32.gmra.mxu0 %v725
        %v1077 = vpop.f32.mrf.mxu0
        %v1078 = vadd.f32 %v999, %v1077
        %v1079 = vpop.f32.mrf.mxu0
        %1080 = vmatprep.mubr.f32.mxu0 %v735
        %1081 = vmatmul.mubr.f32.gmra.mxu0 %v734
        %v1082 = vpop.f32.mrf.mxu0
        %v1083 = vadd.f32 %v999, %v1082
        %v1084 = vpop.f32.mrf.mxu0
        %1085 = vmatprep.mubr.f32.mxu0 %v744
        %1086 = vmatmul.mubr.f32.gmra.mxu0 %v743
        %v1087 = vpop.f32.mrf.mxu0
        %v1088 = vadd.f32 %v999, %v1087
        %v1089 = vpop.f32.mrf.mxu0
        %1090 = vmatprep.mubr.f32.mxu0 %v753
        %1091 = vmatmul.mubr.f32.gmra.mxu0 %v752
        %v1092 = vpop.f32.mrf.mxu0
        %v1093 = vadd.f32 %v999, %v1092
        %v1094 = vpop.f32.mrf.mxu0
        %1095 = vmatprep.mubr.f32.mxu0 %v762
        %1096 = vmatmul.mubr.f32.gmra.mxu0 %v761
        %v1097 = vpop.f32.mrf.mxu0
        %v1098 = vadd.f32 %v999, %v1097
        %v1099 = vpop.f32.mrf.mxu0
        %1100 = vmatprep.mubr.f32.mxu0 %v771
        %1101 = vmatmul.mubr.f32.gmra.mxu0 %v770
        %v1102 = vpop.f32.mrf.mxu0
        %v1103 = vadd.f32 %v999, %v1102
        %v1104 = vpop.f32.mrf.mxu0
        %1105 = vmatprep.mubr.f32.mxu0 %v780
        %1106 = vmatmul.mubr.f32.gmra.mxu0 %v779
        %v1107 = vpop.f32.mrf.mxu0
        %v1108 = vadd.f32 %v999, %v1107
        %v1109 = vpop.f32.mrf.mxu0
        %1110 = vmatprep.mubr.f32.mxu0 %v789
        %1111 = vmatmul.mubr.f32.gmra.mxu0 %v788
        %v1112 = vpop.f32.mrf.mxu0
        %v1113 = vadd.f32 %v999, %v1112
        %v1114 = vpop.f32.mrf.mxu0
        %1115 = vmatprep.mubr.f32.mxu0 %v798
        %1116 = vmatmul.mubr.f32.gmra.mxu0 %v797
        %v1117 = vpop.f32.mrf.mxu0
        %v1118 = vadd.f32 %v999, %v1117
        %v1119 = vpop.f32.mrf.mxu0
        %1120 = vmatprep.mubr.f32.mxu0 %v807
        %1121 = vmatmul.mubr.f32.gmra.mxu0 %v806
        %v1122 = vpop.f32.mrf.mxu0
        %v1123 = vadd.f32 %v999, %v1122
        %v1124 = vpop.f32.mrf.mxu0
        %1125 = vmatprep.mubr.f32.mxu0 %v816
        %1126 = vmatmul.mubr.f32.gmra.mxu0 %v815
        %v1127 = vpop.f32.mrf.mxu0
        %v1128 = vadd.f32 %v999, %v1127
        %v1129 = vpop.f32.mrf.mxu0
        %1130 = vmatprep.mubr.f32.mxu0 %v825
        %1131 = vmatmul.mubr.f32.gmra.mxu0 %v824
        %v1132 = vpop.f32.mrf.mxu0
        %v1133 = vadd.f32 %v999, %v1132
        %v1134 = vpop.f32.mrf.mxu0
        %1135 = vmatprep.mubr.f32.mxu0 %v834
        %1136 = vmatmul.mubr.f32.gmra.mxu0 %v833
        %v1137 = vpop.f32.mrf.mxu0
        %v1138 = vadd.f32 %v999, %v1137
        %v1139 = vpop.f32.mrf.mxu0
        %1140 = vmatprep.mubr.f32.mxu0 %v843
        %1141 = vmatmul.mubr.f32.gmra.mxu0 %v842
        %v1142 = vpop.f32.mrf.mxu0
        %v1143 = vadd.f32 %v999, %v1142
        %v1144 = vpop.f32.mrf.mxu0
        %1145 = vdwg.mxu0
        %1146 = vmatprep.subr.mxu0 0.0
        %1147 = vmatpush1.msra.mxu0 %v898
        %1148 = vmatprep.subr.mxu0 0.0
        %1149 = vmatpush1.msra.mxu0 %v897
        %1150 = vmatprep.subr.mxu0 0.0
        %1151 = vmatpush1.msra.mxu0 %v896
        %1152 = vmatprep.subr.mxu0 0.0
        %1153 = vmatpush1.msra.mxu0 %v895
        %1154 = vmatprep.subr.mxu0 0.0
        %1155 = vmatpush1.msra.mxu0 %v894
        %1156 = vmatprep.subr.mxu0 0.0
        %1157 = vmatpush1.msra.mxu0 %v893
        %1158 = vmatprep.subr.mxu0 0.0
        %1159 = vmatpush1.msra.mxu0 %v892
        %1160 = vmatprep.subr.mxu0 0.0
        %1161 = vmatpush1.msra.mxu0 %v891
        %1162 = vmatprep.subr.mxu0 0.0
        %1163 = vmatpush1.msra.mxu0 %v890
        %1164 = vmatprep.subr.mxu0 0.0
        %1165 = vmatpush1.msra.mxu0 %v889
        %1166 = vmatprep.subr.mxu0 0.0
        %1167 = vmatpush1.msra.mxu0 %v888
        %1168 = vmatprep.subr.mxu0 0.0
        %1169 = vmatpush1.msra.mxu0 %v887
        %1170 = vmatprep.subr.mxu0 0.0
        %1171 = vmatpush1.msra.mxu0 %v886
        %1172 = vmatprep.subr.mxu0 0.0
        %1173 = vmatpush1.msra.mxu0 %v885
        %1174 = vmatprep.subr.mxu0 0.0
        %1175 = vmatpush1.msra.mxu0 %v884
        %1176 = vmatprep.subr.mxu0 0.0
        %1177 = vmatpush1.msra.mxu0 %v883
        %1178 = vmatprep.subr.mxu0 0.0
        %1179 = vmatpush2.msra.mxu0 %v914
        %1180 = vmatprep.subr.mxu0 0.0
        %1181 = vmatpush2.msra.mxu0 %v913
        %1182 = vmatprep.subr.mxu0 0.0
        %1183 = vmatpush2.msra.mxu0 %v912
        %1184 = vmatprep.subr.mxu0 0.0
        %1185 = vmatpush2.msra.mxu0 %v911
        %1186 = vmatprep.subr.mxu0 0.0
        %1187 = vmatpush2.msra.mxu0 %v910
        %1188 = vmatprep.subr.mxu0 0.0
        %1189 = vmatpush2.msra.mxu0 %v909
        %1190 = vmatprep.subr.mxu0 0.0
        %1191 = vmatpush2.msra.mxu0 %v908
        %1192 = vmatprep.subr.mxu0 0.0
        %1193 = vmatpush2.msra.mxu0 %v907
        %1194 = vmatprep.subr.mxu0 0.0
        %1195 = vmatpush2.msra.mxu0 %v906
        %1196 = vmatprep.subr.mxu0 0.0
        %1197 = vmatpush2.msra.mxu0 %v905
        %1198 = vmatprep.subr.mxu0 0.0
        %1199 = vmatpush2.msra.mxu0 %v904
        %1200 = vmatprep.subr.mxu0 0.0
        %1201 = vmatpush2.msra.mxu0 %v903
        %1202 = vmatprep.subr.mxu0 0.0
        %1203 = vmatpush2.msra.mxu0 %v902
        %1204 = vmatprep.subr.mxu0 0.0
        %1205 = vmatpush2.msra.mxu0 %v901
        %1206 = vmatprep.subr.mxu0 0.0
        %1207 = vmatpush2.msra.mxu0 %v900
        %1208 = vmatprep.subr.mxu0 0.0
        %1209 = vmatpush2.msra.mxu0 %v899
        %1210 = vmatprep.mubr.f32.mxu0 %v710
        %1211 = vmatmul.mubr.f32.gmra.mxu0 %v709
        %v1212 = vpop.f32.mrf.mxu0
        %v1213 = vadd.f32 %v1068, %v1212
        %v1214 = vpop.f32.mrf.mxu0
        %1215 = vmatprep.mubr.f32.mxu0 %v719
        %1216 = vmatmul.mubr.f32.gmra.mxu0 %v718
        %v1217 = vpop.f32.mrf.mxu0
        %v1218 = vadd.f32 %v1073, %v1217
        %v1219 = vpop.f32.mrf.mxu0
        %1220 = vmatprep.mubr.f32.mxu0 %v728
        %1221 = vmatmul.mubr.f32.gmra.mxu0 %v727
        %v1222 = vpop.f32.mrf.mxu0
        %v1223 = vadd.f32 %v1078, %v1222
        %v1224 = vpop.f32.mrf.mxu0
        %1225 = vmatprep.mubr.f32.mxu0 %v737
        %1226 = vmatmul.mubr.f32.gmra.mxu0 %v736
        %v1227 = vpop.f32.mrf.mxu0
        %v1228 = vadd.f32 %v1083, %v1227
        %v1229 = vpop.f32.mrf.mxu0
        %1230 = vmatprep.mubr.f32.mxu0 %v746
        %1231 = vmatmul.mubr.f32.gmra.mxu0 %v745
        %v1232 = vpop.f32.mrf.mxu0
        %v1233 = vadd.f32 %v1088, %v1232
        %v1234 = vpop.f32.mrf.mxu0
        %1235 = vmatprep.mubr.f32.mxu0 %v755
        %1236 = vmatmul.mubr.f32.gmra.mxu0 %v754
        %v1237 = vpop.f32.mrf.mxu0
        %v1238 = vadd.f32 %v1093, %v1237
        %v1239 = vpop.f32.mrf.mxu0
        %1240 = vmatprep.mubr.f32.mxu0 %v764
        %1241 = vmatmul.mubr.f32.gmra.mxu0 %v763
        %v1242 = vpop.f32.mrf.mxu0
        %v1243 = vadd.f32 %v1098, %v1242
        %v1244 = vpop.f32.mrf.mxu0
        %1245 = vmatprep.mubr.f32.mxu0 %v773
        %1246 = vmatmul.mubr.f32.gmra.mxu0 %v772
        %v1247 = vpop.f32.mrf.mxu0
        %v1248 = vadd.f32 %v1103, %v1247
        %v1249 = vpop.f32.mrf.mxu0
        %1250 = vmatprep.mubr.f32.mxu0 %v782
        %1251 = vmatmul.mubr.f32.gmra.mxu0 %v781
        %v1252 = vpop.f32.mrf.mxu0
        %v1253 = vadd.f32 %v1108, %v1252
        %v1254 = vpop.f32.mrf.mxu0
        %1255 = vmatprep.mubr.f32.mxu0 %v791
        %1256 = vmatmul.mubr.f32.gmra.mxu0 %v790
        %v1257 = vpop.f32.mrf.mxu0
        %v1258 = vadd.f32 %v1113, %v1257
        %v1259 = vpop.f32.mrf.mxu0
        %1260 = vmatprep.mubr.f32.mxu0 %v800
        %1261 = vmatmul.mubr.f32.gmra.mxu0 %v799
        %v1262 = vpop.f32.mrf.mxu0
        %v1263 = vadd.f32 %v1118, %v1262
        %v1264 = vpop.f32.mrf.mxu0
        %1265 = vmatprep.mubr.f32.mxu0 %v809
        %1266 = vmatmul.mubr.f32.gmra.mxu0 %v808
        %v1267 = vpop.f32.mrf.mxu0
        %v1268 = vadd.f32 %v1123, %v1267
        %v1269 = vpop.f32.mrf.mxu0
        %1270 = vmatprep.mubr.f32.mxu0 %v818
        %1271 = vmatmul.mubr.f32.gmra.mxu0 %v817
        %v1272 = vpop.f32.mrf.mxu0
        %v1273 = vadd.f32 %v1128, %v1272
        %v1274 = vpop.f32.mrf.mxu0
        %1275 = vmatprep.mubr.f32.mxu0 %v827
        %1276 = vmatmul.mubr.f32.gmra.mxu0 %v826
        %v1277 = vpop.f32.mrf.mxu0
        %v1278 = vadd.f32 %v1133, %v1277
        %v1279 = vpop.f32.mrf.mxu0
        %1280 = vmatprep.mubr.f32.mxu0 %v836
        %1281 = vmatmul.mubr.f32.gmra.mxu0 %v835
        %v1282 = vpop.f32.mrf.mxu0
        %v1283 = vadd.f32 %v1138, %v1282
        %v1284 = vpop.f32.mrf.mxu0
        %1285 = vmatprep.mubr.f32.mxu0 %v845
        %1286 = vmatmul.mubr.f32.gmra.mxu0 %v844
        %v1287 = vpop.f32.mrf.mxu0
        %v1288 = vadd.f32 %v1143, %v1287
        %v1289 = vpop.f32.mrf.mxu0
        %1290 = vdwg.mxu0
        %1291 = vmatprep.subr.mxu0 0.0
        %1292 = vmatpush1.msra.mxu0 %v930
        %1293 = vmatprep.subr.mxu0 0.0
        %1294 = vmatpush1.msra.mxu0 %v929
        %1295 = vmatprep.subr.mxu0 0.0
        %1296 = vmatpush1.msra.mxu0 %v928
        %1297 = vmatprep.subr.mxu0 0.0
        %1298 = vmatpush1.msra.mxu0 %v927
        %1299 = vmatprep.subr.mxu0 0.0
        %1300 = vmatpush1.msra.mxu0 %v926
        %1301 = vmatprep.subr.mxu0 0.0
        %1302 = vmatpush1.msra.mxu0 %v925
        %1303 = vmatprep.subr.mxu0 0.0
        %1304 = vmatpush1.msra.mxu0 %v924
        %1305 = vmatprep.subr.mxu0 0.0
        %1306 = vmatpush1.msra.mxu0 %v923
        %1307 = vmatprep.subr.mxu0 0.0
        %1308 = vmatpush1.msra.mxu0 %v922
        %1309 = vmatprep.subr.mxu0 0.0
        %1310 = vmatpush1.msra.mxu0 %v921
        %1311 = vmatprep.subr.mxu0 0.0
        %1312 = vmatpush1.msra.mxu0 %v920
        %1313 = vmatprep.subr.mxu0 0.0
        %1314 = vmatpush1.msra.mxu0 %v919
        %1315 = vmatprep.subr.mxu0 0.0
        %1316 = vmatpush1.msra.mxu0 %v918
        %1317 = vmatprep.subr.mxu0 0.0
        %1318 = vmatpush1.msra.mxu0 %v917
        %1319 = vmatprep.subr.mxu0 0.0
        %1320 = vmatpush1.msra.mxu0 %v916
        %1321 = vmatprep.subr.mxu0 0.0
        %1322 = vmatpush1.msra.mxu0 %v915
        %1323 = vmatprep.subr.mxu0 0.0
        %1324 = vmatpush2.msra.mxu0 %v946
        %1325 = vmatprep.subr.mxu0 0.0
        %1326 = vmatpush2.msra.mxu0 %v945
        %1327 = vmatprep.subr.mxu0 0.0
        %1328 = vmatpush2.msra.mxu0 %v944
        %1329 = vmatprep.subr.mxu0 0.0
        %1330 = vmatpush2.msra.mxu0 %v943
        %1331 = vmatprep.subr.mxu0 0.0
        %1332 = vmatpush2.msra.mxu0 %v942
        %1333 = vmatprep.subr.mxu0 0.0
        %1334 = vmatpush2.msra.mxu0 %v941
        %1335 = vmatprep.subr.mxu0 0.0
        %1336 = vmatpush2.msra.mxu0 %v940
        %1337 = vmatprep.subr.mxu0 0.0
        %1338 = vmatpush2.msra.mxu0 %v939
        %1339 = vmatprep.subr.mxu0 0.0
        %1340 = vmatpush2.msra.mxu0 %v938
        %1341 = vmatprep.subr.mxu0 0.0
        %1342 = vmatpush2.msra.mxu0 %v937
        %1343 = vmatprep.subr.mxu0 0.0
        %1344 = vmatpush2.msra.mxu0 %v936
        %1345 = vmatprep.subr.mxu0 0.0
        %1346 = vmatpush2.msra.mxu0 %v935
        %1347 = vmatprep.subr.mxu0 0.0
        %1348 = vmatpush2.msra.mxu0 %v934
        %1349 = vmatprep.subr.mxu0 0.0
        %1350 = vmatpush2.msra.mxu0 %v933
        %1351 = vmatprep.subr.mxu0 0.0
        %1352 = vmatpush2.msra.mxu0 %v932
        %1353 = vmatprep.subr.mxu0 0.0
        %1354 = vmatpush2.msra.mxu0 %v931
        %1355 = vmatprep.mubr.f32.mxu0 %v712
        %1356 = vmatmul.mubr.f32.gmra.mxu0 %v711
        %v1357 = vpop.f32.mrf.mxu0
        %v1358 = vadd.f32 %v1213, %v1357
        %v1359 = vpop.f32.mrf.mxu0
        %1360 = vmatprep.mubr.f32.mxu0 %v721
        %1361 = vmatmul.mubr.f32.gmra.mxu0 %v720
        %v1362 = vpop.f32.mrf.mxu0
        %v1363 = vadd.f32 %v1218, %v1362
        %v1364 = vpop.f32.mrf.mxu0
        %1365 = vmatprep.mubr.f32.mxu0 %v730
        %1366 = vmatmul.mubr.f32.gmra.mxu0 %v729
        %v1367 = vpop.f32.mrf.mxu0
        %v1368 = vadd.f32 %v1223, %v1367
        %v1369 = vpop.f32.mrf.mxu0
        %1370 = vmatprep.mubr.f32.mxu0 %v739
        %1371 = vmatmul.mubr.f32.gmra.mxu0 %v738
        %v1372 = vpop.f32.mrf.mxu0
        %v1373 = vadd.f32 %v1228, %v1372
        %v1374 = vpop.f32.mrf.mxu0
        %1375 = vmatprep.mubr.f32.mxu0 %v748
        %1376 = vmatmul.mubr.f32.gmra.mxu0 %v747
        %v1377 = vpop.f32.mrf.mxu0
        %v1378 = vadd.f32 %v1233, %v1377
        %v1379 = vpop.f32.mrf.mxu0
        %1380 = vmatprep.mubr.f32.mxu0 %v757
        %1381 = vmatmul.mubr.f32.gmra.mxu0 %v756
        %v1382 = vpop.f32.mrf.mxu0
        %v1383 = vadd.f32 %v1238, %v1382
        %v1384 = vpop.f32.mrf.mxu0
        %1385 = vmatprep.mubr.f32.mxu0 %v766
        %1386 = vmatmul.mubr.f32.gmra.mxu0 %v765
        %v1387 = vpop.f32.mrf.mxu0
        %v1388 = vadd.f32 %v1243, %v1387
        %v1389 = vpop.f32.mrf.mxu0
        %1390 = vmatprep.mubr.f32.mxu0 %v775
        %1391 = vmatmul.mubr.f32.gmra.mxu0 %v774
        %v1392 = vpop.f32.mrf.mxu0
        %v1393 = vadd.f32 %v1248, %v1392
        %v1394 = vpop.f32.mrf.mxu0
        %1395 = vmatprep.mubr.f32.mxu0 %v784
        %1396 = vmatmul.mubr.f32.gmra.mxu0 %v783
        %v1397 = vpop.f32.mrf.mxu0
        %v1398 = vadd.f32 %v1253, %v1397
        %v1399 = vpop.f32.mrf.mxu0
        %1400 = vmatprep.mubr.f32.mxu0 %v793
        %1401 = vmatmul.mubr.f32.gmra.mxu0 %v792
        %v1402 = vpop.f32.mrf.mxu0
        %v1403 = vadd.f32 %v1258, %v1402
        %v1404 = vpop.f32.mrf.mxu0
        %1405 = vmatprep.mubr.f32.mxu0 %v802
        %1406 = vmatmul.mubr.f32.gmra.mxu0 %v801
        %v1407 = vpop.f32.mrf.mxu0
        %v1408 = vadd.f32 %v1263, %v1407
        %v1409 = vpop.f32.mrf.mxu0
        %1410 = vmatprep.mubr.f32.mxu0 %v811
        %1411 = vmatmul.mubr.f32.gmra.mxu0 %v810
        %v1412 = vpop.f32.mrf.mxu0
        %v1413 = vadd.f32 %v1268, %v1412
        %v1414 = vpop.f32.mrf.mxu0
        %1415 = vmatprep.mubr.f32.mxu0 %v820
        %1416 = vmatmul.mubr.f32.gmra.mxu0 %v819
        %v1417 = vpop.f32.mrf.mxu0
        %v1418 = vadd.f32 %v1273, %v1417
        %v1419 = vpop.f32.mrf.mxu0
        %1420 = vmatprep.mubr.f32.mxu0 %v829
        %1421 = vmatmul.mubr.f32.gmra.mxu0 %v828
        %v1422 = vpop.f32.mrf.mxu0
        %v1423 = vadd.f32 %v1278, %v1422
        %v1424 = vpop.f32.mrf.mxu0
        %1425 = vmatprep.mubr.f32.mxu0 %v838
        %1426 = vmatmul.mubr.f32.gmra.mxu0 %v837
        %v1427 = vpop.f32.mrf.mxu0
        %v1428 = vadd.f32 %v1283, %v1427
        %v1429 = vpop.f32.mrf.mxu0
        %1430 = vmatprep.mubr.f32.mxu0 %v847
        %1431 = vmatmul.mubr.f32.gmra.mxu0 %v846
        %v1432 = vpop.f32.mrf.mxu0
        %v1433 = vadd.f32 %v1288, %v1432
        %v1434 = vpop.f32.mrf.mxu0
        %1435 = vdwg.mxu0
        %1436 = vmatprep.subr.mxu0 0.0
        %1437 = vmatpush1.msra.mxu0 %v962
        %1438 = vmatprep.subr.mxu0 0.0
        %1439 = vmatpush1.msra.mxu0 %v961
        %1440 = vmatprep.subr.mxu0 0.0
        %1441 = vmatpush1.msra.mxu0 %v960
        %1442 = vmatprep.subr.mxu0 0.0
        %1443 = vmatpush1.msra.mxu0 %v959
        %1444 = vmatprep.subr.mxu0 0.0
        %1445 = vmatpush1.msra.mxu0 %v958
        %1446 = vmatprep.subr.mxu0 0.0
        %1447 = vmatpush1.msra.mxu0 %v957
        %1448 = vmatprep.subr.mxu0 0.0
        %1449 = vmatpush1.msra.mxu0 %v956
        %1450 = vmatprep.subr.mxu0 0.0
        %1451 = vmatpush1.msra.mxu0 %v955
        %1452 = vmatprep.subr.mxu0 0.0
        %1453 = vmatpush1.msra.mxu0 %v954
        %1454 = vmatprep.subr.mxu0 0.0
        %1455 = vmatpush1.msra.mxu0 %v953
        %1456 = vmatprep.subr.mxu0 0.0
        %1457 = vmatpush1.msra.mxu0 %v952
        %1458 = vmatprep.subr.mxu0 0.0
        %1459 = vmatpush1.msra.mxu0 %v951
        %1460 = vmatprep.subr.mxu0 0.0
        %1461 = vmatpush1.msra.mxu0 %v950
        %1462 = vmatprep.subr.mxu0 0.0
        %1463 = vmatpush1.msra.mxu0 %v949
        %1464 = vmatprep.subr.mxu0 0.0
        %1465 = vmatpush1.msra.mxu0 %v948
        %1466 = vmatprep.subr.mxu0 0.0
        %1467 = vmatpush1.msra.mxu0 %v947
        %1468 = vmatprep.subr.mxu0 0.0
        %1469 = vmatpush2.msra.mxu0 %v978
        %1470 = vmatprep.subr.mxu0 0.0
        %1471 = vmatpush2.msra.mxu0 %v977
        %1472 = vmatprep.subr.mxu0 0.0
        %1473 = vmatpush2.msra.mxu0 %v976
        %1474 = vmatprep.subr.mxu0 0.0
        %1475 = vmatpush2.msra.mxu0 %v975
        %1476 = vmatprep.subr.mxu0 0.0
        %1477 = vmatpush2.msra.mxu0 %v974
        %1478 = vmatprep.subr.mxu0 0.0
        %1479 = vmatpush2.msra.mxu0 %v973
        %1480 = vmatprep.subr.mxu0 0.0
        %1481 = vmatpush2.msra.mxu0 %v972
        %1482 = vmatprep.subr.mxu0 0.0
        %1483 = vmatpush2.msra.mxu0 %v971
        %1484 = vmatprep.subr.mxu0 0.0
        %1485 = vmatpush2.msra.mxu0 %v970
        %1486 = vmatprep.subr.mxu0 0.0
        %1487 = vmatpush2.msra.mxu0 %v969
        %1488 = vmatprep.subr.mxu0 0.0
        %1489 = vmatpush2.msra.mxu0 %v968
        %1490 = vmatprep.subr.mxu0 0.0
        %1491 = vmatpush2.msra.mxu0 %v967
        %1492 = vmatprep.subr.mxu0 0.0
        %1493 = vmatpush2.msra.mxu0 %v966
        %1494 = vmatprep.subr.mxu0 0.0
        %1495 = vmatpush2.msra.mxu0 %v965
        %1496 = vmatprep.subr.mxu0 0.0
        %1497 = vmatpush2.msra.mxu0 %v964
        %1498 = vmatprep.subr.mxu0 0.0
        %1499 = vmatpush2.msra.mxu0 %v963
        %1500 = vmatprep.mubr.f32.mxu0 %v714
        %1501 = vmatmul.mubr.f32.gmra.mxu0 %v713
        %v1502 = vpop.f32.mrf.mxu0
        %v1503 = vadd.f32 %v1358, %v1502
        %v1504 = vpop.f32.mrf.mxu0
        %1505 = vmatprep.mubr.f32.mxu0 %v723
        %1506 = vmatmul.mubr.f32.gmra.mxu0 %v722
        %v1507 = vpop.f32.mrf.mxu0
        %v1508 = vadd.f32 %v1363, %v1507
        %v1509 = vpop.f32.mrf.mxu0
        %1510 = vmatprep.mubr.f32.mxu0 %v732
        %1511 = vmatmul.mubr.f32.gmra.mxu0 %v731
        %v1512 = vpop.f32.mrf.mxu0
        %v1513 = vadd.f32 %v1368, %v1512
        %v1514 = vpop.f32.mrf.mxu0
        %1515 = vmatprep.mubr.f32.mxu0 %v741
        %1516 = vmatmul.mubr.f32.gmra.mxu0 %v740
        %v1517 = vpop.f32.mrf.mxu0
        %v1518 = vadd.f32 %v1373, %v1517
        %v1519 = vpop.f32.mrf.mxu0
        %1520 = vmatprep.mubr.f32.mxu0 %v750
        %1521 = vmatmul.mubr.f32.gmra.mxu0 %v749
        %v1522 = vpop.f32.mrf.mxu0
        %v1523 = vadd.f32 %v1378, %v1522
        %v1524 = vpop.f32.mrf.mxu0
        %1525 = vmatprep.mubr.f32.mxu0 %v759
        %1526 = vmatmul.mubr.f32.gmra.mxu0 %v758
        %v1527 = vpop.f32.mrf.mxu0
        %v1528 = vadd.f32 %v1383, %v1527
        %v1529 = vpop.f32.mrf.mxu0
        %1530 = vmatprep.mubr.f32.mxu0 %v768
        %1531 = vmatmul.mubr.f32.gmra.mxu0 %v767
        %v1532 = vpop.f32.mrf.mxu0
        %v1533 = vadd.f32 %v1388, %v1532
        %v1534 = vpop.f32.mrf.mxu0
        %1535 = vmatprep.mubr.f32.mxu0 %v777
        %1536 = vmatmul.mubr.f32.gmra.mxu0 %v776
        %v1537 = vpop.f32.mrf.mxu0
        %v1538 = vadd.f32 %v1393, %v1537
        %v1539 = vpop.f32.mrf.mxu0
        %1540 = vmatprep.mubr.f32.mxu0 %v786
        %1541 = vmatmul.mubr.f32.gmra.mxu0 %v785
        %v1542 = vpop.f32.mrf.mxu0
        %v1543 = vadd.f32 %v1398, %v1542
        %v1544 = vpop.f32.mrf.mxu0
        %1545 = vmatprep.mubr.f32.mxu0 %v795
        %1546 = vmatmul.mubr.f32.gmra.mxu0 %v794
        %v1547 = vpop.f32.mrf.mxu0
        %v1548 = vadd.f32 %v1403, %v1547
        %v1549 = vpop.f32.mrf.mxu0
        %1550 = vmatprep.mubr.f32.mxu0 %v804
        %1551 = vmatmul.mubr.f32.gmra.mxu0 %v803
        %v1552 = vpop.f32.mrf.mxu0
        %v1553 = vadd.f32 %v1408, %v1552
        %v1554 = vpop.f32.mrf.mxu0
        %1555 = vmatprep.mubr.f32.mxu0 %v813
        %1556 = vmatmul.mubr.f32.gmra.mxu0 %v812
        %v1557 = vpop.f32.mrf.mxu0
        %v1558 = vadd.f32 %v1413, %v1557
        %v1559 = vpop.f32.mrf.mxu0
        %1560 = vmatprep.mubr.f32.mxu0 %v822
        %1561 = vmatmul.mubr.f32.gmra.mxu0 %v821
        %v1562 = vpop.f32.mrf.mxu0
        %v1563 = vadd.f32 %v1418, %v1562
        %v1564 = vpop.f32.mrf.mxu0
        %1565 = vmatprep.mubr.f32.mxu0 %v831
        %1566 = vmatmul.mubr.f32.gmra.mxu0 %v830
        %v1567 = vpop.f32.mrf.mxu0
        %v1568 = vadd.f32 %v1423, %v1567
        %v1569 = vpop.f32.mrf.mxu0
        %1570 = vmatprep.mubr.f32.mxu0 %v840
        %1571 = vmatmul.mubr.f32.gmra.mxu0 %v839
        %v1572 = vpop.f32.mrf.mxu0
        %v1573 = vadd.f32 %v1428, %v1572
        %v1574 = vpop.f32.mrf.mxu0
        %1575 = vmatprep.mubr.f32.mxu0 %v849
        %1576 = vmatmul.mubr.f32.gmra.mxu0 %v848
        %v1577 = vpop.f32.mrf.mxu0
        %v1578 = vadd.f32 %v1433, %v1577
        %v1579 = vpop.f32.mrf.mxu0
        %1580 = vdwg.mxu0
        %1581 = vmatprep.subr.mxu0 0.0
        %1582 = vmatpush1.msra.mxu0 %v994
        %1583 = vmatprep.subr.mxu0 0.0
        %1584 = vmatpush1.msra.mxu0 %v993
        %1585 = vmatprep.subr.mxu0 0.0
        %1586 = vmatpush1.msra.mxu0 %v992
        %1587 = vmatprep.subr.mxu0 0.0
        %1588 = vmatpush1.msra.mxu0 %v991
        %1589 = vmatprep.subr.mxu0 0.0
        %1590 = vmatpush1.msra.mxu0 %v990
        %1591 = vmatprep.subr.mxu0 0.0
        %1592 = vmatpush1.msra.mxu0 %v989
        %1593 = vmatprep.subr.mxu0 0.0
        %1594 = vmatpush1.msra.mxu0 %v988
        %1595 = vmatprep.subr.mxu0 0.0
        %1596 = vmatpush1.msra.mxu0 %v987
        %1597 = vmatprep.subr.mxu0 0.0
        %1598 = vmatpush1.msra.mxu0 %v986
        %1599 = vmatprep.subr.mxu0 0.0
        %1600 = vmatpush1.msra.mxu0 %v985
        %1601 = vmatprep.subr.mxu0 0.0
        %1602 = vmatpush1.msra.mxu0 %v984
        %1603 = vmatprep.subr.mxu0 0.0
        %1604 = vmatpush1.msra.mxu0 %v983
        %1605 = vmatprep.subr.mxu0 0.0
        %1606 = vmatpush1.msra.mxu0 %v982
        %1607 = vmatprep.subr.mxu0 0.0
        %1608 = vmatpush1.msra.mxu0 %v981
        %1609 = vmatprep.subr.mxu0 0.0
        %1610 = vmatpush1.msra.mxu0 %v980
        %1611 = vmatprep.subr.mxu0 0.0
        %1612 = vmatpush1.msra.mxu0 %v979
        %1613 = vmatprep.subr.mxu0 0.0
        %1614 = vmatpush2.msra.mxu0 0.0
        %1615 = vmatprep.subr.mxu0 0.0
        %1616 = vmatpush2.msra.mxu0 0.0
        %1617 = vmatprep.subr.mxu0 0.0
        %1618 = vmatpush2.msra.mxu0 0.0
        %1619 = vmatprep.subr.mxu0 0.0
        %1620 = vmatpush2.msra.mxu0 0.0
        %1621 = vmatprep.subr.mxu0 0.0
        %1622 = vmatpush2.msra.mxu0 0.0
        %1623 = vmatprep.subr.mxu0 0.0
        %1624 = vmatpush2.msra.mxu0 0.0
        %1625 = vmatprep.subr.mxu0 0.0
        %1626 = vmatpush2.msra.mxu0 0.0
        %1627 = vmatprep.subr.mxu0 0.0
        %1628 = vmatpush2.msra.mxu0 0.0
        %1629 = vmatprep.subr.mxu0 0.0
        %1630 = vmatpush2.msra.mxu0 0.0
        %1631 = vmatprep.subr.mxu0 0.0
        %1632 = vmatpush2.msra.mxu0 0.0
        %1633 = vmatprep.subr.mxu0 0.0
        %1634 = vmatpush2.msra.mxu0 0.0
        %1635 = vmatprep.subr.mxu0 0.0
        %1636 = vmatpush2.msra.mxu0 0.0
        %1637 = vmatprep.subr.mxu0 0.0
        %1638 = vmatpush2.msra.mxu0 0.0
        %1639 = vmatprep.subr.mxu0 0.0
        %1640 = vmatpush2.msra.mxu0 0.0
        %1641 = vmatprep.subr.mxu0 0.0
        %1642 = vmatpush2.msra.mxu0 0.0
        %1643 = vmatprep.subr.mxu0 0.0
        %1644 = vmatpush2.msra.mxu0 0.0
        %1645 = vmatprep.mubr.f32.mxu0 0.0
        %1646 = vmatmul.mubr.f32.gmra.mxu0 %v715
        %v1647 = vpop.f32.mrf.mxu0
        %v1648 = vadd.f32 %v1503, %v1647
        %v1649 = vpop.f32.mrf.mxu0
        %1650 = vmatprep.mubr.f32.mxu0 0.0
        %1651 = vmatmul.mubr.f32.gmra.mxu0 %v724
        %v1652 = vpop.f32.mrf.mxu0
        %v1653 = vadd.f32 %v1508, %v1652
        %v1654 = vpop.f32.mrf.mxu0
        %1655 = vmatprep.mubr.f32.mxu0 0.0
        %1656 = vmatmul.mubr.f32.gmra.mxu0 %v733
        %v1657 = vpop.f32.mrf.mxu0
        %v1658 = vadd.f32 %v1513, %v1657
        %v1659 = vpop.f32.mrf.mxu0
        %1660 = vmatprep.mubr.f32.mxu0 0.0
        %1661 = vmatmul.mubr.f32.gmra.mxu0 %v742
        %v1662 = vpop.f32.mrf.mxu0
        %v1663 = vadd.f32 %v1518, %v1662
        %v1664 = vpop.f32.mrf.mxu0
        %1665 = vmatprep.mubr.f32.mxu0 0.0
        %1666 = vmatmul.mubr.f32.gmra.mxu0 %v751
        %v1667 = vpop.f32.mrf.mxu0
        %v1668 = vadd.f32 %v1523, %v1667
        %v1669 = vpop.f32.mrf.mxu0
        %1670 = vmatprep.mubr.f32.mxu0 0.0
        %1671 = vmatmul.mubr.f32.gmra.mxu0 %v760
        %v1672 = vpop.f32.mrf.mxu0
        %v1673 = vadd.f32 %v1528, %v1672
        %v1674 = vpop.f32.mrf.mxu0
        %1675 = vmatprep.mubr.f32.mxu0 0.0
        %1676 = vmatmul.mubr.f32.gmra.mxu0 %v769
        %v1677 = vpop.f32.mrf.mxu0
        %v1678 = vadd.f32 %v1533, %v1677
        %v1679 = vpop.f32.mrf.mxu0
        %1680 = vmatprep.mubr.f32.mxu0 0.0
        %1681 = vmatmul.mubr.f32.gmra.mxu0 %v778
        %v1682 = vpop.f32.mrf.mxu0
        %v1683 = vadd.f32 %v1538, %v1682
        %v1684 = vpop.f32.mrf.mxu0
        %1685 = vmatprep.mubr.f32.mxu0 0.0
        %1686 = vmatmul.mubr.f32.gmra.mxu0 %v787
        %v1687 = vpop.f32.mrf.mxu0
        %v1688 = vadd.f32 %v1543, %v1687
        %v1689 = vpop.f32.mrf.mxu0
        %1690 = vmatprep.mubr.f32.mxu0 0.0
        %1691 = vmatmul.mubr.f32.gmra.mxu0 %v796
        %v1692 = vpop.f32.mrf.mxu0
        %v1693 = vadd.f32 %v1548, %v1692
        %v1694 = vpop.f32.mrf.mxu0
        %1695 = vmatprep.mubr.f32.mxu0 0.0
        %1696 = vmatmul.mubr.f32.gmra.mxu0 %v805
        %v1697 = vpop.f32.mrf.mxu0
        %v1698 = vadd.f32 %v1553, %v1697
        %v1699 = vpop.f32.mrf.mxu0
        %1700 = vmatprep.mubr.f32.mxu0 0.0
        %1701 = vmatmul.mubr.f32.gmra.mxu0 %v814
        %v1702 = vpop.f32.mrf.mxu0
        %v1703 = vadd.f32 %v1558, %v1702
        %v1704 = vpop.f32.mrf.mxu0
        %1705 = vmatprep.mubr.f32.mxu0 0.0
        %1706 = vmatmul.mubr.f32.gmra.mxu0 %v823
        %v1707 = vpop.f32.mrf.mxu0
        %v1708 = vadd.f32 %v1563, %v1707
        %v1709 = vpop.f32.mrf.mxu0
        %1710 = vmatprep.mubr.f32.mxu0 0.0
        %1711 = vmatmul.mubr.f32.gmra.mxu0 %v832
        %v1712 = vpop.f32.mrf.mxu0
        %v1713 = vadd.f32 %v1568, %v1712
        %v1714 = vpop.f32.mrf.mxu0
        %1715 = vmatprep.mubr.f32.mxu0 0.0
        %1716 = vmatmul.mubr.f32.gmra.mxu0 %v841
        %v1717 = vpop.f32.mrf.mxu0
        %v1718 = vadd.f32 %v1573, %v1717
        %v1719 = vpop.f32.mrf.mxu0
        %1720 = vmatprep.mubr.f32.mxu0 0.0
        %1721 = vmatmul.mubr.f32.gmra.mxu0 %v850
        %v1722 = vpop.f32.mrf.mxu0
        %v1723 = vadd.f32 %v1578, %v1722
        %v1724 = vpop.f32.mrf.mxu0
        %1725 = vdwg.mxu0
        %v1726 = vmax.f32 %v1648, 0.0
        %v1727 = vmax.f32 %v1653, 0.0
        %v1728 = vmax.f32 %v1658, 0.0
        %v1729 = vmax.f32 %v1663, 0.0
        %v1730 = vmax.f32 %v1668, 0.0
        %v1731 = vmax.f32 %v1673, 0.0
        %v1732 = vmax.f32 %v1678, 0.0
        %v1733 = vmax.f32 %v1683, 0.0
        %v1734 = vmax.f32 %v1688, 0.0
        %v1735 = vmax.f32 %v1693, 0.0
        %v1736 = vmax.f32 %v1698, 0.0
        %v1737 = vmax.f32 %v1703, 0.0
        %v1738 = vmax.f32 %v1708, 0.0
        %v1739 = vmax.f32 %v1713, 0.0
        %v1740 = vmax.f32 %v1718, 0.0
        %v1741 = vmax.f32 %v1723, 0.0
        %1742 = vst [vmem:[%s319 + $0x1] sm:$0xff] %v1726
        %1743 = vst [vmem:[%s319 + $0x9] sm:$0xff] %v1727
        %1744 = vst [vmem:[%s319 + $0x19] sm:$0xff] %v1728
        %1745 = vst [vmem:[%s319 + $0x21] sm:$0xff] %v1729
        %1746 = vst [vmem:[%s319 + $0x31] sm:$0xff] %v1730
        %1747 = vst [vmem:[%s319 + $0x39] sm:$0xff] %v1731
        %1748 = vst [vmem:[%s319 + $0x49] sm:$0xff] %v1732
        %1749 = vst [vmem:[%s319 + $0x51] sm:$0xff] %v1733
        %1750 = vst [vmem:[%s319 + $0x61] sm:$0xff] %v1734
        %1751 = vst [vmem:[%s319 + $0x69] sm:$0xff] %v1735
        %1752 = vst [vmem:[%s319 + $0x79] sm:$0xff] %v1736
        %1753 = vst [vmem:[%s319 + $0x81] sm:$0xff] %v1737
        %1754 = vst [vmem:[%s319 + $0x91] sm:$0xff] %v1738
        %1755 = vst [vmem:[%s319 + $0x99] sm:$0xff] %v1739
        %1756 = vst [vmem:[%s319 + $0xa9] sm:$0xff] %v1740
        %1757 = vst [vmem:[%s319 + $0xb1] sm:$0xff] %v1741
        %s1758 = scalar_lea.vmem [#allocation2], 192
        %v1759 = vld [vmem:[%s1758] sm:$0xff]
        %v1760 = vld [vmem:[%s1758 + $0x8] sm:$0xff]
        %v1761 = vld [vmem:[%s1758 + $0x18] sm:$0xff]
        %v1762 = vld [vmem:[%s1758 + $0x20] sm:$0xff]
        %v1763 = vld [vmem:[%s1758 + $0x30] sm:$0xff]
        %v1764 = vld [vmem:[%s1758 + $0x38] sm:$0xff]
        %v1765 = vld [vmem:[%s1758 + $0x48] sm:$0xff]
        %v1766 = vld [vmem:[%s1758 + $0x50] sm:$0xff]
        %v1767 = vld [vmem:[%s1758 + $0x60] sm:$0xff]
        %v1768 = vld [vmem:[%s1758 + $0x68] sm:$0xff]
        %v1769 = vld [vmem:[%s1758 + $0x78] sm:$0xff]
        %v1770 = vld [vmem:[%s1758 + $0x80] sm:$0xff]
        %v1771 = vld [vmem:[%s1758 + $0x90] sm:$0xff]
        %v1772 = vld [vmem:[%s1758 + $0x98] sm:$0xff]
        %v1773 = vld [vmem:[%s1758 + $0xa8] sm:$0xff]
        %v1774 = vld [vmem:[%s1758 + $0xb0] sm:$0xff]
        %1775 = vst [vmem:[#allocation4] sm:$0xff] %v1759
        %1776 = vst [vmem:[#allocation4 + $0x48] sm:$0xff] %v1760
        %1777 = vst [vmem:[#allocation4 + $0x90] sm:$0xff] %v1761
        %1778 = vst [vmem:[#allocation4 + $0xd8] sm:$0xff] %v1762
        %1779 = vst [vmem:[#allocation4 + $0x120] sm:$0xff] %v1763
        %1780 = vst [vmem:[#allocation4 + $0x168] sm:$0xff] %v1764
        %1781 = vst [vmem:[#allocation4 + $0x1b0] sm:$0xff] %v1765
        %1782 = vst [vmem:[#allocation4 + $0x1f8] sm:$0xff] %v1766
        %1783 = vst [vmem:[#allocation4 + $0x240] sm:$0xff] %v1767
        %1784 = vst [vmem:[#allocation4 + $0x288] sm:$0xff] %v1768
        %1785 = vst [vmem:[#allocation4 + $0x2d0] sm:$0xff] %v1769
        %1786 = vst [vmem:[#allocation4 + $0x318] sm:$0xff] %v1770
        %1787 = vst [vmem:[#allocation4 + $0x360] sm:$0xff] %v1771
        %1788 = vst [vmem:[#allocation4 + $0x3a8] sm:$0xff] %v1772
        %1789 = vst [vmem:[#allocation4 + $0x3f0] sm:$0xff] %v1773
        %1790 = vst [vmem:[#allocation4 + $0x438] sm:$0xff] %v1774
        %v1791 = vld [vmem:[%s1758 + $0x1] sm:$0xff]
        %v1792 = vld [vmem:[%s1758 + $0x9] sm:$0xff]
        %v1793 = vld [vmem:[%s1758 + $0x19] sm:$0xff]
        %v1794 = vld [vmem:[%s1758 + $0x21] sm:$0xff]
        %v1795 = vld [vmem:[%s1758 + $0x31] sm:$0xff]
        %v1796 = vld [vmem:[%s1758 + $0x39] sm:$0xff]
        %v1797 = vld [vmem:[%s1758 + $0x49] sm:$0xff]
        %v1798 = vld [vmem:[%s1758 + $0x51] sm:$0xff]
        %v1799 = vld [vmem:[%s1758 + $0x61] sm:$0xff]
        %v1800 = vld [vmem:[%s1758 + $0x69] sm:$0xff]
        %v1801 = vld [vmem:[%s1758 + $0x79] sm:$0xff]
        %v1802 = vld [vmem:[%s1758 + $0x81] sm:$0xff]
        %v1803 = vld [vmem:[%s1758 + $0x91] sm:$0xff]
        %v1804 = vld [vmem:[%s1758 + $0x99] sm:$0xff]
        %v1805 = vld [vmem:[%s1758 + $0xa9] sm:$0xff]
        %v1806 = vld [vmem:[%s1758 + $0xb1] sm:$0xff]
        %1807 = vst [vmem:[#allocation4 + $0x8] sm:$0xff] %v1791
        %1808 = vst [vmem:[#allocation4 + $0x50] sm:$0xff] %v1792
        %1809 = vst [vmem:[#allocation4 + $0x98] sm:$0xff] %v1793
        %1810 = vst [vmem:[#allocation4 + $0xe0] sm:$0xff] %v1794
        %1811 = vst [vmem:[#allocation4 + $0x128] sm:$0xff] %v1795
        %1812 = vst [vmem:[#allocation4 + $0x170] sm:$0xff] %v1796
        %1813 = vst [vmem:[#allocation4 + $0x1b8] sm:$0xff] %v1797
        %1814 = vst [vmem:[#allocation4 + $0x200] sm:$0xff] %v1798
        %1815 = vst [vmem:[#allocation4 + $0x248] sm:$0xff] %v1799
        %1816 = vst [vmem:[#allocation4 + $0x290] sm:$0xff] %v1800
        %1817 = vst [vmem:[#allocation4 + $0x2d8] sm:$0xff] %v1801
        %1818 = vst [vmem:[#allocation4 + $0x320] sm:$0xff] %v1802
        %1819 = vst [vmem:[#allocation4 + $0x368] sm:$0xff] %v1803
        %1820 = vst [vmem:[#allocation4 + $0x3b0] sm:$0xff] %v1804
        %1821 = vst [vmem:[#allocation4 + $0x3f8] sm:$0xff] %v1805
        %1822 = vst [vmem:[#allocation4 + $0x440] sm:$0xff] %v1806
        %v1823 = vld [vmem:[%s1758 + $0x2] sm:$0xff]
        %v1824 = vld [vmem:[%s1758 + $0xa] sm:$0xff]
        %v1825 = vld [vmem:[%s1758 + $0x1a] sm:$0xff]
        %v1826 = vld [vmem:[%s1758 + $0x22] sm:$0xff]
        %v1827 = vld [vmem:[%s1758 + $0x32] sm:$0xff]
        %v1828 = vld [vmem:[%s1758 + $0x3a] sm:$0xff]
        %v1829 = vld [vmem:[%s1758 + $0x4a] sm:$0xff]
        %v1830 = vld [vmem:[%s1758 + $0x52] sm:$0xff]
        %v1831 = vld [vmem:[%s1758 + $0x62] sm:$0xff]
        %v1832 = vld [vmem:[%s1758 + $0x6a] sm:$0xff]
        %v1833 = vld [vmem:[%s1758 + $0x7a] sm:$0xff]
        %v1834 = vld [vmem:[%s1758 + $0x82] sm:$0xff]
        %v1835 = vld [vmem:[%s1758 + $0x92] sm:$0xff]
        %v1836 = vld [vmem:[%s1758 + $0x9a] sm:$0xff]
        %v1837 = vld [vmem:[%s1758 + $0xaa] sm:$0xff]
        %v1838 = vld [vmem:[%s1758 + $0xb2] sm:$0xff]
        %1839 = vst [vmem:[#allocation4 + $0x10] sm:$0xff] %v1823
        %1840 = vst [vmem:[#allocation4 + $0x58] sm:$0xff] %v1824
        %1841 = vst [vmem:[#allocation4 + $0xa0] sm:$0xff] %v1825
        %1842 = vst [vmem:[#allocation4 + $0xe8] sm:$0xff] %v1826
        %1843 = vst [vmem:[#allocation4 + $0x130] sm:$0xff] %v1827
        %1844 = vst [vmem:[#allocation4 + $0x178] sm:$0xff] %v1828
        %1845 = vst [vmem:[#allocation4 + $0x1c0] sm:$0xff] %v1829
        %1846 = vst [vmem:[#allocation4 + $0x208] sm:$0xff] %v1830
        %1847 = vst [vmem:[#allocation4 + $0x250] sm:$0xff] %v1831
        %1848 = vst [vmem:[#allocation4 + $0x298] sm:$0xff] %v1832
        %1849 = vst [vmem:[#allocation4 + $0x2e0] sm:$0xff] %v1833
        %1850 = vst [vmem:[#allocation4 + $0x328] sm:$0xff] %v1834
        %1851 = vst [vmem:[#allocation4 + $0x370] sm:$0xff] %v1835
        %1852 = vst [vmem:[#allocation4 + $0x3b8] sm:$0xff] %v1836
        %1853 = vst [vmem:[#allocation4 + $0x400] sm:$0xff] %v1837
        %1854 = vst [vmem:[#allocation4 + $0x448] sm:$0xff] %v1838
        %s1855 = scalar_lea.vmem [#allocation2], 216
        %v1856 = vld [vmem:[%s1855] sm:$0xff]
        %v1857 = vld [vmem:[%s1855 + $0x8] sm:$0xff]
        %v1858 = vld [vmem:[%s1855 + $0x18] sm:$0xff]
        %v1859 = vld [vmem:[%s1855 + $0x20] sm:$0xff]
        %v1860 = vld [vmem:[%s1855 + $0x30] sm:$0xff]
        %v1861 = vld [vmem:[%s1855 + $0x38] sm:$0xff]
        %v1862 = vld [vmem:[%s1855 + $0x48] sm:$0xff]
        %v1863 = vld [vmem:[%s1855 + $0x50] sm:$0xff]
        %v1864 = vld [vmem:[%s1855 + $0x60] sm:$0xff]
        %v1865 = vld [vmem:[%s1855 + $0x68] sm:$0xff]
        %v1866 = vld [vmem:[%s1855 + $0x78] sm:$0xff]
        %v1867 = vld [vmem:[%s1855 + $0x80] sm:$0xff]
        %v1868 = vld [vmem:[%s1855 + $0x90] sm:$0xff]
        %v1869 = vld [vmem:[%s1855 + $0x98] sm:$0xff]
        %v1870 = vld [vmem:[%s1855 + $0xa8] sm:$0xff]
        %v1871 = vld [vmem:[%s1855 + $0xb0] sm:$0xff]
        %1872 = vst [vmem:[#allocation4 + $0x18] sm:$0xff] %v1856
        %1873 = vst [vmem:[#allocation4 + $0x60] sm:$0xff] %v1857
        %1874 = vst [vmem:[#allocation4 + $0xa8] sm:$0xff] %v1858
        %1875 = vst [vmem:[#allocation4 + $0xf0] sm:$0xff] %v1859
        %1876 = vst [vmem:[#allocation4 + $0x138] sm:$0xff] %v1860
        %1877 = vst [vmem:[#allocation4 + $0x180] sm:$0xff] %v1861
        %1878 = vst [vmem:[#allocation4 + $0x1c8] sm:$0xff] %v1862
        %1879 = vst [vmem:[#allocation4 + $0x210] sm:$0xff] %v1863
        %1880 = vst [vmem:[#allocation4 + $0x258] sm:$0xff] %v1864
        %1881 = vst [vmem:[#allocation4 + $0x2a0] sm:$0xff] %v1865
        %1882 = vst [vmem:[#allocation4 + $0x2e8] sm:$0xff] %v1866
        %1883 = vst [vmem:[#allocation4 + $0x330] sm:$0xff] %v1867
        %1884 = vst [vmem:[#allocation4 + $0x378] sm:$0xff] %v1868
        %1885 = vst [vmem:[#allocation4 + $0x3c0] sm:$0xff] %v1869
        %1886 = vst [vmem:[#allocation4 + $0x408] sm:$0xff] %v1870
        %1887 = vst [vmem:[#allocation4 + $0x450] sm:$0xff] %v1871
        %v1888 = vld [vmem:[%s1855 + $0x1] sm:$0xff]
        %v1889 = vld [vmem:[%s1855 + $0x9] sm:$0xff]
        %v1890 = vld [vmem:[%s1855 + $0x19] sm:$0xff]
        %v1891 = vld [vmem:[%s1855 + $0x21] sm:$0xff]
        %v1892 = vld [vmem:[%s1855 + $0x31] sm:$0xff]
        %v1893 = vld [vmem:[%s1855 + $0x39] sm:$0xff]
        %v1894 = vld [vmem:[%s1855 + $0x49] sm:$0xff]
        %v1895 = vld [vmem:[%s1855 + $0x51] sm:$0xff]
        %v1896 = vld [vmem:[%s1855 + $0x61] sm:$0xff]
        %v1897 = vld [vmem:[%s1855 + $0x69] sm:$0xff]
        %v1898 = vld [vmem:[%s1855 + $0x79] sm:$0xff]
        %v1899 = vld [vmem:[%s1855 + $0x81] sm:$0xff]
        %v1900 = vld [vmem:[%s1855 + $0x91] sm:$0xff]
        %v1901 = vld [vmem:[%s1855 + $0x99] sm:$0xff]
        %v1902 = vld [vmem:[%s1855 + $0xa9] sm:$0xff]
        %v1903 = vld [vmem:[%s1855 + $0xb1] sm:$0xff]
        %1904 = vst [vmem:[#allocation4 + $0x20] sm:$0xff] %v1888
        %1905 = vst [vmem:[#allocation4 + $0x68] sm:$0xff] %v1889
        %1906 = vst [vmem:[#allocation4 + $0xb0] sm:$0xff] %v1890
        %1907 = vst [vmem:[#allocation4 + $0xf8] sm:$0xff] %v1891
        %1908 = vst [vmem:[#allocation4 + $0x140] sm:$0xff] %v1892
        %1909 = vst [vmem:[#allocation4 + $0x188] sm:$0xff] %v1893
        %1910 = vst [vmem:[#allocation4 + $0x1d0] sm:$0xff] %v1894
        %1911 = vst [vmem:[#allocation4 + $0x218] sm:$0xff] %v1895
        %1912 = vst [vmem:[#allocation4 + $0x260] sm:$0xff] %v1896
        %1913 = vst [vmem:[#allocation4 + $0x2a8] sm:$0xff] %v1897
        %1914 = vst [vmem:[#allocation4 + $0x2f0] sm:$0xff] %v1898
        %1915 = vst [vmem:[#allocation4 + $0x338] sm:$0xff] %v1899
        %1916 = vst [vmem:[#allocation4 + $0x380] sm:$0xff] %v1900
        %1917 = vst [vmem:[#allocation4 + $0x3c8] sm:$0xff] %v1901
        %1918 = vst [vmem:[#allocation4 + $0x410] sm:$0xff] %v1902
        %1919 = vst [vmem:[#allocation4 + $0x458] sm:$0xff] %v1903
        %v1920 = vld [vmem:[%s1855 + $0x2] sm:$0xff]
        %v1921 = vld [vmem:[%s1855 + $0xa] sm:$0xff]
        %v1922 = vld [vmem:[%s1855 + $0x1a] sm:$0xff]
        %v1923 = vld [vmem:[%s1855 + $0x22] sm:$0xff]
        %v1924 = vld [vmem:[%s1855 + $0x32] sm:$0xff]
        %v1925 = vld [vmem:[%s1855 + $0x3a] sm:$0xff]
        %v1926 = vld [vmem:[%s1855 + $0x4a] sm:$0xff]
        %v1927 = vld [vmem:[%s1855 + $0x52] sm:$0xff]
        %v1928 = vld [vmem:[%s1855 + $0x62] sm:$0xff]
        %v1929 = vld [vmem:[%s1855 + $0x6a] sm:$0xff]
        %v1930 = vld [vmem:[%s1855 + $0x7a] sm:$0xff]
        %v1931 = vld [vmem:[%s1855 + $0x82] sm:$0xff]
        %v1932 = vld [vmem:[%s1855 + $0x92] sm:$0xff]
        %v1933 = vld [vmem:[%s1855 + $0x9a] sm:$0xff]
        %v1934 = vld [vmem:[%s1855 + $0xaa] sm:$0xff]
        %v1935 = vld [vmem:[%s1855 + $0xb2] sm:$0xff]
        %1936 = vst [vmem:[#allocation4 + $0x28] sm:$0xff] %v1920
        %1937 = vst [vmem:[#allocation4 + $0x70] sm:$0xff] %v1921
        %1938 = vst [vmem:[#allocation4 + $0xb8] sm:$0xff] %v1922
        %1939 = vst [vmem:[#allocation4 + $0x100] sm:$0xff] %v1923
        %1940 = vst [vmem:[#allocation4 + $0x148] sm:$0xff] %v1924
        %1941 = vst [vmem:[#allocation4 + $0x190] sm:$0xff] %v1925
        %1942 = vst [vmem:[#allocation4 + $0x1d8] sm:$0xff] %v1926
        %1943 = vst [vmem:[#allocation4 + $0x220] sm:$0xff] %v1927
        %1944 = vst [vmem:[#allocation4 + $0x268] sm:$0xff] %v1928
        %1945 = vst [vmem:[#allocation4 + $0x2b0] sm:$0xff] %v1929
        %1946 = vst [vmem:[#allocation4 + $0x2f8] sm:$0xff] %v1930
        %1947 = vst [vmem:[#allocation4 + $0x340] sm:$0xff] %v1931
        %1948 = vst [vmem:[#allocation4 + $0x388] sm:$0xff] %v1932
        %1949 = vst [vmem:[#allocation4 + $0x3d0] sm:$0xff] %v1933
        %1950 = vst [vmem:[#allocation4 + $0x418] sm:$0xff] %v1934
        %1951 = vst [vmem:[#allocation4 + $0x460] sm:$0xff] %v1935
        %s1952 = scalar_lea.vmem [#allocation2], 240
        %v1953 = vld [vmem:[%s1952] sm:$0xff]
        %v1954 = vld [vmem:[%s1952 + $0x8] sm:$0xff]
        %v1955 = vld [vmem:[%s1952 + $0x18] sm:$0xff]
        %v1956 = vld [vmem:[%s1952 + $0x20] sm:$0xff]
        %v1957 = vld [vmem:[%s1952 + $0x30] sm:$0xff]
        %v1958 = vld [vmem:[%s1952 + $0x38] sm:$0xff]
        %v1959 = vld [vmem:[%s1952 + $0x48] sm:$0xff]
        %v1960 = vld [vmem:[%s1952 + $0x50] sm:$0xff]
        %v1961 = vld [vmem:[%s1952 + $0x60] sm:$0xff]
        %v1962 = vld [vmem:[%s1952 + $0x68] sm:$0xff]
        %v1963 = vld [vmem:[%s1952 + $0x78] sm:$0xff]
        %v1964 = vld [vmem:[%s1952 + $0x80] sm:$0xff]
        %v1965 = vld [vmem:[%s1952 + $0x90] sm:$0xff]
        %v1966 = vld [vmem:[%s1952 + $0x98] sm:$0xff]
        %v1967 = vld [vmem:[%s1952 + $0xa8] sm:$0xff]
        %v1968 = vld [vmem:[%s1952 + $0xb0] sm:$0xff]
        %1969 = vst [vmem:[#allocation4 + $0x30] sm:$0xff] %v1953
        %1970 = vst [vmem:[#allocation4 + $0x78] sm:$0xff] %v1954
        %1971 = vst [vmem:[#allocation4 + $0xc0] sm:$0xff] %v1955
        %1972 = vst [vmem:[#allocation4 + $0x108] sm:$0xff] %v1956
        %1973 = vst [vmem:[#allocation4 + $0x150] sm:$0xff] %v1957
        %1974 = vst [vmem:[#allocation4 + $0x198] sm:$0xff] %v1958
        %1975 = vst [vmem:[#allocation4 + $0x1e0] sm:$0xff] %v1959
        %1976 = vst [vmem:[#allocation4 + $0x228] sm:$0xff] %v1960
        %1977 = vst [vmem:[#allocation4 + $0x270] sm:$0xff] %v1961
        %1978 = vst [vmem:[#allocation4 + $0x2b8] sm:$0xff] %v1962
        %1979 = vst [vmem:[#allocation4 + $0x300] sm:$0xff] %v1963
        %1980 = vst [vmem:[#allocation4 + $0x348] sm:$0xff] %v1964
        %1981 = vst [vmem:[#allocation4 + $0x390] sm:$0xff] %v1965
        %1982 = vst [vmem:[#allocation4 + $0x3d8] sm:$0xff] %v1966
        %1983 = vst [vmem:[#allocation4 + $0x420] sm:$0xff] %v1967
        %1984 = vst [vmem:[#allocation4 + $0x468] sm:$0xff] %v1968
        %v1985 = vld [vmem:[%s1952 + $0x1] sm:$0xff]
        %v1986 = vld [vmem:[%s1952 + $0x9] sm:$0xff]
        %v1987 = vld [vmem:[%s1952 + $0x19] sm:$0xff]
        %v1988 = vld [vmem:[%s1952 + $0x21] sm:$0xff]
        %v1989 = vld [vmem:[%s1952 + $0x31] sm:$0xff]
        %v1990 = vld [vmem:[%s1952 + $0x39] sm:$0xff]
        %v1991 = vld [vmem:[%s1952 + $0x49] sm:$0xff]
        %v1992 = vld [vmem:[%s1952 + $0x51] sm:$0xff]
        %v1993 = vld [vmem:[%s1952 + $0x61] sm:$0xff]
        %v1994 = vld [vmem:[%s1952 + $0x69] sm:$0xff]
        %v1995 = vld [vmem:[%s1952 + $0x79] sm:$0xff]
        %v1996 = vld [vmem:[%s1952 + $0x81] sm:$0xff]
        %v1997 = vld [vmem:[%s1952 + $0x91] sm:$0xff]
        %v1998 = vld [vmem:[%s1952 + $0x99] sm:$0xff]
        %v1999 = vld [vmem:[%s1952 + $0xa9] sm:$0xff]
        %v2000 = vld [vmem:[%s1952 + $0xb1] sm:$0xff]
        %2001 = vst [vmem:[#allocation4 + $0x38] sm:$0xff] %v1985
        %2002 = vst [vmem:[#allocation4 + $0x80] sm:$0xff] %v1986
        %2003 = vst [vmem:[#allocation4 + $0xc8] sm:$0xff] %v1987
        %2004 = vst [vmem:[#allocation4 + $0x110] sm:$0xff] %v1988
        %2005 = vst [vmem:[#allocation4 + $0x158] sm:$0xff] %v1989
        %2006 = vst [vmem:[#allocation4 + $0x1a0] sm:$0xff] %v1990
        %2007 = vst [vmem:[#allocation4 + $0x1e8] sm:$0xff] %v1991
        %2008 = vst [vmem:[#allocation4 + $0x230] sm:$0xff] %v1992
        %2009 = vst [vmem:[#allocation4 + $0x278] sm:$0xff] %v1993
        %2010 = vst [vmem:[#allocation4 + $0x2c0] sm:$0xff] %v1994
        %2011 = vst [vmem:[#allocation4 + $0x308] sm:$0xff] %v1995
        %2012 = vst [vmem:[#allocation4 + $0x350] sm:$0xff] %v1996
        %2013 = vst [vmem:[#allocation4 + $0x398] sm:$0xff] %v1997
        %2014 = vst [vmem:[#allocation4 + $0x3e0] sm:$0xff] %v1998
        %2015 = vst [vmem:[#allocation4 + $0x428] sm:$0xff] %v1999
        %2016 = vst [vmem:[#allocation4 + $0x470] sm:$0xff] %v2000
        %v2017 = vld [vmem:[%s1952 + $0x2] sm:$0xff]
        %v2018 = vld [vmem:[%s1952 + $0xa] sm:$0xff]
        %v2019 = vld [vmem:[%s1952 + $0x1a] sm:$0xff]
        %v2020 = vld [vmem:[%s1952 + $0x22] sm:$0xff]
        %v2021 = vld [vmem:[%s1952 + $0x32] sm:$0xff]
        %v2022 = vld [vmem:[%s1952 + $0x3a] sm:$0xff]
        %v2023 = vld [vmem:[%s1952 + $0x4a] sm:$0xff]
        %v2024 = vld [vmem:[%s1952 + $0x52] sm:$0xff]
        %v2025 = vld [vmem:[%s1952 + $0x62] sm:$0xff]
        %v2026 = vld [vmem:[%s1952 + $0x6a] sm:$0xff]
        %v2027 = vld [vmem:[%s1952 + $0x7a] sm:$0xff]
        %v2028 = vld [vmem:[%s1952 + $0x82] sm:$0xff]
        %v2029 = vld [vmem:[%s1952 + $0x92] sm:$0xff]
        %v2030 = vld [vmem:[%s1952 + $0x9a] sm:$0xff]
        %v2031 = vld [vmem:[%s1952 + $0xaa] sm:$0xff]
        %v2032 = vld [vmem:[%s1952 + $0xb2] sm:$0xff]
        %2033 = vst [vmem:[#allocation4 + $0x40] sm:$0xff] %v2017
        %2034 = vst [vmem:[#allocation4 + $0x88] sm:$0xff] %v2018
        %2035 = vst [vmem:[#allocation4 + $0xd0] sm:$0xff] %v2019
        %2036 = vst [vmem:[#allocation4 + $0x118] sm:$0xff] %v2020
        %2037 = vst [vmem:[#allocation4 + $0x160] sm:$0xff] %v2021
        %2038 = vst [vmem:[#allocation4 + $0x1a8] sm:$0xff] %v2022
        %2039 = vst [vmem:[#allocation4 + $0x1f0] sm:$0xff] %v2023
        %2040 = vst [vmem:[#allocation4 + $0x238] sm:$0xff] %v2024
        %2041 = vst [vmem:[#allocation4 + $0x280] sm:$0xff] %v2025
        %2042 = vst [vmem:[#allocation4 + $0x2c8] sm:$0xff] %v2026
        %2043 = vst [vmem:[#allocation4 + $0x310] sm:$0xff] %v2027
        %2044 = vst [vmem:[#allocation4 + $0x358] sm:$0xff] %v2028
        %2045 = vst [vmem:[#allocation4 + $0x3a0] sm:$0xff] %v2029
        %2046 = vst [vmem:[#allocation4 + $0x3e8] sm:$0xff] %v2030
        %2047 = vst [vmem:[#allocation4 + $0x430] sm:$0xff] %v2031
        %2048 = vst [vmem:[#allocation4 + $0x478] sm:$0xff] %v2032
        %v2049 = vld [vmem:[#allocation4] sm:$0xff]
        %v2050 = vld [vmem:[#allocation4 + $0x8] sm:$0xff]
        %v2051 = vld [vmem:[#allocation4 + $0x10] sm:$0xff]
        %v2052 = vld [vmem:[#allocation4 + $0x18] sm:$0xff]
        %v2053 = vld [vmem:[#allocation4 + $0x20] sm:$0xff]
        %v2054 = vld [vmem:[#allocation4 + $0x28] sm:$0xff]
        %v2055 = vld [vmem:[#allocation4 + $0x30] sm:$0xff]
        %v2056 = vld [vmem:[#allocation4 + $0x38] sm:$0xff]
        %v2057 = vld [vmem:[#allocation4 + $0x40] sm:$0xff]
        %v2058 = vld [vmem:[#allocation4 + $0x48] sm:$0xff]
        %v2059 = vld [vmem:[#allocation4 + $0x50] sm:$0xff]
        %v2060 = vld [vmem:[#allocation4 + $0x58] sm:$0xff]
        %v2061 = vld [vmem:[#allocation4 + $0x60] sm:$0xff]
        %v2062 = vld [vmem:[#allocation4 + $0x68] sm:$0xff]
        %v2063 = vld [vmem:[#allocation4 + $0x70] sm:$0xff]
        %v2064 = vld [vmem:[#allocation4 + $0x78] sm:$0xff]
        %v2065 = vld [vmem:[#allocation4 + $0x80] sm:$0xff]
        %v2066 = vld [vmem:[#allocation4 + $0x88] sm:$0xff]
        %v2067 = vld [vmem:[#allocation4 + $0x90] sm:$0xff]
        %v2068 = vld [vmem:[#allocation4 + $0x98] sm:$0xff]
        %v2069 = vld [vmem:[#allocation4 + $0xa0] sm:$0xff]
        %v2070 = vld [vmem:[#allocation4 + $0xa8] sm:$0xff]
        %v2071 = vld [vmem:[#allocation4 + $0xb0] sm:$0xff]
        %v2072 = vld [vmem:[#allocation4 + $0xb8] sm:$0xff]
        %v2073 = vld [vmem:[#allocation4 + $0xc0] sm:$0xff]
        %v2074 = vld [vmem:[#allocation4 + $0xc8] sm:$0xff]
        %v2075 = vld [vmem:[#allocation4 + $0xd0] sm:$0xff]
        %v2076 = vld [vmem:[#allocation4 + $0xd8] sm:$0xff]
        %v2077 = vld [vmem:[#allocation4 + $0xe0] sm:$0xff]
        %v2078 = vld [vmem:[#allocation4 + $0xe8] sm:$0xff]
        %v2079 = vld [vmem:[#allocation4 + $0xf0] sm:$0xff]
        %v2080 = vld [vmem:[#allocation4 + $0xf8] sm:$0xff]
        %v2081 = vld [vmem:[#allocation4 + $0x100] sm:$0xff]
        %v2082 = vld [vmem:[#allocation4 + $0x108] sm:$0xff]
        %v2083 = vld [vmem:[#allocation4 + $0x110] sm:$0xff]
        %v2084 = vld [vmem:[#allocation4 + $0x118] sm:$0xff]
        %v2085 = vld [vmem:[#allocation4 + $0x120] sm:$0xff]
        %v2086 = vld [vmem:[#allocation4 + $0x128] sm:$0xff]
        %v2087 = vld [vmem:[#allocation4 + $0x130] sm:$0xff]
        %v2088 = vld [vmem:[#allocation4 + $0x138] sm:$0xff]
        %v2089 = vld [vmem:[#allocation4 + $0x140] sm:$0xff]
        %v2090 = vld [vmem:[#allocation4 + $0x148] sm:$0xff]
        %v2091 = vld [vmem:[#allocation4 + $0x150] sm:$0xff]
        %v2092 = vld [vmem:[#allocation4 + $0x158] sm:$0xff]
        %v2093 = vld [vmem:[#allocation4 + $0x160] sm:$0xff]
        %v2094 = vld [vmem:[#allocation4 + $0x168] sm:$0xff]
        %v2095 = vld [vmem:[#allocation4 + $0x170] sm:$0xff]
        %v2096 = vld [vmem:[#allocation4 + $0x178] sm:$0xff]
        %v2097 = vld [vmem:[#allocation4 + $0x180] sm:$0xff]
        %v2098 = vld [vmem:[#allocation4 + $0x188] sm:$0xff]
        %v2099 = vld [vmem:[#allocation4 + $0x190] sm:$0xff]
        %v2100 = vld [vmem:[#allocation4 + $0x198] sm:$0xff]
        %v2101 = vld [vmem:[#allocation4 + $0x1a0] sm:$0xff]
        %v2102 = vld [vmem:[#allocation4 + $0x1a8] sm:$0xff]
        %v2103 = vld [vmem:[#allocation4 + $0x1b0] sm:$0xff]
        %v2104 = vld [vmem:[#allocation4 + $0x1b8] sm:$0xff]
        %v2105 = vld [vmem:[#allocation4 + $0x1c0] sm:$0xff]
        %v2106 = vld [vmem:[#allocation4 + $0x1c8] sm:$0xff]
        %v2107 = vld [vmem:[#allocation4 + $0x1d0] sm:$0xff]
        %v2108 = vld [vmem:[#allocation4 + $0x1d8] sm:$0xff]
        %v2109 = vld [vmem:[#allocation4 + $0x1e0] sm:$0xff]
        %v2110 = vld [vmem:[#allocation4 + $0x1e8] sm:$0xff]
        %v2111 = vld [vmem:[#allocation4 + $0x1f0] sm:$0xff]
        %v2112 = vld [vmem:[#allocation4 + $0x1f8] sm:$0xff]
        %v2113 = vld [vmem:[#allocation4 + $0x200] sm:$0xff]
        %v2114 = vld [vmem:[#allocation4 + $0x208] sm:$0xff]
        %v2115 = vld [vmem:[#allocation4 + $0x210] sm:$0xff]
        %v2116 = vld [vmem:[#allocation4 + $0x218] sm:$0xff]
        %v2117 = vld [vmem:[#allocation4 + $0x220] sm:$0xff]
        %v2118 = vld [vmem:[#allocation4 + $0x228] sm:$0xff]
        %v2119 = vld [vmem:[#allocation4 + $0x230] sm:$0xff]
        %v2120 = vld [vmem:[#allocation4 + $0x238] sm:$0xff]
        %v2121 = vld [vmem:[#allocation4 + $0x240] sm:$0xff]
        %v2122 = vld [vmem:[#allocation4 + $0x248] sm:$0xff]
        %v2123 = vld [vmem:[#allocation4 + $0x250] sm:$0xff]
        %v2124 = vld [vmem:[#allocation4 + $0x258] sm:$0xff]
        %v2125 = vld [vmem:[#allocation4 + $0x260] sm:$0xff]
        %v2126 = vld [vmem:[#allocation4 + $0x268] sm:$0xff]
        %v2127 = vld [vmem:[#allocation4 + $0x270] sm:$0xff]
        %v2128 = vld [vmem:[#allocation4 + $0x278] sm:$0xff]
        %v2129 = vld [vmem:[#allocation4 + $0x280] sm:$0xff]
        %v2130 = vld [vmem:[#allocation4 + $0x288] sm:$0xff]
        %v2131 = vld [vmem:[#allocation4 + $0x290] sm:$0xff]
        %v2132 = vld [vmem:[#allocation4 + $0x298] sm:$0xff]
        %v2133 = vld [vmem:[#allocation4 + $0x2a0] sm:$0xff]
        %v2134 = vld [vmem:[#allocation4 + $0x2a8] sm:$0xff]
        %v2135 = vld [vmem:[#allocation4 + $0x2b0] sm:$0xff]
        %v2136 = vld [vmem:[#allocation4 + $0x2b8] sm:$0xff]
        %v2137 = vld [vmem:[#allocation4 + $0x2c0] sm:$0xff]
        %v2138 = vld [vmem:[#allocation4 + $0x2c8] sm:$0xff]
        %v2139 = vld [vmem:[#allocation4 + $0x2d0] sm:$0xff]
        %v2140 = vld [vmem:[#allocation4 + $0x2d8] sm:$0xff]
        %v2141 = vld [vmem:[#allocation4 + $0x2e0] sm:$0xff]
        %v2142 = vld [vmem:[#allocation4 + $0x2e8] sm:$0xff]
        %v2143 = vld [vmem:[#allocation4 + $0x2f0] sm:$0xff]
        %v2144 = vld [vmem:[#allocation4 + $0x2f8] sm:$0xff]
        %v2145 = vld [vmem:[#allocation4 + $0x300] sm:$0xff]
        %v2146 = vld [vmem:[#allocation4 + $0x308] sm:$0xff]
        %v2147 = vld [vmem:[#allocation4 + $0x310] sm:$0xff]
        %v2148 = vld [vmem:[#allocation4 + $0x318] sm:$0xff]
        %v2149 = vld [vmem:[#allocation4 + $0x320] sm:$0xff]
        %v2150 = vld [vmem:[#allocation4 + $0x328] sm:$0xff]
        %v2151 = vld [vmem:[#allocation4 + $0x330] sm:$0xff]
        %v2152 = vld [vmem:[#allocation4 + $0x338] sm:$0xff]
        %v2153 = vld [vmem:[#allocation4 + $0x340] sm:$0xff]
        %v2154 = vld [vmem:[#allocation4 + $0x348] sm:$0xff]
        %v2155 = vld [vmem:[#allocation4 + $0x350] sm:$0xff]
        %v2156 = vld [vmem:[#allocation4 + $0x358] sm:$0xff]
        %v2157 = vld [vmem:[#allocation4 + $0x360] sm:$0xff]
        %v2158 = vld [vmem:[#allocation4 + $0x368] sm:$0xff]
        %v2159 = vld [vmem:[#allocation4 + $0x370] sm:$0xff]
        %v2160 = vld [vmem:[#allocation4 + $0x378] sm:$0xff]
        %v2161 = vld [vmem:[#allocation4 + $0x380] sm:$0xff]
        %v2162 = vld [vmem:[#allocation4 + $0x388] sm:$0xff]
        %v2163 = vld [vmem:[#allocation4 + $0x390] sm:$0xff]
        %v2164 = vld [vmem:[#allocation4 + $0x398] sm:$0xff]
        %v2165 = vld [vmem:[#allocation4 + $0x3a0] sm:$0xff]
        %v2166 = vld [vmem:[#allocation4 + $0x3a8] sm:$0xff]
        %v2167 = vld [vmem:[#allocation4 + $0x3b0] sm:$0xff]
        %v2168 = vld [vmem:[#allocation4 + $0x3b8] sm:$0xff]
        %v2169 = vld [vmem:[#allocation4 + $0x3c0] sm:$0xff]
        %v2170 = vld [vmem:[#allocation4 + $0x3c8] sm:$0xff]
        %v2171 = vld [vmem:[#allocation4 + $0x3d0] sm:$0xff]
        %v2172 = vld [vmem:[#allocation4 + $0x3d8] sm:$0xff]
        %v2173 = vld [vmem:[#allocation4 + $0x3e0] sm:$0xff]
        %v2174 = vld [vmem:[#allocation4 + $0x3e8] sm:$0xff]
        %v2175 = vld [vmem:[#allocation4 + $0x3f0] sm:$0xff]
        %v2176 = vld [vmem:[#allocation4 + $0x3f8] sm:$0xff]
        %v2177 = vld [vmem:[#allocation4 + $0x400] sm:$0xff]
        %v2178 = vld [vmem:[#allocation4 + $0x408] sm:$0xff]
        %v2179 = vld [vmem:[#allocation4 + $0x410] sm:$0xff]
        %v2180 = vld [vmem:[#allocation4 + $0x418] sm:$0xff]
        %v2181 = vld [vmem:[#allocation4 + $0x420] sm:$0xff]
        %v2182 = vld [vmem:[#allocation4 + $0x428] sm:$0xff]
        %v2183 = vld [vmem:[#allocation4 + $0x430] sm:$0xff]
        %v2184 = vld [vmem:[#allocation4 + $0x438] sm:$0xff]
        %v2185 = vld [vmem:[#allocation4 + $0x440] sm:$0xff]
        %v2186 = vld [vmem:[#allocation4 + $0x448] sm:$0xff]
        %v2187 = vld [vmem:[#allocation4 + $0x450] sm:$0xff]
        %v2188 = vld [vmem:[#allocation4 + $0x458] sm:$0xff]
        %v2189 = vld [vmem:[#allocation4 + $0x460] sm:$0xff]
        %v2190 = vld [vmem:[#allocation4 + $0x468] sm:$0xff]
        %v2191 = vld [vmem:[#allocation4 + $0x470] sm:$0xff]
        %v2192 = vld [vmem:[#allocation4 + $0x478] sm:$0xff]
        %v2193 = vld [vmem:[#allocation8] sm:$0xff]
        %v2194 = vld [vmem:[#allocation8 + $0x8] sm:$0xff]
        %v2195 = vld [vmem:[#allocation8 + $0x10] sm:$0xff]
        %v2196 = vld [vmem:[#allocation8 + $0x18] sm:$0xff]
        %v2197 = vld [vmem:[#allocation8 + $0x20] sm:$0xff]
        %v2198 = vld [vmem:[#allocation8 + $0x28] sm:$0xff]
        %v2199 = vld [vmem:[#allocation8 + $0x30] sm:$0xff]
        %v2200 = vld [vmem:[#allocation8 + $0x38] sm:$0xff]
        %v2201 = vld [vmem:[#allocation8 + $0x40] sm:$0xff]
        %v2202 = vld [vmem:[#allocation8 + $0x48] sm:$0xff]
        %v2203 = vld [vmem:[#allocation8 + $0x50] sm:$0xff]
        %v2204 = vld [vmem:[#allocation8 + $0x58] sm:$0xff]
        %v2205 = vld [vmem:[#allocation8 + $0x60] sm:$0xff]
        %v2206 = vld [vmem:[#allocation8 + $0x68] sm:$0xff]
        %v2207 = vld [vmem:[#allocation8 + $0x70] sm:$0xff]
        %v2208 = vld [vmem:[#allocation8 + $0x78] sm:$0xff]
        %v2209 = vld [vmem:[#allocation8 + $0x80] sm:$0xff]
        %v2210 = vld [vmem:[#allocation8 + $0x88] sm:$0xff]
        %v2211 = vld [vmem:[#allocation8 + $0x90] sm:$0xff]
        %v2212 = vld [vmem:[#allocation8 + $0x98] sm:$0xff]
        %v2213 = vld [vmem:[#allocation8 + $0xa0] sm:$0xff]
        %v2214 = vld [vmem:[#allocation8 + $0xa8] sm:$0xff]
        %v2215 = vld [vmem:[#allocation8 + $0xb0] sm:$0xff]
        %v2216 = vld [vmem:[#allocation8 + $0xb8] sm:$0xff]
        %v2217 = vld [vmem:[#allocation8 + $0xc0] sm:$0xff]
        %v2218 = vld [vmem:[#allocation8 + $0xc8] sm:$0xff]
        %v2219 = vld [vmem:[#allocation8 + $0xd0] sm:$0xff]
        %v2220 = vld [vmem:[#allocation8 + $0xd8] sm:$0xff]
        %v2221 = vld [vmem:[#allocation8 + $0xe0] sm:$0xff]
        %v2222 = vld [vmem:[#allocation8 + $0xe8] sm:$0xff]
        %v2223 = vld [vmem:[#allocation8 + $0xf0] sm:$0xff]
        %v2224 = vld [vmem:[#allocation8 + $0xf8] sm:$0xff]
        %v2225 = vld [vmem:[#allocation8 + $0x100] sm:$0xff]
        %v2226 = vld [vmem:[#allocation8 + $0x108] sm:$0xff]
        %v2227 = vld [vmem:[#allocation8 + $0x110] sm:$0xff]
        %v2228 = vld [vmem:[#allocation8 + $0x118] sm:$0xff]
        %v2229 = vld [vmem:[#allocation8 + $0x120] sm:$0xff]
        %v2230 = vld [vmem:[#allocation8 + $0x128] sm:$0xff]
        %v2231 = vld [vmem:[#allocation8 + $0x130] sm:$0xff]
        %v2232 = vld [vmem:[#allocation8 + $0x138] sm:$0xff]
        %v2233 = vld [vmem:[#allocation8 + $0x140] sm:$0xff]
        %v2234 = vld [vmem:[#allocation8 + $0x148] sm:$0xff]
        %v2235 = vld [vmem:[#allocation8 + $0x150] sm:$0xff]
        %v2236 = vld [vmem:[#allocation8 + $0x158] sm:$0xff]
        %v2237 = vld [vmem:[#allocation8 + $0x160] sm:$0xff]
        %v2238 = vld [vmem:[#allocation8 + $0x168] sm:$0xff]
        %v2239 = vld [vmem:[#allocation8 + $0x170] sm:$0xff]
        %v2240 = vld [vmem:[#allocation8 + $0x178] sm:$0xff]
        %v2241 = vld [vmem:[#allocation8 + $0x180] sm:$0xff]
        %v2242 = vld [vmem:[#allocation8 + $0x188] sm:$0xff]
        %v2243 = vld [vmem:[#allocation8 + $0x190] sm:$0xff]
        %v2244 = vld [vmem:[#allocation8 + $0x198] sm:$0xff]
        %v2245 = vld [vmem:[#allocation8 + $0x1a0] sm:$0xff]
        %v2246 = vld [vmem:[#allocation8 + $0x1a8] sm:$0xff]
        %v2247 = vld [vmem:[#allocation8 + $0x1b0] sm:$0xff]
        %v2248 = vld [vmem:[#allocation8 + $0x1b8] sm:$0xff]
        %v2249 = vld [vmem:[#allocation8 + $0x1c0] sm:$0xff]
        %v2250 = vld [vmem:[#allocation8 + $0x1c8] sm:$0xff]
        %v2251 = vld [vmem:[#allocation8 + $0x1d0] sm:$0xff]
        %v2252 = vld [vmem:[#allocation8 + $0x1d8] sm:$0xff]
        %v2253 = vld [vmem:[#allocation8 + $0x1e0] sm:$0xff]
        %v2254 = vld [vmem:[#allocation8 + $0x1e8] sm:$0xff]
        %v2255 = vld [vmem:[#allocation8 + $0x1f0] sm:$0xff]
        %v2256 = vld [vmem:[#allocation8 + $0x1f8] sm:$0xff]
        %v2257 = vld [vmem:[#allocation8 + $0x200] sm:$0xff]
        %v2258 = vld [vmem:[#allocation8 + $0x208] sm:$0xff]
        %v2259 = vld [vmem:[#allocation8 + $0x210] sm:$0xff]
        %v2260 = vld [vmem:[#allocation8 + $0x218] sm:$0xff]
        %v2261 = vld [vmem:[#allocation8 + $0x220] sm:$0xff]
        %v2262 = vld [vmem:[#allocation8 + $0x228] sm:$0xff]
        %v2263 = vld [vmem:[#allocation8 + $0x230] sm:$0xff]
        %v2264 = vld [vmem:[#allocation8 + $0x238] sm:$0xff]
        %v2265 = vld [vmem:[#allocation8 + $0x240] sm:$0xff]
        %v2266 = vld [vmem:[#allocation8 + $0x248] sm:$0xff]
        %v2267 = vld [vmem:[#allocation8 + $0x250] sm:$0xff]
        %v2268 = vld [vmem:[#allocation8 + $0x258] sm:$0xff]
        %v2269 = vld [vmem:[#allocation8 + $0x260] sm:$0xff]
        %v2270 = vld [vmem:[#allocation8 + $0x268] sm:$0xff]
        %v2271 = vld [vmem:[#allocation8 + $0x270] sm:$0xff]
        %v2272 = vld [vmem:[#allocation8 + $0x278] sm:$0xff]
        %v2273 = vld [vmem:[#allocation8 + $0x280] sm:$0xff]
        %v2274 = vld [vmem:[#allocation8 + $0x288] sm:$0xff]
        %v2275 = vld [vmem:[#allocation8 + $0x290] sm:$0xff]
        %v2276 = vld [vmem:[#allocation8 + $0x298] sm:$0xff]
        %v2277 = vld [vmem:[#allocation8 + $0x2a0] sm:$0xff]
        %v2278 = vld [vmem:[#allocation8 + $0x2a8] sm:$0xff]
        %v2279 = vld [vmem:[#allocation8 + $0x2b0] sm:$0xff]
        %v2280 = vld [vmem:[#allocation8 + $0x2b8] sm:$0xff]
        %v2281 = vld [vmem:[#allocation8 + $0x2c0] sm:$0xff]
        %v2282 = vld [vmem:[#allocation8 + $0x2c8] sm:$0xff]
        %v2283 = vld [vmem:[#allocation8 + $0x2d0] sm:$0xff]
        %v2284 = vld [vmem:[#allocation8 + $0x2d8] sm:$0xff]
        %v2285 = vld [vmem:[#allocation8 + $0x2e0] sm:$0xff]
        %v2286 = vld [vmem:[#allocation8 + $0x2e8] sm:$0xff]
        %v2287 = vld [vmem:[#allocation8 + $0x2f0] sm:$0xff]
        %v2288 = vld [vmem:[#allocation8 + $0x2f8] sm:$0xff]
        %v2289 = vld [vmem:[#allocation8 + $0x300] sm:$0xff]
        %v2290 = vld [vmem:[#allocation8 + $0x308] sm:$0xff]
        %v2291 = vld [vmem:[#allocation8 + $0x310] sm:$0xff]
        %v2292 = vld [vmem:[#allocation8 + $0x318] sm:$0xff]
        %v2293 = vld [vmem:[#allocation8 + $0x320] sm:$0xff]
        %v2294 = vld [vmem:[#allocation8 + $0x328] sm:$0xff]
        %v2295 = vld [vmem:[#allocation8 + $0x330] sm:$0xff]
        %v2296 = vld [vmem:[#allocation8 + $0x338] sm:$0xff]
        %v2297 = vld [vmem:[#allocation8 + $0x340] sm:$0xff]
        %v2298 = vld [vmem:[#allocation8 + $0x348] sm:$0xff]
        %v2299 = vld [vmem:[#allocation8 + $0x350] sm:$0xff]
        %v2300 = vld [vmem:[#allocation8 + $0x358] sm:$0xff]
        %v2301 = vld [vmem:[#allocation8 + $0x360] sm:$0xff]
        %v2302 = vld [vmem:[#allocation8 + $0x368] sm:$0xff]
        %v2303 = vld [vmem:[#allocation8 + $0x370] sm:$0xff]
        %v2304 = vld [vmem:[#allocation8 + $0x378] sm:$0xff]
        %v2305 = vld [vmem:[#allocation8 + $0x380] sm:$0xff]
        %v2306 = vld [vmem:[#allocation8 + $0x388] sm:$0xff]
        %v2307 = vld [vmem:[#allocation8 + $0x390] sm:$0xff]
        %v2308 = vld [vmem:[#allocation8 + $0x398] sm:$0xff]
        %v2309 = vld [vmem:[#allocation8 + $0x3a0] sm:$0xff]
        %v2310 = vld [vmem:[#allocation8 + $0x3a8] sm:$0xff]
        %v2311 = vld [vmem:[#allocation8 + $0x3b0] sm:$0xff]
        %v2312 = vld [vmem:[#allocation8 + $0x3b8] sm:$0xff]
        %v2313 = vld [vmem:[#allocation8 + $0x3c0] sm:$0xff]
        %v2314 = vld [vmem:[#allocation8 + $0x3c8] sm:$0xff]
        %v2315 = vld [vmem:[#allocation8 + $0x3d0] sm:$0xff]
        %v2316 = vld [vmem:[#allocation8 + $0x3d8] sm:$0xff]
        %v2317 = vld [vmem:[#allocation8 + $0x3e0] sm:$0xff]
        %v2318 = vld [vmem:[#allocation8 + $0x3e8] sm:$0xff]
        %v2319 = vld [vmem:[#allocation8 + $0x3f0] sm:$0xff]
        %v2320 = vld [vmem:[#allocation8 + $0x3f8] sm:$0xff]
        %v2321 = vld [vmem:[#allocation8 + $0x400] sm:$0xff]
        %v2322 = vld [vmem:[#allocation8 + $0x408] sm:$0xff]
        %v2323 = vld [vmem:[#allocation8 + $0x410] sm:$0xff]
        %v2324 = vld [vmem:[#allocation8 + $0x418] sm:$0xff]
        %v2325 = vld [vmem:[#allocation8 + $0x420] sm:$0xff]
        %v2326 = vld [vmem:[#allocation8 + $0x428] sm:$0xff]
        %v2327 = vld [vmem:[#allocation8 + $0x430] sm:$0xff]
        %v2328 = vld [vmem:[#allocation8 + $0x438] sm:$0xff]
        %v2329 = vld [vmem:[#allocation8 + $0x440] sm:$0xff]
        %v2330 = vld [vmem:[#allocation8 + $0x448] sm:$0xff]
        %v2331 = vld [vmem:[#allocation8 + $0x450] sm:$0xff]
        %v2332 = vld [vmem:[#allocation8 + $0x458] sm:$0xff]
        %v2333 = vld [vmem:[#allocation8 + $0x460] sm:$0xff]
        %v2334 = vld [vmem:[#allocation8 + $0x468] sm:$0xff]
        %v2335 = vld [vmem:[#allocation8 + $0x470] sm:$0xff]
        %v2336 = vld [vmem:[#allocation8 + $0x478] sm:$0xff]
        %2337 = vmatprep.subr.mxu0 0.0
        %2338 = vmatpush1.msra.mxu0 %v2208
        %2339 = vmatprep.subr.mxu0 0.0
        %2340 = vmatpush1.msra.mxu0 %v2207
        %2341 = vmatprep.subr.mxu0 0.0
        %2342 = vmatpush1.msra.mxu0 %v2206
        %2343 = vmatprep.subr.mxu0 0.0
        %2344 = vmatpush1.msra.mxu0 %v2205
        %2345 = vmatprep.subr.mxu0 0.0
        %2346 = vmatpush1.msra.mxu0 %v2204
        %2347 = vmatprep.subr.mxu0 0.0
        %2348 = vmatpush1.msra.mxu0 %v2203
        %2349 = vmatprep.subr.mxu0 0.0
        %2350 = vmatpush1.msra.mxu0 %v2202
        %2351 = vmatprep.subr.mxu0 0.0
        %2352 = vmatpush1.msra.mxu0 %v2201
        %2353 = vmatprep.subr.mxu0 0.0
        %2354 = vmatpush1.msra.mxu0 %v2200
        %2355 = vmatprep.subr.mxu0 0.0
        %2356 = vmatpush1.msra.mxu0 %v2199
        %2357 = vmatprep.subr.mxu0 0.0
        %2358 = vmatpush1.msra.mxu0 %v2198
        %2359 = vmatprep.subr.mxu0 0.0
        %2360 = vmatpush1.msra.mxu0 %v2197
        %2361 = vmatprep.subr.mxu0 0.0
        %2362 = vmatpush1.msra.mxu0 %v2196
        %2363 = vmatprep.subr.mxu0 0.0
        %2364 = vmatpush1.msra.mxu0 %v2195
        %2365 = vmatprep.subr.mxu0 0.0
        %2366 = vmatpush1.msra.mxu0 %v2194
        %2367 = vmatprep.subr.mxu0 0.0
        %2368 = vmatpush1.msra.mxu0 %v2193
        %2369 = vmatprep.subr.mxu0 0.0
        %2370 = vmatpush2.msra.mxu0 %v2224
        %2371 = vmatprep.subr.mxu0 0.0
        %2372 = vmatpush2.msra.mxu0 %v2223
        %2373 = vmatprep.subr.mxu0 0.0
        %2374 = vmatpush2.msra.mxu0 %v2222
        %2375 = vmatprep.subr.mxu0 0.0
        %2376 = vmatpush2.msra.mxu0 %v2221
        %2377 = vmatprep.subr.mxu0 0.0
        %2378 = vmatpush2.msra.mxu0 %v2220
        %2379 = vmatprep.subr.mxu0 0.0
        %2380 = vmatpush2.msra.mxu0 %v2219
        %2381 = vmatprep.subr.mxu0 0.0
        %2382 = vmatpush2.msra.mxu0 %v2218
        %2383 = vmatprep.subr.mxu0 0.0
        %2384 = vmatpush2.msra.mxu0 %v2217
        %2385 = vmatprep.subr.mxu0 0.0
        %2386 = vmatpush2.msra.mxu0 %v2216
        %2387 = vmatprep.subr.mxu0 0.0
        %2388 = vmatpush2.msra.mxu0 %v2215
        %2389 = vmatprep.subr.mxu0 0.0
        %2390 = vmatpush2.msra.mxu0 %v2214
        %2391 = vmatprep.subr.mxu0 0.0
        %2392 = vmatpush2.msra.mxu0 %v2213
        %2393 = vmatprep.subr.mxu0 0.0
        %2394 = vmatpush2.msra.mxu0 %v2212
        %2395 = vmatprep.subr.mxu0 0.0
        %2396 = vmatpush2.msra.mxu0 %v2211
        %2397 = vmatprep.subr.mxu0 0.0
        %2398 = vmatpush2.msra.mxu0 %v2210
        %2399 = vmatprep.subr.mxu0 0.0
        %2400 = vmatpush2.msra.mxu0 %v2209
        %2401 = vmatprep.mubr.f32.mxu0 %v2050
        %2402 = vmatmul.mubr.f32.gmra.mxu0 %v2049
        %v2403 = vpop.f32.mrf.mxu0
        %v2404 = vadd.f32 %v999, %v2403
        %v2405 = vpop.f32.mrf.mxu0
        %2406 = vmatprep.mubr.f32.mxu0 %v2059
        %2407 = vmatmul.mubr.f32.gmra.mxu0 %v2058
        %v2408 = vpop.f32.mrf.mxu0
        %v2409 = vadd.f32 %v999, %v2408
        %v2410 = vpop.f32.mrf.mxu0
        %2411 = vmatprep.mubr.f32.mxu0 %v2068
        %2412 = vmatmul.mubr.f32.gmra.mxu0 %v2067
        %v2413 = vpop.f32.mrf.mxu0
        %v2414 = vadd.f32 %v999, %v2413
        %v2415 = vpop.f32.mrf.mxu0
        %2416 = vmatprep.mubr.f32.mxu0 %v2077
        %2417 = vmatmul.mubr.f32.gmra.mxu0 %v2076
        %v2418 = vpop.f32.mrf.mxu0
        %v2419 = vadd.f32 %v999, %v2418
        %v2420 = vpop.f32.mrf.mxu0
        %2421 = vmatprep.mubr.f32.mxu0 %v2086
        %2422 = vmatmul.mubr.f32.gmra.mxu0 %v2085
        %v2423 = vpop.f32.mrf.mxu0
        %v2424 = vadd.f32 %v999, %v2423
        %v2425 = vpop.f32.mrf.mxu0
        %2426 = vmatprep.mubr.f32.mxu0 %v2095
        %2427 = vmatmul.mubr.f32.gmra.mxu0 %v2094
        %v2428 = vpop.f32.mrf.mxu0
        %v2429 = vadd.f32 %v999, %v2428
        %v2430 = vpop.f32.mrf.mxu0
        %2431 = vmatprep.mubr.f32.mxu0 %v2104
        %2432 = vmatmul.mubr.f32.gmra.mxu0 %v2103
        %v2433 = vpop.f32.mrf.mxu0
        %v2434 = vadd.f32 %v999, %v2433
        %v2435 = vpop.f32.mrf.mxu0
        %2436 = vmatprep.mubr.f32.mxu0 %v2113
        %2437 = vmatmul.mubr.f32.gmra.mxu0 %v2112
        %v2438 = vpop.f32.mrf.mxu0
        %v2439 = vadd.f32 %v999, %v2438
        %v2440 = vpop.f32.mrf.mxu0
        %2441 = vmatprep.mubr.f32.mxu0 %v2122
        %2442 = vmatmul.mubr.f32.gmra.mxu0 %v2121
        %v2443 = vpop.f32.mrf.mxu0
        %v2444 = vadd.f32 %v999, %v2443
        %v2445 = vpop.f32.mrf.mxu0
        %2446 = vmatprep.mubr.f32.mxu0 %v2131
        %2447 = vmatmul.mubr.f32.gmra.mxu0 %v2130
        %v2448 = vpop.f32.mrf.mxu0
        %v2449 = vadd.f32 %v999, %v2448
        %v2450 = vpop.f32.mrf.mxu0
        %2451 = vmatprep.mubr.f32.mxu0 %v2140
        %2452 = vmatmul.mubr.f32.gmra.mxu0 %v2139
        %v2453 = vpop.f32.mrf.mxu0
        %v2454 = vadd.f32 %v999, %v2453
        %v2455 = vpop.f32.mrf.mxu0
        %2456 = vmatprep.mubr.f32.mxu0 %v2149
        %2457 = vmatmul.mubr.f32.gmra.mxu0 %v2148
        %v2458 = vpop.f32.mrf.mxu0
        %v2459 = vadd.f32 %v999, %v2458
        %v2460 = vpop.f32.mrf.mxu0
        %2461 = vmatprep.mubr.f32.mxu0 %v2158
        %2462 = vmatmul.mubr.f32.gmra.mxu0 %v2157
        %v2463 = vpop.f32.mrf.mxu0
        %v2464 = vadd.f32 %v999, %v2463
        %v2465 = vpop.f32.mrf.mxu0
        %2466 = vmatprep.mubr.f32.mxu0 %v2167
        %2467 = vmatmul.mubr.f32.gmra.mxu0 %v2166
        %v2468 = vpop.f32.mrf.mxu0
        %v2469 = vadd.f32 %v999, %v2468
        %v2470 = vpop.f32.mrf.mxu0
        %2471 = vmatprep.mubr.f32.mxu0 %v2176
        %2472 = vmatmul.mubr.f32.gmra.mxu0 %v2175
        %v2473 = vpop.f32.mrf.mxu0
        %v2474 = vadd.f32 %v999, %v2473
        %v2475 = vpop.f32.mrf.mxu0
        %2476 = vmatprep.mubr.f32.mxu0 %v2185
        %2477 = vmatmul.mubr.f32.gmra.mxu0 %v2184
        %v2478 = vpop.f32.mrf.mxu0
        %v2479 = vadd.f32 %v999, %v2478
        %v2480 = vpop.f32.mrf.mxu0
        %2481 = vdwg.mxu0
        %2482 = vmatprep.subr.mxu0 0.0
        %2483 = vmatpush1.msra.mxu0 %v2240
        %2484 = vmatprep.subr.mxu0 0.0
        %2485 = vmatpush1.msra.mxu0 %v2239
        %2486 = vmatprep.subr.mxu0 0.0
        %2487 = vmatpush1.msra.mxu0 %v2238
        %2488 = vmatprep.subr.mxu0 0.0
        %2489 = vmatpush1.msra.mxu0 %v2237
        %2490 = vmatprep.subr.mxu0 0.0
        %2491 = vmatpush1.msra.mxu0 %v2236
        %2492 = vmatprep.subr.mxu0 0.0
        %2493 = vmatpush1.msra.mxu0 %v2235
        %2494 = vmatprep.subr.mxu0 0.0
        %2495 = vmatpush1.msra.mxu0 %v2234
        %2496 = vmatprep.subr.mxu0 0.0
        %2497 = vmatpush1.msra.mxu0 %v2233
        %2498 = vmatprep.subr.mxu0 0.0
        %2499 = vmatpush1.msra.mxu0 %v2232
        %2500 = vmatprep.subr.mxu0 0.0
        %2501 = vmatpush1.msra.mxu0 %v2231
        %2502 = vmatprep.subr.mxu0 0.0
        %2503 = vmatpush1.msra.mxu0 %v2230
        %2504 = vmatprep.subr.mxu0 0.0
        %2505 = vmatpush1.msra.mxu0 %v2229
        %2506 = vmatprep.subr.mxu0 0.0
        %2507 = vmatpush1.msra.mxu0 %v2228
        %2508 = vmatprep.subr.mxu0 0.0
        %2509 = vmatpush1.msra.mxu0 %v2227
        %2510 = vmatprep.subr.mxu0 0.0
        %2511 = vmatpush1.msra.mxu0 %v2226
        %2512 = vmatprep.subr.mxu0 0.0
        %2513 = vmatpush1.msra.mxu0 %v2225
        %2514 = vmatprep.subr.mxu0 0.0
        %2515 = vmatpush2.msra.mxu0 %v2256
        %2516 = vmatprep.subr.mxu0 0.0
        %2517 = vmatpush2.msra.mxu0 %v2255
        %2518 = vmatprep.subr.mxu0 0.0
        %2519 = vmatpush2.msra.mxu0 %v2254
        %2520 = vmatprep.subr.mxu0 0.0
        %2521 = vmatpush2.msra.mxu0 %v2253
        %2522 = vmatprep.subr.mxu0 0.0
        %2523 = vmatpush2.msra.mxu0 %v2252
        %2524 = vmatprep.subr.mxu0 0.0
        %2525 = vmatpush2.msra.mxu0 %v2251
        %2526 = vmatprep.subr.mxu0 0.0
        %2527 = vmatpush2.msra.mxu0 %v2250
        %2528 = vmatprep.subr.mxu0 0.0
        %2529 = vmatpush2.msra.mxu0 %v2249
        %2530 = vmatprep.subr.mxu0 0.0
        %2531 = vmatpush2.msra.mxu0 %v2248
        %2532 = vmatprep.subr.mxu0 0.0
        %2533 = vmatpush2.msra.mxu0 %v2247
        %2534 = vmatprep.subr.mxu0 0.0
        %2535 = vmatpush2.msra.mxu0 %v2246
        %2536 = vmatprep.subr.mxu0 0.0
        %2537 = vmatpush2.msra.mxu0 %v2245
        %2538 = vmatprep.subr.mxu0 0.0
        %2539 = vmatpush2.msra.mxu0 %v2244
        %2540 = vmatprep.subr.mxu0 0.0
        %2541 = vmatpush2.msra.mxu0 %v2243
        %2542 = vmatprep.subr.mxu0 0.0
        %2543 = vmatpush2.msra.mxu0 %v2242
        %2544 = vmatprep.subr.mxu0 0.0
        %2545 = vmatpush2.msra.mxu0 %v2241
        %2546 = vmatprep.mubr.f32.mxu0 %v2052
        %2547 = vmatmul.mubr.f32.gmra.mxu0 %v2051
        %v2548 = vpop.f32.mrf.mxu0
        %v2549 = vadd.f32 %v2404, %v2548
        %v2550 = vpop.f32.mrf.mxu0
        %2551 = vmatprep.mubr.f32.mxu0 %v2061
        %2552 = vmatmul.mubr.f32.gmra.mxu0 %v2060
        %v2553 = vpop.f32.mrf.mxu0
        %v2554 = vadd.f32 %v2409, %v2553
        %v2555 = vpop.f32.mrf.mxu0
        %2556 = vmatprep.mubr.f32.mxu0 %v2070
        %2557 = vmatmul.mubr.f32.gmra.mxu0 %v2069
        %v2558 = vpop.f32.mrf.mxu0
        %v2559 = vadd.f32 %v2414, %v2558
        %v2560 = vpop.f32.mrf.mxu0
        %2561 = vmatprep.mubr.f32.mxu0 %v2079
        %2562 = vmatmul.mubr.f32.gmra.mxu0 %v2078
        %v2563 = vpop.f32.mrf.mxu0
        %v2564 = vadd.f32 %v2419, %v2563
        %v2565 = vpop.f32.mrf.mxu0
        %2566 = vmatprep.mubr.f32.mxu0 %v2088
        %2567 = vmatmul.mubr.f32.gmra.mxu0 %v2087
        %v2568 = vpop.f32.mrf.mxu0
        %v2569 = vadd.f32 %v2424, %v2568
        %v2570 = vpop.f32.mrf.mxu0
        %2571 = vmatprep.mubr.f32.mxu0 %v2097
        %2572 = vmatmul.mubr.f32.gmra.mxu0 %v2096
        %v2573 = vpop.f32.mrf.mxu0
        %v2574 = vadd.f32 %v2429, %v2573
        %v2575 = vpop.f32.mrf.mxu0
        %2576 = vmatprep.mubr.f32.mxu0 %v2106
        %2577 = vmatmul.mubr.f32.gmra.mxu0 %v2105
        %v2578 = vpop.f32.mrf.mxu0
        %v2579 = vadd.f32 %v2434, %v2578
        %v2580 = vpop.f32.mrf.mxu0
        %2581 = vmatprep.mubr.f32.mxu0 %v2115
        %2582 = vmatmul.mubr.f32.gmra.mxu0 %v2114
        %v2583 = vpop.f32.mrf.mxu0
        %v2584 = vadd.f32 %v2439, %v2583
        %v2585 = vpop.f32.mrf.mxu0
        %2586 = vmatprep.mubr.f32.mxu0 %v2124
        %2587 = vmatmul.mubr.f32.gmra.mxu0 %v2123
        %v2588 = vpop.f32.mrf.mxu0
        %v2589 = vadd.f32 %v2444, %v2588
        %v2590 = vpop.f32.mrf.mxu0
        %2591 = vmatprep.mubr.f32.mxu0 %v2133
        %2592 = vmatmul.mubr.f32.gmra.mxu0 %v2132
        %v2593 = vpop.f32.mrf.mxu0
        %v2594 = vadd.f32 %v2449, %v2593
        %v2595 = vpop.f32.mrf.mxu0
        %2596 = vmatprep.mubr.f32.mxu0 %v2142
        %2597 = vmatmul.mubr.f32.gmra.mxu0 %v2141
        %v2598 = vpop.f32.mrf.mxu0
        %v2599 = vadd.f32 %v2454, %v2598
        %v2600 = vpop.f32.mrf.mxu0
        %2601 = vmatprep.mubr.f32.mxu0 %v2151
        %2602 = vmatmul.mubr.f32.gmra.mxu0 %v2150
        %v2603 = vpop.f32.mrf.mxu0
        %v2604 = vadd.f32 %v2459, %v2603
        %v2605 = vpop.f32.mrf.mxu0
        %2606 = vmatprep.mubr.f32.mxu0 %v2160
        %2607 = vmatmul.mubr.f32.gmra.mxu0 %v2159
        %v2608 = vpop.f32.mrf.mxu0
        %v2609 = vadd.f32 %v2464, %v2608
        %v2610 = vpop.f32.mrf.mxu0
        %2611 = vmatprep.mubr.f32.mxu0 %v2169
        %2612 = vmatmul.mubr.f32.gmra.mxu0 %v2168
        %v2613 = vpop.f32.mrf.mxu0
        %v2614 = vadd.f32 %v2469, %v2613
        %v2615 = vpop.f32.mrf.mxu0
        %2616 = vmatprep.mubr.f32.mxu0 %v2178
        %2617 = vmatmul.mubr.f32.gmra.mxu0 %v2177
        %v2618 = vpop.f32.mrf.mxu0
        %v2619 = vadd.f32 %v2474, %v2618
        %v2620 = vpop.f32.mrf.mxu0
        %2621 = vmatprep.mubr.f32.mxu0 %v2187
        %2622 = vmatmul.mubr.f32.gmra.mxu0 %v2186
        %v2623 = vpop.f32.mrf.mxu0
        %v2624 = vadd.f32 %v2479, %v2623
        %v2625 = vpop.f32.mrf.mxu0
        %2626 = vdwg.mxu0
        %2627 = vmatprep.subr.mxu0 0.0
        %2628 = vmatpush1.msra.mxu0 %v2272
        %2629 = vmatprep.subr.mxu0 0.0
        %2630 = vmatpush1.msra.mxu0 %v2271
        %2631 = vmatprep.subr.mxu0 0.0
        %2632 = vmatpush1.msra.mxu0 %v2270
        %2633 = vmatprep.subr.mxu0 0.0
        %2634 = vmatpush1.msra.mxu0 %v2269
        %2635 = vmatprep.subr.mxu0 0.0
        %2636 = vmatpush1.msra.mxu0 %v2268
        %2637 = vmatprep.subr.mxu0 0.0
        %2638 = vmatpush1.msra.mxu0 %v2267
        %2639 = vmatprep.subr.mxu0 0.0
        %2640 = vmatpush1.msra.mxu0 %v2266
        %2641 = vmatprep.subr.mxu0 0.0
        %2642 = vmatpush1.msra.mxu0 %v2265
        %2643 = vmatprep.subr.mxu0 0.0
        %2644 = vmatpush1.msra.mxu0 %v2264
        %2645 = vmatprep.subr.mxu0 0.0
        %2646 = vmatpush1.msra.mxu0 %v2263
        %2647 = vmatprep.subr.mxu0 0.0
        %2648 = vmatpush1.msra.mxu0 %v2262
        %2649 = vmatprep.subr.mxu0 0.0
        %2650 = vmatpush1.msra.mxu0 %v2261
        %2651 = vmatprep.subr.mxu0 0.0
        %2652 = vmatpush1.msra.mxu0 %v2260
        %2653 = vmatprep.subr.mxu0 0.0
        %2654 = vmatpush1.msra.mxu0 %v2259
        %2655 = vmatprep.subr.mxu0 0.0
        %2656 = vmatpush1.msra.mxu0 %v2258
        %2657 = vmatprep.subr.mxu0 0.0
        %2658 = vmatpush1.msra.mxu0 %v2257
        %2659 = vmatprep.subr.mxu0 0.0
        %2660 = vmatpush2.msra.mxu0 %v2288
        %2661 = vmatprep.subr.mxu0 0.0
        %2662 = vmatpush2.msra.mxu0 %v2287
        %2663 = vmatprep.subr.mxu0 0.0
        %2664 = vmatpush2.msra.mxu0 %v2286
        %2665 = vmatprep.subr.mxu0 0.0
        %2666 = vmatpush2.msra.mxu0 %v2285
        %2667 = vmatprep.subr.mxu0 0.0
        %2668 = vmatpush2.msra.mxu0 %v2284
        %2669 = vmatprep.subr.mxu0 0.0
        %2670 = vmatpush2.msra.mxu0 %v2283
        %2671 = vmatprep.subr.mxu0 0.0
        %2672 = vmatpush2.msra.mxu0 %v2282
        %2673 = vmatprep.subr.mxu0 0.0
        %2674 = vmatpush2.msra.mxu0 %v2281
        %2675 = vmatprep.subr.mxu0 0.0
        %2676 = vmatpush2.msra.mxu0 %v2280
        %2677 = vmatprep.subr.mxu0 0.0
        %2678 = vmatpush2.msra.mxu0 %v2279
        %2679 = vmatprep.subr.mxu0 0.0
        %2680 = vmatpush2.msra.mxu0 %v2278
        %2681 = vmatprep.subr.mxu0 0.0
        %2682 = vmatpush2.msra.mxu0 %v2277
        %2683 = vmatprep.subr.mxu0 0.0
        %2684 = vmatpush2.msra.mxu0 %v2276
        %2685 = vmatprep.subr.mxu0 0.0
        %2686 = vmatpush2.msra.mxu0 %v2275
        %2687 = vmatprep.subr.mxu0 0.0
        %2688 = vmatpush2.msra.mxu0 %v2274
        %2689 = vmatprep.subr.mxu0 0.0
        %2690 = vmatpush2.msra.mxu0 %v2273
        %2691 = vmatprep.mubr.f32.mxu0 %v2054
        %2692 = vmatmul.mubr.f32.gmra.mxu0 %v2053
        %v2693 = vpop.f32.mrf.mxu0
        %v2694 = vadd.f32 %v2549, %v2693
        %v2695 = vpop.f32.mrf.mxu0
        %2696 = vmatprep.mubr.f32.mxu0 %v2063
        %2697 = vmatmul.mubr.f32.gmra.mxu0 %v2062
        %v2698 = vpop.f32.mrf.mxu0
        %v2699 = vadd.f32 %v2554, %v2698
        %v2700 = vpop.f32.mrf.mxu0
        %2701 = vmatprep.mubr.f32.mxu0 %v2072
        %2702 = vmatmul.mubr.f32.gmra.mxu0 %v2071
        %v2703 = vpop.f32.mrf.mxu0
        %v2704 = vadd.f32 %v2559, %v2703
        %v2705 = vpop.f32.mrf.mxu0
        %2706 = vmatprep.mubr.f32.mxu0 %v2081
        %2707 = vmatmul.mubr.f32.gmra.mxu0 %v2080
        %v2708 = vpop.f32.mrf.mxu0
        %v2709 = vadd.f32 %v2564, %v2708
        %v2710 = vpop.f32.mrf.mxu0
        %2711 = vmatprep.mubr.f32.mxu0 %v2090
        %2712 = vmatmul.mubr.f32.gmra.mxu0 %v2089
        %v2713 = vpop.f32.mrf.mxu0
        %v2714 = vadd.f32 %v2569, %v2713
        %v2715 = vpop.f32.mrf.mxu0
        %2716 = vmatprep.mubr.f32.mxu0 %v2099
        %2717 = vmatmul.mubr.f32.gmra.mxu0 %v2098
        %v2718 = vpop.f32.mrf.mxu0
        %v2719 = vadd.f32 %v2574, %v2718
        %v2720 = vpop.f32.mrf.mxu0
        %2721 = vmatprep.mubr.f32.mxu0 %v2108
        %2722 = vmatmul.mubr.f32.gmra.mxu0 %v2107
        %v2723 = vpop.f32.mrf.mxu0
        %v2724 = vadd.f32 %v2579, %v2723
        %v2725 = vpop.f32.mrf.mxu0
        %2726 = vmatprep.mubr.f32.mxu0 %v2117
        %2727 = vmatmul.mubr.f32.gmra.mxu0 %v2116
        %v2728 = vpop.f32.mrf.mxu0
        %v2729 = vadd.f32 %v2584, %v2728
        %v2730 = vpop.f32.mrf.mxu0
        %2731 = vmatprep.mubr.f32.mxu0 %v2126
        %2732 = vmatmul.mubr.f32.gmra.mxu0 %v2125
        %v2733 = vpop.f32.mrf.mxu0
        %v2734 = vadd.f32 %v2589, %v2733
        %v2735 = vpop.f32.mrf.mxu0
        %2736 = vmatprep.mubr.f32.mxu0 %v2135
        %2737 = vmatmul.mubr.f32.gmra.mxu0 %v2134
        %v2738 = vpop.f32.mrf.mxu0
        %v2739 = vadd.f32 %v2594, %v2738
        %v2740 = vpop.f32.mrf.mxu0
        %2741 = vmatprep.mubr.f32.mxu0 %v2144
        %2742 = vmatmul.mubr.f32.gmra.mxu0 %v2143
        %v2743 = vpop.f32.mrf.mxu0
        %v2744 = vadd.f32 %v2599, %v2743
        %v2745 = vpop.f32.mrf.mxu0
        %2746 = vmatprep.mubr.f32.mxu0 %v2153
        %2747 = vmatmul.mubr.f32.gmra.mxu0 %v2152
        %v2748 = vpop.f32.mrf.mxu0
        %v2749 = vadd.f32 %v2604, %v2748
        %v2750 = vpop.f32.mrf.mxu0
        %2751 = vmatprep.mubr.f32.mxu0 %v2162
        %2752 = vmatmul.mubr.f32.gmra.mxu0 %v2161
        %v2753 = vpop.f32.mrf.mxu0
        %v2754 = vadd.f32 %v2609, %v2753
        %v2755 = vpop.f32.mrf.mxu0
        %2756 = vmatprep.mubr.f32.mxu0 %v2171
        %2757 = vmatmul.mubr.f32.gmra.mxu0 %v2170
        %v2758 = vpop.f32.mrf.mxu0
        %v2759 = vadd.f32 %v2614, %v2758
        %v2760 = vpop.f32.mrf.mxu0
        %2761 = vmatprep.mubr.f32.mxu0 %v2180
        %2762 = vmatmul.mubr.f32.gmra.mxu0 %v2179
        %v2763 = vpop.f32.mrf.mxu0
        %v2764 = vadd.f32 %v2619, %v2763
        %v2765 = vpop.f32.mrf.mxu0
        %2766 = vmatprep.mubr.f32.mxu0 %v2189
        %2767 = vmatmul.mubr.f32.gmra.mxu0 %v2188
        %v2768 = vpop.f32.mrf.mxu0
        %v2769 = vadd.f32 %v2624, %v2768
        %v2770 = vpop.f32.mrf.mxu0
        %2771 = vdwg.mxu0
        %2772 = vmatprep.subr.mxu0 0.0
        %2773 = vmatpush1.msra.mxu0 %v2304
        %2774 = vmatprep.subr.mxu0 0.0
        %2775 = vmatpush1.msra.mxu0 %v2303
        %2776 = vmatprep.subr.mxu0 0.0
        %2777 = vmatpush1.msra.mxu0 %v2302
        %2778 = vmatprep.subr.mxu0 0.0
        %2779 = vmatpush1.msra.mxu0 %v2301
        %2780 = vmatprep.subr.mxu0 0.0
        %2781 = vmatpush1.msra.mxu0 %v2300
        %2782 = vmatprep.subr.mxu0 0.0
        %2783 = vmatpush1.msra.mxu0 %v2299
        %2784 = vmatprep.subr.mxu0 0.0
        %2785 = vmatpush1.msra.mxu0 %v2298
        %2786 = vmatprep.subr.mxu0 0.0
        %2787 = vmatpush1.msra.mxu0 %v2297
        %2788 = vmatprep.subr.mxu0 0.0
        %2789 = vmatpush1.msra.mxu0 %v2296
        %2790 = vmatprep.subr.mxu0 0.0
        %2791 = vmatpush1.msra.mxu0 %v2295
        %2792 = vmatprep.subr.mxu0 0.0
        %2793 = vmatpush1.msra.mxu0 %v2294
        %2794 = vmatprep.subr.mxu0 0.0
        %2795 = vmatpush1.msra.mxu0 %v2293
        %2796 = vmatprep.subr.mxu0 0.0
        %2797 = vmatpush1.msra.mxu0 %v2292
        %2798 = vmatprep.subr.mxu0 0.0
        %2799 = vmatpush1.msra.mxu0 %v2291
        %2800 = vmatprep.subr.mxu0 0.0
        %2801 = vmatpush1.msra.mxu0 %v2290
        %2802 = vmatprep.subr.mxu0 0.0
        %2803 = vmatpush1.msra.mxu0 %v2289
        %2804 = vmatprep.subr.mxu0 0.0
        %2805 = vmatpush2.msra.mxu0 %v2320
        %2806 = vmatprep.subr.mxu0 0.0
        %2807 = vmatpush2.msra.mxu0 %v2319
        %2808 = vmatprep.subr.mxu0 0.0
        %2809 = vmatpush2.msra.mxu0 %v2318
        %2810 = vmatprep.subr.mxu0 0.0
        %2811 = vmatpush2.msra.mxu0 %v2317
        %2812 = vmatprep.subr.mxu0 0.0
        %2813 = vmatpush2.msra.mxu0 %v2316
        %2814 = vmatprep.subr.mxu0 0.0
        %2815 = vmatpush2.msra.mxu0 %v2315
        %2816 = vmatprep.subr.mxu0 0.0
        %2817 = vmatpush2.msra.mxu0 %v2314
        %2818 = vmatprep.subr.mxu0 0.0
        %2819 = vmatpush2.msra.mxu0 %v2313
        %2820 = vmatprep.subr.mxu0 0.0
        %2821 = vmatpush2.msra.mxu0 %v2312
        %2822 = vmatprep.subr.mxu0 0.0
        %2823 = vmatpush2.msra.mxu0 %v2311
        %2824 = vmatprep.subr.mxu0 0.0
        %2825 = vmatpush2.msra.mxu0 %v2310
        %2826 = vmatprep.subr.mxu0 0.0
        %2827 = vmatpush2.msra.mxu0 %v2309
        %2828 = vmatprep.subr.mxu0 0.0
        %2829 = vmatpush2.msra.mxu0 %v2308
        %2830 = vmatprep.subr.mxu0 0.0
        %2831 = vmatpush2.msra.mxu0 %v2307
        %2832 = vmatprep.subr.mxu0 0.0
        %2833 = vmatpush2.msra.mxu0 %v2306
        %2834 = vmatprep.subr.mxu0 0.0
        %2835 = vmatpush2.msra.mxu0 %v2305
        %2836 = vmatprep.mubr.f32.mxu0 %v2056
        %2837 = vmatmul.mubr.f32.gmra.mxu0 %v2055
        %v2838 = vpop.f32.mrf.mxu0
        %v2839 = vadd.f32 %v2694, %v2838
        %v2840 = vpop.f32.mrf.mxu0
        %2841 = vmatprep.mubr.f32.mxu0 %v2065
        %2842 = vmatmul.mubr.f32.gmra.mxu0 %v2064
        %v2843 = vpop.f32.mrf.mxu0
        %v2844 = vadd.f32 %v2699, %v2843
        %v2845 = vpop.f32.mrf.mxu0
        %2846 = vmatprep.mubr.f32.mxu0 %v2074
        %2847 = vmatmul.mubr.f32.gmra.mxu0 %v2073
        %v2848 = vpop.f32.mrf.mxu0
        %v2849 = vadd.f32 %v2704, %v2848
        %v2850 = vpop.f32.mrf.mxu0
        %2851 = vmatprep.mubr.f32.mxu0 %v2083
        %2852 = vmatmul.mubr.f32.gmra.mxu0 %v2082
        %v2853 = vpop.f32.mrf.mxu0
        %v2854 = vadd.f32 %v2709, %v2853
        %v2855 = vpop.f32.mrf.mxu0
        %2856 = vmatprep.mubr.f32.mxu0 %v2092
        %2857 = vmatmul.mubr.f32.gmra.mxu0 %v2091
        %v2858 = vpop.f32.mrf.mxu0
        %v2859 = vadd.f32 %v2714, %v2858
        %v2860 = vpop.f32.mrf.mxu0
        %2861 = vmatprep.mubr.f32.mxu0 %v2101
        %2862 = vmatmul.mubr.f32.gmra.mxu0 %v2100
        %v2863 = vpop.f32.mrf.mxu0
        %v2864 = vadd.f32 %v2719, %v2863
        %v2865 = vpop.f32.mrf.mxu0
        %2866 = vmatprep.mubr.f32.mxu0 %v2110
        %2867 = vmatmul.mubr.f32.gmra.mxu0 %v2109
        %v2868 = vpop.f32.mrf.mxu0
        %v2869 = vadd.f32 %v2724, %v2868
        %v2870 = vpop.f32.mrf.mxu0
        %2871 = vmatprep.mubr.f32.mxu0 %v2119
        %2872 = vmatmul.mubr.f32.gmra.mxu0 %v2118
        %v2873 = vpop.f32.mrf.mxu0
        %v2874 = vadd.f32 %v2729, %v2873
        %v2875 = vpop.f32.mrf.mxu0
        %2876 = vmatprep.mubr.f32.mxu0 %v2128
        %2877 = vmatmul.mubr.f32.gmra.mxu0 %v2127
        %v2878 = vpop.f32.mrf.mxu0
        %v2879 = vadd.f32 %v2734, %v2878
        %v2880 = vpop.f32.mrf.mxu0
        %2881 = vmatprep.mubr.f32.mxu0 %v2137
        %2882 = vmatmul.mubr.f32.gmra.mxu0 %v2136
        %v2883 = vpop.f32.mrf.mxu0
        %v2884 = vadd.f32 %v2739, %v2883
        %v2885 = vpop.f32.mrf.mxu0
        %2886 = vmatprep.mubr.f32.mxu0 %v2146
        %2887 = vmatmul.mubr.f32.gmra.mxu0 %v2145
        %v2888 = vpop.f32.mrf.mxu0
        %v2889 = vadd.f32 %v2744, %v2888
        %v2890 = vpop.f32.mrf.mxu0
        %2891 = vmatprep.mubr.f32.mxu0 %v2155
        %2892 = vmatmul.mubr.f32.gmra.mxu0 %v2154
        %v2893 = vpop.f32.mrf.mxu0
        %v2894 = vadd.f32 %v2749, %v2893
        %v2895 = vpop.f32.mrf.mxu0
        %2896 = vmatprep.mubr.f32.mxu0 %v2164
        %2897 = vmatmul.mubr.f32.gmra.mxu0 %v2163
        %v2898 = vpop.f32.mrf.mxu0
        %v2899 = vadd.f32 %v2754, %v2898
        %v2900 = vpop.f32.mrf.mxu0
        %2901 = vmatprep.mubr.f32.mxu0 %v2173
        %2902 = vmatmul.mubr.f32.gmra.mxu0 %v2172
        %v2903 = vpop.f32.mrf.mxu0
        %v2904 = vadd.f32 %v2759, %v2903
        %v2905 = vpop.f32.mrf.mxu0
        %2906 = vmatprep.mubr.f32.mxu0 %v2182
        %2907 = vmatmul.mubr.f32.gmra.mxu0 %v2181
        %v2908 = vpop.f32.mrf.mxu0
        %v2909 = vadd.f32 %v2764, %v2908
        %v2910 = vpop.f32.mrf.mxu0
        %2911 = vmatprep.mubr.f32.mxu0 %v2191
        %2912 = vmatmul.mubr.f32.gmra.mxu0 %v2190
        %v2913 = vpop.f32.mrf.mxu0
        %v2914 = vadd.f32 %v2769, %v2913
        %v2915 = vpop.f32.mrf.mxu0
        %2916 = vdwg.mxu0
        %2917 = vmatprep.subr.mxu0 0.0
        %2918 = vmatpush1.msra.mxu0 %v2336
        %2919 = vmatprep.subr.mxu0 0.0
        %2920 = vmatpush1.msra.mxu0 %v2335
        %2921 = vmatprep.subr.mxu0 0.0
        %2922 = vmatpush1.msra.mxu0 %v2334
        %2923 = vmatprep.subr.mxu0 0.0
        %2924 = vmatpush1.msra.mxu0 %v2333
        %2925 = vmatprep.subr.mxu0 0.0
        %2926 = vmatpush1.msra.mxu0 %v2332
        %2927 = vmatprep.subr.mxu0 0.0
        %2928 = vmatpush1.msra.mxu0 %v2331
        %2929 = vmatprep.subr.mxu0 0.0
        %2930 = vmatpush1.msra.mxu0 %v2330
        %2931 = vmatprep.subr.mxu0 0.0
        %2932 = vmatpush1.msra.mxu0 %v2329
        %2933 = vmatprep.subr.mxu0 0.0
        %2934 = vmatpush1.msra.mxu0 %v2328
        %2935 = vmatprep.subr.mxu0 0.0
        %2936 = vmatpush1.msra.mxu0 %v2327
        %2937 = vmatprep.subr.mxu0 0.0
        %2938 = vmatpush1.msra.mxu0 %v2326
        %2939 = vmatprep.subr.mxu0 0.0
        %2940 = vmatpush1.msra.mxu0 %v2325
        %2941 = vmatprep.subr.mxu0 0.0
        %2942 = vmatpush1.msra.mxu0 %v2324
        %2943 = vmatprep.subr.mxu0 0.0
        %2944 = vmatpush1.msra.mxu0 %v2323
        %2945 = vmatprep.subr.mxu0 0.0
        %2946 = vmatpush1.msra.mxu0 %v2322
        %2947 = vmatprep.subr.mxu0 0.0
        %2948 = vmatpush1.msra.mxu0 %v2321
        %2949 = vmatprep.subr.mxu0 0.0
        %2950 = vmatpush2.msra.mxu0 0.0
        %2951 = vmatprep.subr.mxu0 0.0
        %2952 = vmatpush2.msra.mxu0 0.0
        %2953 = vmatprep.subr.mxu0 0.0
        %2954 = vmatpush2.msra.mxu0 0.0
        %2955 = vmatprep.subr.mxu0 0.0
        %2956 = vmatpush2.msra.mxu0 0.0
        %2957 = vmatprep.subr.mxu0 0.0
        %2958 = vmatpush2.msra.mxu0 0.0
        %2959 = vmatprep.subr.mxu0 0.0
        %2960 = vmatpush2.msra.mxu0 0.0
        %2961 = vmatprep.subr.mxu0 0.0
        %2962 = vmatpush2.msra.mxu0 0.0
        %2963 = vmatprep.subr.mxu0 0.0
        %2964 = vmatpush2.msra.mxu0 0.0
        %2965 = vmatprep.subr.mxu0 0.0
        %2966 = vmatpush2.msra.mxu0 0.0
        %2967 = vmatprep.subr.mxu0 0.0
        %2968 = vmatpush2.msra.mxu0 0.0
        %2969 = vmatprep.subr.mxu0 0.0
        %2970 = vmatpush2.msra.mxu0 0.0
        %2971 = vmatprep.subr.mxu0 0.0
        %2972 = vmatpush2.msra.mxu0 0.0
        %2973 = vmatprep.subr.mxu0 0.0
        %2974 = vmatpush2.msra.mxu0 0.0
        %2975 = vmatprep.subr.mxu0 0.0
        %2976 = vmatpush2.msra.mxu0 0.0
        %2977 = vmatprep.subr.mxu0 0.0
        %2978 = vmatpush2.msra.mxu0 0.0
        %2979 = vmatprep.subr.mxu0 0.0
        %2980 = vmatpush2.msra.mxu0 0.0
        %2981 = vmatprep.mubr.f32.mxu0 0.0
        %2982 = vmatmul.mubr.f32.gmra.mxu0 %v2057
        %v2983 = vpop.f32.mrf.mxu0
        %v2984 = vadd.f32 %v2839, %v2983
        %v2985 = vpop.f32.mrf.mxu0
        %2986 = vmatprep.mubr.f32.mxu0 0.0
        %2987 = vmatmul.mubr.f32.gmra.mxu0 %v2066
        %v2988 = vpop.f32.mrf.mxu0
        %v2989 = vadd.f32 %v2844, %v2988
        %v2990 = vpop.f32.mrf.mxu0
        %2991 = vmatprep.mubr.f32.mxu0 0.0
        %2992 = vmatmul.mubr.f32.gmra.mxu0 %v2075
        %v2993 = vpop.f32.mrf.mxu0
        %v2994 = vadd.f32 %v2849, %v2993
        %v2995 = vpop.f32.mrf.mxu0
        %2996 = vmatprep.mubr.f32.mxu0 0.0
        %2997 = vmatmul.mubr.f32.gmra.mxu0 %v2084
        %v2998 = vpop.f32.mrf.mxu0
        %v2999 = vadd.f32 %v2854, %v2998
        %v3000 = vpop.f32.mrf.mxu0
        %3001 = vmatprep.mubr.f32.mxu0 0.0
        %3002 = vmatmul.mubr.f32.gmra.mxu0 %v2093
        %v3003 = vpop.f32.mrf.mxu0
        %v3004 = vadd.f32 %v2859, %v3003
        %v3005 = vpop.f32.mrf.mxu0
        %3006 = vmatprep.mubr.f32.mxu0 0.0
        %3007 = vmatmul.mubr.f32.gmra.mxu0 %v2102
        %v3008 = vpop.f32.mrf.mxu0
        %v3009 = vadd.f32 %v2864, %v3008
        %v3010 = vpop.f32.mrf.mxu0
        %3011 = vmatprep.mubr.f32.mxu0 0.0
        %3012 = vmatmul.mubr.f32.gmra.mxu0 %v2111
        %v3013 = vpop.f32.mrf.mxu0
        %v3014 = vadd.f32 %v2869, %v3013
        %v3015 = vpop.f32.mrf.mxu0
        %3016 = vmatprep.mubr.f32.mxu0 0.0
        %3017 = vmatmul.mubr.f32.gmra.mxu0 %v2120
        %v3018 = vpop.f32.mrf.mxu0
        %v3019 = vadd.f32 %v2874, %v3018
        %v3020 = vpop.f32.mrf.mxu0
        %3021 = vmatprep.mubr.f32.mxu0 0.0
        %3022 = vmatmul.mubr.f32.gmra.mxu0 %v2129
        %v3023 = vpop.f32.mrf.mxu0
        %v3024 = vadd.f32 %v2879, %v3023
        %v3025 = vpop.f32.mrf.mxu0
        %3026 = vmatprep.mubr.f32.mxu0 0.0
        %3027 = vmatmul.mubr.f32.gmra.mxu0 %v2138
        %v3028 = vpop.f32.mrf.mxu0
        %v3029 = vadd.f32 %v2884, %v3028
        %v3030 = vpop.f32.mrf.mxu0
        %3031 = vmatprep.mubr.f32.mxu0 0.0
        %3032 = vmatmul.mubr.f32.gmra.mxu0 %v2147
        %v3033 = vpop.f32.mrf.mxu0
        %v3034 = vadd.f32 %v2889, %v3033
        %v3035 = vpop.f32.mrf.mxu0
        %3036 = vmatprep.mubr.f32.mxu0 0.0
        %3037 = vmatmul.mubr.f32.gmra.mxu0 %v2156
        %v3038 = vpop.f32.mrf.mxu0
        %v3039 = vadd.f32 %v2894, %v3038
        %v3040 = vpop.f32.mrf.mxu0
        %3041 = vmatprep.mubr.f32.mxu0 0.0
        %3042 = vmatmul.mubr.f32.gmra.mxu0 %v2165
        %v3043 = vpop.f32.mrf.mxu0
        %v3044 = vadd.f32 %v2899, %v3043
        %v3045 = vpop.f32.mrf.mxu0
        %3046 = vmatprep.mubr.f32.mxu0 0.0
        %3047 = vmatmul.mubr.f32.gmra.mxu0 %v2174
        %v3048 = vpop.f32.mrf.mxu0
        %v3049 = vadd.f32 %v2904, %v3048
        %v3050 = vpop.f32.mrf.mxu0
        %3051 = vmatprep.mubr.f32.mxu0 0.0
        %3052 = vmatmul.mubr.f32.gmra.mxu0 %v2183
        %v3053 = vpop.f32.mrf.mxu0
        %v3054 = vadd.f32 %v2909, %v3053
        %v3055 = vpop.f32.mrf.mxu0
        %3056 = vmatprep.mubr.f32.mxu0 0.0
        %3057 = vmatmul.mubr.f32.gmra.mxu0 %v2192
        %v3058 = vpop.f32.mrf.mxu0
        %v3059 = vadd.f32 %v2914, %v3058
        %v3060 = vpop.f32.mrf.mxu0
        %3061 = vdwg.mxu0
        %v3062 = vmax.f32 %v2984, 0.0
        %v3063 = vmax.f32 %v2989, 0.0
        %v3064 = vmax.f32 %v2994, 0.0
        %v3065 = vmax.f32 %v2999, 0.0
        %v3066 = vmax.f32 %v3004, 0.0
        %v3067 = vmax.f32 %v3009, 0.0
        %v3068 = vmax.f32 %v3014, 0.0
        %v3069 = vmax.f32 %v3019, 0.0
        %v3070 = vmax.f32 %v3024, 0.0
        %v3071 = vmax.f32 %v3029, 0.0
        %v3072 = vmax.f32 %v3034, 0.0
        %v3073 = vmax.f32 %v3039, 0.0
        %v3074 = vmax.f32 %v3044, 0.0
        %v3075 = vmax.f32 %v3049, 0.0
        %v3076 = vmax.f32 %v3054, 0.0
        %v3077 = vmax.f32 %v3059, 0.0
        %s3078 = scalar_lea.vmem [#allocation3], 216
        %3079 = vst [vmem:[%s3078 + $0x1] sm:$0xff] %v3062
        %3080 = vst [vmem:[%s3078 + $0x9] sm:$0xff] %v3063
        %3081 = vst [vmem:[%s3078 + $0x19] sm:$0xff] %v3064
        %3082 = vst [vmem:[%s3078 + $0x21] sm:$0xff] %v3065
        %3083 = vst [vmem:[%s3078 + $0x31] sm:$0xff] %v3066
        %3084 = vst [vmem:[%s3078 + $0x39] sm:$0xff] %v3067
        %3085 = vst [vmem:[%s3078 + $0x49] sm:$0xff] %v3068
        %3086 = vst [vmem:[%s3078 + $0x51] sm:$0xff] %v3069
        %3087 = vst [vmem:[%s3078 + $0x61] sm:$0xff] %v3070
        %3088 = vst [vmem:[%s3078 + $0x69] sm:$0xff] %v3071
        %3089 = vst [vmem:[%s3078 + $0x79] sm:$0xff] %v3072
        %3090 = vst [vmem:[%s3078 + $0x81] sm:$0xff] %v3073
        %3091 = vst [vmem:[%s3078 + $0x91] sm:$0xff] %v3074
        %3092 = vst [vmem:[%s3078 + $0x99] sm:$0xff] %v3075
        %3093 = vst [vmem:[%s3078 + $0xa9] sm:$0xff] %v3076
        %3094 = vst [vmem:[%s3078 + $0xb1] sm:$0xff] %v3077
        %v3095 = vld [vmem:[#allocation3] sm:$0xff]
        %v3096 = vld [vmem:[#allocation3 + $0x8] sm:$0xff]
        %v3097 = vld [vmem:[#allocation3 + $0x18] sm:$0xff]
        %v3098 = vld [vmem:[#allocation3 + $0x20] sm:$0xff]
        %v3099 = vld [vmem:[#allocation3 + $0x30] sm:$0xff]
        %v3100 = vld [vmem:[#allocation3 + $0x38] sm:$0xff]
        %v3101 = vld [vmem:[#allocation3 + $0x48] sm:$0xff]
        %v3102 = vld [vmem:[#allocation3 + $0x50] sm:$0xff]
        %v3103 = vld [vmem:[#allocation3 + $0x60] sm:$0xff]
        %v3104 = vld [vmem:[#allocation3 + $0x68] sm:$0xff]
        %v3105 = vld [vmem:[#allocation3 + $0x78] sm:$0xff]
        %v3106 = vld [vmem:[#allocation3 + $0x80] sm:$0xff]
        %v3107 = vld [vmem:[#allocation3 + $0x90] sm:$0xff]
        %v3108 = vld [vmem:[#allocation3 + $0x98] sm:$0xff]
        %v3109 = vld [vmem:[#allocation3 + $0xa8] sm:$0xff]
        %v3110 = vld [vmem:[#allocation3 + $0xb0] sm:$0xff]
        %3111 = vst [vmem:[#allocation4] sm:$0xff] %v3095
        %3112 = vst [vmem:[#allocation4 + $0x48] sm:$0xff] %v3096
        %3113 = vst [vmem:[#allocation4 + $0x90] sm:$0xff] %v3097
        %3114 = vst [vmem:[#allocation4 + $0xd8] sm:$0xff] %v3098
        %3115 = vst [vmem:[#allocation4 + $0x120] sm:$0xff] %v3099
        %3116 = vst [vmem:[#allocation4 + $0x168] sm:$0xff] %v3100
        %3117 = vst [vmem:[#allocation4 + $0x1b0] sm:$0xff] %v3101
        %3118 = vst [vmem:[#allocation4 + $0x1f8] sm:$0xff] %v3102
        %3119 = vst [vmem:[#allocation4 + $0x240] sm:$0xff] %v3103
        %3120 = vst [vmem:[#allocation4 + $0x288] sm:$0xff] %v3104
        %3121 = vst [vmem:[#allocation4 + $0x2d0] sm:$0xff] %v3105
        %3122 = vst [vmem:[#allocation4 + $0x318] sm:$0xff] %v3106
        %3123 = vst [vmem:[#allocation4 + $0x360] sm:$0xff] %v3107
        %3124 = vst [vmem:[#allocation4 + $0x3a8] sm:$0xff] %v3108
        %3125 = vst [vmem:[#allocation4 + $0x3f0] sm:$0xff] %v3109
        %3126 = vst [vmem:[#allocation4 + $0x438] sm:$0xff] %v3110
        %v3127 = vld [vmem:[#allocation3 + $0x1] sm:$0xff]
        %v3128 = vld [vmem:[#allocation3 + $0x9] sm:$0xff]
        %v3129 = vld [vmem:[#allocation3 + $0x19] sm:$0xff]
        %v3130 = vld [vmem:[#allocation3 + $0x21] sm:$0xff]
        %v3131 = vld [vmem:[#allocation3 + $0x31] sm:$0xff]
        %v3132 = vld [vmem:[#allocation3 + $0x39] sm:$0xff]
        %v3133 = vld [vmem:[#allocation3 + $0x49] sm:$0xff]
        %v3134 = vld [vmem:[#allocation3 + $0x51] sm:$0xff]
        %v3135 = vld [vmem:[#allocation3 + $0x61] sm:$0xff]
        %v3136 = vld [vmem:[#allocation3 + $0x69] sm:$0xff]
        %v3137 = vld [vmem:[#allocation3 + $0x79] sm:$0xff]
        %v3138 = vld [vmem:[#allocation3 + $0x81] sm:$0xff]
        %v3139 = vld [vmem:[#allocation3 + $0x91] sm:$0xff]
        %v3140 = vld [vmem:[#allocation3 + $0x99] sm:$0xff]
        %v3141 = vld [vmem:[#allocation3 + $0xa9] sm:$0xff]
        %v3142 = vld [vmem:[#allocation3 + $0xb1] sm:$0xff]
        %3143 = vst [vmem:[#allocation4 + $0x8] sm:$0xff] %v3127
        %3144 = vst [vmem:[#allocation4 + $0x50] sm:$0xff] %v3128
        %3145 = vst [vmem:[#allocation4 + $0x98] sm:$0xff] %v3129
        %3146 = vst [vmem:[#allocation4 + $0xe0] sm:$0xff] %v3130
        %3147 = vst [vmem:[#allocation4 + $0x128] sm:$0xff] %v3131
        %3148 = vst [vmem:[#allocation4 + $0x170] sm:$0xff] %v3132
        %3149 = vst [vmem:[#allocation4 + $0x1b8] sm:$0xff] %v3133
        %3150 = vst [vmem:[#allocation4 + $0x200] sm:$0xff] %v3134
        %3151 = vst [vmem:[#allocation4 + $0x248] sm:$0xff] %v3135
        %3152 = vst [vmem:[#allocation4 + $0x290] sm:$0xff] %v3136
        %3153 = vst [vmem:[#allocation4 + $0x2d8] sm:$0xff] %v3137
        %3154 = vst [vmem:[#allocation4 + $0x320] sm:$0xff] %v3138
        %3155 = vst [vmem:[#allocation4 + $0x368] sm:$0xff] %v3139
        %3156 = vst [vmem:[#allocation4 + $0x3b0] sm:$0xff] %v3140
        %3157 = vst [vmem:[#allocation4 + $0x3f8] sm:$0xff] %v3141
        %3158 = vst [vmem:[#allocation4 + $0x440] sm:$0xff] %v3142
        %v3159 = vld [vmem:[#allocation3 + $0x2] sm:$0xff]
        %v3160 = vld [vmem:[#allocation3 + $0xa] sm:$0xff]
        %v3161 = vld [vmem:[#allocation3 + $0x1a] sm:$0xff]
        %v3162 = vld [vmem:[#allocation3 + $0x22] sm:$0xff]
        %v3163 = vld [vmem:[#allocation3 + $0x32] sm:$0xff]
        %v3164 = vld [vmem:[#allocation3 + $0x3a] sm:$0xff]
        %v3165 = vld [vmem:[#allocation3 + $0x4a] sm:$0xff]
        %v3166 = vld [vmem:[#allocation3 + $0x52] sm:$0xff]
        %v3167 = vld [vmem:[#allocation3 + $0x62] sm:$0xff]
        %v3168 = vld [vmem:[#allocation3 + $0x6a] sm:$0xff]
        %v3169 = vld [vmem:[#allocation3 + $0x7a] sm:$0xff]
        %v3170 = vld [vmem:[#allocation3 + $0x82] sm:$0xff]
        %v3171 = vld [vmem:[#allocation3 + $0x92] sm:$0xff]
        %v3172 = vld [vmem:[#allocation3 + $0x9a] sm:$0xff]
        %v3173 = vld [vmem:[#allocation3 + $0xaa] sm:$0xff]
        %v3174 = vld [vmem:[#allocation3 + $0xb2] sm:$0xff]
        %3175 = vst [vmem:[#allocation4 + $0x10] sm:$0xff] %v3159
        %3176 = vst [vmem:[#allocation4 + $0x58] sm:$0xff] %v3160
        %3177 = vst [vmem:[#allocation4 + $0xa0] sm:$0xff] %v3161
        %3178 = vst [vmem:[#allocation4 + $0xe8] sm:$0xff] %v3162
        %3179 = vst [vmem:[#allocation4 + $0x130] sm:$0xff] %v3163
        %3180 = vst [vmem:[#allocation4 + $0x178] sm:$0xff] %v3164
        %3181 = vst [vmem:[#allocation4 + $0x1c0] sm:$0xff] %v3165
        %3182 = vst [vmem:[#allocation4 + $0x208] sm:$0xff] %v3166
        %3183 = vst [vmem:[#allocation4 + $0x250] sm:$0xff] %v3167
        %3184 = vst [vmem:[#allocation4 + $0x298] sm:$0xff] %v3168
        %3185 = vst [vmem:[#allocation4 + $0x2e0] sm:$0xff] %v3169
        %3186 = vst [vmem:[#allocation4 + $0x328] sm:$0xff] %v3170
        %3187 = vst [vmem:[#allocation4 + $0x370] sm:$0xff] %v3171
        %3188 = vst [vmem:[#allocation4 + $0x3b8] sm:$0xff] %v3172
        %3189 = vst [vmem:[#allocation4 + $0x400] sm:$0xff] %v3173
        %3190 = vst [vmem:[#allocation4 + $0x448] sm:$0xff] %v3174
        %v3191 = vld [vmem:[%s319] sm:$0xff]
        %v3192 = vld [vmem:[%s319 + $0x8] sm:$0xff]
        %v3193 = vld [vmem:[%s319 + $0x18] sm:$0xff]
        %v3194 = vld [vmem:[%s319 + $0x20] sm:$0xff]
        %v3195 = vld [vmem:[%s319 + $0x30] sm:$0xff]
        %v3196 = vld [vmem:[%s319 + $0x38] sm:$0xff]
        %v3197 = vld [vmem:[%s319 + $0x48] sm:$0xff]
        %v3198 = vld [vmem:[%s319 + $0x50] sm:$0xff]
        %v3199 = vld [vmem:[%s319 + $0x60] sm:$0xff]
        %v3200 = vld [vmem:[%s319 + $0x68] sm:$0xff]
        %v3201 = vld [vmem:[%s319 + $0x78] sm:$0xff]
        %v3202 = vld [vmem:[%s319 + $0x80] sm:$0xff]
        %v3203 = vld [vmem:[%s319 + $0x90] sm:$0xff]
        %v3204 = vld [vmem:[%s319 + $0x98] sm:$0xff]
        %v3205 = vld [vmem:[%s319 + $0xa8] sm:$0xff]
        %v3206 = vld [vmem:[%s319 + $0xb0] sm:$0xff]
        %3207 = vst [vmem:[#allocation4 + $0x18] sm:$0xff] %v3191
        %3208 = vst [vmem:[#allocation4 + $0x60] sm:$0xff] %v3192
        %3209 = vst [vmem:[#allocation4 + $0xa8] sm:$0xff] %v3193
        %3210 = vst [vmem:[#allocation4 + $0xf0] sm:$0xff] %v3194
        %3211 = vst [vmem:[#allocation4 + $0x138] sm:$0xff] %v3195
        %3212 = vst [vmem:[#allocation4 + $0x180] sm:$0xff] %v3196
        %3213 = vst [vmem:[#allocation4 + $0x1c8] sm:$0xff] %v3197
        %3214 = vst [vmem:[#allocation4 + $0x210] sm:$0xff] %v3198
        %3215 = vst [vmem:[#allocation4 + $0x258] sm:$0xff] %v3199
        %3216 = vst [vmem:[#allocation4 + $0x2a0] sm:$0xff] %v3200
        %3217 = vst [vmem:[#allocation4 + $0x2e8] sm:$0xff] %v3201
        %3218 = vst [vmem:[#allocation4 + $0x330] sm:$0xff] %v3202
        %3219 = vst [vmem:[#allocation4 + $0x378] sm:$0xff] %v3203
        %3220 = vst [vmem:[#allocation4 + $0x3c0] sm:$0xff] %v3204
        %3221 = vst [vmem:[#allocation4 + $0x408] sm:$0xff] %v3205
        %3222 = vst [vmem:[#allocation4 + $0x450] sm:$0xff] %v3206
        %v3223 = vld [vmem:[%s319 + $0x1] sm:$0xff]
        %v3224 = vld [vmem:[%s319 + $0x9] sm:$0xff]
        %v3225 = vld [vmem:[%s319 + $0x19] sm:$0xff]
        %v3226 = vld [vmem:[%s319 + $0x21] sm:$0xff]
        %v3227 = vld [vmem:[%s319 + $0x31] sm:$0xff]
        %v3228 = vld [vmem:[%s319 + $0x39] sm:$0xff]
        %v3229 = vld [vmem:[%s319 + $0x49] sm:$0xff]
        %v3230 = vld [vmem:[%s319 + $0x51] sm:$0xff]
        %v3231 = vld [vmem:[%s319 + $0x61] sm:$0xff]
        %v3232 = vld [vmem:[%s319 + $0x69] sm:$0xff]
        %v3233 = vld [vmem:[%s319 + $0x79] sm:$0xff]
        %v3234 = vld [vmem:[%s319 + $0x81] sm:$0xff]
        %v3235 = vld [vmem:[%s319 + $0x91] sm:$0xff]
        %v3236 = vld [vmem:[%s319 + $0x99] sm:$0xff]
        %v3237 = vld [vmem:[%s319 + $0xa9] sm:$0xff]
        %v3238 = vld [vmem:[%s319 + $0xb1] sm:$0xff]
        %3239 = vst [vmem:[#allocation4 + $0x20] sm:$0xff] %v3223
        %3240 = vst [vmem:[#allocation4 + $0x68] sm:$0xff] %v3224
        %3241 = vst [vmem:[#allocation4 + $0xb0] sm:$0xff] %v3225
        %3242 = vst [vmem:[#allocation4 + $0xf8] sm:$0xff] %v3226
        %3243 = vst [vmem:[#allocation4 + $0x140] sm:$0xff] %v3227
        %3244 = vst [vmem:[#allocation4 + $0x188] sm:$0xff] %v3228
        %3245 = vst [vmem:[#allocation4 + $0x1d0] sm:$0xff] %v3229
        %3246 = vst [vmem:[#allocation4 + $0x218] sm:$0xff] %v3230
        %3247 = vst [vmem:[#allocation4 + $0x260] sm:$0xff] %v3231
        %3248 = vst [vmem:[#allocation4 + $0x2a8] sm:$0xff] %v3232
        %3249 = vst [vmem:[#allocation4 + $0x2f0] sm:$0xff] %v3233
        %3250 = vst [vmem:[#allocation4 + $0x338] sm:$0xff] %v3234
        %3251 = vst [vmem:[#allocation4 + $0x380] sm:$0xff] %v3235
        %3252 = vst [vmem:[#allocation4 + $0x3c8] sm:$0xff] %v3236
        %3253 = vst [vmem:[#allocation4 + $0x410] sm:$0xff] %v3237
        %3254 = vst [vmem:[#allocation4 + $0x458] sm:$0xff] %v3238
        %v3255 = vld [vmem:[%s319 + $0x2] sm:$0xff]
        %v3256 = vld [vmem:[%s319 + $0xa] sm:$0xff]
        %v3257 = vld [vmem:[%s319 + $0x1a] sm:$0xff]
        %v3258 = vld [vmem:[%s319 + $0x22] sm:$0xff]
        %v3259 = vld [vmem:[%s319 + $0x32] sm:$0xff]
        %v3260 = vld [vmem:[%s319 + $0x3a] sm:$0xff]
        %v3261 = vld [vmem:[%s319 + $0x4a] sm:$0xff]
        %v3262 = vld [vmem:[%s319 + $0x52] sm:$0xff]
        %v3263 = vld [vmem:[%s319 + $0x62] sm:$0xff]
        %v3264 = vld [vmem:[%s319 + $0x6a] sm:$0xff]
        %v3265 = vld [vmem:[%s319 + $0x7a] sm:$0xff]
        %v3266 = vld [vmem:[%s319 + $0x82] sm:$0xff]
        %v3267 = vld [vmem:[%s319 + $0x92] sm:$0xff]
        %v3268 = vld [vmem:[%s319 + $0x9a] sm:$0xff]
        %v3269 = vld [vmem:[%s319 + $0xaa] sm:$0xff]
        %v3270 = vld [vmem:[%s319 + $0xb2] sm:$0xff]
        %3271 = vst [vmem:[#allocation4 + $0x28] sm:$0xff] %v3255
        %3272 = vst [vmem:[#allocation4 + $0x70] sm:$0xff] %v3256
        %3273 = vst [vmem:[#allocation4 + $0xb8] sm:$0xff] %v3257
        %3274 = vst [vmem:[#allocation4 + $0x100] sm:$0xff] %v3258
        %3275 = vst [vmem:[#allocation4 + $0x148] sm:$0xff] %v3259
        %3276 = vst [vmem:[#allocation4 + $0x190] sm:$0xff] %v3260
        %3277 = vst [vmem:[#allocation4 + $0x1d8] sm:$0xff] %v3261
        %3278 = vst [vmem:[#allocation4 + $0x220] sm:$0xff] %v3262
        %3279 = vst [vmem:[#allocation4 + $0x268] sm:$0xff] %v3263
        %3280 = vst [vmem:[#allocation4 + $0x2b0] sm:$0xff] %v3264
        %3281 = vst [vmem:[#allocation4 + $0x2f8] sm:$0xff] %v3265
        %3282 = vst [vmem:[#allocation4 + $0x340] sm:$0xff] %v3266
        %3283 = vst [vmem:[#allocation4 + $0x388] sm:$0xff] %v3267
        %3284 = vst [vmem:[#allocation4 + $0x3d0] sm:$0xff] %v3268
        %3285 = vst [vmem:[#allocation4 + $0x418] sm:$0xff] %v3269
        %3286 = vst [vmem:[#allocation4 + $0x460] sm:$0xff] %v3270
        %s3287 = scalar_lea.vmem [#allocation3], 48
        %v3288 = vld [vmem:[%s3287] sm:$0xff]
        %v3289 = vld [vmem:[%s3287 + $0x8] sm:$0xff]
        %v3290 = vld [vmem:[%s3287 + $0x18] sm:$0xff]
        %v3291 = vld [vmem:[%s3287 + $0x20] sm:$0xff]
        %v3292 = vld [vmem:[%s3287 + $0x30] sm:$0xff]
        %v3293 = vld [vmem:[%s3287 + $0x38] sm:$0xff]
        %v3294 = vld [vmem:[%s3287 + $0x48] sm:$0xff]
        %v3295 = vld [vmem:[%s3287 + $0x50] sm:$0xff]
        %v3296 = vld [vmem:[%s3287 + $0x60] sm:$0xff]
        %v3297 = vld [vmem:[%s3287 + $0x68] sm:$0xff]
        %v3298 = vld [vmem:[%s3287 + $0x78] sm:$0xff]
        %v3299 = vld [vmem:[%s3287 + $0x80] sm:$0xff]
        %v3300 = vld [vmem:[%s3287 + $0x90] sm:$0xff]
        %v3301 = vld [vmem:[%s3287 + $0x98] sm:$0xff]
        %v3302 = vld [vmem:[%s3287 + $0xa8] sm:$0xff]
        %v3303 = vld [vmem:[%s3287 + $0xb0] sm:$0xff]
        %3304 = vst [vmem:[#allocation4 + $0x30] sm:$0xff] %v3288
        %3305 = vst [vmem:[#allocation4 + $0x78] sm:$0xff] %v3289
        %3306 = vst [vmem:[#allocation4 + $0xc0] sm:$0xff] %v3290
        %3307 = vst [vmem:[#allocation4 + $0x108] sm:$0xff] %v3291
        %3308 = vst [vmem:[#allocation4 + $0x150] sm:$0xff] %v3292
        %3309 = vst [vmem:[#allocation4 + $0x198] sm:$0xff] %v3293
        %3310 = vst [vmem:[#allocation4 + $0x1e0] sm:$0xff] %v3294
        %3311 = vst [vmem:[#allocation4 + $0x228] sm:$0xff] %v3295
        %3312 = vst [vmem:[#allocation4 + $0x270] sm:$0xff] %v3296
        %3313 = vst [vmem:[#allocation4 + $0x2b8] sm:$0xff] %v3297
        %3314 = vst [vmem:[#allocation4 + $0x300] sm:$0xff] %v3298
        %3315 = vst [vmem:[#allocation4 + $0x348] sm:$0xff] %v3299
        %3316 = vst [vmem:[#allocation4 + $0x390] sm:$0xff] %v3300
        %3317 = vst [vmem:[#allocation4 + $0x3d8] sm:$0xff] %v3301
        %3318 = vst [vmem:[#allocation4 + $0x420] sm:$0xff] %v3302
        %3319 = vst [vmem:[#allocation4 + $0x468] sm:$0xff] %v3303
        %v3320 = vld [vmem:[%s3287 + $0x1] sm:$0xff]
        %v3321 = vld [vmem:[%s3287 + $0x9] sm:$0xff]
        %v3322 = vld [vmem:[%s3287 + $0x19] sm:$0xff]
        %v3323 = vld [vmem:[%s3287 + $0x21] sm:$0xff]
        %v3324 = vld [vmem:[%s3287 + $0x31] sm:$0xff]
        %v3325 = vld [vmem:[%s3287 + $0x39] sm:$0xff]
        %v3326 = vld [vmem:[%s3287 + $0x49] sm:$0xff]
        %v3327 = vld [vmem:[%s3287 + $0x51] sm:$0xff]
        %v3328 = vld [vmem:[%s3287 + $0x61] sm:$0xff]
        %v3329 = vld [vmem:[%s3287 + $0x69] sm:$0xff]
        %v3330 = vld [vmem:[%s3287 + $0x79] sm:$0xff]
        %v3331 = vld [vmem:[%s3287 + $0x81] sm:$0xff]
        %v3332 = vld [vmem:[%s3287 + $0x91] sm:$0xff]
        %v3333 = vld [vmem:[%s3287 + $0x99] sm:$0xff]
        %v3334 = vld [vmem:[%s3287 + $0xa9] sm:$0xff]
        %v3335 = vld [vmem:[%s3287 + $0xb1] sm:$0xff]
        %3336 = vst [vmem:[#allocation4 + $0x38] sm:$0xff] %v3320
        %3337 = vst [vmem:[#allocation4 + $0x80] sm:$0xff] %v3321
        %3338 = vst [vmem:[#allocation4 + $0xc8] sm:$0xff] %v3322
        %3339 = vst [vmem:[#allocation4 + $0x110] sm:$0xff] %v3323
        %3340 = vst [vmem:[#allocation4 + $0x158] sm:$0xff] %v3324
        %3341 = vst [vmem:[#allocation4 + $0x1a0] sm:$0xff] %v3325
        %3342 = vst [vmem:[#allocation4 + $0x1e8] sm:$0xff] %v3326
        %3343 = vst [vmem:[#allocation4 + $0x230] sm:$0xff] %v3327
        %3344 = vst [vmem:[#allocation4 + $0x278] sm:$0xff] %v3328
        %3345 = vst [vmem:[#allocation4 + $0x2c0] sm:$0xff] %v3329
        %3346 = vst [vmem:[#allocation4 + $0x308] sm:$0xff] %v3330
        %3347 = vst [vmem:[#allocation4 + $0x350] sm:$0xff] %v3331
        %3348 = vst [vmem:[#allocation4 + $0x398] sm:$0xff] %v3332
        %3349 = vst [vmem:[#allocation4 + $0x3e0] sm:$0xff] %v3333
        %3350 = vst [vmem:[#allocation4 + $0x428] sm:$0xff] %v3334
        %3351 = vst [vmem:[#allocation4 + $0x470] sm:$0xff] %v3335
        %v3352 = vld [vmem:[%s3287 + $0x2] sm:$0xff]
        %v3353 = vld [vmem:[%s3287 + $0xa] sm:$0xff]
        %v3354 = vld [vmem:[%s3287 + $0x1a] sm:$0xff]
        %v3355 = vld [vmem:[%s3287 + $0x22] sm:$0xff]
        %v3356 = vld [vmem:[%s3287 + $0x32] sm:$0xff]
        %v3357 = vld [vmem:[%s3287 + $0x3a] sm:$0xff]
        %v3358 = vld [vmem:[%s3287 + $0x4a] sm:$0xff]
        %v3359 = vld [vmem:[%s3287 + $0x52] sm:$0xff]
        %v3360 = vld [vmem:[%s3287 + $0x62] sm:$0xff]
        %v3361 = vld [vmem:[%s3287 + $0x6a] sm:$0xff]
        %v3362 = vld [vmem:[%s3287 + $0x7a] sm:$0xff]
        %v3363 = vld [vmem:[%s3287 + $0x82] sm:$0xff]
        %v3364 = vld [vmem:[%s3287 + $0x92] sm:$0xff]
        %v3365 = vld [vmem:[%s3287 + $0x9a] sm:$0xff]
        %v3366 = vld [vmem:[%s3287 + $0xaa] sm:$0xff]
        %v3367 = vld [vmem:[%s3287 + $0xb2] sm:$0xff]
        %3368 = vst [vmem:[#allocation4 + $0x40] sm:$0xff] %v3352
        %3369 = vst [vmem:[#allocation4 + $0x88] sm:$0xff] %v3353
        %3370 = vst [vmem:[#allocation4 + $0xd0] sm:$0xff] %v3354
        %3371 = vst [vmem:[#allocation4 + $0x118] sm:$0xff] %v3355
        %3372 = vst [vmem:[#allocation4 + $0x160] sm:$0xff] %v3356
        %3373 = vst [vmem:[#allocation4 + $0x1a8] sm:$0xff] %v3357
        %3374 = vst [vmem:[#allocation4 + $0x1f0] sm:$0xff] %v3358
        %3375 = vst [vmem:[#allocation4 + $0x238] sm:$0xff] %v3359
        %3376 = vst [vmem:[#allocation4 + $0x280] sm:$0xff] %v3360
        %3377 = vst [vmem:[#allocation4 + $0x2c8] sm:$0xff] %v3361
        %3378 = vst [vmem:[#allocation4 + $0x310] sm:$0xff] %v3362
        %3379 = vst [vmem:[#allocation4 + $0x358] sm:$0xff] %v3363
        %3380 = vst [vmem:[#allocation4 + $0x3a0] sm:$0xff] %v3364
        %3381 = vst [vmem:[#allocation4 + $0x3e8] sm:$0xff] %v3365
        %3382 = vst [vmem:[#allocation4 + $0x430] sm:$0xff] %v3366
        %3383 = vst [vmem:[#allocation4 + $0x478] sm:$0xff] %v3367
        %v3384 = vld [vmem:[#allocation4] sm:$0xff]
        %v3385 = vld [vmem:[#allocation4 + $0x8] sm:$0xff]
        %v3386 = vld [vmem:[#allocation4 + $0x10] sm:$0xff]
        %v3387 = vld [vmem:[#allocation4 + $0x18] sm:$0xff]
        %v3388 = vld [vmem:[#allocation4 + $0x20] sm:$0xff]
        %v3389 = vld [vmem:[#allocation4 + $0x28] sm:$0xff]
        %v3390 = vld [vmem:[#allocation4 + $0x30] sm:$0xff]
        %v3391 = vld [vmem:[#allocation4 + $0x38] sm:$0xff]
        %v3392 = vld [vmem:[#allocation4 + $0x40] sm:$0xff]
        %v3393 = vld [vmem:[#allocation4 + $0x48] sm:$0xff]
        %v3394 = vld [vmem:[#allocation4 + $0x50] sm:$0xff]
        %v3395 = vld [vmem:[#allocation4 + $0x58] sm:$0xff]
        %v3396 = vld [vmem:[#allocation4 + $0x60] sm:$0xff]
        %v3397 = vld [vmem:[#allocation4 + $0x68] sm:$0xff]
        %v3398 = vld [vmem:[#allocation4 + $0x70] sm:$0xff]
        %v3399 = vld [vmem:[#allocation4 + $0x78] sm:$0xff]
        %v3400 = vld [vmem:[#allocation4 + $0x80] sm:$0xff]
        %v3401 = vld [vmem:[#allocation4 + $0x88] sm:$0xff]
        %v3402 = vld [vmem:[#allocation4 + $0x90] sm:$0xff]
        %v3403 = vld [vmem:[#allocation4 + $0x98] sm:$0xff]
        %v3404 = vld [vmem:[#allocation4 + $0xa0] sm:$0xff]
        %v3405 = vld [vmem:[#allocation4 + $0xa8] sm:$0xff]
        %v3406 = vld [vmem:[#allocation4 + $0xb0] sm:$0xff]
        %v3407 = vld [vmem:[#allocation4 + $0xb8] sm:$0xff]
        %v3408 = vld [vmem:[#allocation4 + $0xc0] sm:$0xff]
        %v3409 = vld [vmem:[#allocation4 + $0xc8] sm:$0xff]
        %v3410 = vld [vmem:[#allocation4 + $0xd0] sm:$0xff]
        %v3411 = vld [vmem:[#allocation4 + $0xd8] sm:$0xff]
        %v3412 = vld [vmem:[#allocation4 + $0xe0] sm:$0xff]
        %v3413 = vld [vmem:[#allocation4 + $0xe8] sm:$0xff]
        %v3414 = vld [vmem:[#allocation4 + $0xf0] sm:$0xff]
        %v3415 = vld [vmem:[#allocation4 + $0xf8] sm:$0xff]
        %v3416 = vld [vmem:[#allocation4 + $0x100] sm:$0xff]
        %v3417 = vld [vmem:[#allocation4 + $0x108] sm:$0xff]
        %v3418 = vld [vmem:[#allocation4 + $0x110] sm:$0xff]
        %v3419 = vld [vmem:[#allocation4 + $0x118] sm:$0xff]
        %v3420 = vld [vmem:[#allocation4 + $0x120] sm:$0xff]
        %v3421 = vld [vmem:[#allocation4 + $0x128] sm:$0xff]
        %v3422 = vld [vmem:[#allocation4 + $0x130] sm:$0xff]
        %v3423 = vld [vmem:[#allocation4 + $0x138] sm:$0xff]
        %v3424 = vld [vmem:[#allocation4 + $0x140] sm:$0xff]
        %v3425 = vld [vmem:[#allocation4 + $0x148] sm:$0xff]
        %v3426 = vld [vmem:[#allocation4 + $0x150] sm:$0xff]
        %v3427 = vld [vmem:[#allocation4 + $0x158] sm:$0xff]
        %v3428 = vld [vmem:[#allocation4 + $0x160] sm:$0xff]
        %v3429 = vld [vmem:[#allocation4 + $0x168] sm:$0xff]
        %v3430 = vld [vmem:[#allocation4 + $0x170] sm:$0xff]
        %v3431 = vld [vmem:[#allocation4 + $0x178] sm:$0xff]
        %v3432 = vld [vmem:[#allocation4 + $0x180] sm:$0xff]
        %v3433 = vld [vmem:[#allocation4 + $0x188] sm:$0xff]
        %v3434 = vld [vmem:[#allocation4 + $0x190] sm:$0xff]
        %v3435 = vld [vmem:[#allocation4 + $0x198] sm:$0xff]
        %v3436 = vld [vmem:[#allocation4 + $0x1a0] sm:$0xff]
        %v3437 = vld [vmem:[#allocation4 + $0x1a8] sm:$0xff]
        %v3438 = vld [vmem:[#allocation4 + $0x1b0] sm:$0xff]
        %v3439 = vld [vmem:[#allocation4 + $0x1b8] sm:$0xff]
        %v3440 = vld [vmem:[#allocation4 + $0x1c0] sm:$0xff]
        %v3441 = vld [vmem:[#allocation4 + $0x1c8] sm:$0xff]
        %v3442 = vld [vmem:[#allocation4 + $0x1d0] sm:$0xff]
        %v3443 = vld [vmem:[#allocation4 + $0x1d8] sm:$0xff]
        %v3444 = vld [vmem:[#allocation4 + $0x1e0] sm:$0xff]
        %v3445 = vld [vmem:[#allocation4 + $0x1e8] sm:$0xff]
        %v3446 = vld [vmem:[#allocation4 + $0x1f0] sm:$0xff]
        %v3447 = vld [vmem:[#allocation4 + $0x1f8] sm:$0xff]
        %v3448 = vld [vmem:[#allocation4 + $0x200] sm:$0xff]
        %v3449 = vld [vmem:[#allocation4 + $0x208] sm:$0xff]
        %v3450 = vld [vmem:[#allocation4 + $0x210] sm:$0xff]
        %v3451 = vld [vmem:[#allocation4 + $0x218] sm:$0xff]
        %v3452 = vld [vmem:[#allocation4 + $0x220] sm:$0xff]
        %v3453 = vld [vmem:[#allocation4 + $0x228] sm:$0xff]
        %v3454 = vld [vmem:[#allocation4 + $0x230] sm:$0xff]
        %v3455 = vld [vmem:[#allocation4 + $0x238] sm:$0xff]
        %v3456 = vld [vmem:[#allocation4 + $0x240] sm:$0xff]
        %v3457 = vld [vmem:[#allocation4 + $0x248] sm:$0xff]
        %v3458 = vld [vmem:[#allocation4 + $0x250] sm:$0xff]
        %v3459 = vld [vmem:[#allocation4 + $0x258] sm:$0xff]
        %v3460 = vld [vmem:[#allocation4 + $0x260] sm:$0xff]
        %v3461 = vld [vmem:[#allocation4 + $0x268] sm:$0xff]
        %v3462 = vld [vmem:[#allocation4 + $0x270] sm:$0xff]
        %v3463 = vld [vmem:[#allocation4 + $0x278] sm:$0xff]
        %v3464 = vld [vmem:[#allocation4 + $0x280] sm:$0xff]
        %v3465 = vld [vmem:[#allocation4 + $0x288] sm:$0xff]
        %v3466 = vld [vmem:[#allocation4 + $0x290] sm:$0xff]
        %v3467 = vld [vmem:[#allocation4 + $0x298] sm:$0xff]
        %v3468 = vld [vmem:[#allocation4 + $0x2a0] sm:$0xff]
        %v3469 = vld [vmem:[#allocation4 + $0x2a8] sm:$0xff]
        %v3470 = vld [vmem:[#allocation4 + $0x2b0] sm:$0xff]
        %v3471 = vld [vmem:[#allocation4 + $0x2b8] sm:$0xff]
        %v3472 = vld [vmem:[#allocation4 + $0x2c0] sm:$0xff]
        %v3473 = vld [vmem:[#allocation4 + $0x2c8] sm:$0xff]
        %v3474 = vld [vmem:[#allocation4 + $0x2d0] sm:$0xff]
        %v3475 = vld [vmem:[#allocation4 + $0x2d8] sm:$0xff]
        %v3476 = vld [vmem:[#allocation4 + $0x2e0] sm:$0xff]
        %v3477 = vld [vmem:[#allocation4 + $0x2e8] sm:$0xff]
        %v3478 = vld [vmem:[#allocation4 + $0x2f0] sm:$0xff]
        %v3479 = vld [vmem:[#allocation4 + $0x2f8] sm:$0xff]
        %v3480 = vld [vmem:[#allocation4 + $0x300] sm:$0xff]
        %v3481 = vld [vmem:[#allocation4 + $0x308] sm:$0xff]
        %v3482 = vld [vmem:[#allocation4 + $0x310] sm:$0xff]
        %v3483 = vld [vmem:[#allocation4 + $0x318] sm:$0xff]
        %v3484 = vld [vmem:[#allocation4 + $0x320] sm:$0xff]
        %v3485 = vld [vmem:[#allocation4 + $0x328] sm:$0xff]
        %v3486 = vld [vmem:[#allocation4 + $0x330] sm:$0xff]
        %v3487 = vld [vmem:[#allocation4 + $0x338] sm:$0xff]
        %v3488 = vld [vmem:[#allocation4 + $0x340] sm:$0xff]
        %v3489 = vld [vmem:[#allocation4 + $0x348] sm:$0xff]
        %v3490 = vld [vmem:[#allocation4 + $0x350] sm:$0xff]
        %v3491 = vld [vmem:[#allocation4 + $0x358] sm:$0xff]
        %v3492 = vld [vmem:[#allocation4 + $0x360] sm:$0xff]
        %v3493 = vld [vmem:[#allocation4 + $0x368] sm:$0xff]
        %v3494 = vld [vmem:[#allocation4 + $0x370] sm:$0xff]
        %v3495 = vld [vmem:[#allocation4 + $0x378] sm:$0xff]
        %v3496 = vld [vmem:[#allocation4 + $0x380] sm:$0xff]
        %v3497 = vld [vmem:[#allocation4 + $0x388] sm:$0xff]
        %v3498 = vld [vmem:[#allocation4 + $0x390] sm:$0xff]
        %v3499 = vld [vmem:[#allocation4 + $0x398] sm:$0xff]
        %v3500 = vld [vmem:[#allocation4 + $0x3a0] sm:$0xff]
        %v3501 = vld [vmem:[#allocation4 + $0x3a8] sm:$0xff]
        %v3502 = vld [vmem:[#allocation4 + $0x3b0] sm:$0xff]
        %v3503 = vld [vmem:[#allocation4 + $0x3b8] sm:$0xff]
        %v3504 = vld [vmem:[#allocation4 + $0x3c0] sm:$0xff]
        %v3505 = vld [vmem:[#allocation4 + $0x3c8] sm:$0xff]
        %v3506 = vld [vmem:[#allocation4 + $0x3d0] sm:$0xff]
        %v3507 = vld [vmem:[#allocation4 + $0x3d8] sm:$0xff]
        %v3508 = vld [vmem:[#allocation4 + $0x3e0] sm:$0xff]
        %v3509 = vld [vmem:[#allocation4 + $0x3e8] sm:$0xff]
        %v3510 = vld [vmem:[#allocation4 + $0x3f0] sm:$0xff]
        %v3511 = vld [vmem:[#allocation4 + $0x3f8] sm:$0xff]
        %v3512 = vld [vmem:[#allocation4 + $0x400] sm:$0xff]
        %v3513 = vld [vmem:[#allocation4 + $0x408] sm:$0xff]
        %v3514 = vld [vmem:[#allocation4 + $0x410] sm:$0xff]
        %v3515 = vld [vmem:[#allocation4 + $0x418] sm:$0xff]
        %v3516 = vld [vmem:[#allocation4 + $0x420] sm:$0xff]
        %v3517 = vld [vmem:[#allocation4 + $0x428] sm:$0xff]
        %v3518 = vld [vmem:[#allocation4 + $0x430] sm:$0xff]
        %v3519 = vld [vmem:[#allocation4 + $0x438] sm:$0xff]
        %v3520 = vld [vmem:[#allocation4 + $0x440] sm:$0xff]
        %v3521 = vld [vmem:[#allocation4 + $0x448] sm:$0xff]
        %v3522 = vld [vmem:[#allocation4 + $0x450] sm:$0xff]
        %v3523 = vld [vmem:[#allocation4 + $0x458] sm:$0xff]
        %v3524 = vld [vmem:[#allocation4 + $0x460] sm:$0xff]
        %v3525 = vld [vmem:[#allocation4 + $0x468] sm:$0xff]
        %v3526 = vld [vmem:[#allocation4 + $0x470] sm:$0xff]
        %v3527 = vld [vmem:[#allocation4 + $0x478] sm:$0xff]
        %v3528 = vld [vmem:[#allocation10] sm:$0xff]
        %v3529 = vld [vmem:[#allocation10 + $0x8] sm:$0xff]
        %v3530 = vld [vmem:[#allocation10 + $0x10] sm:$0xff]
        %v3531 = vld [vmem:[#allocation10 + $0x18] sm:$0xff]
        %v3532 = vld [vmem:[#allocation10 + $0x20] sm:$0xff]
        %v3533 = vld [vmem:[#allocation10 + $0x28] sm:$0xff]
        %v3534 = vld [vmem:[#allocation10 + $0x30] sm:$0xff]
        %v3535 = vld [vmem:[#allocation10 + $0x38] sm:$0xff]
        %v3536 = vld [vmem:[#allocation10 + $0x40] sm:$0xff]
        %v3537 = vld [vmem:[#allocation10 + $0x48] sm:$0xff]
        %v3538 = vld [vmem:[#allocation10 + $0x50] sm:$0xff]
        %v3539 = vld [vmem:[#allocation10 + $0x58] sm:$0xff]
        %v3540 = vld [vmem:[#allocation10 + $0x60] sm:$0xff]
        %v3541 = vld [vmem:[#allocation10 + $0x68] sm:$0xff]
        %v3542 = vld [vmem:[#allocation10 + $0x70] sm:$0xff]
        %v3543 = vld [vmem:[#allocation10 + $0x78] sm:$0xff]
        %v3544 = vld [vmem:[#allocation10 + $0x80] sm:$0xff]
        %v3545 = vld [vmem:[#allocation10 + $0x88] sm:$0xff]
        %v3546 = vld [vmem:[#allocation10 + $0x90] sm:$0xff]
        %v3547 = vld [vmem:[#allocation10 + $0x98] sm:$0xff]
        %v3548 = vld [vmem:[#allocation10 + $0xa0] sm:$0xff]
        %v3549 = vld [vmem:[#allocation10 + $0xa8] sm:$0xff]
        %v3550 = vld [vmem:[#allocation10 + $0xb0] sm:$0xff]
        %v3551 = vld [vmem:[#allocation10 + $0xb8] sm:$0xff]
        %v3552 = vld [vmem:[#allocation10 + $0xc0] sm:$0xff]
        %v3553 = vld [vmem:[#allocation10 + $0xc8] sm:$0xff]
        %v3554 = vld [vmem:[#allocation10 + $0xd0] sm:$0xff]
        %v3555 = vld [vmem:[#allocation10 + $0xd8] sm:$0xff]
        %v3556 = vld [vmem:[#allocation10 + $0xe0] sm:$0xff]
        %v3557 = vld [vmem:[#allocation10 + $0xe8] sm:$0xff]
        %v3558 = vld [vmem:[#allocation10 + $0xf0] sm:$0xff]
        %v3559 = vld [vmem:[#allocation10 + $0xf8] sm:$0xff]
        %v3560 = vld [vmem:[#allocation10 + $0x100] sm:$0xff]
        %v3561 = vld [vmem:[#allocation10 + $0x108] sm:$0xff]
        %v3562 = vld [vmem:[#allocation10 + $0x110] sm:$0xff]
        %v3563 = vld [vmem:[#allocation10 + $0x118] sm:$0xff]
        %v3564 = vld [vmem:[#allocation10 + $0x120] sm:$0xff]
        %v3565 = vld [vmem:[#allocation10 + $0x128] sm:$0xff]
        %v3566 = vld [vmem:[#allocation10 + $0x130] sm:$0xff]
        %v3567 = vld [vmem:[#allocation10 + $0x138] sm:$0xff]
        %v3568 = vld [vmem:[#allocation10 + $0x140] sm:$0xff]
        %v3569 = vld [vmem:[#allocation10 + $0x148] sm:$0xff]
        %v3570 = vld [vmem:[#allocation10 + $0x150] sm:$0xff]
        %v3571 = vld [vmem:[#allocation10 + $0x158] sm:$0xff]
        %v3572 = vld [vmem:[#allocation10 + $0x160] sm:$0xff]
        %v3573 = vld [vmem:[#allocation10 + $0x168] sm:$0xff]
        %v3574 = vld [vmem:[#allocation10 + $0x170] sm:$0xff]
        %v3575 = vld [vmem:[#allocation10 + $0x178] sm:$0xff]
        %v3576 = vld [vmem:[#allocation10 + $0x180] sm:$0xff]
        %v3577 = vld [vmem:[#allocation10 + $0x188] sm:$0xff]
        %v3578 = vld [vmem:[#allocation10 + $0x190] sm:$0xff]
        %v3579 = vld [vmem:[#allocation10 + $0x198] sm:$0xff]
        %v3580 = vld [vmem:[#allocation10 + $0x1a0] sm:$0xff]
        %v3581 = vld [vmem:[#allocation10 + $0x1a8] sm:$0xff]
        %v3582 = vld [vmem:[#allocation10 + $0x1b0] sm:$0xff]
        %v3583 = vld [vmem:[#allocation10 + $0x1b8] sm:$0xff]
        %v3584 = vld [vmem:[#allocation10 + $0x1c0] sm:$0xff]
        %v3585 = vld [vmem:[#allocation10 + $0x1c8] sm:$0xff]
        %v3586 = vld [vmem:[#allocation10 + $0x1d0] sm:$0xff]
        %v3587 = vld [vmem:[#allocation10 + $0x1d8] sm:$0xff]
        %v3588 = vld [vmem:[#allocation10 + $0x1e0] sm:$0xff]
        %v3589 = vld [vmem:[#allocation10 + $0x1e8] sm:$0xff]
        %v3590 = vld [vmem:[#allocation10 + $0x1f0] sm:$0xff]
        %v3591 = vld [vmem:[#allocation10 + $0x1f8] sm:$0xff]
        %v3592 = vld [vmem:[#allocation10 + $0x200] sm:$0xff]
        %v3593 = vld [vmem:[#allocation10 + $0x208] sm:$0xff]
        %v3594 = vld [vmem:[#allocation10 + $0x210] sm:$0xff]
        %v3595 = vld [vmem:[#allocation10 + $0x218] sm:$0xff]
        %v3596 = vld [vmem:[#allocation10 + $0x220] sm:$0xff]
        %v3597 = vld [vmem:[#allocation10 + $0x228] sm:$0xff]
        %v3598 = vld [vmem:[#allocation10 + $0x230] sm:$0xff]
        %v3599 = vld [vmem:[#allocation10 + $0x238] sm:$0xff]
        %v3600 = vld [vmem:[#allocation10 + $0x240] sm:$0xff]
        %v3601 = vld [vmem:[#allocation10 + $0x248] sm:$0xff]
        %v3602 = vld [vmem:[#allocation10 + $0x250] sm:$0xff]
        %v3603 = vld [vmem:[#allocation10 + $0x258] sm:$0xff]
        %v3604 = vld [vmem:[#allocation10 + $0x260] sm:$0xff]
        %v3605 = vld [vmem:[#allocation10 + $0x268] sm:$0xff]
        %v3606 = vld [vmem:[#allocation10 + $0x270] sm:$0xff]
        %v3607 = vld [vmem:[#allocation10 + $0x278] sm:$0xff]
        %v3608 = vld [vmem:[#allocation10 + $0x280] sm:$0xff]
        %v3609 = vld [vmem:[#allocation10 + $0x288] sm:$0xff]
        %v3610 = vld [vmem:[#allocation10 + $0x290] sm:$0xff]
        %v3611 = vld [vmem:[#allocation10 + $0x298] sm:$0xff]
        %v3612 = vld [vmem:[#allocation10 + $0x2a0] sm:$0xff]
        %v3613 = vld [vmem:[#allocation10 + $0x2a8] sm:$0xff]
        %v3614 = vld [vmem:[#allocation10 + $0x2b0] sm:$0xff]
        %v3615 = vld [vmem:[#allocation10 + $0x2b8] sm:$0xff]
        %v3616 = vld [vmem:[#allocation10 + $0x2c0] sm:$0xff]
        %v3617 = vld [vmem:[#allocation10 + $0x2c8] sm:$0xff]
        %v3618 = vld [vmem:[#allocation10 + $0x2d0] sm:$0xff]
        %v3619 = vld [vmem:[#allocation10 + $0x2d8] sm:$0xff]
        %v3620 = vld [vmem:[#allocation10 + $0x2e0] sm:$0xff]
        %v3621 = vld [vmem:[#allocation10 + $0x2e8] sm:$0xff]
        %v3622 = vld [vmem:[#allocation10 + $0x2f0] sm:$0xff]
        %v3623 = vld [vmem:[#allocation10 + $0x2f8] sm:$0xff]
        %v3624 = vld [vmem:[#allocation10 + $0x300] sm:$0xff]
        %v3625 = vld [vmem:[#allocation10 + $0x308] sm:$0xff]
        %v3626 = vld [vmem:[#allocation10 + $0x310] sm:$0xff]
        %v3627 = vld [vmem:[#allocation10 + $0x318] sm:$0xff]
        %v3628 = vld [vmem:[#allocation10 + $0x320] sm:$0xff]
        %v3629 = vld [vmem:[#allocation10 + $0x328] sm:$0xff]
        %v3630 = vld [vmem:[#allocation10 + $0x330] sm:$0xff]
        %v3631 = vld [vmem:[#allocation10 + $0x338] sm:$0xff]
        %v3632 = vld [vmem:[#allocation10 + $0x340] sm:$0xff]
        %v3633 = vld [vmem:[#allocation10 + $0x348] sm:$0xff]
        %v3634 = vld [vmem:[#allocation10 + $0x350] sm:$0xff]
        %v3635 = vld [vmem:[#allocation10 + $0x358] sm:$0xff]
        %v3636 = vld [vmem:[#allocation10 + $0x360] sm:$0xff]
        %v3637 = vld [vmem:[#allocation10 + $0x368] sm:$0xff]
        %v3638 = vld [vmem:[#allocation10 + $0x370] sm:$0xff]
        %v3639 = vld [vmem:[#allocation10 + $0x378] sm:$0xff]
        %v3640 = vld [vmem:[#allocation10 + $0x380] sm:$0xff]
        %v3641 = vld [vmem:[#allocation10 + $0x388] sm:$0xff]
        %v3642 = vld [vmem:[#allocation10 + $0x390] sm:$0xff]
        %v3643 = vld [vmem:[#allocation10 + $0x398] sm:$0xff]
        %v3644 = vld [vmem:[#allocation10 + $0x3a0] sm:$0xff]
        %v3645 = vld [vmem:[#allocation10 + $0x3a8] sm:$0xff]
        %v3646 = vld [vmem:[#allocation10 + $0x3b0] sm:$0xff]
        %v3647 = vld [vmem:[#allocation10 + $0x3b8] sm:$0xff]
        %v3648 = vld [vmem:[#allocation10 + $0x3c0] sm:$0xff]
        %v3649 = vld [vmem:[#allocation10 + $0x3c8] sm:$0xff]
        %v3650 = vld [vmem:[#allocation10 + $0x3d0] sm:$0xff]
        %v3651 = vld [vmem:[#allocation10 + $0x3d8] sm:$0xff]
        %v3652 = vld [vmem:[#allocation10 + $0x3e0] sm:$0xff]
        %v3653 = vld [vmem:[#allocation10 + $0x3e8] sm:$0xff]
        %v3654 = vld [vmem:[#allocation10 + $0x3f0] sm:$0xff]
        %v3655 = vld [vmem:[#allocation10 + $0x3f8] sm:$0xff]
        %v3656 = vld [vmem:[#allocation10 + $0x400] sm:$0xff]
        %v3657 = vld [vmem:[#allocation10 + $0x408] sm:$0xff]
        %v3658 = vld [vmem:[#allocation10 + $0x410] sm:$0xff]
        %v3659 = vld [vmem:[#allocation10 + $0x418] sm:$0xff]
        %v3660 = vld [vmem:[#allocation10 + $0x420] sm:$0xff]
        %v3661 = vld [vmem:[#allocation10 + $0x428] sm:$0xff]
        %v3662 = vld [vmem:[#allocation10 + $0x430] sm:$0xff]
        %v3663 = vld [vmem:[#allocation10 + $0x438] sm:$0xff]
        %v3664 = vld [vmem:[#allocation10 + $0x440] sm:$0xff]
        %v3665 = vld [vmem:[#allocation10 + $0x448] sm:$0xff]
        %v3666 = vld [vmem:[#allocation10 + $0x450] sm:$0xff]
        %v3667 = vld [vmem:[#allocation10 + $0x458] sm:$0xff]
        %v3668 = vld [vmem:[#allocation10 + $0x460] sm:$0xff]
        %v3669 = vld [vmem:[#allocation10 + $0x468] sm:$0xff]
        %v3670 = vld [vmem:[#allocation10 + $0x470] sm:$0xff]
        %v3671 = vld [vmem:[#allocation10 + $0x478] sm:$0xff]
        %v3673 = vlaneseq
        %v3674 = vshrl.u32 %v3673, 7
        %v3675 = vsub.s32 0, %v3674
        %v3676 = vrot.slane %v417, %v3675
        %3678 = vmatprep.subr.mxu0 0.0
        %3679 = vmatpush1.msra.mxu0 %v3543
        %3680 = vmatprep.subr.mxu0 0.0
        %3681 = vmatpush1.msra.mxu0 %v3542
        %3682 = vmatprep.subr.mxu0 0.0
        %3683 = vmatpush1.msra.mxu0 %v3541
        %3684 = vmatprep.subr.mxu0 0.0
        %3685 = vmatpush1.msra.mxu0 %v3540
        %3686 = vmatprep.subr.mxu0 0.0
        %3687 = vmatpush1.msra.mxu0 %v3539
        %3688 = vmatprep.subr.mxu0 0.0
        %3689 = vmatpush1.msra.mxu0 %v3538
        %3690 = vmatprep.subr.mxu0 0.0
        %3691 = vmatpush1.msra.mxu0 %v3537
        %3692 = vmatprep.subr.mxu0 0.0
        %3693 = vmatpush1.msra.mxu0 %v3536
        %3694 = vmatprep.subr.mxu0 0.0
        %3695 = vmatpush1.msra.mxu0 %v3535
        %3696 = vmatprep.subr.mxu0 0.0
        %3697 = vmatpush1.msra.mxu0 %v3534
        %3698 = vmatprep.subr.mxu0 0.0
        %3699 = vmatpush1.msra.mxu0 %v3533
        %3700 = vmatprep.subr.mxu0 0.0
        %3701 = vmatpush1.msra.mxu0 %v3532
        %3702 = vmatprep.subr.mxu0 0.0
        %3703 = vmatpush1.msra.mxu0 %v3531
        %3704 = vmatprep.subr.mxu0 0.0
        %3705 = vmatpush1.msra.mxu0 %v3530
        %3706 = vmatprep.subr.mxu0 0.0
        %3707 = vmatpush1.msra.mxu0 %v3529
        %3708 = vmatprep.subr.mxu0 0.0
        %3709 = vmatpush1.msra.mxu0 %v3528
        %3710 = vmatprep.subr.mxu0 0.0
        %3711 = vmatpush2.msra.mxu0 %v3559
        %3712 = vmatprep.subr.mxu0 0.0
        %3713 = vmatpush2.msra.mxu0 %v3558
        %3714 = vmatprep.subr.mxu0 0.0
        %3715 = vmatpush2.msra.mxu0 %v3557
        %3716 = vmatprep.subr.mxu0 0.0
        %3717 = vmatpush2.msra.mxu0 %v3556
        %3718 = vmatprep.subr.mxu0 0.0
        %3719 = vmatpush2.msra.mxu0 %v3555
        %3720 = vmatprep.subr.mxu0 0.0
        %3721 = vmatpush2.msra.mxu0 %v3554
        %3722 = vmatprep.subr.mxu0 0.0
        %3723 = vmatpush2.msra.mxu0 %v3553
        %3724 = vmatprep.subr.mxu0 0.0
        %3725 = vmatpush2.msra.mxu0 %v3552
        %3726 = vmatprep.subr.mxu0 0.0
        %3727 = vmatpush2.msra.mxu0 %v3551
        %3728 = vmatprep.subr.mxu0 0.0
        %3729 = vmatpush2.msra.mxu0 %v3550
        %3730 = vmatprep.subr.mxu0 0.0
        %3731 = vmatpush2.msra.mxu0 %v3549
        %3732 = vmatprep.subr.mxu0 0.0
        %3733 = vmatpush2.msra.mxu0 %v3548
        %3734 = vmatprep.subr.mxu0 0.0
        %3735 = vmatpush2.msra.mxu0 %v3547
        %3736 = vmatprep.subr.mxu0 0.0
        %3737 = vmatpush2.msra.mxu0 %v3546
        %3738 = vmatprep.subr.mxu0 0.0
        %3739 = vmatpush2.msra.mxu0 %v3545
        %3740 = vmatprep.subr.mxu0 0.0
        %3741 = vmatpush2.msra.mxu0 %v3544
        %3742 = vmatprep.mubr.f32.mxu0 %v3385
        %3743 = vmatmul.mubr.f32.gmra.mxu0 %v3384
        %v3744 = vpop.f32.mrf.mxu0
        %v3745 = vadd.f32 %v3676, %v3744
        %v3746 = vpop.f32.mrf.mxu0
        %3747 = vmatprep.mubr.f32.mxu0 %v3394
        %3748 = vmatmul.mubr.f32.gmra.mxu0 %v3393
        %v3749 = vpop.f32.mrf.mxu0
        %v3750 = vadd.f32 %v3676, %v3749
        %v3751 = vpop.f32.mrf.mxu0
        %3752 = vmatprep.mubr.f32.mxu0 %v3403
        %3753 = vmatmul.mubr.f32.gmra.mxu0 %v3402
        %v3754 = vpop.f32.mrf.mxu0
        %v3755 = vadd.f32 %v3676, %v3754
        %v3756 = vpop.f32.mrf.mxu0
        %3757 = vmatprep.mubr.f32.mxu0 %v3412
        %3758 = vmatmul.mubr.f32.gmra.mxu0 %v3411
        %v3759 = vpop.f32.mrf.mxu0
        %v3760 = vadd.f32 %v3676, %v3759
        %v3761 = vpop.f32.mrf.mxu0
        %3762 = vmatprep.mubr.f32.mxu0 %v3421
        %3763 = vmatmul.mubr.f32.gmra.mxu0 %v3420
        %v3764 = vpop.f32.mrf.mxu0
        %v3765 = vadd.f32 %v3676, %v3764
        %v3766 = vpop.f32.mrf.mxu0
        %3767 = vmatprep.mubr.f32.mxu0 %v3430
        %3768 = vmatmul.mubr.f32.gmra.mxu0 %v3429
        %v3769 = vpop.f32.mrf.mxu0
        %v3770 = vadd.f32 %v3676, %v3769
        %v3771 = vpop.f32.mrf.mxu0
        %3772 = vmatprep.mubr.f32.mxu0 %v3439
        %3773 = vmatmul.mubr.f32.gmra.mxu0 %v3438
        %v3774 = vpop.f32.mrf.mxu0
        %v3775 = vadd.f32 %v3676, %v3774
        %v3776 = vpop.f32.mrf.mxu0
        %3777 = vmatprep.mubr.f32.mxu0 %v3448
        %3778 = vmatmul.mubr.f32.gmra.mxu0 %v3447
        %v3779 = vpop.f32.mrf.mxu0
        %v3780 = vadd.f32 %v3676, %v3779
        %v3781 = vpop.f32.mrf.mxu0
        %3782 = vmatprep.mubr.f32.mxu0 %v3457
        %3783 = vmatmul.mubr.f32.gmra.mxu0 %v3456
        %v3784 = vpop.f32.mrf.mxu0
        %v3785 = vadd.f32 %v3676, %v3784
        %v3786 = vpop.f32.mrf.mxu0
        %3787 = vmatprep.mubr.f32.mxu0 %v3466
        %3788 = vmatmul.mubr.f32.gmra.mxu0 %v3465
        %v3789 = vpop.f32.mrf.mxu0
        %v3790 = vadd.f32 %v3676, %v3789
        %v3791 = vpop.f32.mrf.mxu0
        %3792 = vmatprep.mubr.f32.mxu0 %v3475
        %3793 = vmatmul.mubr.f32.gmra.mxu0 %v3474
        %v3794 = vpop.f32.mrf.mxu0
        %v3795 = vadd.f32 %v3676, %v3794
        %v3796 = vpop.f32.mrf.mxu0
        %3797 = vmatprep.mubr.f32.mxu0 %v3484
        %3798 = vmatmul.mubr.f32.gmra.mxu0 %v3483
        %v3799 = vpop.f32.mrf.mxu0
        %v3800 = vadd.f32 %v3676, %v3799
        %v3801 = vpop.f32.mrf.mxu0
        %3802 = vmatprep.mubr.f32.mxu0 %v3493
        %3803 = vmatmul.mubr.f32.gmra.mxu0 %v3492
        %v3804 = vpop.f32.mrf.mxu0
        %v3805 = vadd.f32 %v3676, %v3804
        %v3806 = vpop.f32.mrf.mxu0
        %3807 = vmatprep.mubr.f32.mxu0 %v3502
        %3808 = vmatmul.mubr.f32.gmra.mxu0 %v3501
        %v3809 = vpop.f32.mrf.mxu0
        %v3810 = vadd.f32 %v3676, %v3809
        %v3811 = vpop.f32.mrf.mxu0
        %3812 = vmatprep.mubr.f32.mxu0 %v3511
        %3813 = vmatmul.mubr.f32.gmra.mxu0 %v3510
        %v3814 = vpop.f32.mrf.mxu0
        %v3815 = vadd.f32 %v3676, %v3814
        %v3816 = vpop.f32.mrf.mxu0
        %3817 = vmatprep.mubr.f32.mxu0 %v3520
        %3818 = vmatmul.mubr.f32.gmra.mxu0 %v3519
        %v3819 = vpop.f32.mrf.mxu0
        %v3820 = vadd.f32 %v3676, %v3819
        %v3821 = vpop.f32.mrf.mxu0
        %3822 = vdwg.mxu0
        %3823 = vmatprep.subr.mxu0 0.0
        %3824 = vmatpush1.msra.mxu0 %v3575
        %3825 = vmatprep.subr.mxu0 0.0
        %3826 = vmatpush1.msra.mxu0 %v3574
        %3827 = vmatprep.subr.mxu0 0.0
        %3828 = vmatpush1.msra.mxu0 %v3573
        %3829 = vmatprep.subr.mxu0 0.0
        %3830 = vmatpush1.msra.mxu0 %v3572
        %3831 = vmatprep.subr.mxu0 0.0
        %3832 = vmatpush1.msra.mxu0 %v3571
        %3833 = vmatprep.subr.mxu0 0.0
        %3834 = vmatpush1.msra.mxu0 %v3570
        %3835 = vmatprep.subr.mxu0 0.0
        %3836 = vmatpush1.msra.mxu0 %v3569
        %3837 = vmatprep.subr.mxu0 0.0
        %3838 = vmatpush1.msra.mxu0 %v3568
        %3839 = vmatprep.subr.mxu0 0.0
        %3840 = vmatpush1.msra.mxu0 %v3567
        %3841 = vmatprep.subr.mxu0 0.0
        %3842 = vmatpush1.msra.mxu0 %v3566
        %3843 = vmatprep.subr.mxu0 0.0
        %3844 = vmatpush1.msra.mxu0 %v3565
        %3845 = vmatprep.subr.mxu0 0.0
        %3846 = vmatpush1.msra.mxu0 %v3564
        %3847 = vmatprep.subr.mxu0 0.0
        %3848 = vmatpush1.msra.mxu0 %v3563
        %3849 = vmatprep.subr.mxu0 0.0
        %3850 = vmatpush1.msra.mxu0 %v3562
        %3851 = vmatprep.subr.mxu0 0.0
        %3852 = vmatpush1.msra.mxu0 %v3561
        %3853 = vmatprep.subr.mxu0 0.0
        %3854 = vmatpush1.msra.mxu0 %v3560
        %3855 = vmatprep.subr.mxu0 0.0
        %3856 = vmatpush2.msra.mxu0 %v3591
        %3857 = vmatprep.subr.mxu0 0.0
        %3858 = vmatpush2.msra.mxu0 %v3590
        %3859 = vmatprep.subr.mxu0 0.0
        %3860 = vmatpush2.msra.mxu0 %v3589
        %3861 = vmatprep.subr.mxu0 0.0
        %3862 = vmatpush2.msra.mxu0 %v3588
        %3863 = vmatprep.subr.mxu0 0.0
        %3864 = vmatpush2.msra.mxu0 %v3587
        %3865 = vmatprep.subr.mxu0 0.0
        %3866 = vmatpush2.msra.mxu0 %v3586
        %3867 = vmatprep.subr.mxu0 0.0
        %3868 = vmatpush2.msra.mxu0 %v3585
        %3869 = vmatprep.subr.mxu0 0.0
        %3870 = vmatpush2.msra.mxu0 %v3584
        %3871 = vmatprep.subr.mxu0 0.0
        %3872 = vmatpush2.msra.mxu0 %v3583
        %3873 = vmatprep.subr.mxu0 0.0
        %3874 = vmatpush2.msra.mxu0 %v3582
        %3875 = vmatprep.subr.mxu0 0.0
        %3876 = vmatpush2.msra.mxu0 %v3581
        %3877 = vmatprep.subr.mxu0 0.0
        %3878 = vmatpush2.msra.mxu0 %v3580
        %3879 = vmatprep.subr.mxu0 0.0
        %3880 = vmatpush2.msra.mxu0 %v3579
        %3881 = vmatprep.subr.mxu0 0.0
        %3882 = vmatpush2.msra.mxu0 %v3578
        %3883 = vmatprep.subr.mxu0 0.0
        %3884 = vmatpush2.msra.mxu0 %v3577
        %3885 = vmatprep.subr.mxu0 0.0
        %3886 = vmatpush2.msra.mxu0 %v3576
        %3887 = vmatprep.mubr.f32.mxu0 %v3387
        %3888 = vmatmul.mubr.f32.gmra.mxu0 %v3386
        %v3889 = vpop.f32.mrf.mxu0
        %v3890 = vadd.f32 %v3745, %v3889
        %v3891 = vpop.f32.mrf.mxu0
        %3892 = vmatprep.mubr.f32.mxu0 %v3396
        %3893 = vmatmul.mubr.f32.gmra.mxu0 %v3395
        %v3894 = vpop.f32.mrf.mxu0
        %v3895 = vadd.f32 %v3750, %v3894
        %v3896 = vpop.f32.mrf.mxu0
        %3897 = vmatprep.mubr.f32.mxu0 %v3405
        %3898 = vmatmul.mubr.f32.gmra.mxu0 %v3404
        %v3899 = vpop.f32.mrf.mxu0
        %v3900 = vadd.f32 %v3755, %v3899
        %v3901 = vpop.f32.mrf.mxu0
        %3902 = vmatprep.mubr.f32.mxu0 %v3414
        %3903 = vmatmul.mubr.f32.gmra.mxu0 %v3413
        %v3904 = vpop.f32.mrf.mxu0
        %v3905 = vadd.f32 %v3760, %v3904
        %v3906 = vpop.f32.mrf.mxu0
        %3907 = vmatprep.mubr.f32.mxu0 %v3423
        %3908 = vmatmul.mubr.f32.gmra.mxu0 %v3422
        %v3909 = vpop.f32.mrf.mxu0
        %v3910 = vadd.f32 %v3765, %v3909
        %v3911 = vpop.f32.mrf.mxu0
        %3912 = vmatprep.mubr.f32.mxu0 %v3432
        %3913 = vmatmul.mubr.f32.gmra.mxu0 %v3431
        %v3914 = vpop.f32.mrf.mxu0
        %v3915 = vadd.f32 %v3770, %v3914
        %v3916 = vpop.f32.mrf.mxu0
        %3917 = vmatprep.mubr.f32.mxu0 %v3441
        %3918 = vmatmul.mubr.f32.gmra.mxu0 %v3440
        %v3919 = vpop.f32.mrf.mxu0
        %v3920 = vadd.f32 %v3775, %v3919
        %v3921 = vpop.f32.mrf.mxu0
        %3922 = vmatprep.mubr.f32.mxu0 %v3450
        %3923 = vmatmul.mubr.f32.gmra.mxu0 %v3449
        %v3924 = vpop.f32.mrf.mxu0
        %v3925 = vadd.f32 %v3780, %v3924
        %v3926 = vpop.f32.mrf.mxu0
        %3927 = vmatprep.mubr.f32.mxu0 %v3459
        %3928 = vmatmul.mubr.f32.gmra.mxu0 %v3458
        %v3929 = vpop.f32.mrf.mxu0
        %v3930 = vadd.f32 %v3785, %v3929
        %v3931 = vpop.f32.mrf.mxu0
        %3932 = vmatprep.mubr.f32.mxu0 %v3468
        %3933 = vmatmul.mubr.f32.gmra.mxu0 %v3467
        %v3934 = vpop.f32.mrf.mxu0
        %v3935 = vadd.f32 %v3790, %v3934
        %v3936 = vpop.f32.mrf.mxu0
        %3937 = vmatprep.mubr.f32.mxu0 %v3477
        %3938 = vmatmul.mubr.f32.gmra.mxu0 %v3476
        %v3939 = vpop.f32.mrf.mxu0
        %v3940 = vadd.f32 %v3795, %v3939
        %v3941 = vpop.f32.mrf.mxu0
        %3942 = vmatprep.mubr.f32.mxu0 %v3486
        %3943 = vmatmul.mubr.f32.gmra.mxu0 %v3485
        %v3944 = vpop.f32.mrf.mxu0
        %v3945 = vadd.f32 %v3800, %v3944
        %v3946 = vpop.f32.mrf.mxu0
        %3947 = vmatprep.mubr.f32.mxu0 %v3495
        %3948 = vmatmul.mubr.f32.gmra.mxu0 %v3494
        %v3949 = vpop.f32.mrf.mxu0
        %v3950 = vadd.f32 %v3805, %v3949
        %v3951 = vpop.f32.mrf.mxu0
        %3952 = vmatprep.mubr.f32.mxu0 %v3504
        %3953 = vmatmul.mubr.f32.gmra.mxu0 %v3503
        %v3954 = vpop.f32.mrf.mxu0
        %v3955 = vadd.f32 %v3810, %v3954
        %v3956 = vpop.f32.mrf.mxu0
        %3957 = vmatprep.mubr.f32.mxu0 %v3513
        %3958 = vmatmul.mubr.f32.gmra.mxu0 %v3512
        %v3959 = vpop.f32.mrf.mxu0
        %v3960 = vadd.f32 %v3815, %v3959
        %v3961 = vpop.f32.mrf.mxu0
        %3962 = vmatprep.mubr.f32.mxu0 %v3522
        %3963 = vmatmul.mubr.f32.gmra.mxu0 %v3521
        %v3964 = vpop.f32.mrf.mxu0
        %v3965 = vadd.f32 %v3820, %v3964
        %v3966 = vpop.f32.mrf.mxu0
        %3967 = vdwg.mxu0
        %3968 = vmatprep.subr.mxu0 0.0
        %3969 = vmatpush1.msra.mxu0 %v3607
        %3970 = vmatprep.subr.mxu0 0.0
        %3971 = vmatpush1.msra.mxu0 %v3606
        %3972 = vmatprep.subr.mxu0 0.0
        %3973 = vmatpush1.msra.mxu0 %v3605
        %3974 = vmatprep.subr.mxu0 0.0
        %3975 = vmatpush1.msra.mxu0 %v3604
        %3976 = vmatprep.subr.mxu0 0.0
        %3977 = vmatpush1.msra.mxu0 %v3603
        %3978 = vmatprep.subr.mxu0 0.0
        %3979 = vmatpush1.msra.mxu0 %v3602
        %3980 = vmatprep.subr.mxu0 0.0
        %3981 = vmatpush1.msra.mxu0 %v3601
        %3982 = vmatprep.subr.mxu0 0.0
        %3983 = vmatpush1.msra.mxu0 %v3600
        %3984 = vmatprep.subr.mxu0 0.0
        %3985 = vmatpush1.msra.mxu0 %v3599
        %3986 = vmatprep.subr.mxu0 0.0
        %3987 = vmatpush1.msra.mxu0 %v3598
        %3988 = vmatprep.subr.mxu0 0.0
        %3989 = vmatpush1.msra.mxu0 %v3597
        %3990 = vmatprep.subr.mxu0 0.0
        %3991 = vmatpush1.msra.mxu0 %v3596
        %3992 = vmatprep.subr.mxu0 0.0
        %3993 = vmatpush1.msra.mxu0 %v3595
        %3994 = vmatprep.subr.mxu0 0.0
        %3995 = vmatpush1.msra.mxu0 %v3594
        %3996 = vmatprep.subr.mxu0 0.0
        %3997 = vmatpush1.msra.mxu0 %v3593
        %3998 = vmatprep.subr.mxu0 0.0
        %3999 = vmatpush1.msra.mxu0 %v3592
        %4000 = vmatprep.subr.mxu0 0.0
        %4001 = vmatpush2.msra.mxu0 %v3623
        %4002 = vmatprep.subr.mxu0 0.0
        %4003 = vmatpush2.msra.mxu0 %v3622
        %4004 = vmatprep.subr.mxu0 0.0
        %4005 = vmatpush2.msra.mxu0 %v3621
        %4006 = vmatprep.subr.mxu0 0.0
        %4007 = vmatpush2.msra.mxu0 %v3620
        %4008 = vmatprep.subr.mxu0 0.0
        %4009 = vmatpush2.msra.mxu0 %v3619
        %4010 = vmatprep.subr.mxu0 0.0
        %4011 = vmatpush2.msra.mxu0 %v3618
        %4012 = vmatprep.subr.mxu0 0.0
        %4013 = vmatpush2.msra.mxu0 %v3617
        %4014 = vmatprep.subr.mxu0 0.0
        %4015 = vmatpush2.msra.mxu0 %v3616
        %4016 = vmatprep.subr.mxu0 0.0
        %4017 = vmatpush2.msra.mxu0 %v3615
        %4018 = vmatprep.subr.mxu0 0.0
        %4019 = vmatpush2.msra.mxu0 %v3614
        %4020 = vmatprep.subr.mxu0 0.0
        %4021 = vmatpush2.msra.mxu0 %v3613
        %4022 = vmatprep.subr.mxu0 0.0
        %4023 = vmatpush2.msra.mxu0 %v3612
        %4024 = vmatprep.subr.mxu0 0.0
        %4025 = vmatpush2.msra.mxu0 %v3611
        %4026 = vmatprep.subr.mxu0 0.0
        %4027 = vmatpush2.msra.mxu0 %v3610
        %4028 = vmatprep.subr.mxu0 0.0
        %4029 = vmatpush2.msra.mxu0 %v3609
        %4030 = vmatprep.subr.mxu0 0.0
        %4031 = vmatpush2.msra.mxu0 %v3608
        %4032 = vmatprep.mubr.f32.mxu0 %v3389
        %4033 = vmatmul.mubr.f32.gmra.mxu0 %v3388
        %v4034 = vpop.f32.mrf.mxu0
        %v4035 = vadd.f32 %v3890, %v4034
        %v4036 = vpop.f32.mrf.mxu0
        %4037 = vmatprep.mubr.f32.mxu0 %v3398
        %4038 = vmatmul.mubr.f32.gmra.mxu0 %v3397
        %v4039 = vpop.f32.mrf.mxu0
        %v4040 = vadd.f32 %v3895, %v4039
        %v4041 = vpop.f32.mrf.mxu0
        %4042 = vmatprep.mubr.f32.mxu0 %v3407
        %4043 = vmatmul.mubr.f32.gmra.mxu0 %v3406
        %v4044 = vpop.f32.mrf.mxu0
        %v4045 = vadd.f32 %v3900, %v4044
        %v4046 = vpop.f32.mrf.mxu0
        %4047 = vmatprep.mubr.f32.mxu0 %v3416
        %4048 = vmatmul.mubr.f32.gmra.mxu0 %v3415
        %v4049 = vpop.f32.mrf.mxu0
        %v4050 = vadd.f32 %v3905, %v4049
        %v4051 = vpop.f32.mrf.mxu0
        %4052 = vmatprep.mubr.f32.mxu0 %v3425
        %4053 = vmatmul.mubr.f32.gmra.mxu0 %v3424
        %v4054 = vpop.f32.mrf.mxu0
        %v4055 = vadd.f32 %v3910, %v4054
        %v4056 = vpop.f32.mrf.mxu0
        %4057 = vmatprep.mubr.f32.mxu0 %v3434
        %4058 = vmatmul.mubr.f32.gmra.mxu0 %v3433
        %v4059 = vpop.f32.mrf.mxu0
        %v4060 = vadd.f32 %v3915, %v4059
        %v4061 = vpop.f32.mrf.mxu0
        %4062 = vmatprep.mubr.f32.mxu0 %v3443
        %4063 = vmatmul.mubr.f32.gmra.mxu0 %v3442
        %v4064 = vpop.f32.mrf.mxu0
        %v4065 = vadd.f32 %v3920, %v4064
        %v4066 = vpop.f32.mrf.mxu0
        %4067 = vmatprep.mubr.f32.mxu0 %v3452
        %4068 = vmatmul.mubr.f32.gmra.mxu0 %v3451
        %v4069 = vpop.f32.mrf.mxu0
        %v4070 = vadd.f32 %v3925, %v4069
        %v4071 = vpop.f32.mrf.mxu0
        %4072 = vmatprep.mubr.f32.mxu0 %v3461
        %4073 = vmatmul.mubr.f32.gmra.mxu0 %v3460
        %v4074 = vpop.f32.mrf.mxu0
        %v4075 = vadd.f32 %v3930, %v4074
        %v4076 = vpop.f32.mrf.mxu0
        %4077 = vmatprep.mubr.f32.mxu0 %v3470
        %4078 = vmatmul.mubr.f32.gmra.mxu0 %v3469
        %v4079 = vpop.f32.mrf.mxu0
        %v4080 = vadd.f32 %v3935, %v4079
        %v4081 = vpop.f32.mrf.mxu0
        %4082 = vmatprep.mubr.f32.mxu0 %v3479
        %4083 = vmatmul.mubr.f32.gmra.mxu0 %v3478
        %v4084 = vpop.f32.mrf.mxu0
        %v4085 = vadd.f32 %v3940, %v4084
        %v4086 = vpop.f32.mrf.mxu0
        %4087 = vmatprep.mubr.f32.mxu0 %v3488
        %4088 = vmatmul.mubr.f32.gmra.mxu0 %v3487
        %v4089 = vpop.f32.mrf.mxu0
        %v4090 = vadd.f32 %v3945, %v4089
        %v4091 = vpop.f32.mrf.mxu0
        %4092 = vmatprep.mubr.f32.mxu0 %v3497
        %4093 = vmatmul.mubr.f32.gmra.mxu0 %v3496
        %v4094 = vpop.f32.mrf.mxu0
        %v4095 = vadd.f32 %v3950, %v4094
        %v4096 = vpop.f32.mrf.mxu0
        %4097 = vmatprep.mubr.f32.mxu0 %v3506
        %4098 = vmatmul.mubr.f32.gmra.mxu0 %v3505
        %v4099 = vpop.f32.mrf.mxu0
        %v4100 = vadd.f32 %v3955, %v4099
        %v4101 = vpop.f32.mrf.mxu0
        %4102 = vmatprep.mubr.f32.mxu0 %v3515
        %4103 = vmatmul.mubr.f32.gmra.mxu0 %v3514
        %v4104 = vpop.f32.mrf.mxu0
        %v4105 = vadd.f32 %v3960, %v4104
        %v4106 = vpop.f32.mrf.mxu0
        %4107 = vmatprep.mubr.f32.mxu0 %v3524
        %4108 = vmatmul.mubr.f32.gmra.mxu0 %v3523
        %v4109 = vpop.f32.mrf.mxu0
        %v4110 = vadd.f32 %v3965, %v4109
        %v4111 = vpop.f32.mrf.mxu0
        %4112 = vdwg.mxu0
        %4113 = vmatprep.subr.mxu0 0.0
        %4114 = vmatpush1.msra.mxu0 %v3639
        %4115 = vmatprep.subr.mxu0 0.0
        %4116 = vmatpush1.msra.mxu0 %v3638
        %4117 = vmatprep.subr.mxu0 0.0
        %4118 = vmatpush1.msra.mxu0 %v3637
        %4119 = vmatprep.subr.mxu0 0.0
        %4120 = vmatpush1.msra.mxu0 %v3636
        %4121 = vmatprep.subr.mxu0 0.0
        %4122 = vmatpush1.msra.mxu0 %v3635
        %4123 = vmatprep.subr.mxu0 0.0
        %4124 = vmatpush1.msra.mxu0 %v3634
        %4125 = vmatprep.subr.mxu0 0.0
        %4126 = vmatpush1.msra.mxu0 %v3633
        %4127 = vmatprep.subr.mxu0 0.0
        %4128 = vmatpush1.msra.mxu0 %v3632
        %4129 = vmatprep.subr.mxu0 0.0
        %4130 = vmatpush1.msra.mxu0 %v3631
        %4131 = vmatprep.subr.mxu0 0.0
        %4132 = vmatpush1.msra.mxu0 %v3630
        %4133 = vmatprep.subr.mxu0 0.0
        %4134 = vmatpush1.msra.mxu0 %v3629
        %4135 = vmatprep.subr.mxu0 0.0
        %4136 = vmatpush1.msra.mxu0 %v3628
        %4137 = vmatprep.subr.mxu0 0.0
        %4138 = vmatpush1.msra.mxu0 %v3627
        %4139 = vmatprep.subr.mxu0 0.0
        %4140 = vmatpush1.msra.mxu0 %v3626
        %4141 = vmatprep.subr.mxu0 0.0
        %4142 = vmatpush1.msra.mxu0 %v3625
        %4143 = vmatprep.subr.mxu0 0.0
        %4144 = vmatpush1.msra.mxu0 %v3624
        %4145 = vmatprep.subr.mxu0 0.0
        %4146 = vmatpush2.msra.mxu0 %v3655
        %4147 = vmatprep.subr.mxu0 0.0
        %4148 = vmatpush2.msra.mxu0 %v3654
        %4149 = vmatprep.subr.mxu0 0.0
        %4150 = vmatpush2.msra.mxu0 %v3653
        %4151 = vmatprep.subr.mxu0 0.0
        %4152 = vmatpush2.msra.mxu0 %v3652
        %4153 = vmatprep.subr.mxu0 0.0
        %4154 = vmatpush2.msra.mxu0 %v3651
        %4155 = vmatprep.subr.mxu0 0.0
        %4156 = vmatpush2.msra.mxu0 %v3650
        %4157 = vmatprep.subr.mxu0 0.0
        %4158 = vmatpush2.msra.mxu0 %v3649
        %4159 = vmatprep.subr.mxu0 0.0
        %4160 = vmatpush2.msra.mxu0 %v3648
        %4161 = vmatprep.subr.mxu0 0.0
        %4162 = vmatpush2.msra.mxu0 %v3647
        %4163 = vmatprep.subr.mxu0 0.0
        %4164 = vmatpush2.msra.mxu0 %v3646
        %4165 = vmatprep.subr.mxu0 0.0
        %4166 = vmatpush2.msra.mxu0 %v3645
        %4167 = vmatprep.subr.mxu0 0.0
        %4168 = vmatpush2.msra.mxu0 %v3644
        %4169 = vmatprep.subr.mxu0 0.0
        %4170 = vmatpush2.msra.mxu0 %v3643
        %4171 = vmatprep.subr.mxu0 0.0
        %4172 = vmatpush2.msra.mxu0 %v3642
        %4173 = vmatprep.subr.mxu0 0.0
        %4174 = vmatpush2.msra.mxu0 %v3641
        %4175 = vmatprep.subr.mxu0 0.0
        %4176 = vmatpush2.msra.mxu0 %v3640
        %4177 = vmatprep.mubr.f32.mxu0 %v3391
        %4178 = vmatmul.mubr.f32.gmra.mxu0 %v3390
        %v4179 = vpop.f32.mrf.mxu0
        %v4180 = vadd.f32 %v4035, %v4179
        %v4181 = vpop.f32.mrf.mxu0
        %4182 = vmatprep.mubr.f32.mxu0 %v3400
        %4183 = vmatmul.mubr.f32.gmra.mxu0 %v3399
        %v4184 = vpop.f32.mrf.mxu0
        %v4185 = vadd.f32 %v4040, %v4184
        %v4186 = vpop.f32.mrf.mxu0
        %4187 = vmatprep.mubr.f32.mxu0 %v3409
        %4188 = vmatmul.mubr.f32.gmra.mxu0 %v3408
        %v4189 = vpop.f32.mrf.mxu0
        %v4190 = vadd.f32 %v4045, %v4189
        %v4191 = vpop.f32.mrf.mxu0
        %4192 = vmatprep.mubr.f32.mxu0 %v3418
        %4193 = vmatmul.mubr.f32.gmra.mxu0 %v3417
        %v4194 = vpop.f32.mrf.mxu0
        %v4195 = vadd.f32 %v4050, %v4194
        %v4196 = vpop.f32.mrf.mxu0
        %4197 = vmatprep.mubr.f32.mxu0 %v3427
        %4198 = vmatmul.mubr.f32.gmra.mxu0 %v3426
        %v4199 = vpop.f32.mrf.mxu0
        %v4200 = vadd.f32 %v4055, %v4199
        %v4201 = vpop.f32.mrf.mxu0
        %4202 = vmatprep.mubr.f32.mxu0 %v3436
        %4203 = vmatmul.mubr.f32.gmra.mxu0 %v3435
        %v4204 = vpop.f32.mrf.mxu0
        %v4205 = vadd.f32 %v4060, %v4204
        %v4206 = vpop.f32.mrf.mxu0
        %4207 = vmatprep.mubr.f32.mxu0 %v3445
        %4208 = vmatmul.mubr.f32.gmra.mxu0 %v3444
        %v4209 = vpop.f32.mrf.mxu0
        %v4210 = vadd.f32 %v4065, %v4209
        %v4211 = vpop.f32.mrf.mxu0
        %4212 = vmatprep.mubr.f32.mxu0 %v3454
        %4213 = vmatmul.mubr.f32.gmra.mxu0 %v3453
        %v4214 = vpop.f32.mrf.mxu0
        %v4215 = vadd.f32 %v4070, %v4214
        %v4216 = vpop.f32.mrf.mxu0
        %4217 = vmatprep.mubr.f32.mxu0 %v3463
        %4218 = vmatmul.mubr.f32.gmra.mxu0 %v3462
        %v4219 = vpop.f32.mrf.mxu0
        %v4220 = vadd.f32 %v4075, %v4219
        %v4221 = vpop.f32.mrf.mxu0
        %4222 = vmatprep.mubr.f32.mxu0 %v3472
        %4223 = vmatmul.mubr.f32.gmra.mxu0 %v3471
        %v4224 = vpop.f32.mrf.mxu0
        %v4225 = vadd.f32 %v4080, %v4224
        %v4226 = vpop.f32.mrf.mxu0
        %4227 = vmatprep.mubr.f32.mxu0 %v3481
        %4228 = vmatmul.mubr.f32.gmra.mxu0 %v3480
        %v4229 = vpop.f32.mrf.mxu0
        %v4230 = vadd.f32 %v4085, %v4229
        %v4231 = vpop.f32.mrf.mxu0
        %4232 = vmatprep.mubr.f32.mxu0 %v3490
        %4233 = vmatmul.mubr.f32.gmra.mxu0 %v3489
        %v4234 = vpop.f32.mrf.mxu0
        %v4235 = vadd.f32 %v4090, %v4234
        %v4236 = vpop.f32.mrf.mxu0
        %4237 = vmatprep.mubr.f32.mxu0 %v3499
        %4238 = vmatmul.mubr.f32.gmra.mxu0 %v3498
        %v4239 = vpop.f32.mrf.mxu0
        %v4240 = vadd.f32 %v4095, %v4239
        %v4241 = vpop.f32.mrf.mxu0
        %4242 = vmatprep.mubr.f32.mxu0 %v3508
        %4243 = vmatmul.mubr.f32.gmra.mxu0 %v3507
        %v4244 = vpop.f32.mrf.mxu0
        %v4245 = vadd.f32 %v4100, %v4244
        %v4246 = vpop.f32.mrf.mxu0
        %4247 = vmatprep.mubr.f32.mxu0 %v3517
        %4248 = vmatmul.mubr.f32.gmra.mxu0 %v3516
        %v4249 = vpop.f32.mrf.mxu0
        %v4250 = vadd.f32 %v4105, %v4249
        %v4251 = vpop.f32.mrf.mxu0
        %4252 = vmatprep.mubr.f32.mxu0 %v3526
        %4253 = vmatmul.mubr.f32.gmra.mxu0 %v3525
        %v4254 = vpop.f32.mrf.mxu0
        %v4255 = vadd.f32 %v4110, %v4254
        %v4256 = vpop.f32.mrf.mxu0
        %4257 = vdwg.mxu0
        %4258 = vmatprep.subr.mxu0 0.0
        %4259 = vmatpush1.msra.mxu0 %v3671
        %4260 = vmatprep.subr.mxu0 0.0
        %4261 = vmatpush1.msra.mxu0 %v3670
        %4262 = vmatprep.subr.mxu0 0.0
        %4263 = vmatpush1.msra.mxu0 %v3669
        %4264 = vmatprep.subr.mxu0 0.0
        %4265 = vmatpush1.msra.mxu0 %v3668
        %4266 = vmatprep.subr.mxu0 0.0
        %4267 = vmatpush1.msra.mxu0 %v3667
        %4268 = vmatprep.subr.mxu0 0.0
        %4269 = vmatpush1.msra.mxu0 %v3666
        %4270 = vmatprep.subr.mxu0 0.0
        %4271 = vmatpush1.msra.mxu0 %v3665
        %4272 = vmatprep.subr.mxu0 0.0
        %4273 = vmatpush1.msra.mxu0 %v3664
        %4274 = vmatprep.subr.mxu0 0.0
        %4275 = vmatpush1.msra.mxu0 %v3663
        %4276 = vmatprep.subr.mxu0 0.0
        %4277 = vmatpush1.msra.mxu0 %v3662
        %4278 = vmatprep.subr.mxu0 0.0
        %4279 = vmatpush1.msra.mxu0 %v3661
        %4280 = vmatprep.subr.mxu0 0.0
        %4281 = vmatpush1.msra.mxu0 %v3660
        %4282 = vmatprep.subr.mxu0 0.0
        %4283 = vmatpush1.msra.mxu0 %v3659
        %4284 = vmatprep.subr.mxu0 0.0
        %4285 = vmatpush1.msra.mxu0 %v3658
        %4286 = vmatprep.subr.mxu0 0.0
        %4287 = vmatpush1.msra.mxu0 %v3657
        %4288 = vmatprep.subr.mxu0 0.0
        %4289 = vmatpush1.msra.mxu0 %v3656
        %4290 = vmatprep.subr.mxu0 0.0
        %4291 = vmatpush2.msra.mxu0 0.0
        %4292 = vmatprep.subr.mxu0 0.0
        %4293 = vmatpush2.msra.mxu0 0.0
        %4294 = vmatprep.subr.mxu0 0.0
        %4295 = vmatpush2.msra.mxu0 0.0
        %4296 = vmatprep.subr.mxu0 0.0
        %4297 = vmatpush2.msra.mxu0 0.0
        %4298 = vmatprep.subr.mxu0 0.0
        %4299 = vmatpush2.msra.mxu0 0.0
        %4300 = vmatprep.subr.mxu0 0.0
        %4301 = vmatpush2.msra.mxu0 0.0
        %4302 = vmatprep.subr.mxu0 0.0
        %4303 = vmatpush2.msra.mxu0 0.0
        %4304 = vmatprep.subr.mxu0 0.0
        %4305 = vmatpush2.msra.mxu0 0.0
        %4306 = vmatprep.subr.mxu0 0.0
        %4307 = vmatpush2.msra.mxu0 0.0
        %4308 = vmatprep.subr.mxu0 0.0
        %4309 = vmatpush2.msra.mxu0 0.0
        %4310 = vmatprep.subr.mxu0 0.0
        %4311 = vmatpush2.msra.mxu0 0.0
        %4312 = vmatprep.subr.mxu0 0.0
        %4313 = vmatpush2.msra.mxu0 0.0
        %4314 = vmatprep.subr.mxu0 0.0
        %4315 = vmatpush2.msra.mxu0 0.0
        %4316 = vmatprep.subr.mxu0 0.0
        %4317 = vmatpush2.msra.mxu0 0.0
        %4318 = vmatprep.subr.mxu0 0.0
        %4319 = vmatpush2.msra.mxu0 0.0
        %4320 = vmatprep.subr.mxu0 0.0
        %4321 = vmatpush2.msra.mxu0 0.0
        %4322 = vmatprep.mubr.f32.mxu0 0.0
        %4323 = vmatmul.mubr.f32.gmra.mxu0 %v3392
        %v4324 = vpop.f32.mrf.mxu0
        %v4325 = vadd.f32 %v4180, %v4324
        %v4326 = vpop.f32.mrf.mxu0
        %4327 = vmatprep.mubr.f32.mxu0 0.0
        %4328 = vmatmul.mubr.f32.gmra.mxu0 %v3401
        %v4329 = vpop.f32.mrf.mxu0
        %v4330 = vadd.f32 %v4185, %v4329
        %v4331 = vpop.f32.mrf.mxu0
        %4332 = vmatprep.mubr.f32.mxu0 0.0
        %4333 = vmatmul.mubr.f32.gmra.mxu0 %v3410
        %v4334 = vpop.f32.mrf.mxu0
        %v4335 = vadd.f32 %v4190, %v4334
        %v4336 = vpop.f32.mrf.mxu0
        %4337 = vmatprep.mubr.f32.mxu0 0.0
        %4338 = vmatmul.mubr.f32.gmra.mxu0 %v3419
        %v4339 = vpop.f32.mrf.mxu0
        %v4340 = vadd.f32 %v4195, %v4339
        %v4341 = vpop.f32.mrf.mxu0
        %4342 = vmatprep.mubr.f32.mxu0 0.0
        %4343 = vmatmul.mubr.f32.gmra.mxu0 %v3428
        %v4344 = vpop.f32.mrf.mxu0
        %v4345 = vadd.f32 %v4200, %v4344
        %v4346 = vpop.f32.mrf.mxu0
        %4347 = vmatprep.mubr.f32.mxu0 0.0
        %4348 = vmatmul.mubr.f32.gmra.mxu0 %v3437
        %v4349 = vpop.f32.mrf.mxu0
        %v4350 = vadd.f32 %v4205, %v4349
        %v4351 = vpop.f32.mrf.mxu0
        %4352 = vmatprep.mubr.f32.mxu0 0.0
        %4353 = vmatmul.mubr.f32.gmra.mxu0 %v3446
        %v4354 = vpop.f32.mrf.mxu0
        %v4355 = vadd.f32 %v4210, %v4354
        %v4356 = vpop.f32.mrf.mxu0
        %4357 = vmatprep.mubr.f32.mxu0 0.0
        %4358 = vmatmul.mubr.f32.gmra.mxu0 %v3455
        %v4359 = vpop.f32.mrf.mxu0
        %v4360 = vadd.f32 %v4215, %v4359
        %v4361 = vpop.f32.mrf.mxu0
        %4362 = vmatprep.mubr.f32.mxu0 0.0
        %4363 = vmatmul.mubr.f32.gmra.mxu0 %v3464
        %v4364 = vpop.f32.mrf.mxu0
        %v4365 = vadd.f32 %v4220, %v4364
        %v4366 = vpop.f32.mrf.mxu0
        %4367 = vmatprep.mubr.f32.mxu0 0.0
        %4368 = vmatmul.mubr.f32.gmra.mxu0 %v3473
        %v4369 = vpop.f32.mrf.mxu0
        %v4370 = vadd.f32 %v4225, %v4369
        %v4371 = vpop.f32.mrf.mxu0
        %4372 = vmatprep.mubr.f32.mxu0 0.0
        %4373 = vmatmul.mubr.f32.gmra.mxu0 %v3482
        %v4374 = vpop.f32.mrf.mxu0
        %v4375 = vadd.f32 %v4230, %v4374
        %v4376 = vpop.f32.mrf.mxu0
        %4377 = vmatprep.mubr.f32.mxu0 0.0
        %4378 = vmatmul.mubr.f32.gmra.mxu0 %v3491
        %v4379 = vpop.f32.mrf.mxu0
        %v4380 = vadd.f32 %v4235, %v4379
        %v4381 = vpop.f32.mrf.mxu0
        %4382 = vmatprep.mubr.f32.mxu0 0.0
        %4383 = vmatmul.mubr.f32.gmra.mxu0 %v3500
        %v4384 = vpop.f32.mrf.mxu0
        %v4385 = vadd.f32 %v4240, %v4384
        %v4386 = vpop.f32.mrf.mxu0
        %4387 = vmatprep.mubr.f32.mxu0 0.0
        %4388 = vmatmul.mubr.f32.gmra.mxu0 %v3509
        %v4389 = vpop.f32.mrf.mxu0
        %v4390 = vadd.f32 %v4245, %v4389
        %v4391 = vpop.f32.mrf.mxu0
        %4392 = vmatprep.mubr.f32.mxu0 0.0
        %4393 = vmatmul.mubr.f32.gmra.mxu0 %v3518
        %v4394 = vpop.f32.mrf.mxu0
        %v4395 = vadd.f32 %v4250, %v4394
        %v4396 = vpop.f32.mrf.mxu0
        %4397 = vmatprep.mubr.f32.mxu0 0.0
        %4398 = vmatmul.mubr.f32.gmra.mxu0 %v3527
        %v4399 = vpop.f32.mrf.mxu0
        %v4400 = vadd.f32 %v4255, %v4399
        %v4401 = vpop.f32.mrf.mxu0
        %4402 = vdwg.mxu0
        %v4403 = vld [vmem:[%s237] sm:$0xff]
        %v4404 = vld [vmem:[%s237 + $0x8] sm:$0xff]
        %v4405 = vld [vmem:[%s237 + $0x10] sm:$0xff]
        %v4406 = vld [vmem:[%s237 + $0x18] sm:$0xff]
        %v4407 = vld [vmem:[%s237 + $0x20] sm:$0xff]
        %v4408 = vld [vmem:[%s237 + $0x28] sm:$0xff]
        %v4409 = vld [vmem:[%s237 + $0x30] sm:$0xff]
        %v4410 = vld [vmem:[%s237 + $0x38] sm:$0xff]
        %v4411 = vld [vmem:[%s237 + $0x40] sm:$0xff]
        %v4412 = vld [vmem:[%s237 + $0x48] sm:$0xff]
        %v4413 = vld [vmem:[%s237 + $0x50] sm:$0xff]
        %v4414 = vld [vmem:[%s237 + $0x58] sm:$0xff]
        %v4415 = vld [vmem:[%s237 + $0x60] sm:$0xff]
        %v4416 = vld [vmem:[%s237 + $0x68] sm:$0xff]
        %v4417 = vld [vmem:[%s237 + $0x70] sm:$0xff]
        %v4418 = vld [vmem:[%s237 + $0x78] sm:$0xff]
        %v4419 = vadd.f32 %v4325, %v4403
        %v4420 = vadd.f32 %v4330, %v4404
        %v4421 = vadd.f32 %v4335, %v4405
        %v4422 = vadd.f32 %v4340, %v4406
        %v4423 = vadd.f32 %v4345, %v4407
        %v4424 = vadd.f32 %v4350, %v4408
        %v4425 = vadd.f32 %v4355, %v4409
        %v4426 = vadd.f32 %v4360, %v4410
        %v4427 = vadd.f32 %v4365, %v4411
        %v4428 = vadd.f32 %v4370, %v4412
        %v4429 = vadd.f32 %v4375, %v4413
        %v4430 = vadd.f32 %v4380, %v4414
        %v4431 = vadd.f32 %v4385, %v4415
        %v4432 = vadd.f32 %v4390, %v4416
        %v4433 = vadd.f32 %v4395, %v4417
        %v4434 = vadd.f32 %v4400, %v4418
        %v4435 = vmax.f32 %v4419, 0.0
        %v4436 = vmax.f32 %v4420, 0.0
        %v4437 = vmax.f32 %v4421, 0.0
        %v4438 = vmax.f32 %v4422, 0.0
        %v4439 = vmax.f32 %v4423, 0.0
        %v4440 = vmax.f32 %v4424, 0.0
        %v4441 = vmax.f32 %v4425, 0.0
        %v4442 = vmax.f32 %v4426, 0.0
        %v4443 = vmax.f32 %v4427, 0.0
        %v4444 = vmax.f32 %v4428, 0.0
        %v4445 = vmax.f32 %v4429, 0.0
        %v4446 = vmax.f32 %v4430, 0.0
        %v4447 = vmax.f32 %v4431, 0.0
        %v4448 = vmax.f32 %v4432, 0.0
        %v4449 = vmax.f32 %v4433, 0.0
        %v4450 = vmax.f32 %v4434, 0.0
        %4451 = vst [vmem:[%s271] sm:$0xff] %v4435
        %4452 = vst [vmem:[%s271 + $0x8] sm:$0xff] %v4436
        %4453 = vst [vmem:[%s271 + $0x10] sm:$0xff] %v4437
        %4454 = vst [vmem:[%s271 + $0x18] sm:$0xff] %v4438
        %4455 = vst [vmem:[%s271 + $0x20] sm:$0xff] %v4439
        %4456 = vst [vmem:[%s271 + $0x28] sm:$0xff] %v4440
        %4457 = vst [vmem:[%s271 + $0x30] sm:$0xff] %v4441
        %4458 = vst [vmem:[%s271 + $0x38] sm:$0xff] %v4442
        %4459 = vst [vmem:[%s271 + $0x40] sm:$0xff] %v4443
        %4460 = vst [vmem:[%s271 + $0x48] sm:$0xff] %v4444
        %4461 = vst [vmem:[%s271 + $0x50] sm:$0xff] %v4445
        %4462 = vst [vmem:[%s271 + $0x58] sm:$0xff] %v4446
        %4463 = vst [vmem:[%s271 + $0x60] sm:$0xff] %v4447
        %4464 = vst [vmem:[%s271 + $0x68] sm:$0xff] %v4448
        %4465 = vst [vmem:[%s271 + $0x70] sm:$0xff] %v4449
        %4466 = vst [vmem:[%s271 + $0x78] sm:$0xff] %v4450
        %s4467 = scalar_lea.vmem [#allocation3], 192
        %v4468 = vld [vmem:[%s4467] sm:$0xff]
        %v4469 = vld [vmem:[%s4467 + $0x8] sm:$0xff]
        %v4470 = vld [vmem:[%s4467 + $0x18] sm:$0xff]
        %v4471 = vld [vmem:[%s4467 + $0x20] sm:$0xff]
        %v4472 = vld [vmem:[%s4467 + $0x30] sm:$0xff]
        %v4473 = vld [vmem:[%s4467 + $0x38] sm:$0xff]
        %v4474 = vld [vmem:[%s4467 + $0x48] sm:$0xff]
        %v4475 = vld [vmem:[%s4467 + $0x50] sm:$0xff]
        %v4476 = vld [vmem:[%s4467 + $0x60] sm:$0xff]
        %v4477 = vld [vmem:[%s4467 + $0x68] sm:$0xff]
        %v4478 = vld [vmem:[%s4467 + $0x78] sm:$0xff]
        %v4479 = vld [vmem:[%s4467 + $0x80] sm:$0xff]
        %v4480 = vld [vmem:[%s4467 + $0x90] sm:$0xff]
        %v4481 = vld [vmem:[%s4467 + $0x98] sm:$0xff]
        %v4482 = vld [vmem:[%s4467 + $0xa8] sm:$0xff]
        %v4483 = vld [vmem:[%s4467 + $0xb0] sm:$0xff]
        %4484 = vst [vmem:[#allocation4] sm:$0xff] %v4468
        %4485 = vst [vmem:[#allocation4 + $0x48] sm:$0xff] %v4469
        %4486 = vst [vmem:[#allocation4 + $0x90] sm:$0xff] %v4470
        %4487 = vst [vmem:[#allocation4 + $0xd8] sm:$0xff] %v4471
        %4488 = vst [vmem:[#allocation4 + $0x120] sm:$0xff] %v4472
        %4489 = vst [vmem:[#allocation4 + $0x168] sm:$0xff] %v4473
        %4490 = vst [vmem:[#allocation4 + $0x1b0] sm:$0xff] %v4474
        %4491 = vst [vmem:[#allocation4 + $0x1f8] sm:$0xff] %v4475
        %4492 = vst [vmem:[#allocation4 + $0x240] sm:$0xff] %v4476
        %4493 = vst [vmem:[#allocation4 + $0x288] sm:$0xff] %v4477
        %4494 = vst [vmem:[#allocation4 + $0x2d0] sm:$0xff] %v4478
        %4495 = vst [vmem:[#allocation4 + $0x318] sm:$0xff] %v4479
        %4496 = vst [vmem:[#allocation4 + $0x360] sm:$0xff] %v4480
        %4497 = vst [vmem:[#allocation4 + $0x3a8] sm:$0xff] %v4481
        %4498 = vst [vmem:[#allocation4 + $0x3f0] sm:$0xff] %v4482
        %4499 = vst [vmem:[#allocation4 + $0x438] sm:$0xff] %v4483
        %v4500 = vld [vmem:[%s4467 + $0x1] sm:$0xff]
        %v4501 = vld [vmem:[%s4467 + $0x9] sm:$0xff]
        %v4502 = vld [vmem:[%s4467 + $0x19] sm:$0xff]
        %v4503 = vld [vmem:[%s4467 + $0x21] sm:$0xff]
        %v4504 = vld [vmem:[%s4467 + $0x31] sm:$0xff]
        %v4505 = vld [vmem:[%s4467 + $0x39] sm:$0xff]
        %v4506 = vld [vmem:[%s4467 + $0x49] sm:$0xff]
        %v4507 = vld [vmem:[%s4467 + $0x51] sm:$0xff]
        %v4508 = vld [vmem:[%s4467 + $0x61] sm:$0xff]
        %v4509 = vld [vmem:[%s4467 + $0x69] sm:$0xff]
        %v4510 = vld [vmem:[%s4467 + $0x79] sm:$0xff]
        %v4511 = vld [vmem:[%s4467 + $0x81] sm:$0xff]
        %v4512 = vld [vmem:[%s4467 + $0x91] sm:$0xff]
        %v4513 = vld [vmem:[%s4467 + $0x99] sm:$0xff]
        %v4514 = vld [vmem:[%s4467 + $0xa9] sm:$0xff]
        %v4515 = vld [vmem:[%s4467 + $0xb1] sm:$0xff]
        %4516 = vst [vmem:[#allocation4 + $0x8] sm:$0xff] %v4500
        %4517 = vst [vmem:[#allocation4 + $0x50] sm:$0xff] %v4501
        %4518 = vst [vmem:[#allocation4 + $0x98] sm:$0xff] %v4502
        %4519 = vst [vmem:[#allocation4 + $0xe0] sm:$0xff] %v4503
        %4520 = vst [vmem:[#allocation4 + $0x128] sm:$0xff] %v4504
        %4521 = vst [vmem:[#allocation4 + $0x170] sm:$0xff] %v4505
        %4522 = vst [vmem:[#allocation4 + $0x1b8] sm:$0xff] %v4506
        %4523 = vst [vmem:[#allocation4 + $0x200] sm:$0xff] %v4507
        %4524 = vst [vmem:[#allocation4 + $0x248] sm:$0xff] %v4508
        %4525 = vst [vmem:[#allocation4 + $0x290] sm:$0xff] %v4509
        %4526 = vst [vmem:[#allocation4 + $0x2d8] sm:$0xff] %v4510
        %4527 = vst [vmem:[#allocation4 + $0x320] sm:$0xff] %v4511
        %4528 = vst [vmem:[#allocation4 + $0x368] sm:$0xff] %v4512
        %4529 = vst [vmem:[#allocation4 + $0x3b0] sm:$0xff] %v4513
        %4530 = vst [vmem:[#allocation4 + $0x3f8] sm:$0xff] %v4514
        %4531 = vst [vmem:[#allocation4 + $0x440] sm:$0xff] %v4515
        %v4532 = vld [vmem:[%s4467 + $0x2] sm:$0xff]
        %v4533 = vld [vmem:[%s4467 + $0xa] sm:$0xff]
        %v4534 = vld [vmem:[%s4467 + $0x1a] sm:$0xff]
        %v4535 = vld [vmem:[%s4467 + $0x22] sm:$0xff]
        %v4536 = vld [vmem:[%s4467 + $0x32] sm:$0xff]
        %v4537 = vld [vmem:[%s4467 + $0x3a] sm:$0xff]
        %v4538 = vld [vmem:[%s4467 + $0x4a] sm:$0xff]
        %v4539 = vld [vmem:[%s4467 + $0x52] sm:$0xff]
        %v4540 = vld [vmem:[%s4467 + $0x62] sm:$0xff]
        %v4541 = vld [vmem:[%s4467 + $0x6a] sm:$0xff]
        %v4542 = vld [vmem:[%s4467 + $0x7a] sm:$0xff]
        %v4543 = vld [vmem:[%s4467 + $0x82] sm:$0xff]
        %v4544 = vld [vmem:[%s4467 + $0x92] sm:$0xff]
        %v4545 = vld [vmem:[%s4467 + $0x9a] sm:$0xff]
        %v4546 = vld [vmem:[%s4467 + $0xaa] sm:$0xff]
        %v4547 = vld [vmem:[%s4467 + $0xb2] sm:$0xff]
        %4548 = vst [vmem:[#allocation4 + $0x10] sm:$0xff] %v4532
        %4549 = vst [vmem:[#allocation4 + $0x58] sm:$0xff] %v4533
        %4550 = vst [vmem:[#allocation4 + $0xa0] sm:$0xff] %v4534
        %4551 = vst [vmem:[#allocation4 + $0xe8] sm:$0xff] %v4535
        %4552 = vst [vmem:[#allocation4 + $0x130] sm:$0xff] %v4536
        %4553 = vst [vmem:[#allocation4 + $0x178] sm:$0xff] %v4537
        %4554 = vst [vmem:[#allocation4 + $0x1c0] sm:$0xff] %v4538
        %4555 = vst [vmem:[#allocation4 + $0x208] sm:$0xff] %v4539
        %4556 = vst [vmem:[#allocation4 + $0x250] sm:$0xff] %v4540
        %4557 = vst [vmem:[#allocation4 + $0x298] sm:$0xff] %v4541
        %4558 = vst [vmem:[#allocation4 + $0x2e0] sm:$0xff] %v4542
        %4559 = vst [vmem:[#allocation4 + $0x328] sm:$0xff] %v4543
        %4560 = vst [vmem:[#allocation4 + $0x370] sm:$0xff] %v4544
        %4561 = vst [vmem:[#allocation4 + $0x3b8] sm:$0xff] %v4545
        %4562 = vst [vmem:[#allocation4 + $0x400] sm:$0xff] %v4546
        %4563 = vst [vmem:[#allocation4 + $0x448] sm:$0xff] %v4547
        %v4564 = vld [vmem:[%s3078] sm:$0xff]
        %v4565 = vld [vmem:[%s3078 + $0x8] sm:$0xff]
        %v4566 = vld [vmem:[%s3078 + $0x18] sm:$0xff]
        %v4567 = vld [vmem:[%s3078 + $0x20] sm:$0xff]
        %v4568 = vld [vmem:[%s3078 + $0x30] sm:$0xff]
        %v4569 = vld [vmem:[%s3078 + $0x38] sm:$0xff]
        %v4570 = vld [vmem:[%s3078 + $0x48] sm:$0xff]
        %v4571 = vld [vmem:[%s3078 + $0x50] sm:$0xff]
        %v4572 = vld [vmem:[%s3078 + $0x60] sm:$0xff]
        %v4573 = vld [vmem:[%s3078 + $0x68] sm:$0xff]
        %v4574 = vld [vmem:[%s3078 + $0x78] sm:$0xff]
        %v4575 = vld [vmem:[%s3078 + $0x80] sm:$0xff]
        %v4576 = vld [vmem:[%s3078 + $0x90] sm:$0xff]
        %v4577 = vld [vmem:[%s3078 + $0x98] sm:$0xff]
        %v4578 = vld [vmem:[%s3078 + $0xa8] sm:$0xff]
        %v4579 = vld [vmem:[%s3078 + $0xb0] sm:$0xff]
        %4580 = vst [vmem:[#allocation4 + $0x18] sm:$0xff] %v4564
        %4581 = vst [vmem:[#allocation4 + $0x60] sm:$0xff] %v4565
        %4582 = vst [vmem:[#allocation4 + $0xa8] sm:$0xff] %v4566
        %4583 = vst [vmem:[#allocation4 + $0xf0] sm:$0xff] %v4567
        %4584 = vst [vmem:[#allocation4 + $0x138] sm:$0xff] %v4568
        %4585 = vst [vmem:[#allocation4 + $0x180] sm:$0xff] %v4569
        %4586 = vst [vmem:[#allocation4 + $0x1c8] sm:$0xff] %v4570
        %4587 = vst [vmem:[#allocation4 + $0x210] sm:$0xff] %v4571
        %4588 = vst [vmem:[#allocation4 + $0x258] sm:$0xff] %v4572
        %4589 = vst [vmem:[#allocation4 + $0x2a0] sm:$0xff] %v4573
        %4590 = vst [vmem:[#allocation4 + $0x2e8] sm:$0xff] %v4574
        %4591 = vst [vmem:[#allocation4 + $0x330] sm:$0xff] %v4575
        %4592 = vst [vmem:[#allocation4 + $0x378] sm:$0xff] %v4576
        %4593 = vst [vmem:[#allocation4 + $0x3c0] sm:$0xff] %v4577
        %4594 = vst [vmem:[#allocation4 + $0x408] sm:$0xff] %v4578
        %4595 = vst [vmem:[#allocation4 + $0x450] sm:$0xff] %v4579
        %v4596 = vld [vmem:[%s3078 + $0x1] sm:$0xff]
        %v4597 = vld [vmem:[%s3078 + $0x9] sm:$0xff]
        %v4598 = vld [vmem:[%s3078 + $0x19] sm:$0xff]
        %v4599 = vld [vmem:[%s3078 + $0x21] sm:$0xff]
        %v4600 = vld [vmem:[%s3078 + $0x31] sm:$0xff]
        %v4601 = vld [vmem:[%s3078 + $0x39] sm:$0xff]
        %v4602 = vld [vmem:[%s3078 + $0x49] sm:$0xff]
        %v4603 = vld [vmem:[%s3078 + $0x51] sm:$0xff]
        %v4604 = vld [vmem:[%s3078 + $0x61] sm:$0xff]
        %v4605 = vld [vmem:[%s3078 + $0x69] sm:$0xff]
        %v4606 = vld [vmem:[%s3078 + $0x79] sm:$0xff]
        %v4607 = vld [vmem:[%s3078 + $0x81] sm:$0xff]
        %v4608 = vld [vmem:[%s3078 + $0x91] sm:$0xff]
        %v4609 = vld [vmem:[%s3078 + $0x99] sm:$0xff]
        %v4610 = vld [vmem:[%s3078 + $0xa9] sm:$0xff]
        %v4611 = vld [vmem:[%s3078 + $0xb1] sm:$0xff]
        %4612 = vst [vmem:[#allocation4 + $0x20] sm:$0xff] %v4596
        %4613 = vst [vmem:[#allocation4 + $0x68] sm:$0xff] %v4597
        %4614 = vst [vmem:[#allocation4 + $0xb0] sm:$0xff] %v4598
        %4615 = vst [vmem:[#allocation4 + $0xf8] sm:$0xff] %v4599
        %4616 = vst [vmem:[#allocation4 + $0x140] sm:$0xff] %v4600
        %4617 = vst [vmem:[#allocation4 + $0x188] sm:$0xff] %v4601
        %4618 = vst [vmem:[#allocation4 + $0x1d0] sm:$0xff] %v4602
        %4619 = vst [vmem:[#allocation4 + $0x218] sm:$0xff] %v4603
        %4620 = vst [vmem:[#allocation4 + $0x260] sm:$0xff] %v4604
        %4621 = vst [vmem:[#allocation4 + $0x2a8] sm:$0xff] %v4605
        %4622 = vst [vmem:[#allocation4 + $0x2f0] sm:$0xff] %v4606
        %4623 = vst [vmem:[#allocation4 + $0x338] sm:$0xff] %v4607
        %4624 = vst [vmem:[#allocation4 + $0x380] sm:$0xff] %v4608
        %4625 = vst [vmem:[#allocation4 + $0x3c8] sm:$0xff] %v4609
        %4626 = vst [vmem:[#allocation4 + $0x410] sm:$0xff] %v4610
        %4627 = vst [vmem:[#allocation4 + $0x458] sm:$0xff] %v4611
        %v4628 = vld [vmem:[%s3078 + $0x2] sm:$0xff]
        %v4629 = vld [vmem:[%s3078 + $0xa] sm:$0xff]
        %v4630 = vld [vmem:[%s3078 + $0x1a] sm:$0xff]
        %v4631 = vld [vmem:[%s3078 + $0x22] sm:$0xff]
        %v4632 = vld [vmem:[%s3078 + $0x32] sm:$0xff]
        %v4633 = vld [vmem:[%s3078 + $0x3a] sm:$0xff]
        %v4634 = vld [vmem:[%s3078 + $0x4a] sm:$0xff]
        %v4635 = vld [vmem:[%s3078 + $0x52] sm:$0xff]
        %v4636 = vld [vmem:[%s3078 + $0x62] sm:$0xff]
        %v4637 = vld [vmem:[%s3078 + $0x6a] sm:$0xff]
        %v4638 = vld [vmem:[%s3078 + $0x7a] sm:$0xff]
        %v4639 = vld [vmem:[%s3078 + $0x82] sm:$0xff]
        %v4640 = vld [vmem:[%s3078 + $0x92] sm:$0xff]
        %v4641 = vld [vmem:[%s3078 + $0x9a] sm:$0xff]
        %v4642 = vld [vmem:[%s3078 + $0xaa] sm:$0xff]
        %v4643 = vld [vmem:[%s3078 + $0xb2] sm:$0xff]
        %4644 = vst [vmem:[#allocation4 + $0x28] sm:$0xff] %v4628
        %4645 = vst [vmem:[#allocation4 + $0x70] sm:$0xff] %v4629
        %4646 = vst [vmem:[#allocation4 + $0xb8] sm:$0xff] %v4630
        %4647 = vst [vmem:[#allocation4 + $0x100] sm:$0xff] %v4631
        %4648 = vst [vmem:[#allocation4 + $0x148] sm:$0xff] %v4632
        %4649 = vst [vmem:[#allocation4 + $0x190] sm:$0xff] %v4633
        %4650 = vst [vmem:[#allocation4 + $0x1d8] sm:$0xff] %v4634
        %4651 = vst [vmem:[#allocation4 + $0x220] sm:$0xff] %v4635
        %4652 = vst [vmem:[#allocation4 + $0x268] sm:$0xff] %v4636
        %4653 = vst [vmem:[#allocation4 + $0x2b0] sm:$0xff] %v4637
        %4654 = vst [vmem:[#allocation4 + $0x2f8] sm:$0xff] %v4638
        %4655 = vst [vmem:[#allocation4 + $0x340] sm:$0xff] %v4639
        %4656 = vst [vmem:[#allocation4 + $0x388] sm:$0xff] %v4640
        %4657 = vst [vmem:[#allocation4 + $0x3d0] sm:$0xff] %v4641
        %4658 = vst [vmem:[#allocation4 + $0x418] sm:$0xff] %v4642
        %4659 = vst [vmem:[#allocation4 + $0x460] sm:$0xff] %v4643
        %s4660 = scalar_lea.vmem [#allocation3], 240
        %v4661 = vld [vmem:[%s4660] sm:$0xff]
        %v4662 = vld [vmem:[%s4660 + $0x8] sm:$0xff]
        %v4663 = vld [vmem:[%s4660 + $0x18] sm:$0xff]
        %v4664 = vld [vmem:[%s4660 + $0x20] sm:$0xff]
        %v4665 = vld [vmem:[%s4660 + $0x30] sm:$0xff]
        %v4666 = vld [vmem:[%s4660 + $0x38] sm:$0xff]
        %v4667 = vld [vmem:[%s4660 + $0x48] sm:$0xff]
        %v4668 = vld [vmem:[%s4660 + $0x50] sm:$0xff]
        %v4669 = vld [vmem:[%s4660 + $0x60] sm:$0xff]
        %v4670 = vld [vmem:[%s4660 + $0x68] sm:$0xff]
        %v4671 = vld [vmem:[%s4660 + $0x78] sm:$0xff]
        %v4672 = vld [vmem:[%s4660 + $0x80] sm:$0xff]
        %v4673 = vld [vmem:[%s4660 + $0x90] sm:$0xff]
        %v4674 = vld [vmem:[%s4660 + $0x98] sm:$0xff]
        %v4675 = vld [vmem:[%s4660 + $0xa8] sm:$0xff]
        %v4676 = vld [vmem:[%s4660 + $0xb0] sm:$0xff]
        %4677 = vst [vmem:[#allocation4 + $0x30] sm:$0xff] %v4661
        %4678 = vst [vmem:[#allocation4 + $0x78] sm:$0xff] %v4662
        %4679 = vst [vmem:[#allocation4 + $0xc0] sm:$0xff] %v4663
        %4680 = vst [vmem:[#allocation4 + $0x108] sm:$0xff] %v4664
        %4681 = vst [vmem:[#allocation4 + $0x150] sm:$0xff] %v4665
        %4682 = vst [vmem:[#allocation4 + $0x198] sm:$0xff] %v4666
        %4683 = vst [vmem:[#allocation4 + $0x1e0] sm:$0xff] %v4667
        %4684 = vst [vmem:[#allocation4 + $0x228] sm:$0xff] %v4668
        %4685 = vst [vmem:[#allocation4 + $0x270] sm:$0xff] %v4669
        %4686 = vst [vmem:[#allocation4 + $0x2b8] sm:$0xff] %v4670
        %4687 = vst [vmem:[#allocation4 + $0x300] sm:$0xff] %v4671
        %4688 = vst [vmem:[#allocation4 + $0x348] sm:$0xff] %v4672
        %4689 = vst [vmem:[#allocation4 + $0x390] sm:$0xff] %v4673
        %4690 = vst [vmem:[#allocation4 + $0x3d8] sm:$0xff] %v4674
        %4691 = vst [vmem:[#allocation4 + $0x420] sm:$0xff] %v4675
        %4692 = vst [vmem:[#allocation4 + $0x468] sm:$0xff] %v4676
        %v4693 = vld [vmem:[%s4660 + $0x1] sm:$0xff]
        %v4694 = vld [vmem:[%s4660 + $0x9] sm:$0xff]
        %v4695 = vld [vmem:[%s4660 + $0x19] sm:$0xff]
        %v4696 = vld [vmem:[%s4660 + $0x21] sm:$0xff]
        %v4697 = vld [vmem:[%s4660 + $0x31] sm:$0xff]
        %v4698 = vld [vmem:[%s4660 + $0x39] sm:$0xff]
        %v4699 = vld [vmem:[%s4660 + $0x49] sm:$0xff]
        %v4700 = vld [vmem:[%s4660 + $0x51] sm:$0xff]
        %v4701 = vld [vmem:[%s4660 + $0x61] sm:$0xff]
        %v4702 = vld [vmem:[%s4660 + $0x69] sm:$0xff]
        %v4703 = vld [vmem:[%s4660 + $0x79] sm:$0xff]
        %v4704 = vld [vmem:[%s4660 + $0x81] sm:$0xff]
        %v4705 = vld [vmem:[%s4660 + $0x91] sm:$0xff]
        %v4706 = vld [vmem:[%s4660 + $0x99] sm:$0xff]
        %v4707 = vld [vmem:[%s4660 + $0xa9] sm:$0xff]
        %v4708 = vld [vmem:[%s4660 + $0xb1] sm:$0xff]
        %4709 = vst [vmem:[#allocation4 + $0x38] sm:$0xff] %v4693
        %4710 = vst [vmem:[#allocation4 + $0x80] sm:$0xff] %v4694
        %4711 = vst [vmem:[#allocation4 + $0xc8] sm:$0xff] %v4695
        %4712 = vst [vmem:[#allocation4 + $0x110] sm:$0xff] %v4696
        %4713 = vst [vmem:[#allocation4 + $0x158] sm:$0xff] %v4697
        %4714 = vst [vmem:[#allocation4 + $0x1a0] sm:$0xff] %v4698
        %4715 = vst [vmem:[#allocation4 + $0x1e8] sm:$0xff] %v4699
        %4716 = vst [vmem:[#allocation4 + $0x230] sm:$0xff] %v4700
        %4717 = vst [vmem:[#allocation4 + $0x278] sm:$0xff] %v4701
        %4718 = vst [vmem:[#allocation4 + $0x2c0] sm:$0xff] %v4702
        %4719 = vst [vmem:[#allocation4 + $0x308] sm:$0xff] %v4703
        %4720 = vst [vmem:[#allocation4 + $0x350] sm:$0xff] %v4704
        %4721 = vst [vmem:[#allocation4 + $0x398] sm:$0xff] %v4705
        %4722 = vst [vmem:[#allocation4 + $0x3e0] sm:$0xff] %v4706
        %4723 = vst [vmem:[#allocation4 + $0x428] sm:$0xff] %v4707
        %4724 = vst [vmem:[#allocation4 + $0x470] sm:$0xff] %v4708
        %v4725 = vld [vmem:[%s4660 + $0x2] sm:$0xff]
        %v4726 = vld [vmem:[%s4660 + $0xa] sm:$0xff]
        %v4727 = vld [vmem:[%s4660 + $0x1a] sm:$0xff]
        %v4728 = vld [vmem:[%s4660 + $0x22] sm:$0xff]
        %v4729 = vld [vmem:[%s4660 + $0x32] sm:$0xff]
        %v4730 = vld [vmem:[%s4660 + $0x3a] sm:$0xff]
        %v4731 = vld [vmem:[%s4660 + $0x4a] sm:$0xff]
        %v4732 = vld [vmem:[%s4660 + $0x52] sm:$0xff]
        %v4733 = vld [vmem:[%s4660 + $0x62] sm:$0xff]
        %v4734 = vld [vmem:[%s4660 + $0x6a] sm:$0xff]
        %v4735 = vld [vmem:[%s4660 + $0x7a] sm:$0xff]
        %v4736 = vld [vmem:[%s4660 + $0x82] sm:$0xff]
        %v4737 = vld [vmem:[%s4660 + $0x92] sm:$0xff]
        %v4738 = vld [vmem:[%s4660 + $0x9a] sm:$0xff]
        %v4739 = vld [vmem:[%s4660 + $0xaa] sm:$0xff]
        %v4740 = vld [vmem:[%s4660 + $0xb2] sm:$0xff]
        %4741 = vst [vmem:[#allocation4 + $0x40] sm:$0xff] %v4725
        %4742 = vst [vmem:[#allocation4 + $0x88] sm:$0xff] %v4726
        %4743 = vst [vmem:[#allocation4 + $0xd0] sm:$0xff] %v4727
        %4744 = vst [vmem:[#allocation4 + $0x118] sm:$0xff] %v4728
        %4745 = vst [vmem:[#allocation4 + $0x160] sm:$0xff] %v4729
        %4746 = vst [vmem:[#allocation4 + $0x1a8] sm:$0xff] %v4730
        %4747 = vst [vmem:[#allocation4 + $0x1f0] sm:$0xff] %v4731
        %4748 = vst [vmem:[#allocation4 + $0x238] sm:$0xff] %v4732
        %4749 = vst [vmem:[#allocation4 + $0x280] sm:$0xff] %v4733
        %4750 = vst [vmem:[#allocation4 + $0x2c8] sm:$0xff] %v4734
        %4751 = vst [vmem:[#allocation4 + $0x310] sm:$0xff] %v4735
        %4752 = vst [vmem:[#allocation4 + $0x358] sm:$0xff] %v4736
        %4753 = vst [vmem:[#allocation4 + $0x3a0] sm:$0xff] %v4737
        %4754 = vst [vmem:[#allocation4 + $0x3e8] sm:$0xff] %v4738
        %4755 = vst [vmem:[#allocation4 + $0x430] sm:$0xff] %v4739
        %4756 = vst [vmem:[#allocation4 + $0x478] sm:$0xff] %v4740
        %v4757 = vld [vmem:[#allocation4] sm:$0xff]
        %v4758 = vld [vmem:[#allocation4 + $0x8] sm:$0xff]
        %v4759 = vld [vmem:[#allocation4 + $0x10] sm:$0xff]
        %v4760 = vld [vmem:[#allocation4 + $0x18] sm:$0xff]
        %v4761 = vld [vmem:[#allocation4 + $0x20] sm:$0xff]
        %v4762 = vld [vmem:[#allocation4 + $0x28] sm:$0xff]
        %v4763 = vld [vmem:[#allocation4 + $0x30] sm:$0xff]
        %v4764 = vld [vmem:[#allocation4 + $0x38] sm:$0xff]
        %v4765 = vld [vmem:[#allocation4 + $0x40] sm:$0xff]
        %v4766 = vld [vmem:[#allocation4 + $0x48] sm:$0xff]
        %v4767 = vld [vmem:[#allocation4 + $0x50] sm:$0xff]
        %v4768 = vld [vmem:[#allocation4 + $0x58] sm:$0xff]
        %v4769 = vld [vmem:[#allocation4 + $0x60] sm:$0xff]
        %v4770 = vld [vmem:[#allocation4 + $0x68] sm:$0xff]
        %v4771 = vld [vmem:[#allocation4 + $0x70] sm:$0xff]
        %v4772 = vld [vmem:[#allocation4 + $0x78] sm:$0xff]
        %v4773 = vld [vmem:[#allocation4 + $0x80] sm:$0xff]
        %v4774 = vld [vmem:[#allocation4 + $0x88] sm:$0xff]
        %v4775 = vld [vmem:[#allocation4 + $0x90] sm:$0xff]
        %v4776 = vld [vmem:[#allocation4 + $0x98] sm:$0xff]
        %v4777 = vld [vmem:[#allocation4 + $0xa0] sm:$0xff]
        %v4778 = vld [vmem:[#allocation4 + $0xa8] sm:$0xff]
        %v4779 = vld [vmem:[#allocation4 + $0xb0] sm:$0xff]
        %v4780 = vld [vmem:[#allocation4 + $0xb8] sm:$0xff]
        %v4781 = vld [vmem:[#allocation4 + $0xc0] sm:$0xff]
        %v4782 = vld [vmem:[#allocation4 + $0xc8] sm:$0xff]
        %v4783 = vld [vmem:[#allocation4 + $0xd0] sm:$0xff]
        %v4784 = vld [vmem:[#allocation4 + $0xd8] sm:$0xff]
        %v4785 = vld [vmem:[#allocation4 + $0xe0] sm:$0xff]
        %v4786 = vld [vmem:[#allocation4 + $0xe8] sm:$0xff]
        %v4787 = vld [vmem:[#allocation4 + $0xf0] sm:$0xff]
        %v4788 = vld [vmem:[#allocation4 + $0xf8] sm:$0xff]
        %v4789 = vld [vmem:[#allocation4 + $0x100] sm:$0xff]
        %v4790 = vld [vmem:[#allocation4 + $0x108] sm:$0xff]
        %v4791 = vld [vmem:[#allocation4 + $0x110] sm:$0xff]
        %v4792 = vld [vmem:[#allocation4 + $0x118] sm:$0xff]
        %v4793 = vld [vmem:[#allocation4 + $0x120] sm:$0xff]
        %v4794 = vld [vmem:[#allocation4 + $0x128] sm:$0xff]
        %v4795 = vld [vmem:[#allocation4 + $0x130] sm:$0xff]
        %v4796 = vld [vmem:[#allocation4 + $0x138] sm:$0xff]
        %v4797 = vld [vmem:[#allocation4 + $0x140] sm:$0xff]
        %v4798 = vld [vmem:[#allocation4 + $0x148] sm:$0xff]
        %v4799 = vld [vmem:[#allocation4 + $0x150] sm:$0xff]
        %v4800 = vld [vmem:[#allocation4 + $0x158] sm:$0xff]
        %v4801 = vld [vmem:[#allocation4 + $0x160] sm:$0xff]
        %v4802 = vld [vmem:[#allocation4 + $0x168] sm:$0xff]
        %v4803 = vld [vmem:[#allocation4 + $0x170] sm:$0xff]
        %v4804 = vld [vmem:[#allocation4 + $0x178] sm:$0xff]
        %v4805 = vld [vmem:[#allocation4 + $0x180] sm:$0xff]
        %v4806 = vld [vmem:[#allocation4 + $0x188] sm:$0xff]
        %v4807 = vld [vmem:[#allocation4 + $0x190] sm:$0xff]
        %v4808 = vld [vmem:[#allocation4 + $0x198] sm:$0xff]
        %v4809 = vld [vmem:[#allocation4 + $0x1a0] sm:$0xff]
        %v4810 = vld [vmem:[#allocation4 + $0x1a8] sm:$0xff]
        %v4811 = vld [vmem:[#allocation4 + $0x1b0] sm:$0xff]
        %v4812 = vld [vmem:[#allocation4 + $0x1b8] sm:$0xff]
        %v4813 = vld [vmem:[#allocation4 + $0x1c0] sm:$0xff]
        %v4814 = vld [vmem:[#allocation4 + $0x1c8] sm:$0xff]
        %v4815 = vld [vmem:[#allocation4 + $0x1d0] sm:$0xff]
        %v4816 = vld [vmem:[#allocation4 + $0x1d8] sm:$0xff]
        %v4817 = vld [vmem:[#allocation4 + $0x1e0] sm:$0xff]
        %v4818 = vld [vmem:[#allocation4 + $0x1e8] sm:$0xff]
        %v4819 = vld [vmem:[#allocation4 + $0x1f0] sm:$0xff]
        %v4820 = vld [vmem:[#allocation4 + $0x1f8] sm:$0xff]
        %v4821 = vld [vmem:[#allocation4 + $0x200] sm:$0xff]
        %v4822 = vld [vmem:[#allocation4 + $0x208] sm:$0xff]
        %v4823 = vld [vmem:[#allocation4 + $0x210] sm:$0xff]
        %v4824 = vld [vmem:[#allocation4 + $0x218] sm:$0xff]
        %v4825 = vld [vmem:[#allocation4 + $0x220] sm:$0xff]
        %v4826 = vld [vmem:[#allocation4 + $0x228] sm:$0xff]
        %v4827 = vld [vmem:[#allocation4 + $0x230] sm:$0xff]
        %v4828 = vld [vmem:[#allocation4 + $0x238] sm:$0xff]
        %v4829 = vld [vmem:[#allocation4 + $0x240] sm:$0xff]
        %v4830 = vld [vmem:[#allocation4 + $0x248] sm:$0xff]
        %v4831 = vld [vmem:[#allocation4 + $0x250] sm:$0xff]
        %v4832 = vld [vmem:[#allocation4 + $0x258] sm:$0xff]
        %v4833 = vld [vmem:[#allocation4 + $0x260] sm:$0xff]
        %v4834 = vld [vmem:[#allocation4 + $0x268] sm:$0xff]
        %v4835 = vld [vmem:[#allocation4 + $0x270] sm:$0xff]
        %v4836 = vld [vmem:[#allocation4 + $0x278] sm:$0xff]
        %v4837 = vld [vmem:[#allocation4 + $0x280] sm:$0xff]
        %v4838 = vld [vmem:[#allocation4 + $0x288] sm:$0xff]
        %v4839 = vld [vmem:[#allocation4 + $0x290] sm:$0xff]
        %v4840 = vld [vmem:[#allocation4 + $0x298] sm:$0xff]
        %v4841 = vld [vmem:[#allocation4 + $0x2a0] sm:$0xff]
        %v4842 = vld [vmem:[#allocation4 + $0x2a8] sm:$0xff]
        %v4843 = vld [vmem:[#allocation4 + $0x2b0] sm:$0xff]
        %v4844 = vld [vmem:[#allocation4 + $0x2b8] sm:$0xff]
        %v4845 = vld [vmem:[#allocation4 + $0x2c0] sm:$0xff]
        %v4846 = vld [vmem:[#allocation4 + $0x2c8] sm:$0xff]
        %v4847 = vld [vmem:[#allocation4 + $0x2d0] sm:$0xff]
        %v4848 = vld [vmem:[#allocation4 + $0x2d8] sm:$0xff]
        %v4849 = vld [vmem:[#allocation4 + $0x2e0] sm:$0xff]
        %v4850 = vld [vmem:[#allocation4 + $0x2e8] sm:$0xff]
        %v4851 = vld [vmem:[#allocation4 + $0x2f0] sm:$0xff]
        %v4852 = vld [vmem:[#allocation4 + $0x2f8] sm:$0xff]
        %v4853 = vld [vmem:[#allocation4 + $0x300] sm:$0xff]
        %v4854 = vld [vmem:[#allocation4 + $0x308] sm:$0xff]
        %v4855 = vld [vmem:[#allocation4 + $0x310] sm:$0xff]
        %v4856 = vld [vmem:[#allocation4 + $0x318] sm:$0xff]
        %v4857 = vld [vmem:[#allocation4 + $0x320] sm:$0xff]
        %v4858 = vld [vmem:[#allocation4 + $0x328] sm:$0xff]
        %v4859 = vld [vmem:[#allocation4 + $0x330] sm:$0xff]
        %v4860 = vld [vmem:[#allocation4 + $0x338] sm:$0xff]
        %v4861 = vld [vmem:[#allocation4 + $0x340] sm:$0xff]
        %v4862 = vld [vmem:[#allocation4 + $0x348] sm:$0xff]
        %v4863 = vld [vmem:[#allocation4 + $0x350] sm:$0xff]
        %v4864 = vld [vmem:[#allocation4 + $0x358] sm:$0xff]
        %v4865 = vld [vmem:[#allocation4 + $0x360] sm:$0xff]
        %v4866 = vld [vmem:[#allocation4 + $0x368] sm:$0xff]
        %v4867 = vld [vmem:[#allocation4 + $0x370] sm:$0xff]
        %v4868 = vld [vmem:[#allocation4 + $0x378] sm:$0xff]
        %v4869 = vld [vmem:[#allocation4 + $0x380] sm:$0xff]
        %v4870 = vld [vmem:[#allocation4 + $0x388] sm:$0xff]
        %v4871 = vld [vmem:[#allocation4 + $0x390] sm:$0xff]
        %v4872 = vld [vmem:[#allocation4 + $0x398] sm:$0xff]
        %v4873 = vld [vmem:[#allocation4 + $0x3a0] sm:$0xff]
        %v4874 = vld [vmem:[#allocation4 + $0x3a8] sm:$0xff]
        %v4875 = vld [vmem:[#allocation4 + $0x3b0] sm:$0xff]
        %v4876 = vld [vmem:[#allocation4 + $0x3b8] sm:$0xff]
        %v4877 = vld [vmem:[#allocation4 + $0x3c0] sm:$0xff]
        %v4878 = vld [vmem:[#allocation4 + $0x3c8] sm:$0xff]
        %v4879 = vld [vmem:[#allocation4 + $0x3d0] sm:$0xff]
        %v4880 = vld [vmem:[#allocation4 + $0x3d8] sm:$0xff]
        %v4881 = vld [vmem:[#allocation4 + $0x3e0] sm:$0xff]
        %v4882 = vld [vmem:[#allocation4 + $0x3e8] sm:$0xff]
        %v4883 = vld [vmem:[#allocation4 + $0x3f0] sm:$0xff]
        %v4884 = vld [vmem:[#allocation4 + $0x3f8] sm:$0xff]
        %v4885 = vld [vmem:[#allocation4 + $0x400] sm:$0xff]
        %v4886 = vld [vmem:[#allocation4 + $0x408] sm:$0xff]
        %v4887 = vld [vmem:[#allocation4 + $0x410] sm:$0xff]
        %v4888 = vld [vmem:[#allocation4 + $0x418] sm:$0xff]
        %v4889 = vld [vmem:[#allocation4 + $0x420] sm:$0xff]
        %v4890 = vld [vmem:[#allocation4 + $0x428] sm:$0xff]
        %v4891 = vld [vmem:[#allocation4 + $0x430] sm:$0xff]
        %v4892 = vld [vmem:[#allocation4 + $0x438] sm:$0xff]
        %v4893 = vld [vmem:[#allocation4 + $0x440] sm:$0xff]
        %v4894 = vld [vmem:[#allocation4 + $0x448] sm:$0xff]
        %v4895 = vld [vmem:[#allocation4 + $0x450] sm:$0xff]
        %v4896 = vld [vmem:[#allocation4 + $0x458] sm:$0xff]
        %v4897 = vld [vmem:[#allocation4 + $0x460] sm:$0xff]
        %v4898 = vld [vmem:[#allocation4 + $0x468] sm:$0xff]
        %v4899 = vld [vmem:[#allocation4 + $0x470] sm:$0xff]
        %v4900 = vld [vmem:[#allocation4 + $0x478] sm:$0xff]
        %v4901 = vld [vmem:[#allocation10] sm:$0xff]
        %v4902 = vld [vmem:[#allocation10 + $0x8] sm:$0xff]
        %v4903 = vld [vmem:[#allocation10 + $0x10] sm:$0xff]
        %v4904 = vld [vmem:[#allocation10 + $0x18] sm:$0xff]
        %v4905 = vld [vmem:[#allocation10 + $0x20] sm:$0xff]
        %v4906 = vld [vmem:[#allocation10 + $0x28] sm:$0xff]
        %v4907 = vld [vmem:[#allocation10 + $0x30] sm:$0xff]
        %v4908 = vld [vmem:[#allocation10 + $0x38] sm:$0xff]
        %v4909 = vld [vmem:[#allocation10 + $0x40] sm:$0xff]
        %v4910 = vld [vmem:[#allocation10 + $0x48] sm:$0xff]
        %v4911 = vld [vmem:[#allocation10 + $0x50] sm:$0xff]
        %v4912 = vld [vmem:[#allocation10 + $0x58] sm:$0xff]
        %v4913 = vld [vmem:[#allocation10 + $0x60] sm:$0xff]
        %v4914 = vld [vmem:[#allocation10 + $0x68] sm:$0xff]
        %v4915 = vld [vmem:[#allocation10 + $0x70] sm:$0xff]
        %v4916 = vld [vmem:[#allocation10 + $0x78] sm:$0xff]
        %v4917 = vld [vmem:[#allocation10 + $0x80] sm:$0xff]
        %v4918 = vld [vmem:[#allocation10 + $0x88] sm:$0xff]
        %v4919 = vld [vmem:[#allocation10 + $0x90] sm:$0xff]
        %v4920 = vld [vmem:[#allocation10 + $0x98] sm:$0xff]
        %v4921 = vld [vmem:[#allocation10 + $0xa0] sm:$0xff]
        %v4922 = vld [vmem:[#allocation10 + $0xa8] sm:$0xff]
        %v4923 = vld [vmem:[#allocation10 + $0xb0] sm:$0xff]
        %v4924 = vld [vmem:[#allocation10 + $0xb8] sm:$0xff]
        %v4925 = vld [vmem:[#allocation10 + $0xc0] sm:$0xff]
        %v4926 = vld [vmem:[#allocation10 + $0xc8] sm:$0xff]
        %v4927 = vld [vmem:[#allocation10 + $0xd0] sm:$0xff]
        %v4928 = vld [vmem:[#allocation10 + $0xd8] sm:$0xff]
        %v4929 = vld [vmem:[#allocation10 + $0xe0] sm:$0xff]
        %v4930 = vld [vmem:[#allocation10 + $0xe8] sm:$0xff]
        %v4931 = vld [vmem:[#allocation10 + $0xf0] sm:$0xff]
        %v4932 = vld [vmem:[#allocation10 + $0xf8] sm:$0xff]
        %v4933 = vld [vmem:[#allocation10 + $0x100] sm:$0xff]
        %v4934 = vld [vmem:[#allocation10 + $0x108] sm:$0xff]
        %v4935 = vld [vmem:[#allocation10 + $0x110] sm:$0xff]
        %v4936 = vld [vmem:[#allocation10 + $0x118] sm:$0xff]
        %v4937 = vld [vmem:[#allocation10 + $0x120] sm:$0xff]
        %v4938 = vld [vmem:[#allocation10 + $0x128] sm:$0xff]
        %v4939 = vld [vmem:[#allocation10 + $0x130] sm:$0xff]
        %v4940 = vld [vmem:[#allocation10 + $0x138] sm:$0xff]
        %v4941 = vld [vmem:[#allocation10 + $0x140] sm:$0xff]
        %v4942 = vld [vmem:[#allocation10 + $0x148] sm:$0xff]
        %v4943 = vld [vmem:[#allocation10 + $0x150] sm:$0xff]
        %v4944 = vld [vmem:[#allocation10 + $0x158] sm:$0xff]
        %v4945 = vld [vmem:[#allocation10 + $0x160] sm:$0xff]
        %v4946 = vld [vmem:[#allocation10 + $0x168] sm:$0xff]
        %v4947 = vld [vmem:[#allocation10 + $0x170] sm:$0xff]
        %v4948 = vld [vmem:[#allocation10 + $0x178] sm:$0xff]
        %v4949 = vld [vmem:[#allocation10 + $0x180] sm:$0xff]
        %v4950 = vld [vmem:[#allocation10 + $0x188] sm:$0xff]
        %v4951 = vld [vmem:[#allocation10 + $0x190] sm:$0xff]
        %v4952 = vld [vmem:[#allocation10 + $0x198] sm:$0xff]
        %v4953 = vld [vmem:[#allocation10 + $0x1a0] sm:$0xff]
        %v4954 = vld [vmem:[#allocation10 + $0x1a8] sm:$0xff]
        %v4955 = vld [vmem:[#allocation10 + $0x1b0] sm:$0xff]
        %v4956 = vld [vmem:[#allocation10 + $0x1b8] sm:$0xff]
        %v4957 = vld [vmem:[#allocation10 + $0x1c0] sm:$0xff]
        %v4958 = vld [vmem:[#allocation10 + $0x1c8] sm:$0xff]
        %v4959 = vld [vmem:[#allocation10 + $0x1d0] sm:$0xff]
        %v4960 = vld [vmem:[#allocation10 + $0x1d8] sm:$0xff]
        %v4961 = vld [vmem:[#allocation10 + $0x1e0] sm:$0xff]
        %v4962 = vld [vmem:[#allocation10 + $0x1e8] sm:$0xff]
        %v4963 = vld [vmem:[#allocation10 + $0x1f0] sm:$0xff]
        %v4964 = vld [vmem:[#allocation10 + $0x1f8] sm:$0xff]
        %v4965 = vld [vmem:[#allocation10 + $0x200] sm:$0xff]
        %v4966 = vld [vmem:[#allocation10 + $0x208] sm:$0xff]
        %v4967 = vld [vmem:[#allocation10 + $0x210] sm:$0xff]
        %v4968 = vld [vmem:[#allocation10 + $0x218] sm:$0xff]
        %v4969 = vld [vmem:[#allocation10 + $0x220] sm:$0xff]
        %v4970 = vld [vmem:[#allocation10 + $0x228] sm:$0xff]
        %v4971 = vld [vmem:[#allocation10 + $0x230] sm:$0xff]
        %v4972 = vld [vmem:[#allocation10 + $0x238] sm:$0xff]
        %v4973 = vld [vmem:[#allocation10 + $0x240] sm:$0xff]
        %v4974 = vld [vmem:[#allocation10 + $0x248] sm:$0xff]
        %v4975 = vld [vmem:[#allocation10 + $0x250] sm:$0xff]
        %v4976 = vld [vmem:[#allocation10 + $0x258] sm:$0xff]
        %v4977 = vld [vmem:[#allocation10 + $0x260] sm:$0xff]
        %v4978 = vld [vmem:[#allocation10 + $0x268] sm:$0xff]
        %v4979 = vld [vmem:[#allocation10 + $0x270] sm:$0xff]
        %v4980 = vld [vmem:[#allocation10 + $0x278] sm:$0xff]
        %v4981 = vld [vmem:[#allocation10 + $0x280] sm:$0xff]
        %v4982 = vld [vmem:[#allocation10 + $0x288] sm:$0xff]
        %v4983 = vld [vmem:[#allocation10 + $0x290] sm:$0xff]
        %v4984 = vld [vmem:[#allocation10 + $0x298] sm:$0xff]
        %v4985 = vld [vmem:[#allocation10 + $0x2a0] sm:$0xff]
        %v4986 = vld [vmem:[#allocation10 + $0x2a8] sm:$0xff]
        %v4987 = vld [vmem:[#allocation10 + $0x2b0] sm:$0xff]
        %v4988 = vld [vmem:[#allocation10 + $0x2b8] sm:$0xff]
        %v4989 = vld [vmem:[#allocation10 + $0x2c0] sm:$0xff]
        %v4990 = vld [vmem:[#allocation10 + $0x2c8] sm:$0xff]
        %v4991 = vld [vmem:[#allocation10 + $0x2d0] sm:$0xff]
        %v4992 = vld [vmem:[#allocation10 + $0x2d8] sm:$0xff]
        %v4993 = vld [vmem:[#allocation10 + $0x2e0] sm:$0xff]
        %v4994 = vld [vmem:[#allocation10 + $0x2e8] sm:$0xff]
        %v4995 = vld [vmem:[#allocation10 + $0x2f0] sm:$0xff]
        %v4996 = vld [vmem:[#allocation10 + $0x2f8] sm:$0xff]
        %v4997 = vld [vmem:[#allocation10 + $0x300] sm:$0xff]
        %v4998 = vld [vmem:[#allocation10 + $0x308] sm:$0xff]
        %v4999 = vld [vmem:[#allocation10 + $0x310] sm:$0xff]
        %v5000 = vld [vmem:[#allocation10 + $0x318] sm:$0xff]
        %v5001 = vld [vmem:[#allocation10 + $0x320] sm:$0xff]
        %v5002 = vld [vmem:[#allocation10 + $0x328] sm:$0xff]
        %v5003 = vld [vmem:[#allocation10 + $0x330] sm:$0xff]
        %v5004 = vld [vmem:[#allocation10 + $0x338] sm:$0xff]
        %v5005 = vld [vmem:[#allocation10 + $0x340] sm:$0xff]
        %v5006 = vld [vmem:[#allocation10 + $0x348] sm:$0xff]
        %v5007 = vld [vmem:[#allocation10 + $0x350] sm:$0xff]
        %v5008 = vld [vmem:[#allocation10 + $0x358] sm:$0xff]
        %v5009 = vld [vmem:[#allocation10 + $0x360] sm:$0xff]
        %v5010 = vld [vmem:[#allocation10 + $0x368] sm:$0xff]
        %v5011 = vld [vmem:[#allocation10 + $0x370] sm:$0xff]
        %v5012 = vld [vmem:[#allocation10 + $0x378] sm:$0xff]
        %v5013 = vld [vmem:[#allocation10 + $0x380] sm:$0xff]
        %v5014 = vld [vmem:[#allocation10 + $0x388] sm:$0xff]
        %v5015 = vld [vmem:[#allocation10 + $0x390] sm:$0xff]
        %v5016 = vld [vmem:[#allocation10 + $0x398] sm:$0xff]
        %v5017 = vld [vmem:[#allocation10 + $0x3a0] sm:$0xff]
        %v5018 = vld [vmem:[#allocation10 + $0x3a8] sm:$0xff]
        %v5019 = vld [vmem:[#allocation10 + $0x3b0] sm:$0xff]
        %v5020 = vld [vmem:[#allocation10 + $0x3b8] sm:$0xff]
        %v5021 = vld [vmem:[#allocation10 + $0x3c0] sm:$0xff]
        %v5022 = vld [vmem:[#allocation10 + $0x3c8] sm:$0xff]
        %v5023 = vld [vmem:[#allocation10 + $0x3d0] sm:$0xff]
        %v5024 = vld [vmem:[#allocation10 + $0x3d8] sm:$0xff]
        %v5025 = vld [vmem:[#allocation10 + $0x3e0] sm:$0xff]
        %v5026 = vld [vmem:[#allocation10 + $0x3e8] sm:$0xff]
        %v5027 = vld [vmem:[#allocation10 + $0x3f0] sm:$0xff]
        %v5028 = vld [vmem:[#allocation10 + $0x3f8] sm:$0xff]
        %v5029 = vld [vmem:[#allocation10 + $0x400] sm:$0xff]
        %v5030 = vld [vmem:[#allocation10 + $0x408] sm:$0xff]
        %v5031 = vld [vmem:[#allocation10 + $0x410] sm:$0xff]
        %v5032 = vld [vmem:[#allocation10 + $0x418] sm:$0xff]
        %v5033 = vld [vmem:[#allocation10 + $0x420] sm:$0xff]
        %v5034 = vld [vmem:[#allocation10 + $0x428] sm:$0xff]
        %v5035 = vld [vmem:[#allocation10 + $0x430] sm:$0xff]
        %v5036 = vld [vmem:[#allocation10 + $0x438] sm:$0xff]
        %v5037 = vld [vmem:[#allocation10 + $0x440] sm:$0xff]
        %v5038 = vld [vmem:[#allocation10 + $0x448] sm:$0xff]
        %v5039 = vld [vmem:[#allocation10 + $0x450] sm:$0xff]
        %v5040 = vld [vmem:[#allocation10 + $0x458] sm:$0xff]
        %v5041 = vld [vmem:[#allocation10 + $0x460] sm:$0xff]
        %v5042 = vld [vmem:[#allocation10 + $0x468] sm:$0xff]
        %v5043 = vld [vmem:[#allocation10 + $0x470] sm:$0xff]
        %v5044 = vld [vmem:[#allocation10 + $0x478] sm:$0xff]
        %5045 = vmatprep.subr.mxu0 0.0
        %5046 = vmatpush1.msra.mxu0 %v4916
        %5047 = vmatprep.subr.mxu0 0.0
        %5048 = vmatpush1.msra.mxu0 %v4915
        %5049 = vmatprep.subr.mxu0 0.0
        %5050 = vmatpush1.msra.mxu0 %v4914
        %5051 = vmatprep.subr.mxu0 0.0
        %5052 = vmatpush1.msra.mxu0 %v4913
        %5053 = vmatprep.subr.mxu0 0.0
        %5054 = vmatpush1.msra.mxu0 %v4912
        %5055 = vmatprep.subr.mxu0 0.0
        %5056 = vmatpush1.msra.mxu0 %v4911
        %5057 = vmatprep.subr.mxu0 0.0
        %5058 = vmatpush1.msra.mxu0 %v4910
        %5059 = vmatprep.subr.mxu0 0.0
        %5060 = vmatpush1.msra.mxu0 %v4909
        %5061 = vmatprep.subr.mxu0 0.0
        %5062 = vmatpush1.msra.mxu0 %v4908
        %5063 = vmatprep.subr.mxu0 0.0
        %5064 = vmatpush1.msra.mxu0 %v4907
        %5065 = vmatprep.subr.mxu0 0.0
        %5066 = vmatpush1.msra.mxu0 %v4906
        %5067 = vmatprep.subr.mxu0 0.0
        %5068 = vmatpush1.msra.mxu0 %v4905
        %5069 = vmatprep.subr.mxu0 0.0
        %5070 = vmatpush1.msra.mxu0 %v4904
        %5071 = vmatprep.subr.mxu0 0.0
        %5072 = vmatpush1.msra.mxu0 %v4903
        %5073 = vmatprep.subr.mxu0 0.0
        %5074 = vmatpush1.msra.mxu0 %v4902
        %5075 = vmatprep.subr.mxu0 0.0
        %5076 = vmatpush1.msra.mxu0 %v4901
        %5077 = vmatprep.subr.mxu0 0.0
        %5078 = vmatpush2.msra.mxu0 %v4932
        %5079 = vmatprep.subr.mxu0 0.0
        %5080 = vmatpush2.msra.mxu0 %v4931
        %5081 = vmatprep.subr.mxu0 0.0
        %5082 = vmatpush2.msra.mxu0 %v4930
        %5083 = vmatprep.subr.mxu0 0.0
        %5084 = vmatpush2.msra.mxu0 %v4929
        %5085 = vmatprep.subr.mxu0 0.0
        %5086 = vmatpush2.msra.mxu0 %v4928
        %5087 = vmatprep.subr.mxu0 0.0
        %5088 = vmatpush2.msra.mxu0 %v4927
        %5089 = vmatprep.subr.mxu0 0.0
        %5090 = vmatpush2.msra.mxu0 %v4926
        %5091 = vmatprep.subr.mxu0 0.0
        %5092 = vmatpush2.msra.mxu0 %v4925
        %5093 = vmatprep.subr.mxu0 0.0
        %5094 = vmatpush2.msra.mxu0 %v4924
        %5095 = vmatprep.subr.mxu0 0.0
        %5096 = vmatpush2.msra.mxu0 %v4923
        %5097 = vmatprep.subr.mxu0 0.0
        %5098 = vmatpush2.msra.mxu0 %v4922
        %5099 = vmatprep.subr.mxu0 0.0
        %5100 = vmatpush2.msra.mxu0 %v4921
        %5101 = vmatprep.subr.mxu0 0.0
        %5102 = vmatpush2.msra.mxu0 %v4920
        %5103 = vmatprep.subr.mxu0 0.0
        %5104 = vmatpush2.msra.mxu0 %v4919
        %5105 = vmatprep.subr.mxu0 0.0
        %5106 = vmatpush2.msra.mxu0 %v4918
        %5107 = vmatprep.subr.mxu0 0.0
        %5108 = vmatpush2.msra.mxu0 %v4917
        %5109 = vmatprep.mubr.f32.mxu0 %v4758
        %5110 = vmatmul.mubr.f32.gmra.mxu0 %v4757
        %v5111 = vpop.f32.mrf.mxu0
        %v5112 = vadd.f32 %v3676, %v5111
        %v5113 = vpop.f32.mrf.mxu0
        %5114 = vmatprep.mubr.f32.mxu0 %v4767
        %5115 = vmatmul.mubr.f32.gmra.mxu0 %v4766
        %v5116 = vpop.f32.mrf.mxu0
        %v5117 = vadd.f32 %v3676, %v5116
        %v5118 = vpop.f32.mrf.mxu0
        %5119 = vmatprep.mubr.f32.mxu0 %v4776
        %5120 = vmatmul.mubr.f32.gmra.mxu0 %v4775
        %v5121 = vpop.f32.mrf.mxu0
        %v5122 = vadd.f32 %v3676, %v5121
        %v5123 = vpop.f32.mrf.mxu0
        %5124 = vmatprep.mubr.f32.mxu0 %v4785
        %5125 = vmatmul.mubr.f32.gmra.mxu0 %v4784
        %v5126 = vpop.f32.mrf.mxu0
        %v5127 = vadd.f32 %v3676, %v5126
        %v5128 = vpop.f32.mrf.mxu0
        %5129 = vmatprep.mubr.f32.mxu0 %v4794
        %5130 = vmatmul.mubr.f32.gmra.mxu0 %v4793
        %v5131 = vpop.f32.mrf.mxu0
        %v5132 = vadd.f32 %v3676, %v5131
        %v5133 = vpop.f32.mrf.mxu0
        %5134 = vmatprep.mubr.f32.mxu0 %v4803
        %5135 = vmatmul.mubr.f32.gmra.mxu0 %v4802
        %v5136 = vpop.f32.mrf.mxu0
        %v5137 = vadd.f32 %v3676, %v5136
        %v5138 = vpop.f32.mrf.mxu0
        %5139 = vmatprep.mubr.f32.mxu0 %v4812
        %5140 = vmatmul.mubr.f32.gmra.mxu0 %v4811
        %v5141 = vpop.f32.mrf.mxu0
        %v5142 = vadd.f32 %v3676, %v5141
        %v5143 = vpop.f32.mrf.mxu0
        %5144 = vmatprep.mubr.f32.mxu0 %v4821
        %5145 = vmatmul.mubr.f32.gmra.mxu0 %v4820
        %v5146 = vpop.f32.mrf.mxu0
        %v5147 = vadd.f32 %v3676, %v5146
        %v5148 = vpop.f32.mrf.mxu0
        %5149 = vmatprep.mubr.f32.mxu0 %v4830
        %5150 = vmatmul.mubr.f32.gmra.mxu0 %v4829
        %v5151 = vpop.f32.mrf.mxu0
        %v5152 = vadd.f32 %v3676, %v5151
        %v5153 = vpop.f32.mrf.mxu0
        %5154 = vmatprep.mubr.f32.mxu0 %v4839
        %5155 = vmatmul.mubr.f32.gmra.mxu0 %v4838
        %v5156 = vpop.f32.mrf.mxu0
        %v5157 = vadd.f32 %v3676, %v5156
        %v5158 = vpop.f32.mrf.mxu0
        %5159 = vmatprep.mubr.f32.mxu0 %v4848
        %5160 = vmatmul.mubr.f32.gmra.mxu0 %v4847
        %v5161 = vpop.f32.mrf.mxu0
        %v5162 = vadd.f32 %v3676, %v5161
        %v5163 = vpop.f32.mrf.mxu0
        %5164 = vmatprep.mubr.f32.mxu0 %v4857
        %5165 = vmatmul.mubr.f32.gmra.mxu0 %v4856
        %v5166 = vpop.f32.mrf.mxu0
        %v5167 = vadd.f32 %v3676, %v5166
        %v5168 = vpop.f32.mrf.mxu0
        %5169 = vmatprep.mubr.f32.mxu0 %v4866
        %5170 = vmatmul.mubr.f32.gmra.mxu0 %v4865
        %v5171 = vpop.f32.mrf.mxu0
        %v5172 = vadd.f32 %v3676, %v5171
        %v5173 = vpop.f32.mrf.mxu0
        %5174 = vmatprep.mubr.f32.mxu0 %v4875
        %5175 = vmatmul.mubr.f32.gmra.mxu0 %v4874
        %v5176 = vpop.f32.mrf.mxu0
        %v5177 = vadd.f32 %v3676, %v5176
        %v5178 = vpop.f32.mrf.mxu0
        %5179 = vmatprep.mubr.f32.mxu0 %v4884
        %5180 = vmatmul.mubr.f32.gmra.mxu0 %v4883
        %v5181 = vpop.f32.mrf.mxu0
        %v5182 = vadd.f32 %v3676, %v5181
        %v5183 = vpop.f32.mrf.mxu0
        %5184 = vmatprep.mubr.f32.mxu0 %v4893
        %5185 = vmatmul.mubr.f32.gmra.mxu0 %v4892
        %v5186 = vpop.f32.mrf.mxu0
        %v5187 = vadd.f32 %v3676, %v5186
        %v5188 = vpop.f32.mrf.mxu0
        %5189 = vdwg.mxu0
        %5190 = vmatprep.subr.mxu0 0.0
        %5191 = vmatpush1.msra.mxu0 %v4948
        %5192 = vmatprep.subr.mxu0 0.0
        %5193 = vmatpush1.msra.mxu0 %v4947
        %5194 = vmatprep.subr.mxu0 0.0
        %5195 = vmatpush1.msra.mxu0 %v4946
        %5196 = vmatprep.subr.mxu0 0.0
        %5197 = vmatpush1.msra.mxu0 %v4945
        %5198 = vmatprep.subr.mxu0 0.0
        %5199 = vmatpush1.msra.mxu0 %v4944
        %5200 = vmatprep.subr.mxu0 0.0
        %5201 = vmatpush1.msra.mxu0 %v4943
        %5202 = vmatprep.subr.mxu0 0.0
        %5203 = vmatpush1.msra.mxu0 %v4942
        %5204 = vmatprep.subr.mxu0 0.0
        %5205 = vmatpush1.msra.mxu0 %v4941
        %5206 = vmatprep.subr.mxu0 0.0
        %5207 = vmatpush1.msra.mxu0 %v4940
        %5208 = vmatprep.subr.mxu0 0.0
        %5209 = vmatpush1.msra.mxu0 %v4939
        %5210 = vmatprep.subr.mxu0 0.0
        %5211 = vmatpush1.msra.mxu0 %v4938
        %5212 = vmatprep.subr.mxu0 0.0
        %5213 = vmatpush1.msra.mxu0 %v4937
        %5214 = vmatprep.subr.mxu0 0.0
        %5215 = vmatpush1.msra.mxu0 %v4936
        %5216 = vmatprep.subr.mxu0 0.0
        %5217 = vmatpush1.msra.mxu0 %v4935
        %5218 = vmatprep.subr.mxu0 0.0
        %5219 = vmatpush1.msra.mxu0 %v4934
        %5220 = vmatprep.subr.mxu0 0.0
        %5221 = vmatpush1.msra.mxu0 %v4933
        %5222 = vmatprep.subr.mxu0 0.0
        %5223 = vmatpush2.msra.mxu0 %v4964
        %5224 = vmatprep.subr.mxu0 0.0
        %5225 = vmatpush2.msra.mxu0 %v4963
        %5226 = vmatprep.subr.mxu0 0.0
        %5227 = vmatpush2.msra.mxu0 %v4962
        %5228 = vmatprep.subr.mxu0 0.0
        %5229 = vmatpush2.msra.mxu0 %v4961
        %5230 = vmatprep.subr.mxu0 0.0
        %5231 = vmatpush2.msra.mxu0 %v4960
        %5232 = vmatprep.subr.mxu0 0.0
        %5233 = vmatpush2.msra.mxu0 %v4959
        %5234 = vmatprep.subr.mxu0 0.0
        %5235 = vmatpush2.msra.mxu0 %v4958
        %5236 = vmatprep.subr.mxu0 0.0
        %5237 = vmatpush2.msra.mxu0 %v4957
        %5238 = vmatprep.subr.mxu0 0.0
        %5239 = vmatpush2.msra.mxu0 %v4956
        %5240 = vmatprep.subr.mxu0 0.0
        %5241 = vmatpush2.msra.mxu0 %v4955
        %5242 = vmatprep.subr.mxu0 0.0
        %5243 = vmatpush2.msra.mxu0 %v4954
        %5244 = vmatprep.subr.mxu0 0.0
        %5245 = vmatpush2.msra.mxu0 %v4953
        %5246 = vmatprep.subr.mxu0 0.0
        %5247 = vmatpush2.msra.mxu0 %v4952
        %5248 = vmatprep.subr.mxu0 0.0
        %5249 = vmatpush2.msra.mxu0 %v4951
        %5250 = vmatprep.subr.mxu0 0.0
        %5251 = vmatpush2.msra.mxu0 %v4950
        %5252 = vmatprep.subr.mxu0 0.0
        %5253 = vmatpush2.msra.mxu0 %v4949
        %5254 = vmatprep.mubr.f32.mxu0 %v4760
        %5255 = vmatmul.mubr.f32.gmra.mxu0 %v4759
        %v5256 = vpop.f32.mrf.mxu0
        %v5257 = vadd.f32 %v5112, %v5256
        %v5258 = vpop.f32.mrf.mxu0
        %5259 = vmatprep.mubr.f32.mxu0 %v4769
        %5260 = vmatmul.mubr.f32.gmra.mxu0 %v4768
        %v5261 = vpop.f32.mrf.mxu0
        %v5262 = vadd.f32 %v5117, %v5261
        %v5263 = vpop.f32.mrf.mxu0
        %5264 = vmatprep.mubr.f32.mxu0 %v4778
        %5265 = vmatmul.mubr.f32.gmra.mxu0 %v4777
        %v5266 = vpop.f32.mrf.mxu0
        %v5267 = vadd.f32 %v5122, %v5266
        %v5268 = vpop.f32.mrf.mxu0
        %5269 = vmatprep.mubr.f32.mxu0 %v4787
        %5270 = vmatmul.mubr.f32.gmra.mxu0 %v4786
        %v5271 = vpop.f32.mrf.mxu0
        %v5272 = vadd.f32 %v5127, %v5271
        %v5273 = vpop.f32.mrf.mxu0
        %5274 = vmatprep.mubr.f32.mxu0 %v4796
        %5275 = vmatmul.mubr.f32.gmra.mxu0 %v4795
        %v5276 = vpop.f32.mrf.mxu0
        %v5277 = vadd.f32 %v5132, %v5276
        %v5278 = vpop.f32.mrf.mxu0
        %5279 = vmatprep.mubr.f32.mxu0 %v4805
        %5280 = vmatmul.mubr.f32.gmra.mxu0 %v4804
        %v5281 = vpop.f32.mrf.mxu0
        %v5282 = vadd.f32 %v5137, %v5281
        %v5283 = vpop.f32.mrf.mxu0
        %5284 = vmatprep.mubr.f32.mxu0 %v4814
        %5285 = vmatmul.mubr.f32.gmra.mxu0 %v4813
        %v5286 = vpop.f32.mrf.mxu0
        %v5287 = vadd.f32 %v5142, %v5286
        %v5288 = vpop.f32.mrf.mxu0
        %5289 = vmatprep.mubr.f32.mxu0 %v4823
        %5290 = vmatmul.mubr.f32.gmra.mxu0 %v4822
        %v5291 = vpop.f32.mrf.mxu0
        %v5292 = vadd.f32 %v5147, %v5291
        %v5293 = vpop.f32.mrf.mxu0
        %5294 = vmatprep.mubr.f32.mxu0 %v4832
        %5295 = vmatmul.mubr.f32.gmra.mxu0 %v4831
        %v5296 = vpop.f32.mrf.mxu0
        %v5297 = vadd.f32 %v5152, %v5296
        %v5298 = vpop.f32.mrf.mxu0
        %5299 = vmatprep.mubr.f32.mxu0 %v4841
        %5300 = vmatmul.mubr.f32.gmra.mxu0 %v4840
        %v5301 = vpop.f32.mrf.mxu0
        %v5302 = vadd.f32 %v5157, %v5301
        %v5303 = vpop.f32.mrf.mxu0
        %5304 = vmatprep.mubr.f32.mxu0 %v4850
        %5305 = vmatmul.mubr.f32.gmra.mxu0 %v4849
        %v5306 = vpop.f32.mrf.mxu0
        %v5307 = vadd.f32 %v5162, %v5306
        %v5308 = vpop.f32.mrf.mxu0
        %5309 = vmatprep.mubr.f32.mxu0 %v4859
        %5310 = vmatmul.mubr.f32.gmra.mxu0 %v4858
        %v5311 = vpop.f32.mrf.mxu0
        %v5312 = vadd.f32 %v5167, %v5311
        %v5313 = vpop.f32.mrf.mxu0
        %5314 = vmatprep.mubr.f32.mxu0 %v4868
        %5315 = vmatmul.mubr.f32.gmra.mxu0 %v4867
        %v5316 = vpop.f32.mrf.mxu0
        %v5317 = vadd.f32 %v5172, %v5316
        %v5318 = vpop.f32.mrf.mxu0
        %5319 = vmatprep.mubr.f32.mxu0 %v4877
        %5320 = vmatmul.mubr.f32.gmra.mxu0 %v4876
        %v5321 = vpop.f32.mrf.mxu0
        %v5322 = vadd.f32 %v5177, %v5321
        %v5323 = vpop.f32.mrf.mxu0
        %5324 = vmatprep.mubr.f32.mxu0 %v4886
        %5325 = vmatmul.mubr.f32.gmra.mxu0 %v4885
        %v5326 = vpop.f32.mrf.mxu0
        %v5327 = vadd.f32 %v5182, %v5326
        %v5328 = vpop.f32.mrf.mxu0
        %5329 = vmatprep.mubr.f32.mxu0 %v4895
        %5330 = vmatmul.mubr.f32.gmra.mxu0 %v4894
        %v5331 = vpop.f32.mrf.mxu0
        %v5332 = vadd.f32 %v5187, %v5331
        %v5333 = vpop.f32.mrf.mxu0
        %5334 = vdwg.mxu0
        %5335 = vmatprep.subr.mxu0 0.0
        %5336 = vmatpush1.msra.mxu0 %v4980
        %5337 = vmatprep.subr.mxu0 0.0
        %5338 = vmatpush1.msra.mxu0 %v4979
        %5339 = vmatprep.subr.mxu0 0.0
        %5340 = vmatpush1.msra.mxu0 %v4978
        %5341 = vmatprep.subr.mxu0 0.0
        %5342 = vmatpush1.msra.mxu0 %v4977
        %5343 = vmatprep.subr.mxu0 0.0
        %5344 = vmatpush1.msra.mxu0 %v4976
        %5345 = vmatprep.subr.mxu0 0.0
        %5346 = vmatpush1.msra.mxu0 %v4975
        %5347 = vmatprep.subr.mxu0 0.0
        %5348 = vmatpush1.msra.mxu0 %v4974
        %5349 = vmatprep.subr.mxu0 0.0
        %5350 = vmatpush1.msra.mxu0 %v4973
        %5351 = vmatprep.subr.mxu0 0.0
        %5352 = vmatpush1.msra.mxu0 %v4972
        %5353 = vmatprep.subr.mxu0 0.0
        %5354 = vmatpush1.msra.mxu0 %v4971
        %5355 = vmatprep.subr.mxu0 0.0
        %5356 = vmatpush1.msra.mxu0 %v4970
        %5357 = vmatprep.subr.mxu0 0.0
        %5358 = vmatpush1.msra.mxu0 %v4969
        %5359 = vmatprep.subr.mxu0 0.0
        %5360 = vmatpush1.msra.mxu0 %v4968
        %5361 = vmatprep.subr.mxu0 0.0
        %5362 = vmatpush1.msra.mxu0 %v4967
        %5363 = vmatprep.subr.mxu0 0.0
        %5364 = vmatpush1.msra.mxu0 %v4966
        %5365 = vmatprep.subr.mxu0 0.0
        %5366 = vmatpush1.msra.mxu0 %v4965
        %5367 = vmatprep.subr.mxu0 0.0
        %5368 = vmatpush2.msra.mxu0 %v4996
        %5369 = vmatprep.subr.mxu0 0.0
        %5370 = vmatpush2.msra.mxu0 %v4995
        %5371 = vmatprep.subr.mxu0 0.0
        %5372 = vmatpush2.msra.mxu0 %v4994
        %5373 = vmatprep.subr.mxu0 0.0
        %5374 = vmatpush2.msra.mxu0 %v4993
        %5375 = vmatprep.subr.mxu0 0.0
        %5376 = vmatpush2.msra.mxu0 %v4992
        %5377 = vmatprep.subr.mxu0 0.0
        %5378 = vmatpush2.msra.mxu0 %v4991
        %5379 = vmatprep.subr.mxu0 0.0
        %5380 = vmatpush2.msra.mxu0 %v4990
        %5381 = vmatprep.subr.mxu0 0.0
        %5382 = vmatpush2.msra.mxu0 %v4989
        %5383 = vmatprep.subr.mxu0 0.0
        %5384 = vmatpush2.msra.mxu0 %v4988
        %5385 = vmatprep.subr.mxu0 0.0
        %5386 = vmatpush2.msra.mxu0 %v4987
        %5387 = vmatprep.subr.mxu0 0.0
        %5388 = vmatpush2.msra.mxu0 %v4986
        %5389 = vmatprep.subr.mxu0 0.0
        %5390 = vmatpush2.msra.mxu0 %v4985
        %5391 = vmatprep.subr.mxu0 0.0
        %5392 = vmatpush2.msra.mxu0 %v4984
        %5393 = vmatprep.subr.mxu0 0.0
        %5394 = vmatpush2.msra.mxu0 %v4983
        %5395 = vmatprep.subr.mxu0 0.0
        %5396 = vmatpush2.msra.mxu0 %v4982
        %5397 = vmatprep.subr.mxu0 0.0
        %5398 = vmatpush2.msra.mxu0 %v4981
        %5399 = vmatprep.mubr.f32.mxu0 %v4762
        %5400 = vmatmul.mubr.f32.gmra.mxu0 %v4761
        %v5401 = vpop.f32.mrf.mxu0
        %v5402 = vadd.f32 %v5257, %v5401
        %v5403 = vpop.f32.mrf.mxu0
        %5404 = vmatprep.mubr.f32.mxu0 %v4771
        %5405 = vmatmul.mubr.f32.gmra.mxu0 %v4770
        %v5406 = vpop.f32.mrf.mxu0
        %v5407 = vadd.f32 %v5262, %v5406
        %v5408 = vpop.f32.mrf.mxu0
        %5409 = vmatprep.mubr.f32.mxu0 %v4780
        %5410 = vmatmul.mubr.f32.gmra.mxu0 %v4779
        %v5411 = vpop.f32.mrf.mxu0
        %v5412 = vadd.f32 %v5267, %v5411
        %v5413 = vpop.f32.mrf.mxu0
        %5414 = vmatprep.mubr.f32.mxu0 %v4789
        %5415 = vmatmul.mubr.f32.gmra.mxu0 %v4788
        %v5416 = vpop.f32.mrf.mxu0
        %v5417 = vadd.f32 %v5272, %v5416
        %v5418 = vpop.f32.mrf.mxu0
        %5419 = vmatprep.mubr.f32.mxu0 %v4798
        %5420 = vmatmul.mubr.f32.gmra.mxu0 %v4797
        %v5421 = vpop.f32.mrf.mxu0
        %v5422 = vadd.f32 %v5277, %v5421
        %v5423 = vpop.f32.mrf.mxu0
        %5424 = vmatprep.mubr.f32.mxu0 %v4807
        %5425 = vmatmul.mubr.f32.gmra.mxu0 %v4806
        %v5426 = vpop.f32.mrf.mxu0
        %v5427 = vadd.f32 %v5282, %v5426
        %v5428 = vpop.f32.mrf.mxu0
        %5429 = vmatprep.mubr.f32.mxu0 %v4816
        %5430 = vmatmul.mubr.f32.gmra.mxu0 %v4815
        %v5431 = vpop.f32.mrf.mxu0
        %v5432 = vadd.f32 %v5287, %v5431
        %v5433 = vpop.f32.mrf.mxu0
        %5434 = vmatprep.mubr.f32.mxu0 %v4825
        %5435 = vmatmul.mubr.f32.gmra.mxu0 %v4824
        %v5436 = vpop.f32.mrf.mxu0
        %v5437 = vadd.f32 %v5292, %v5436
        %v5438 = vpop.f32.mrf.mxu0
        %5439 = vmatprep.mubr.f32.mxu0 %v4834
        %5440 = vmatmul.mubr.f32.gmra.mxu0 %v4833
        %v5441 = vpop.f32.mrf.mxu0
        %v5442 = vadd.f32 %v5297, %v5441
        %v5443 = vpop.f32.mrf.mxu0
        %5444 = vmatprep.mubr.f32.mxu0 %v4843
        %5445 = vmatmul.mubr.f32.gmra.mxu0 %v4842
        %v5446 = vpop.f32.mrf.mxu0
        %v5447 = vadd.f32 %v5302, %v5446
        %v5448 = vpop.f32.mrf.mxu0
        %5449 = vmatprep.mubr.f32.mxu0 %v4852
        %5450 = vmatmul.mubr.f32.gmra.mxu0 %v4851
        %v5451 = vpop.f32.mrf.mxu0
        %v5452 = vadd.f32 %v5307, %v5451
        %v5453 = vpop.f32.mrf.mxu0
        %5454 = vmatprep.mubr.f32.mxu0 %v4861
        %5455 = vmatmul.mubr.f32.gmra.mxu0 %v4860
        %v5456 = vpop.f32.mrf.mxu0
        %v5457 = vadd.f32 %v5312, %v5456
        %v5458 = vpop.f32.mrf.mxu0
        %5459 = vmatprep.mubr.f32.mxu0 %v4870
        %5460 = vmatmul.mubr.f32.gmra.mxu0 %v4869
        %v5461 = vpop.f32.mrf.mxu0
        %v5462 = vadd.f32 %v5317, %v5461
        %v5463 = vpop.f32.mrf.mxu0
        %5464 = vmatprep.mubr.f32.mxu0 %v4879
        %5465 = vmatmul.mubr.f32.gmra.mxu0 %v4878
        %v5466 = vpop.f32.mrf.mxu0
        %v5467 = vadd.f32 %v5322, %v5466
        %v5468 = vpop.f32.mrf.mxu0
        %5469 = vmatprep.mubr.f32.mxu0 %v4888
        %5470 = vmatmul.mubr.f32.gmra.mxu0 %v4887
        %v5471 = vpop.f32.mrf.mxu0
        %v5472 = vadd.f32 %v5327, %v5471
        %v5473 = vpop.f32.mrf.mxu0
        %5474 = vmatprep.mubr.f32.mxu0 %v4897
        %5475 = vmatmul.mubr.f32.gmra.mxu0 %v4896
        %v5476 = vpop.f32.mrf.mxu0
        %v5477 = vadd.f32 %v5332, %v5476
        %v5478 = vpop.f32.mrf.mxu0
        %5479 = vdwg.mxu0
        %5480 = vmatprep.subr.mxu0 0.0
        %5481 = vmatpush1.msra.mxu0 %v5012
        %5482 = vmatprep.subr.mxu0 0.0
        %5483 = vmatpush1.msra.mxu0 %v5011
        %5484 = vmatprep.subr.mxu0 0.0
        %5485 = vmatpush1.msra.mxu0 %v5010
        %5486 = vmatprep.subr.mxu0 0.0
        %5487 = vmatpush1.msra.mxu0 %v5009
        %5488 = vmatprep.subr.mxu0 0.0
        %5489 = vmatpush1.msra.mxu0 %v5008
        %5490 = vmatprep.subr.mxu0 0.0
        %5491 = vmatpush1.msra.mxu0 %v5007
        %5492 = vmatprep.subr.mxu0 0.0
        %5493 = vmatpush1.msra.mxu0 %v5006
        %5494 = vmatprep.subr.mxu0 0.0
        %5495 = vmatpush1.msra.mxu0 %v5005
        %5496 = vmatprep.subr.mxu0 0.0
        %5497 = vmatpush1.msra.mxu0 %v5004
        %5498 = vmatprep.subr.mxu0 0.0
        %5499 = vmatpush1.msra.mxu0 %v5003
        %5500 = vmatprep.subr.mxu0 0.0
        %5501 = vmatpush1.msra.mxu0 %v5002
        %5502 = vmatprep.subr.mxu0 0.0
        %5503 = vmatpush1.msra.mxu0 %v5001
        %5504 = vmatprep.subr.mxu0 0.0
        %5505 = vmatpush1.msra.mxu0 %v5000
        %5506 = vmatprep.subr.mxu0 0.0
        %5507 = vmatpush1.msra.mxu0 %v4999
        %5508 = vmatprep.subr.mxu0 0.0
        %5509 = vmatpush1.msra.mxu0 %v4998
        %5510 = vmatprep.subr.mxu0 0.0
        %5511 = vmatpush1.msra.mxu0 %v4997
        %5512 = vmatprep.subr.mxu0 0.0
        %5513 = vmatpush2.msra.mxu0 %v5028
        %5514 = vmatprep.subr.mxu0 0.0
        %5515 = vmatpush2.msra.mxu0 %v5027
        %5516 = vmatprep.subr.mxu0 0.0
        %5517 = vmatpush2.msra.mxu0 %v5026
        %5518 = vmatprep.subr.mxu0 0.0
        %5519 = vmatpush2.msra.mxu0 %v5025
        %5520 = vmatprep.subr.mxu0 0.0
        %5521 = vmatpush2.msra.mxu0 %v5024
        %5522 = vmatprep.subr.mxu0 0.0
        %5523 = vmatpush2.msra.mxu0 %v5023
        %5524 = vmatprep.subr.mxu0 0.0
        %5525 = vmatpush2.msra.mxu0 %v5022
        %5526 = vmatprep.subr.mxu0 0.0
        %5527 = vmatpush2.msra.mxu0 %v5021
        %5528 = vmatprep.subr.mxu0 0.0
        %5529 = vmatpush2.msra.mxu0 %v5020
        %5530 = vmatprep.subr.mxu0 0.0
        %5531 = vmatpush2.msra.mxu0 %v5019
        %5532 = vmatprep.subr.mxu0 0.0
        %5533 = vmatpush2.msra.mxu0 %v5018
        %5534 = vmatprep.subr.mxu0 0.0
        %5535 = vmatpush2.msra.mxu0 %v5017
        %5536 = vmatprep.subr.mxu0 0.0
        %5537 = vmatpush2.msra.mxu0 %v5016
        %5538 = vmatprep.subr.mxu0 0.0
        %5539 = vmatpush2.msra.mxu0 %v5015
        %5540 = vmatprep.subr.mxu0 0.0
        %5541 = vmatpush2.msra.mxu0 %v5014
        %5542 = vmatprep.subr.mxu0 0.0
        %5543 = vmatpush2.msra.mxu0 %v5013
        %5544 = vmatprep.mubr.f32.mxu0 %v4764
        %5545 = vmatmul.mubr.f32.gmra.mxu0 %v4763
        %v5546 = vpop.f32.mrf.mxu0
        %v5547 = vadd.f32 %v5402, %v5546
        %v5548 = vpop.f32.mrf.mxu0
        %5549 = vmatprep.mubr.f32.mxu0 %v4773
        %5550 = vmatmul.mubr.f32.gmra.mxu0 %v4772
        %v5551 = vpop.f32.mrf.mxu0
        %v5552 = vadd.f32 %v5407, %v5551
        %v5553 = vpop.f32.mrf.mxu0
        %5554 = vmatprep.mubr.f32.mxu0 %v4782
        %5555 = vmatmul.mubr.f32.gmra.mxu0 %v4781
        %v5556 = vpop.f32.mrf.mxu0
        %v5557 = vadd.f32 %v5412, %v5556
        %v5558 = vpop.f32.mrf.mxu0
        %5559 = vmatprep.mubr.f32.mxu0 %v4791
        %5560 = vmatmul.mubr.f32.gmra.mxu0 %v4790
        %v5561 = vpop.f32.mrf.mxu0
        %v5562 = vadd.f32 %v5417, %v5561
        %v5563 = vpop.f32.mrf.mxu0
        %5564 = vmatprep.mubr.f32.mxu0 %v4800
        %5565 = vmatmul.mubr.f32.gmra.mxu0 %v4799
        %v5566 = vpop.f32.mrf.mxu0
        %v5567 = vadd.f32 %v5422, %v5566
        %v5568 = vpop.f32.mrf.mxu0
        %5569 = vmatprep.mubr.f32.mxu0 %v4809
        %5570 = vmatmul.mubr.f32.gmra.mxu0 %v4808
        %v5571 = vpop.f32.mrf.mxu0
        %v5572 = vadd.f32 %v5427, %v5571
        %v5573 = vpop.f32.mrf.mxu0
        %5574 = vmatprep.mubr.f32.mxu0 %v4818
        %5575 = vmatmul.mubr.f32.gmra.mxu0 %v4817
        %v5576 = vpop.f32.mrf.mxu0
        %v5577 = vadd.f32 %v5432, %v5576
        %v5578 = vpop.f32.mrf.mxu0
        %5579 = vmatprep.mubr.f32.mxu0 %v4827
        %5580 = vmatmul.mubr.f32.gmra.mxu0 %v4826
        %v5581 = vpop.f32.mrf.mxu0
        %v5582 = vadd.f32 %v5437, %v5581
        %v5583 = vpop.f32.mrf.mxu0
        %5584 = vmatprep.mubr.f32.mxu0 %v4836
        %5585 = vmatmul.mubr.f32.gmra.mxu0 %v4835
        %v5586 = vpop.f32.mrf.mxu0
        %v5587 = vadd.f32 %v5442, %v5586
        %v5588 = vpop.f32.mrf.mxu0
        %5589 = vmatprep.mubr.f32.mxu0 %v4845
        %5590 = vmatmul.mubr.f32.gmra.mxu0 %v4844
        %v5591 = vpop.f32.mrf.mxu0
        %v5592 = vadd.f32 %v5447, %v5591
        %v5593 = vpop.f32.mrf.mxu0
        %5594 = vmatprep.mubr.f32.mxu0 %v4854
        %5595 = vmatmul.mubr.f32.gmra.mxu0 %v4853
        %v5596 = vpop.f32.mrf.mxu0
        %v5597 = vadd.f32 %v5452, %v5596
        %v5598 = vpop.f32.mrf.mxu0
        %5599 = vmatprep.mubr.f32.mxu0 %v4863
        %5600 = vmatmul.mubr.f32.gmra.mxu0 %v4862
        %v5601 = vpop.f32.mrf.mxu0
        %v5602 = vadd.f32 %v5457, %v5601
        %v5603 = vpop.f32.mrf.mxu0
        %5604 = vmatprep.mubr.f32.mxu0 %v4872
        %5605 = vmatmul.mubr.f32.gmra.mxu0 %v4871
        %v5606 = vpop.f32.mrf.mxu0
        %v5607 = vadd.f32 %v5462, %v5606
        %v5608 = vpop.f32.mrf.mxu0
        %5609 = vmatprep.mubr.f32.mxu0 %v4881
        %5610 = vmatmul.mubr.f32.gmra.mxu0 %v4880
        %v5611 = vpop.f32.mrf.mxu0
        %v5612 = vadd.f32 %v5467, %v5611
        %v5613 = vpop.f32.mrf.mxu0
        %5614 = vmatprep.mubr.f32.mxu0 %v4890
        %5615 = vmatmul.mubr.f32.gmra.mxu0 %v4889
        %v5616 = vpop.f32.mrf.mxu0
        %v5617 = vadd.f32 %v5472, %v5616
        %v5618 = vpop.f32.mrf.mxu0
        %5619 = vmatprep.mubr.f32.mxu0 %v4899
        %5620 = vmatmul.mubr.f32.gmra.mxu0 %v4898
        %v5621 = vpop.f32.mrf.mxu0
        %v5622 = vadd.f32 %v5477, %v5621
        %v5623 = vpop.f32.mrf.mxu0
        %5624 = vdwg.mxu0
        %5625 = vmatprep.subr.mxu0 0.0
        %5626 = vmatpush1.msra.mxu0 %v5044
        %5627 = vmatprep.subr.mxu0 0.0
        %5628 = vmatpush1.msra.mxu0 %v5043
        %5629 = vmatprep.subr.mxu0 0.0
        %5630 = vmatpush1.msra.mxu0 %v5042
        %5631 = vmatprep.subr.mxu0 0.0
        %5632 = vmatpush1.msra.mxu0 %v5041
        %5633 = vmatprep.subr.mxu0 0.0
        %5634 = vmatpush1.msra.mxu0 %v5040
        %5635 = vmatprep.subr.mxu0 0.0
        %5636 = vmatpush1.msra.mxu0 %v5039
        %5637 = vmatprep.subr.mxu0 0.0
        %5638 = vmatpush1.msra.mxu0 %v5038
        %5639 = vmatprep.subr.mxu0 0.0
        %5640 = vmatpush1.msra.mxu0 %v5037
        %5641 = vmatprep.subr.mxu0 0.0
        %5642 = vmatpush1.msra.mxu0 %v5036
        %5643 = vmatprep.subr.mxu0 0.0
        %5644 = vmatpush1.msra.mxu0 %v5035
        %5645 = vmatprep.subr.mxu0 0.0
        %5646 = vmatpush1.msra.mxu0 %v5034
        %5647 = vmatprep.subr.mxu0 0.0
        %5648 = vmatpush1.msra.mxu0 %v5033
        %5649 = vmatprep.subr.mxu0 0.0
        %5650 = vmatpush1.msra.mxu0 %v5032
        %5651 = vmatprep.subr.mxu0 0.0
        %5652 = vmatpush1.msra.mxu0 %v5031
        %5653 = vmatprep.subr.mxu0 0.0
        %5654 = vmatpush1.msra.mxu0 %v5030
        %5655 = vmatprep.subr.mxu0 0.0
        %5656 = vmatpush1.msra.mxu0 %v5029
        %5657 = vmatprep.subr.mxu0 0.0
        %5658 = vmatpush2.msra.mxu0 0.0
        %5659 = vmatprep.subr.mxu0 0.0
        %5660 = vmatpush2.msra.mxu0 0.0
        %5661 = vmatprep.subr.mxu0 0.0
        %5662 = vmatpush2.msra.mxu0 0.0
        %5663 = vmatprep.subr.mxu0 0.0
        %5664 = vmatpush2.msra.mxu0 0.0
        %5665 = vmatprep.subr.mxu0 0.0
        %5666 = vmatpush2.msra.mxu0 0.0
        %5667 = vmatprep.subr.mxu0 0.0
        %5668 = vmatpush2.msra.mxu0 0.0
        %5669 = vmatprep.subr.mxu0 0.0
        %5670 = vmatpush2.msra.mxu0 0.0
        %5671 = vmatprep.subr.mxu0 0.0
        %5672 = vmatpush2.msra.mxu0 0.0
        %5673 = vmatprep.subr.mxu0 0.0
        %5674 = vmatpush2.msra.mxu0 0.0
        %5675 = vmatprep.subr.mxu0 0.0
        %5676 = vmatpush2.msra.mxu0 0.0
        %5677 = vmatprep.subr.mxu0 0.0
        %5678 = vmatpush2.msra.mxu0 0.0
        %5679 = vmatprep.subr.mxu0 0.0
        %5680 = vmatpush2.msra.mxu0 0.0
        %5681 = vmatprep.subr.mxu0 0.0
        %5682 = vmatpush2.msra.mxu0 0.0
        %5683 = vmatprep.subr.mxu0 0.0
        %5684 = vmatpush2.msra.mxu0 0.0
        %5685 = vmatprep.subr.mxu0 0.0
        %5686 = vmatpush2.msra.mxu0 0.0
        %5687 = vmatprep.subr.mxu0 0.0
        %5688 = vmatpush2.msra.mxu0 0.0
        %5689 = vmatprep.mubr.f32.mxu0 0.0
        %5690 = vmatmul.mubr.f32.gmra.mxu0 %v4765
        %v5691 = vpop.f32.mrf.mxu0
        %v5692 = vadd.f32 %v5547, %v5691
        %v5693 = vpop.f32.mrf.mxu0
        %5694 = vmatprep.mubr.f32.mxu0 0.0
        %5695 = vmatmul.mubr.f32.gmra.mxu0 %v4774
        %v5696 = vpop.f32.mrf.mxu0
        %v5697 = vadd.f32 %v5552, %v5696
        %v5698 = vpop.f32.mrf.mxu0
        %5699 = vmatprep.mubr.f32.mxu0 0.0
        %5700 = vmatmul.mubr.f32.gmra.mxu0 %v4783
        %v5701 = vpop.f32.mrf.mxu0
        %v5702 = vadd.f32 %v5557, %v5701
        %v5703 = vpop.f32.mrf.mxu0
        %5704 = vmatprep.mubr.f32.mxu0 0.0
        %5705 = vmatmul.mubr.f32.gmra.mxu0 %v4792
        %v5706 = vpop.f32.mrf.mxu0
        %v5707 = vadd.f32 %v5562, %v5706
        %v5708 = vpop.f32.mrf.mxu0
        %5709 = vmatprep.mubr.f32.mxu0 0.0
        %5710 = vmatmul.mubr.f32.gmra.mxu0 %v4801
        %v5711 = vpop.f32.mrf.mxu0
        %v5712 = vadd.f32 %v5567, %v5711
        %v5713 = vpop.f32.mrf.mxu0
        %5714 = vmatprep.mubr.f32.mxu0 0.0
        %5715 = vmatmul.mubr.f32.gmra.mxu0 %v4810
        %v5716 = vpop.f32.mrf.mxu0
        %v5717 = vadd.f32 %v5572, %v5716
        %v5718 = vpop.f32.mrf.mxu0
        %5719 = vmatprep.mubr.f32.mxu0 0.0
        %5720 = vmatmul.mubr.f32.gmra.mxu0 %v4819
        %v5721 = vpop.f32.mrf.mxu0
        %v5722 = vadd.f32 %v5577, %v5721
        %v5723 = vpop.f32.mrf.mxu0
        %5724 = vmatprep.mubr.f32.mxu0 0.0
        %5725 = vmatmul.mubr.f32.gmra.mxu0 %v4828
        %v5726 = vpop.f32.mrf.mxu0
        %v5727 = vadd.f32 %v5582, %v5726
        %v5728 = vpop.f32.mrf.mxu0
        %5729 = vmatprep.mubr.f32.mxu0 0.0
        %5730 = vmatmul.mubr.f32.gmra.mxu0 %v4837
        %v5731 = vpop.f32.mrf.mxu0
        %v5732 = vadd.f32 %v5587, %v5731
        %v5733 = vpop.f32.mrf.mxu0
        %5734 = vmatprep.mubr.f32.mxu0 0.0
        %5735 = vmatmul.mubr.f32.gmra.mxu0 %v4846
        %v5736 = vpop.f32.mrf.mxu0
        %v5737 = vadd.f32 %v5592, %v5736
        %v5738 = vpop.f32.mrf.mxu0
        %5739 = vmatprep.mubr.f32.mxu0 0.0
        %5740 = vmatmul.mubr.f32.gmra.mxu0 %v4855
        %v5741 = vpop.f32.mrf.mxu0
        %v5742 = vadd.f32 %v5597, %v5741
        %v5743 = vpop.f32.mrf.mxu0
        %5744 = vmatprep.mubr.f32.mxu0 0.0
        %5745 = vmatmul.mubr.f32.gmra.mxu0 %v4864
        %v5746 = vpop.f32.mrf.mxu0
        %v5747 = vadd.f32 %v5602, %v5746
        %v5748 = vpop.f32.mrf.mxu0
        %5749 = vmatprep.mubr.f32.mxu0 0.0
        %5750 = vmatmul.mubr.f32.gmra.mxu0 %v4873
        %v5751 = vpop.f32.mrf.mxu0
        %v5752 = vadd.f32 %v5607, %v5751
        %v5753 = vpop.f32.mrf.mxu0
        %5754 = vmatprep.mubr.f32.mxu0 0.0
        %5755 = vmatmul.mubr.f32.gmra.mxu0 %v4882
        %v5756 = vpop.f32.mrf.mxu0
        %v5757 = vadd.f32 %v5612, %v5756
        %v5758 = vpop.f32.mrf.mxu0
        %5759 = vmatprep.mubr.f32.mxu0 0.0
        %5760 = vmatmul.mubr.f32.gmra.mxu0 %v4891
        %v5761 = vpop.f32.mrf.mxu0
        %v5762 = vadd.f32 %v5617, %v5761
        %v5763 = vpop.f32.mrf.mxu0
        %5764 = vmatprep.mubr.f32.mxu0 0.0
        %5765 = vmatmul.mubr.f32.gmra.mxu0 %v4900
        %v5766 = vpop.f32.mrf.mxu0
        %v5767 = vadd.f32 %v5622, %v5766
        %v5768 = vpop.f32.mrf.mxu0
        %5769 = vdwg.mxu0
        %s5770 = scalar_lea.vmem %s237, 128 [#allocation5]
        %v5771 = vld [vmem:[%s5770] sm:$0xff]
        %v5772 = vld [vmem:[%s5770 + $0x8] sm:$0xff]
        %v5773 = vld [vmem:[%s5770 + $0x10] sm:$0xff]
        %v5774 = vld [vmem:[%s5770 + $0x18] sm:$0xff]
        %v5775 = vld [vmem:[%s5770 + $0x20] sm:$0xff]
        %v5776 = vld [vmem:[%s5770 + $0x28] sm:$0xff]
        %v5777 = vld [vmem:[%s5770 + $0x30] sm:$0xff]
        %v5778 = vld [vmem:[%s5770 + $0x38] sm:$0xff]
        %v5779 = vld [vmem:[%s5770 + $0x40] sm:$0xff]
        %v5780 = vld [vmem:[%s5770 + $0x48] sm:$0xff]
        %v5781 = vld [vmem:[%s5770 + $0x50] sm:$0xff]
        %v5782 = vld [vmem:[%s5770 + $0x58] sm:$0xff]
        %v5783 = vld [vmem:[%s5770 + $0x60] sm:$0xff]
        %v5784 = vld [vmem:[%s5770 + $0x68] sm:$0xff]
        %v5785 = vld [vmem:[%s5770 + $0x70] sm:$0xff]
        %v5786 = vld [vmem:[%s5770 + $0x78] sm:$0xff]
        %v5787 = vadd.f32 %v5692, %v5771
        %v5788 = vadd.f32 %v5697, %v5772
        %v5789 = vadd.f32 %v5702, %v5773
        %v5790 = vadd.f32 %v5707, %v5774
        %v5791 = vadd.f32 %v5712, %v5775
        %v5792 = vadd.f32 %v5717, %v5776
        %v5793 = vadd.f32 %v5722, %v5777
        %v5794 = vadd.f32 %v5727, %v5778
        %v5795 = vadd.f32 %v5732, %v5779
        %v5796 = vadd.f32 %v5737, %v5780
        %v5797 = vadd.f32 %v5742, %v5781
        %v5798 = vadd.f32 %v5747, %v5782
        %v5799 = vadd.f32 %v5752, %v5783
        %v5800 = vadd.f32 %v5757, %v5784
        %v5801 = vadd.f32 %v5762, %v5785
        %v5802 = vadd.f32 %v5767, %v5786
        %v5803 = vmax.f32 %v5787, 0.0
        %v5804 = vmax.f32 %v5788, 0.0
        %v5805 = vmax.f32 %v5789, 0.0
        %v5806 = vmax.f32 %v5790, 0.0
        %v5807 = vmax.f32 %v5791, 0.0
        %v5808 = vmax.f32 %v5792, 0.0
        %v5809 = vmax.f32 %v5793, 0.0
        %v5810 = vmax.f32 %v5794, 0.0
        %v5811 = vmax.f32 %v5795, 0.0
        %v5812 = vmax.f32 %v5796, 0.0
        %v5813 = vmax.f32 %v5797, 0.0
        %v5814 = vmax.f32 %v5798, 0.0
        %v5815 = vmax.f32 %v5799, 0.0
        %v5816 = vmax.f32 %v5800, 0.0
        %v5817 = vmax.f32 %v5801, 0.0
        %v5818 = vmax.f32 %v5802, 0.0
        %s5819 = scalar_lea.vmem %s271, 128 [#allocation11]
        %5820 = vst [vmem:[%s5819] sm:$0xff] %v5803
        %5821 = vst [vmem:[%s5819 + $0x8] sm:$0xff] %v5804
        %5822 = vst [vmem:[%s5819 + $0x10] sm:$0xff] %v5805
        %5823 = vst [vmem:[%s5819 + $0x18] sm:$0xff] %v5806
        %5824 = vst [vmem:[%s5819 + $0x20] sm:$0xff] %v5807
        %5825 = vst [vmem:[%s5819 + $0x28] sm:$0xff] %v5808
        %5826 = vst [vmem:[%s5819 + $0x30] sm:$0xff] %v5809
        %5827 = vst [vmem:[%s5819 + $0x38] sm:$0xff] %v5810
        %5828 = vst [vmem:[%s5819 + $0x40] sm:$0xff] %v5811
        %5829 = vst [vmem:[%s5819 + $0x48] sm:$0xff] %v5812
        %5830 = vst [vmem:[%s5819 + $0x50] sm:$0xff] %v5813
        %5831 = vst [vmem:[%s5819 + $0x58] sm:$0xff] %v5814
        %5832 = vst [vmem:[%s5819 + $0x60] sm:$0xff] %v5815
        %5833 = vst [vmem:[%s5819 + $0x68] sm:$0xff] %v5816
        %5834 = vst [vmem:[%s5819 + $0x70] sm:$0xff] %v5817
        %5835 = vst [vmem:[%s5819 + $0x78] sm:$0xff] %v5818
        %s5836 = sand.u32 %s141, 1
        %s5837 = scalar_lea.sflag [#allocation7], %s5836
        %s5838 = sand.u32 %s141, 1
        %s5839 = smul.addr %s5838, 256
        %s5840 = scalar_lea.vmem [#allocation11], %s5839
        // Predicated region
        $region53: #{tpu_custom_call.1} parent=39 // pred_check
          %p5841 = pneg %p151
        $region54: #{tpu_custom_call.1} parent=39 // pred_check_branch
          %5843 = sbr.rel (%p5841) target = $region56
        $region55: #{tpu_custom_call.1} parent=39 // pred_region
          %s5845 = ssub.s32 4096, 4096
          %5846 = vsyncadd %s5837, %s5845
          %s5847 = smul.addr %s23, 32
          %s5848 = smul.addr %s5847, 128
          %s5849 = scalar_lea.hbm %s5, %s5848
          %s5850 = sshll.u32 %s5840, 4
          %s5851 = int_to_ptr.vmem [resolvable:$true] %s5850
          %5856 = dma.vmem_to_hbm [thread:$0]  %s5851, 4096, %s5849, %s5837, 128, 128, 8
        $region56: #{tpu_custom_call.1} parent=39 // pred_fallthru
          _
      $region40: #{tpu_custom_call.1} parent=5 // pred_fallthru
        _
      %p5857 = scmp.le.s32.totalorder 2, %s18
      // Predicated region
      $region57: #{tpu_custom_call.1} parent=5 // pred_check
        %p5858 = pneg %p5857
      $region58: #{tpu_custom_call.1} parent=5 // pred_check_branch
        %5860 = sbr.rel (%p5858) target = $region60
      $region59: #{tpu_custom_call.1} parent=5 // pred_region
        %s5861 = ssub.s32 %s18, 2
        // Predicated region
        $region61: #{tpu_custom_call.1} parent=59 // pred_check
          %p5862 = pneg %p157
        $region62: #{tpu_custom_call.1} parent=59 // pred_check_branch
          %5864 = sbr.rel (%p5862) target = $region64
        $region63: #{tpu_custom_call.1} parent=59 // pred_region
          %s5865 = sand.u32 %s142, 1
          %s5866 = scalar_lea.sflag [#allocation7], %s5865
          %s5867 = sand.u32 %s142, 1
          %s5868 = smul.addr %s5867, 256
          %s5869 = scalar_lea.vmem [#allocation11], %s5868
          %5870 = dma.done %s5866, 4096
        $region64: #{tpu_custom_call.1} parent=59 // pred_fallthru
          _
      $region60: #{tpu_custom_call.1} parent=5 // pred_fallthru
        _
    $region6: #{tpu_custom_call.1} parent=1 // loop_footer
      %s22 = sadd.s32 1, %s18
    $region7: #{tpu_custom_call.1} parent=1 // loop_footer_branch
      %17 = sbr.rel target = $region3
    $region8: #{tpu_custom_call.1} parent=1 // loop_exit
      _
    %5871 = vsyncpa [#allocation6], 1
    %s5872 = scalar_lea.sflag [#allocation6], 1
    %5873 = vsyncpa %s5872, 1
    %5874 = vsyncpa [#allocation9], 1
    %5875 = vsyncpa [#allocation7], 1
    %s5876 = scalar_lea.sflag [#allocation7], 1
    %5877 = vsyncpa %s5876, 1

</llo_original>
